<compile_context>
chip_gen: v7x
topology: tpu7x:2x2x1
jax: 0.10.0
libtpu: 0.0.40
codegen_flags: <defaults>
</compile_context>

<pallas_src>
import math
import numpy as np
import jax
import jax.numpy as jnp
from jax import lax
from jax.experimental import pallas as pl
from jax.experimental.pallas import tpu as pltpu

jax.config.update("jax_default_matmul_precision", "highest")

# ---- ModelConfig (synthetic, small) ----
DIM = 32          # config.dim
N_HEADS = 4       # config.n_heads
HEAD_DIM = DIM // N_HEADS
HIDDEN = 64       # config.hidden_dim
SEQ = 8
BATCH = 2
EPS = 1e-6        # config.norm_eps
LANE = 128        # lane-dense slab width
# config.norm_way == 'RMS'


def encoder_block_kernel(xb_ref, wts_ref, vec_ref, o_ref):
    """Single-invocation kernel: whole (B*S, D) problem resident in VMEM."""
    BS = xb_ref.shape[0]

    # ---- unpack the lane-dense slabs with static slices ----
    x = xb_ref[:, 0:DIM]                              # (BS, D)  activations
    bias = xb_ref[:, DIM:DIM + BS]                    # (BS, BS) additive attention bias

    wqkv = wts_ref[0:DIM, 0:3 * DIM]                  # (D, 3D)
    wo = wts_ref[0:DIM, 3 * DIM:4 * DIM]              # (D, D)
    w1 = wts_ref[DIM:2 * DIM, 0:HIDDEN]               # (D, H)
    w2 = wts_ref[2 * DIM:2 * DIM + HIDDEN, 0:DIM]     # (H, D)

    attn_nw = vec_ref[0:1, 0:DIM]
    ff_nw = vec_ref[0:1, DIM:2 * DIM]
    bo = vec_ref[0:1, 2 * DIM:3 * DIM]
    b2 = vec_ref[0:1, 3 * DIM:4 * DIM]
    bqkv = vec_ref[1:2, 0:3 * DIM]
    b1 = vec_ref[2:3, 0:HIDDEN]

    def rms_norm(t, w):
        ms = jnp.mean(t * t, axis=-1, keepdims=True)
        return t * lax.rsqrt(ms + EPS) * w

    # ---- attention sub-block (pre-norm) ----
    xn = rms_norm(x, attn_nw)
    qkv = jnp.dot(xn, wqkv, preferred_element_type=jnp.float32) + bqkv    # fused Q/K/V proj
    q = qkv[:, 0:DIM]
    k = qkv[:, DIM:2 * DIM]
    v = qkv[:, 2 * DIM:3 * DIM]

    scale = 1.0 / math.sqrt(HEAD_DIM)
    av_heads = []
    for h in range(N_HEADS):                          # static loop over heads
        sl = slice(h * HEAD_DIM, (h + 1) * HEAD_DIM)
        qh, kh, vh = q[:, sl], k[:, sl], v[:, sl]     # (BS, hd)
        scores = lax.dot_general(qh, kh, (((1,), (1,)), ((), ())),
                                 preferred_element_type=jnp.float32) * scale + bias
        m = jnp.max(scores, axis=-1, keepdims=True)
        e = jnp.exp(scores - m)
        p = e / jnp.sum(e, axis=-1, keepdims=True)    # exact softmax normalization
        av_heads.append(jnp.dot(p, vh, preferred_element_type=jnp.float32))
    av = jnp.concatenate(av_heads, axis=-1)           # (BS, D): lane concat (XLU slot)
    x = x + jnp.dot(av, wo, preferred_element_type=jnp.float32) + bo      # single av @ Wo

    # ---- feed-forward sub-block (pre-norm) ----
    xn = rms_norm(x, ff_nw)
    h1 = jnp.maximum(jnp.dot(xn, w1, preferred_element_type=jnp.float32) + b1, 0.0)
    y = jnp.dot(h1, w2, preferred_element_type=jnp.float32) + b2
    o_ref[...] = x + y                                # residual


def pack_params(p):
    """Build the static lane-dense parameter slabs ONCE (hoisted out of the per-call path)."""
    wqkv = jnp.concatenate([p["wq"], p["wk"], p["wv"]], axis=1)           # (D, 3D)
    w_pack = jnp.zeros((2 * DIM + HIDDEN, LANE), jnp.float32)             # (128, 128)
    w_pack = w_pack.at[0:DIM, 0:3 * DIM].set(wqkv)
    w_pack = w_pack.at[0:DIM, 3 * DIM:4 * DIM].set(p["wo"])
    w_pack = w_pack.at[DIM:2 * DIM, 0:HIDDEN].set(p["w1"])
    w_pack = w_pack.at[2 * DIM:2 * DIM + HIDDEN, 0:DIM].set(p["w2"])

    v_pack = jnp.zeros((8, LANE), jnp.float32)                            # (8, 128)
    v_pack = v_pack.at[0, 0:DIM].set(p["attn_nw"][0])
    v_pack = v_pack.at[0, DIM:2 * DIM].set(p["ff_nw"][0])
    v_pack = v_pack.at[0, 2 * DIM:3 * DIM].set(p["bo"][0])
    v_pack = v_pack.at[0, 3 * DIM:4 * DIM].set(p["b2"][0])
    v_pack = v_pack.at[1, 0:DIM].set(p["bq"][0])
    v_pack = v_pack.at[1, DIM:2 * DIM].set(p["bk"][0])
    v_pack = v_pack.at[1, 2 * DIM:3 * DIM].set(p["bv"][0])
    v_pack = v_pack.at[2, 0:HIDDEN].set(p["b1"][0])
    return {"w_pack": w_pack, "v_pack": v_pack}


@jax.jit
def encoder_block(x, e_mask, packed):
    """x: [B, S, D] f32, e_mask: [B, 1, S] f32 (1 keep / 0 mask). packed: from pack_params()."""
    B, S, D = x.shape
    BS = B * S
    x2 = x.reshape(BS, D)                             # row index = b*S + s
    key_valid = e_mask.reshape(1, BS)                 # col index = b*S + j

    # Combined additive attention bias; the block-diagonal structure is a compile-time
    # constant (numpy), only the key_valid term is dynamic:
    #   same batch & valid key  -> 0
    #   same batch & padded key -> -1e9 (matches masked_fill_(-1e9); softmax weight -> 0)
    #   cross batch             -> -2e9 (one batch element never attends the other)
    same_batch = (np.arange(BS)[:, None] // S) == (np.arange(BS)[None, :] // S)
    bias = jnp.where(jnp.asarray(same_batch),
                     jnp.where(key_valid != 0.0, 0.0, -1.0e9),
                     -2.0e9).astype(jnp.float32)

    # Lane-dense dynamic slab: activations + bias in one 128-lane buffer.
    xb = jnp.zeros((BS, LANE), jnp.float32)
    xb = xb.at[:, 0:D].set(x2)
    xb = xb.at[:, D:D + BS].set(bias)

    vmem = pl.BlockSpec(memory_space=pltpu.MemorySpace.VMEM)
    out = pl.pallas_call(
        encoder_block_kernel,
        out_shape=jax.ShapeDtypeStruct((BS, D), jnp.float32),
        in_specs=[vmem, vmem, vmem],                  # no grid: body runs once, no pipelining
        out_specs=vmem,
    )(xb, packed["w_pack"], packed["v_pack"])
    return out.reshape(B, S, D)


# ---- pure-JAX reference (mirrors the PyTorch forward, eval mode) ----
def reference(x, e_mask, p):
    def rms(v, w):
        return v * lax.rsqrt(jnp.mean(v * v, -1, keepdims=True) + EPS) * w[0]

    B, S, D = x.shape
    xn = rms(x, p["attn_nw"])
    q = xn @ p["wq"] + p["bq"][0]
    k = xn @ p["wk"] + p["bk"][0]
    v = xn @ p["wv"] + p["bv"][0]
    q = q.reshape(B, S, N_HEADS, HEAD_DIM).transpose(0, 2, 1, 3)
    k = k.reshape(B, S, N_HEADS, HEAD_DIM).transpose(0, 2, 1, 3)
    v = v.reshape(B, S, N_HEADS, HEAD_DIM).transpose(0, 2, 1, 3)
    scores = jnp.einsum("bhqd,bhkd->bhqk", q, k) / math.sqrt(HEAD_DIM)
    scores = jnp.where(e_mask[:, None, :, :] == 0, -1.0e9, scores)
    attn = jax.nn.softmax(scores, axis=-1)
    av = jnp.einsum("bhqk,bhkd->bhqd", attn, v)
    av = av.transpose(0, 2, 1, 3).reshape(B, S, D)
    x = x + (av @ p["wo"] + p["bo"][0])
    xn = rms(x, p["ff_nw"])
    h1 = jax.nn.relu(xn @ p["w1"] + p["b1"][0])
    return x + (h1 @ p["w2"] + p["b2"][0])


def init_params(key):
    ks = jax.random.split(key, 8)
    scale = 0.1
    return {
        "attn_nw": jnp.ones((1, DIM), jnp.float32),
        "wq": scale * jax.random.normal(ks[0], (DIM, DIM), jnp.float32),
        "bq": scale * jax.random.normal(ks[1], (1, DIM), jnp.float32),
        "wk": scale * jax.random.normal(ks[2], (DIM, DIM), jnp.float32),
        "bk": jnp.zeros((1, DIM), jnp.float32),
        "wv": scale * jax.random.normal(ks[3], (DIM, DIM), jnp.float32),
        "bv": jnp.zeros((1, DIM), jnp.float32),
        "wo": scale * jax.random.normal(ks[4], (DIM, DIM), jnp.float32),
        "bo": jnp.zeros((1, DIM), jnp.float32),
        "ff_nw": jnp.ones((1, DIM), jnp.float32),
        "w1": scale * jax.random.normal(ks[5], (DIM, HIDDEN), jnp.float32),
        "b1": scale * jax.random.normal(ks[6], (1, HIDDEN), jnp.float32),
        "w2": scale * jax.random.normal(ks[7], (HIDDEN, DIM), jnp.float32),
        "b2": jnp.zeros((1, DIM), jnp.float32),
    }


if __name__ == "__main__":
    key = jax.random.PRNGKey(0)
    kx, kp = jax.random.split(key)
    x = jax.random.normal(kx, (BATCH, SEQ, DIM), jnp.float32)
    # padding mask: first batch element fully valid, second has last 3 positions masked
    mask = jnp.ones((BATCH, 1, SEQ), jnp.float32)
    mask = mask.at[1, 0, SEQ - 3:].set(0.0)
    params = init_params(kp)
    packed = pack_params(params)        # parameter packing done once, outside the call path

    out = encoder_block(x, mask, packed)
    out = jax.block_until_ready(out)

    ref = reference(x, mask, params)
    assert jnp.allclose(out, ref, atol=1e-3, rtol=1e-3), "mismatch vs reference"
    print("KERNEL_OK")
</pallas_src>

<mosaic_0001>
module attributes {stable_mosaic.version = 11 : i64} {
  func.func @encoder_block_kernel(%arg0: memref<16x128xf32, #tpu.memory_space<vmem>>, %arg1: memref<128x128xf32, #tpu.memory_space<vmem>>, %arg2: memref<8x128xf32, #tpu.memory_space<vmem>>, %arg3: memref<16x32xf32, #tpu.memory_space<vmem>>) attributes {dimension_semantics = [], scalar_prefetch = 0 : i64, scratch_operands = 0 : i64, tpu.core_type = #tpu.core_type<tc>} {
    %c0 = arith.constant 0 : index
    %c0_0 = arith.constant 0 : index
    %0 = vector.load %arg0[%c0, %c0_0] : memref<16x128xf32, #tpu.memory_space<vmem>>, vector<16x32xf32>
    %c0_1 = arith.constant 0 : index
    %c32 = arith.constant 32 : index
    %1 = vector.load %arg0[%c0_1, %c32] : memref<16x128xf32, #tpu.memory_space<vmem>>, vector<16x16xf32>
    %c0_2 = arith.constant 0 : index
    %c0_3 = arith.constant 0 : index
    %2 = vector.load %arg1[%c0_2, %c0_3] : memref<128x128xf32, #tpu.memory_space<vmem>>, vector<32x96xf32>
    %c0_4 = arith.constant 0 : index
    %c96 = arith.constant 96 : index
    %3 = vector.load %arg1[%c0_4, %c96] : memref<128x128xf32, #tpu.memory_space<vmem>>, vector<32x32xf32>
    %c32_5 = arith.constant 32 : index
    %c0_6 = arith.constant 0 : index
    %4 = vector.load %arg1[%c32_5, %c0_6] : memref<128x128xf32, #tpu.memory_space<vmem>>, vector<32x64xf32>
    %c64 = arith.constant 64 : index
    %c0_7 = arith.constant 0 : index
    %5 = vector.load %arg1[%c64, %c0_7] : memref<128x128xf32, #tpu.memory_space<vmem>>, vector<64x32xf32>
    %c0_8 = arith.constant 0 : index
    %c0_9 = arith.constant 0 : index
    %6 = vector.load %arg2[%c0_8, %c0_9] : memref<8x128xf32, #tpu.memory_space<vmem>>, vector<1x32xf32>
    %c0_10 = arith.constant 0 : index
    %c32_11 = arith.constant 32 : index
    %7 = vector.load %arg2[%c0_10, %c32_11] : memref<8x128xf32, #tpu.memory_space<vmem>>, vector<1x32xf32>
    %c0_12 = arith.constant 0 : index
    %c64_13 = arith.constant 64 : index
    %8 = vector.load %arg2[%c0_12, %c64_13] : memref<8x128xf32, #tpu.memory_space<vmem>>, vector<1x32xf32>
    %c0_14 = arith.constant 0 : index
    %c96_15 = arith.constant 96 : index
    %9 = vector.load %arg2[%c0_14, %c96_15] : memref<8x128xf32, #tpu.memory_space<vmem>>, vector<1x32xf32>
    %c1 = arith.constant 1 : index
    %c0_16 = arith.constant 0 : index
    %10 = vector.load %arg2[%c1, %c0_16] : memref<8x128xf32, #tpu.memory_space<vmem>>, vector<1x96xf32>
    %c2 = arith.constant 2 : index
    %c0_17 = arith.constant 0 : index
    %11 = vector.load %arg2[%c2, %c0_17] : memref<8x128xf32, #tpu.memory_space<vmem>>, vector<1x64xf32>
    %12 = arith.mulf %0, %0 : vector<16x32xf32>
    %cst = arith.constant dense<0.000000e+00> : vector<16xf32>
    %13 = vector.multi_reduction <add>, %12, %cst [1] : vector<16x32xf32> to vector<16xf32>
    %14 = vector.shape_cast %13 : vector<16xf32> to vector<16x1xf32>
    %cst_18 = arith.constant 3.200000e+01 : f32
    %15 = vector.broadcast %cst_18 : f32 to vector<16x1xf32>
    %16 = arith.divf %14, %15 : vector<16x1xf32>
    %cst_19 = arith.constant 9.99999997E-7 : f32
    %17 = vector.broadcast %cst_19 : f32 to vector<16x1xf32>
    %18 = arith.addf %16, %17 : vector<16x1xf32>
    %19 = math.rsqrt %18 : vector<16x1xf32>
    %20 = vector.broadcast %19 : vector<16x1xf32> to vector<16x32xf32>
    %21 = arith.mulf %0, %20 : vector<16x32xf32>
    %22 = vector.broadcast %6 : vector<1x32xf32> to vector<16x32xf32>
    %23 = arith.mulf %21, %22 : vector<16x32xf32>
    %cst_20 = arith.constant dense<0.000000e+00> : vector<16x96xf32>
    %24 = tpu.matmul %23, %2, %cst_20 {dimension_numbers = #tpu.dot_dimension_numbers<[1], [0], [0], [1], [0, 0, 1, 1], [], []>, precision = #tpu.contract_precision<fp32>} : vector<16x32xf32>, vector<32x96xf32>, vector<16x96xf32> -> vector<16x96xf32>
    %25 = vector.broadcast %10 : vector<1x96xf32> to vector<16x96xf32>
    %26 = arith.addf %24, %25 : vector<16x96xf32>
    %27 = vector.extract_strided_slice %26 {offsets = [0, 0], sizes = [16, 32], strides = [1, 1]} : vector<16x96xf32> to vector<16x32xf32>
    %28 = vector.extract_strided_slice %26 {offsets = [0, 32], sizes = [16, 32], strides = [1, 1]} : vector<16x96xf32> to vector<16x32xf32>
    %29 = vector.extract_strided_slice %26 {offsets = [0, 64], sizes = [16, 32], strides = [1, 1]} : vector<16x96xf32> to vector<16x32xf32>
    %30 = vector.extract_strided_slice %27 {offsets = [0, 0], sizes = [16, 8], strides = [1, 1]} : vector<16x32xf32> to vector<16x8xf32>
    %31 = vector.extract_strided_slice %28 {offsets = [0, 0], sizes = [16, 8], strides = [1, 1]} : vector<16x32xf32> to vector<16x8xf32>
    %32 = vector.extract_strided_slice %29 {offsets = [0, 0], sizes = [16, 8], strides = [1, 1]} : vector<16x32xf32> to vector<16x8xf32>
    %cst_21 = arith.constant dense<0.000000e+00> : vector<16x16xf32>
    %33 = tpu.matmul %30, %31, %cst_21 {dimension_numbers = #tpu.dot_dimension_numbers<[1], [1], [0], [0], [0, 0, 1, 0], [], []>, precision = #tpu.contract_precision<fp32>} : vector<16x8xf32>, vector<16x8xf32>, vector<16x16xf32> -> vector<16x16xf32>
    %cst_22 = arith.constant 0.353553385 : f32
    %34 = vector.broadcast %cst_22 : f32 to vector<16x16xf32>
    %35 = arith.mulf %33, %34 : vector<16x16xf32>
    %36 = arith.addf %35, %1 : vector<16x16xf32>
    %cst_23 = arith.constant dense<0xFF800000> : vector<16xf32>
    %37 = vector.multi_reduction <maximumf>, %36, %cst_23 [1] : vector<16x16xf32> to vector<16xf32>
    %38 = vector.shape_cast %37 : vector<16xf32> to vector<16x1xf32>
    %39 = vector.broadcast %38 : vector<16x1xf32> to vector<16x16xf32>
    %40 = arith.subf %36, %39 : vector<16x16xf32>
    %41 = math.exp %40 : vector<16x16xf32>
    %cst_24 = arith.constant dense<0.000000e+00> : vector<16xf32>
    %42 = vector.multi_reduction <add>, %41, %cst_24 [1] : vector<16x16xf32> to vector<16xf32>
    %43 = vector.shape_cast %42 : vector<16xf32> to vector<16x1xf32>
    %44 = vector.broadcast %43 : vector<16x1xf32> to vector<16x16xf32>
    %45 = arith.divf %41, %44 : vector<16x16xf32>
    %cst_25 = arith.constant dense<0.000000e+00> : vector<16x8xf32>
    %46 = tpu.matmul %45, %32, %cst_25 {dimension_numbers = #tpu.dot_dimension_numbers<[1], [0], [0], [1], [0, 0, 1, 1], [], []>, precision = #tpu.contract_precision<fp32>} : vector<16x16xf32>, vector<16x8xf32>, vector<16x8xf32> -> vector<16x8xf32>
    %47 = vector.extract_strided_slice %27 {offsets = [0, 8], sizes = [16, 8], strides = [1, 1]} : vector<16x32xf32> to vector<16x8xf32>
    %48 = vector.extract_strided_slice %28 {offsets = [0, 8], sizes = [16, 8], strides = [1, 1]} : vector<16x32xf32> to vector<16x8xf32>
    %49 = vector.extract_strided_slice %29 {offsets = [0, 8], sizes = [16, 8], strides = [1, 1]} : vector<16x32xf32> to vector<16x8xf32>
    %cst_26 = arith.constant dense<0.000000e+00> : vector<16x16xf32>
    %50 = tpu.matmul %47, %48, %cst_26 {dimension_numbers = #tpu.dot_dimension_numbers<[1], [1], [0], [0], [0, 0, 1, 0], [], []>, precision = #tpu.contract_precision<fp32>} : vector<16x8xf32>, vector<16x8xf32>, vector<16x16xf32> -> vector<16x16xf32>
    %cst_27 = arith.constant 0.353553385 : f32
    %51 = vector.broadcast %cst_27 : f32 to vector<16x16xf32>
    %52 = arith.mulf %50, %51 : vector<16x16xf32>
    %53 = arith.addf %52, %1 : vector<16x16xf32>
    %cst_28 = arith.constant dense<0xFF800000> : vector<16xf32>
    %54 = vector.multi_reduction <maximumf>, %53, %cst_28 [1] : vector<16x16xf32> to vector<16xf32>
    %55 = vector.shape_cast %54 : vector<16xf32> to vector<16x1xf32>
    %56 = vector.broadcast %55 : vector<16x1xf32> to vector<16x16xf32>
    %57 = arith.subf %53, %56 : vector<16x16xf32>
    %58 = math.exp %57 : vector<16x16xf32>
    %cst_29 = arith.constant dense<0.000000e+00> : vector<16xf32>
    %59 = vector.multi_reduction <add>, %58, %cst_29 [1] : vector<16x16xf32> to vector<16xf32>
    %60 = vector.shape_cast %59 : vector<16xf32> to vector<16x1xf32>
    %61 = vector.broadcast %60 : vector<16x1xf32> to vector<16x16xf32>
    %62 = arith.divf %58, %61 : vector<16x16xf32>
    %cst_30 = arith.constant dense<0.000000e+00> : vector<16x8xf32>
    %63 = tpu.matmul %62, %49, %cst_30 {dimension_numbers = #tpu.dot_dimension_numbers<[1], [0], [0], [1], [0, 0, 1, 1], [], []>, precision = #tpu.contract_precision<fp32>} : vector<16x16xf32>, vector<16x8xf32>, vector<16x8xf32> -> vector<16x8xf32>
    %64 = vector.extract_strided_slice %27 {offsets = [0, 16], sizes = [16, 8], strides = [1, 1]} : vector<16x32xf32> to vector<16x8xf32>
    %65 = vector.extract_strided_slice %28 {offsets = [0, 16], sizes = [16, 8], strides = [1, 1]} : vector<16x32xf32> to vector<16x8xf32>
    %66 = vector.extract_strided_slice %29 {offsets = [0, 16], sizes = [16, 8], strides = [1, 1]} : vector<16x32xf32> to vector<16x8xf32>
    %cst_31 = arith.constant dense<0.000000e+00> : vector<16x16xf32>
    %67 = tpu.matmul %64, %65, %cst_31 {dimension_numbers = #tpu.dot_dimension_numbers<[1], [1], [0], [0], [0, 0, 1, 0], [], []>, precision = #tpu.contract_precision<fp32>} : vector<16x8xf32>, vector<16x8xf32>, vector<16x16xf32> -> vector<16x16xf32>
    %cst_32 = arith.constant 0.353553385 : f32
    %68 = vector.broadcast %cst_32 : f32 to vector<16x16xf32>
    %69 = arith.mulf %67, %68 : vector<16x16xf32>
    %70 = arith.addf %69, %1 : vector<16x16xf32>
    %cst_33 = arith.constant dense<0xFF800000> : vector<16xf32>
    %71 = vector.multi_reduction <maximumf>, %70, %cst_33 [1] : vector<16x16xf32> to vector<16xf32>
    %72 = vector.shape_cast %71 : vector<16xf32> to vector<16x1xf32>
    %73 = vector.broadcast %72 : vector<16x1xf32> to vector<16x16xf32>
    %74 = arith.subf %70, %73 : vector<16x16xf32>
    %75 = math.exp %74 : vector<16x16xf32>
    %cst_34 = arith.constant dense<0.000000e+00> : vector<16xf32>
    %76 = vector.multi_reduction <add>, %75, %cst_34 [1] : vector<16x16xf32> to vector<16xf32>
    %77 = vector.shape_cast %76 : vector<16xf32> to vector<16x1xf32>
    %78 = vector.broadcast %77 : vector<16x1xf32> to vector<16x16xf32>
    %79 = arith.divf %75, %78 : vector<16x16xf32>
    %cst_35 = arith.constant dense<0.000000e+00> : vector<16x8xf32>
    %80 = tpu.matmul %79, %66, %cst_35 {dimension_numbers = #tpu.dot_dimension_numbers<[1], [0], [0], [1], [0, 0, 1, 1], [], []>, precision = #tpu.contract_precision<fp32>} : vector<16x16xf32>, vector<16x8xf32>, vector<16x8xf32> -> vector<16x8xf32>
    %81 = vector.extract_strided_slice %27 {offsets = [0, 24], sizes = [16, 8], strides = [1, 1]} : vector<16x32xf32> to vector<16x8xf32>
    %82 = vector.extract_strided_slice %28 {offsets = [0, 24], sizes = [16, 8], strides = [1, 1]} : vector<16x32xf32> to vector<16x8xf32>
    %83 = vector.extract_strided_slice %29 {offsets = [0, 24], sizes = [16, 8], strides = [1, 1]} : vector<16x32xf32> to vector<16x8xf32>
    %cst_36 = arith.constant dense<0.000000e+00> : vector<16x16xf32>
    %84 = tpu.matmul %81, %82, %cst_36 {dimension_numbers = #tpu.dot_dimension_numbers<[1], [1], [0], [0], [0, 0, 1, 0], [], []>, precision = #tpu.contract_precision<fp32>} : vector<16x8xf32>, vector<16x8xf32>, vector<16x16xf32> -> vector<16x16xf32>
    %cst_37 = arith.constant 0.353553385 : f32
    %85 = vector.broadcast %cst_37 : f32 to vector<16x16xf32>
    %86 = arith.mulf %84, %85 : vector<16x16xf32>
    %87 = arith.addf %86, %1 : vector<16x16xf32>
    %cst_38 = arith.constant dense<0xFF800000> : vector<16xf32>
    %88 = vector.multi_reduction <maximumf>, %87, %cst_38 [1] : vector<16x16xf32> to vector<16xf32>
    %89 = vector.shape_cast %88 : vector<16xf32> to vector<16x1xf32>
    %90 = vector.broadcast %89 : vector<16x1xf32> to vector<16x16xf32>
    %91 = arith.subf %87, %90 : vector<16x16xf32>
    %92 = math.exp %91 : vector<16x16xf32>
    %cst_39 = arith.constant dense<0.000000e+00> : vector<16xf32>
    %93 = vector.multi_reduction <add>, %92, %cst_39 [1] : vector<16x16xf32> to vector<16xf32>
    %94 = vector.shape_cast %93 : vector<16xf32> to vector<16x1xf32>
    %95 = vector.broadcast %94 : vector<16x1xf32> to vector<16x16xf32>
    %96 = arith.divf %92, %95 : vector<16x16xf32>
    %cst_40 = arith.constant dense<0.000000e+00> : vector<16x8xf32>
    %97 = tpu.matmul %96, %83, %cst_40 {dimension_numbers = #tpu.dot_dimension_numbers<[1], [0], [0], [1], [0, 0, 1, 1], [], []>, precision = #tpu.contract_precision<fp32>} : vector<16x16xf32>, vector<16x8xf32>, vector<16x8xf32> -> vector<16x8xf32>
    %98 = tpu.concatenate %46, %63, %80, %97 in 1 : vector<16x8xf32>, vector<16x8xf32>, vector<16x8xf32>, vector<16x8xf32> -> vector<16x32xf32>
    %cst_41 = arith.constant dense<0.000000e+00> : vector<16x32xf32>
    %99 = tpu.matmul %98, %3, %cst_41 {dimension_numbers = #tpu.dot_dimension_numbers<[1], [0], [0], [1], [0, 0, 1, 1], [], []>, precision = #tpu.contract_precision<fp32>} : vector<16x32xf32>, vector<32x32xf32>, vector<16x32xf32> -> vector<16x32xf32>
    %100 = arith.addf %0, %99 : vector<16x32xf32>
    %101 = vector.broadcast %8 : vector<1x32xf32> to vector<16x32xf32>
    %102 = arith.addf %100, %101 : vector<16x32xf32>
    %103 = arith.mulf %102, %102 : vector<16x32xf32>
    %cst_42 = arith.constant dense<0.000000e+00> : vector<16xf32>
    %104 = vector.multi_reduction <add>, %103, %cst_42 [1] : vector<16x32xf32> to vector<16xf32>
    %105 = vector.shape_cast %104 : vector<16xf32> to vector<16x1xf32>
    %cst_43 = arith.constant 3.200000e+01 : f32
    %106 = vector.broadcast %cst_43 : f32 to vector<16x1xf32>
    %107 = arith.divf %105, %106 : vector<16x1xf32>
    %cst_44 = arith.constant 9.99999997E-7 : f32
    %108 = vector.broadcast %cst_44 : f32 to vector<16x1xf32>
    %109 = arith.addf %107, %108 : vector<16x1xf32>
    %110 = math.rsqrt %109 : vector<16x1xf32>
    %111 = vector.broadcast %110 : vector<16x1xf32> to vector<16x32xf32>
    %112 = arith.mulf %102, %111 : vector<16x32xf32>
    %113 = vector.broadcast %7 : vector<1x32xf32> to vector<16x32xf32>
    %114 = arith.mulf %112, %113 : vector<16x32xf32>
    %cst_45 = arith.constant dense<0.000000e+00> : vector<16x64xf32>
    %115 = tpu.matmul %114, %4, %cst_45 {dimension_numbers = #tpu.dot_dimension_numbers<[1], [0], [0], [1], [0, 0, 1, 1], [], []>, precision = #tpu.contract_precision<fp32>} : vector<16x32xf32>, vector<32x64xf32>, vector<16x64xf32> -> vector<16x64xf32>
    %116 = vector.broadcast %11 : vector<1x64xf32> to vector<16x64xf32>
    %117 = arith.addf %115, %116 : vector<16x64xf32>
    %cst_46 = arith.constant 0.000000e+00 : f32
    %118 = vector.broadcast %cst_46 : f32 to vector<16x64xf32>
    %119 = arith.maximumf %117, %118 : vector<16x64xf32>
    %cst_47 = arith.constant dense<0.000000e+00> : vector<16x32xf32>
    %120 = tpu.matmul %119, %5, %cst_47 {dimension_numbers = #tpu.dot_dimension_numbers<[1], [0], [0], [1], [0, 0, 1, 1], [], []>, precision = #tpu.contract_precision<fp32>} : vector<16x64xf32>, vector<64x32xf32>, vector<16x32xf32> -> vector<16x32xf32>
    %121 = vector.broadcast %9 : vector<1x32xf32> to vector<16x32xf32>
    %122 = arith.addf %120, %121 : vector<16x32xf32>
    %123 = arith.addf %102, %122 : vector<16x32xf32>
    %c0_48 = arith.constant 0 : index
    %c0_49 = arith.constant 0 : index
    %124 = vector.load %arg3[%c0_48, %c0_49] : memref<16x32xf32, #tpu.memory_space<vmem>>, vector<16x32xf32>
    tpu.vector_store %arg3[%c0_48, %c0_49], %123 {strides = array<i32>} : memref<16x32xf32, #tpu.memory_space<vmem>>, vector<16x32xf32>,
    return
  }
}

</mosaic_0001>

<llo_original>
// kernel: encoder_block.1
$region0: #{encoder_block.1}
  #allocation0 [shape = 'u32[]', space=smem, size = 0x4, offset = 0x4, fixed_abs, tag = 'smem constant byte address 0x4 - core index']
  #allocation1 [shape = 'u32[144,128]{1,0:T(1,128)}', space=vmem, size = 0x12000, scoped, tag = 'internal scratch']
  %s0 = inlined_call_operand.vmem [shape: f32[16,128], index: 0, kind: input, shape index: {}]
  %s1 = inlined_call_operand.vmem [shape: f32[128,128], index: 1, kind: input, shape index: {}]
  %s2 = inlined_call_operand.vmem [shape: f32[8,128], index: 2, kind: input, shape index: {}]
  %s3 = inlined_call_operand.hbm [shape: f32[16,32], index: 3, kind: output, shape index: {}]
  %s4 = sld [smem:[#allocation0]]
  $region22: #{encoder_block.1} parent=0
    _
  %s6 = ssub.s32 1, %s4
  %s7 = scalar_select 0, %s6, %s4
  $region1: #{encoder_block.1} parent=0
    #allocation2 [shape = 'u8[8192]{0}', space=vmem, size = 0x2000, scoped, tag = 'output window, operand 0, single buffered']
    #allocation3 [shape = 's32[1]{0}', space=sflag, size = 0x4, scoped, tag = 'scoped memory for encoder_block.1']
    %8 = vsyncpa [#allocation3], 0
    // Predicated region
    $region2: #{encoder_block.1} parent=1 // pred_check
      _
    $region3: #{encoder_block.1} parent=1 // pred_check_branch
      %10 = sbr.rel (0) target = $region5
    $region4: #{encoder_block.1} parent=1 // pred_region
      _
    $region5: #{encoder_block.1} parent=1 // pred_fallthru
      _
    // Predicated region
    $region6: #{encoder_block.1} parent=1 // pred_check
      _
    $region7: #{encoder_block.1} parent=1 // pred_check_branch
      %12 = sbr.rel (0) target = $region9
    $region8: #{encoder_block.1} parent=1 // pred_region
      _
    $region9: #{encoder_block.1} parent=1 // pred_fallthru
      _
    // Predicated region
    $region10: #{encoder_block.1} parent=1 // pred_check
      _
    $region11: #{encoder_block.1} parent=1 // pred_check_branch
      %14 = sbr.rel (0) target = $region13
    $region12: #{encoder_block.1} parent=1 // pred_region
      _
    $region13: #{encoder_block.1} parent=1 // pred_fallthru
      _
    %v15 = vld [vmem:[%s0] sm:$0xff]
    %v16 = vld [vmem:[%s0 + $0x8] sm:$0xff]
    %v17 = vld [vmem:[%s1] sm:$0xff]
    %v18 = vld [vmem:[%s1 + $0x8] sm:$0xff]
    %v19 = vld [vmem:[%s1 + $0x10] sm:$0xff]
    %v20 = vld [vmem:[%s1 + $0x18] sm:$0xff]
    %v21 = vld [vmem:[%s1 + $0x20] sm:$0xff]
    %v22 = vld [vmem:[%s1 + $0x28] sm:$0xff]
    %v23 = vld [vmem:[%s1 + $0x30] sm:$0xff]
    %v24 = vld [vmem:[%s1 + $0x38] sm:$0xff]
    %v25 = vld [vmem:[%s1 + $0x40] sm:$0xff]
    %v26 = vld [vmem:[%s1 + $0x48] sm:$0xff]
    %v27 = vld [vmem:[%s1 + $0x50] sm:$0xff]
    %v28 = vld [vmem:[%s1 + $0x58] sm:$0xff]
    %v29 = vld [vmem:[%s1 + $0x60] sm:$0xff]
    %v30 = vld [vmem:[%s1 + $0x68] sm:$0xff]
    %v31 = vld [vmem:[%s1 + $0x70] sm:$0xff]
    %v32 = vld [vmem:[%s1 + $0x78] sm:$0xff]
    %v33 = vld [vmem:[%s2] sm:$0x1]
    %v34 = vld [vmem:[%s2 + $0x1] sm:$0x1]
    %v35 = vld [vmem:[%s2 + $0x2] sm:$0x1]
    %v36 = vmul.f32 %v15, %v15
    %v37 = vmul.f32 %v16, %v16
    %vm38 = vcmask 261120
    %v39 = vsel %vm38, %v36, 0.0
    %40 = vadd.xlane.f32.xlu0 %v39
    %v41 = vpop.xlane.xlu0 %40
    %v42 = vsel %vm38, %v37, 0.0
    %43 = vadd.xlane.f32.xlu0 %v42
    %v44 = vpop.xlane.xlu0 %43
    %v45 = vrcp.pop 32.0
    %v46 = vmul.f32 %v41, %v45
    %v47 = vmul.f32 %v44, %v45
    %v48 = vadd.f32 %v46, 1e-06
    %v49 = vadd.f32 %v47, 1e-06
    %v50 = vrsqrt.pop %v48
    %v51 = vrsqrt.pop %v49
    %v52 = vmul.f32 %v15, %v50
    %v53 = vmul.f32 %v16, %v51
    %v54 = vlaneseq
    %v55 = vshrl.u32 %v54, 7
    %v56 = vsub.s32 0, %v55
    %v57 = vrot.slane %v33, %v56
    %v58 = vmul.f32 %v52, %v57
    %v59 = vmul.f32 %v53, %v57
    %v60 = vlaneseq
    %v61 = vshrl.u32 %v60, 7
    %v62 = vsub.s32 0, %v61
    %v63 = vrot.slane %v34, %v62
    %v65 = vsel %vm38, %v58, 0
    %v68 = vsel %vm38, %v59, 0
    %70 = vmatprep.subr.mxu0 0.0
    %v71 = vand.u32 %v17, 4294901760
    %72 = vmatpush1.msra.mxu0 %v71
    %73 = vmatprep.subr.mxu0 0.0
    %v74 = vand.u32 %v18, 4294901760
    %75 = vmatpush1.msra.mxu0 %v74
    %76 = vmatprep.subr.mxu0 0.0
    %v77 = vand.u32 %v19, 4294901760
    %78 = vmatpush1.msra.mxu0 %v77
    %79 = vmatprep.subr.mxu0 0.0
    %v80 = vand.u32 %v20, 4294901760
    %81 = vmatpush1.msra.mxu0 %v80
    %82 = vmatprep.subr.mxu0 0.0
    %83 = vmatpush1.msra.mxu0 0.0
    %84 = vmatprep.subr.mxu0 0.0
    %85 = vmatpush1.msra.mxu0 0.0
    %86 = vmatprep.subr.mxu0 0.0
    %87 = vmatpush1.msra.mxu0 0.0
    %88 = vmatprep.subr.mxu0 0.0
    %89 = vmatpush1.msra.mxu0 0.0
    %90 = vmatprep.subr.mxu0 0.0
    %91 = vmatpush1.msra.mxu0 0.0
    %92 = vmatprep.subr.mxu0 0.0
    %93 = vmatpush1.msra.mxu0 0.0
    %94 = vmatprep.subr.mxu0 0.0
    %95 = vmatpush1.msra.mxu0 0.0
    %96 = vmatprep.subr.mxu0 0.0
    %97 = vmatpush1.msra.mxu0 0.0
    %98 = vmatprep.subr.mxu0 0.0
    %99 = vmatpush1.msra.mxu0 0.0
    %100 = vmatprep.subr.mxu0 0.0
    %101 = vmatpush1.msra.mxu0 0.0
    %102 = vmatprep.subr.mxu0 0.0
    %103 = vmatpush1.msra.mxu0 0.0
    %104 = vmatprep.subr.mxu0 0.0
    %105 = vmatpush1.msra.mxu0 0.0
    %106 = vmatprep.subr.mxu0 0.0
    %107 = vmatpush1.msra.mxu0 0.0
    %108 = vmatprep.subr.mxu0 0.0
    %109 = vmatpush1.msra.mxu0 0.0
    %110 = vmatprep.subr.mxu0 0.0
    %111 = vmatpush1.msra.mxu0 0.0
    %112 = vmatprep.subr.mxu0 0.0
    %113 = vmatpush1.msra.mxu0 0.0
    %114 = vmatprep.subr.mxu0 0.0
    %115 = vmatpush1.msra.mxu0 0.0
    %116 = vmatprep.subr.mxu0 0.0
    %117 = vmatpush1.msra.mxu0 0.0
    %118 = vmatprep.subr.mxu0 0.0
    %119 = vmatpush1.msra.mxu0 0.0
    %120 = vmatprep.subr.mxu0 0.0
    %121 = vmatpush1.msra.mxu0 0.0
    %122 = vmatprep.subr.mxu0 0.0
    %123 = vmatpush1.msra.mxu0 0.0
    %124 = vmatprep.subr.mxu0 0.0
    %125 = vmatpush1.msra.mxu0 0.0
    %126 = vmatprep.subr.mxu0 0.0
    %127 = vmatpush1.msra.mxu0 0.0
    %128 = vmatprep.subr.mxu0 0.0
    %129 = vmatpush1.msra.mxu0 0.0
    %130 = vmatprep.subr.mxu0 0.0
    %131 = vmatpush1.msra.mxu0 0.0
    %132 = vmatprep.subr.mxu0 0.0
    %133 = vmatpush1.msra.mxu0 0.0
    %134 = vmatprep.subr.mxu0 0.0
    %135 = vmatpush1.msra.mxu0 0.0
    %136 = vmatprep.subr.mxu0 0.0
    %137 = vmatpush1.msra.mxu0 0.0
    %138 = vmatprep.mubr.f32.mxu0 0.0
    %v139 = vand.u32 %v65, 4294901760
    %v140 = vsub.f32 %v65, %v139
    %v141 = vand.u32 %v140, 4294901760
    %v142 = vsub.f32 %v140, %v141
    %v143 = vand.u32 %v142, 4294901760
    %144 = vmatmul.mubr.f32.gmra.mrb[0].mxu0 %v143
    %v145 = vpop.f32.mrb[0].mxu0
    %v146 = vadd.f32 %v63, %v145
    %v147 = vpop.f32.mrb[0].mxu0
    %148 = vmatprep.mubr.f32.mxu0 0.0
    %v149 = vand.u32 %v68, 4294901760
    %v150 = vsub.f32 %v68, %v149
    %v151 = vand.u32 %v150, 4294901760
    %v152 = vsub.f32 %v150, %v151
    %v153 = vand.u32 %v152, 4294901760
    %154 = vmatmul.mubr.f32.gmra.mrb[0].mxu0 %v153
    %v155 = vpop.f32.mrb[0].mxu0
    %v156 = vadd.f32 %v63, %v155
    %v157 = vpop.f32.mrb[0].mxu0
    %158 = vdwg.mxu0
    %159 = vmatprep.subr.mxu0 0.0
    %v160 = vand.u32 %v17, 4294901760
    %v161 = vsub.f32 %v17, %v160
    %v162 = vand.u32 %v161, 4294901760
    %v163 = vsub.f32 %v161, %v162
    %v164 = vand.u32 %v163, 4294901760
    %165 = vmatpush1.msra.mxu0 %v164
    %166 = vmatprep.subr.mxu0 0.0
    %v167 = vand.u32 %v18, 4294901760
    %v168 = vsub.f32 %v18, %v167
    %v169 = vand.u32 %v168, 4294901760
    %v170 = vsub.f32 %v168, %v169
    %v171 = vand.u32 %v170, 4294901760
    %172 = vmatpush1.msra.mxu0 %v171
    %173 = vmatprep.subr.mxu0 0.0
    %v174 = vand.u32 %v19, 4294901760
    %v175 = vsub.f32 %v19, %v174
    %v176 = vand.u32 %v175, 4294901760
    %v177 = vsub.f32 %v175, %v176
    %v178 = vand.u32 %v177, 4294901760
    %179 = vmatpush1.msra.mxu0 %v178
    %180 = vmatprep.subr.mxu0 0.0
    %v181 = vand.u32 %v20, 4294901760
    %v182 = vsub.f32 %v20, %v181
    %v183 = vand.u32 %v182, 4294901760
    %v184 = vsub.f32 %v182, %v183
    %v185 = vand.u32 %v184, 4294901760
    %186 = vmatpush1.msra.mxu0 %v185
    %187 = vmatprep.subr.mxu0 0.0
    %188 = vmatpush1.msra.mxu0 0.0
    %189 = vmatprep.subr.mxu0 0.0
    %190 = vmatpush1.msra.mxu0 0.0
    %191 = vmatprep.subr.mxu0 0.0
    %192 = vmatpush1.msra.mxu0 0.0
    %193 = vmatprep.subr.mxu0 0.0
    %194 = vmatpush1.msra.mxu0 0.0
    %195 = vmatprep.subr.mxu0 0.0
    %196 = vmatpush1.msra.mxu0 0.0
    %197 = vmatprep.subr.mxu0 0.0
    %198 = vmatpush1.msra.mxu0 0.0
    %199 = vmatprep.subr.mxu0 0.0
    %200 = vmatpush1.msra.mxu0 0.0
    %201 = vmatprep.subr.mxu0 0.0
    %202 = vmatpush1.msra.mxu0 0.0
    %203 = vmatprep.subr.mxu0 0.0
    %204 = vmatpush1.msra.mxu0 0.0
    %205 = vmatprep.subr.mxu0 0.0
    %206 = vmatpush1.msra.mxu0 0.0
    %207 = vmatprep.subr.mxu0 0.0
    %208 = vmatpush1.msra.mxu0 0.0
    %209 = vmatprep.subr.mxu0 0.0
    %210 = vmatpush1.msra.mxu0 0.0
    %211 = vmatprep.subr.mxu0 0.0
    %212 = vmatpush1.msra.mxu0 0.0
    %213 = vmatprep.subr.mxu0 0.0
    %214 = vmatpush1.msra.mxu0 0.0
    %215 = vmatprep.subr.mxu0 0.0
    %216 = vmatpush1.msra.mxu0 0.0
    %217 = vmatprep.subr.mxu0 0.0
    %218 = vmatpush1.msra.mxu0 0.0
    %219 = vmatprep.subr.mxu0 0.0
    %220 = vmatpush1.msra.mxu0 0.0
    %221 = vmatprep.subr.mxu0 0.0
    %222 = vmatpush1.msra.mxu0 0.0
    %223 = vmatprep.subr.mxu0 0.0
    %224 = vmatpush1.msra.mxu0 0.0
    %225 = vmatprep.subr.mxu0 0.0
    %226 = vmatpush1.msra.mxu0 0.0
    %227 = vmatprep.subr.mxu0 0.0
    %228 = vmatpush1.msra.mxu0 0.0
    %229 = vmatprep.subr.mxu0 0.0
    %230 = vmatpush1.msra.mxu0 0.0
    %231 = vmatprep.subr.mxu0 0.0
    %232 = vmatpush1.msra.mxu0 0.0
    %233 = vmatprep.subr.mxu0 0.0
    %234 = vmatpush1.msra.mxu0 0.0
    %235 = vmatprep.subr.mxu0 0.0
    %236 = vmatpush1.msra.mxu0 0.0
    %237 = vmatprep.subr.mxu0 0.0
    %238 = vmatpush1.msra.mxu0 0.0
    %239 = vmatprep.subr.mxu0 0.0
    %240 = vmatpush1.msra.mxu0 0.0
    %241 = vmatprep.subr.mxu0 0.0
    %242 = vmatpush1.msra.mxu0 0.0
    %243 = vmatprep.mubr.f32.mxu0 0.0
    %v244 = vand.u32 %v65, 4294901760
    %245 = vmatmul.mubr.f32.gmra.mrb[0].mxu0 %v244
    %v246 = vpop.f32.mrb[0].mxu0
    %v247 = vadd.f32 %v146, %v246
    %v248 = vpop.f32.mrb[0].mxu0
    %249 = vmatprep.mubr.f32.mxu0 0.0
    %v250 = vand.u32 %v68, 4294901760
    %251 = vmatmul.mubr.f32.gmra.mrb[0].mxu0 %v250
    %v252 = vpop.f32.mrb[0].mxu0
    %v253 = vadd.f32 %v156, %v252
    %v254 = vpop.f32.mrb[0].mxu0
    %255 = vdwg.mxu0
    %256 = vmatprep.subr.mxu0 0.0
    %v257 = vand.u32 %v17, 4294901760
    %v258 = vsub.f32 %v17, %v257
    %259 = vmatpush1.msra.mxu0 %v258
    %260 = vmatprep.subr.mxu0 0.0
    %v261 = vand.u32 %v18, 4294901760
    %v262 = vsub.f32 %v18, %v261
    %263 = vmatpush1.msra.mxu0 %v262
    %264 = vmatprep.subr.mxu0 0.0
    %v265 = vand.u32 %v19, 4294901760
    %v266 = vsub.f32 %v19, %v265
    %267 = vmatpush1.msra.mxu0 %v266
    %268 = vmatprep.subr.mxu0 0.0
    %v269 = vand.u32 %v20, 4294901760
    %v270 = vsub.f32 %v20, %v269
    %271 = vmatpush1.msra.mxu0 %v270
    %272 = vmatprep.subr.mxu0 0.0
    %273 = vmatpush1.msra.mxu0 0.0
    %274 = vmatprep.subr.mxu0 0.0
    %275 = vmatpush1.msra.mxu0 0.0
    %276 = vmatprep.subr.mxu0 0.0
    %277 = vmatpush1.msra.mxu0 0.0
    %278 = vmatprep.subr.mxu0 0.0
    %279 = vmatpush1.msra.mxu0 0.0
    %280 = vmatprep.subr.mxu0 0.0
    %281 = vmatpush1.msra.mxu0 0.0
    %282 = vmatprep.subr.mxu0 0.0
    %283 = vmatpush1.msra.mxu0 0.0
    %284 = vmatprep.subr.mxu0 0.0
    %285 = vmatpush1.msra.mxu0 0.0
    %286 = vmatprep.subr.mxu0 0.0
    %287 = vmatpush1.msra.mxu0 0.0
    %288 = vmatprep.subr.mxu0 0.0
    %289 = vmatpush1.msra.mxu0 0.0
    %290 = vmatprep.subr.mxu0 0.0
    %291 = vmatpush1.msra.mxu0 0.0
    %292 = vmatprep.subr.mxu0 0.0
    %293 = vmatpush1.msra.mxu0 0.0
    %294 = vmatprep.subr.mxu0 0.0
    %295 = vmatpush1.msra.mxu0 0.0
    %296 = vmatprep.subr.mxu0 0.0
    %297 = vmatpush1.msra.mxu0 0.0
    %298 = vmatprep.subr.mxu0 0.0
    %299 = vmatpush1.msra.mxu0 0.0
    %300 = vmatprep.subr.mxu0 0.0
    %301 = vmatpush1.msra.mxu0 0.0
    %302 = vmatprep.subr.mxu0 0.0
    %303 = vmatpush1.msra.mxu0 0.0
    %304 = vmatprep.subr.mxu0 0.0
    %305 = vmatpush1.msra.mxu0 0.0
    %306 = vmatprep.subr.mxu0 0.0
    %307 = vmatpush1.msra.mxu0 0.0
    %308 = vmatprep.subr.mxu0 0.0
    %309 = vmatpush1.msra.mxu0 0.0
    %310 = vmatprep.subr.mxu0 0.0
    %311 = vmatpush1.msra.mxu0 0.0
    %312 = vmatprep.subr.mxu0 0.0
    %313 = vmatpush1.msra.mxu0 0.0
    %314 = vmatprep.subr.mxu0 0.0
    %315 = vmatpush1.msra.mxu0 0.0
    %316 = vmatprep.subr.mxu0 0.0
    %317 = vmatpush1.msra.mxu0 0.0
    %318 = vmatprep.subr.mxu0 0.0
    %319 = vmatpush1.msra.mxu0 0.0
    %320 = vmatprep.subr.mxu0 0.0
    %321 = vmatpush1.msra.mxu0 0.0
    %322 = vmatprep.subr.mxu0 0.0
    %323 = vmatpush1.msra.mxu0 0.0
    %324 = vmatprep.subr.mxu0 0.0
    %325 = vmatpush1.msra.mxu0 0.0
    %326 = vmatprep.subr.mxu0 0.0
    %327 = vmatpush1.msra.mxu0 0.0
    %328 = vmatprep.mubr.f32.mxu0 0.0
    %v329 = vand.u32 %v65, 4294901760
    %v330 = vsub.f32 %v65, %v329
    %331 = vmatmul.mubr.f32.gmra.mrb[0].mxu0 %v330
    %v332 = vpop.f32.mrb[0].mxu0
    %v333 = vadd.f32 %v247, %v332
    %v334 = vpop.f32.mrb[0].mxu0
    %335 = vmatprep.mubr.f32.mxu0 0.0
    %v336 = vand.u32 %v68, 4294901760
    %v337 = vsub.f32 %v68, %v336
    %338 = vmatmul.mubr.f32.gmra.mrb[0].mxu0 %v337
    %v339 = vpop.f32.mrb[0].mxu0
    %v340 = vadd.f32 %v253, %v339
    %v341 = vpop.f32.mrb[0].mxu0
    %342 = vdwg.mxu0
    %343 = vmatprep.subr.mxu0 0.0
    %v344 = vand.u32 %v17, 4294901760
    %345 = vmatpush1.msra.mxu0 %v344
    %346 = vmatprep.subr.mxu0 0.0
    %v347 = vand.u32 %v18, 4294901760
    %348 = vmatpush1.msra.mxu0 %v347
    %349 = vmatprep.subr.mxu0 0.0
    %v350 = vand.u32 %v19, 4294901760
    %351 = vmatpush1.msra.mxu0 %v350
    %352 = vmatprep.subr.mxu0 0.0
    %v353 = vand.u32 %v20, 4294901760
    %354 = vmatpush1.msra.mxu0 %v353
    %355 = vmatprep.subr.mxu0 0.0
    %356 = vmatpush1.msra.mxu0 0.0
    %357 = vmatprep.subr.mxu0 0.0
    %358 = vmatpush1.msra.mxu0 0.0
    %359 = vmatprep.subr.mxu0 0.0
    %360 = vmatpush1.msra.mxu0 0.0
    %361 = vmatprep.subr.mxu0 0.0
    %362 = vmatpush1.msra.mxu0 0.0
    %363 = vmatprep.subr.mxu0 0.0
    %364 = vmatpush1.msra.mxu0 0.0
    %365 = vmatprep.subr.mxu0 0.0
    %366 = vmatpush1.msra.mxu0 0.0
    %367 = vmatprep.subr.mxu0 0.0
    %368 = vmatpush1.msra.mxu0 0.0
    %369 = vmatprep.subr.mxu0 0.0
    %370 = vmatpush1.msra.mxu0 0.0
    %371 = vmatprep.subr.mxu0 0.0
    %372 = vmatpush1.msra.mxu0 0.0
    %373 = vmatprep.subr.mxu0 0.0
    %374 = vmatpush1.msra.mxu0 0.0
    %375 = vmatprep.subr.mxu0 0.0
    %376 = vmatpush1.msra.mxu0 0.0
    %377 = vmatprep.subr.mxu0 0.0
    %378 = vmatpush1.msra.mxu0 0.0
    %379 = vmatprep.subr.mxu0 0.0
    %380 = vmatpush1.msra.mxu0 0.0
    %381 = vmatprep.subr.mxu0 0.0
    %382 = vmatpush1.msra.mxu0 0.0
    %383 = vmatprep.subr.mxu0 0.0
    %384 = vmatpush1.msra.mxu0 0.0
    %385 = vmatprep.subr.mxu0 0.0
    %386 = vmatpush1.msra.mxu0 0.0
    %387 = vmatprep.subr.mxu0 0.0
    %388 = vmatpush1.msra.mxu0 0.0
    %389 = vmatprep.subr.mxu0 0.0
    %390 = vmatpush1.msra.mxu0 0.0
    %391 = vmatprep.subr.mxu0 0.0
    %392 = vmatpush1.msra.mxu0 0.0
    %393 = vmatprep.subr.mxu0 0.0
    %394 = vmatpush1.msra.mxu0 0.0
    %395 = vmatprep.subr.mxu0 0.0
    %396 = vmatpush1.msra.mxu0 0.0
    %397 = vmatprep.subr.mxu0 0.0
    %398 = vmatpush1.msra.mxu0 0.0
    %399 = vmatprep.subr.mxu0 0.0
    %400 = vmatpush1.msra.mxu0 0.0
    %401 = vmatprep.subr.mxu0 0.0
    %402 = vmatpush1.msra.mxu0 0.0
    %403 = vmatprep.subr.mxu0 0.0
    %404 = vmatpush1.msra.mxu0 0.0
    %405 = vmatprep.subr.mxu0 0.0
    %406 = vmatpush1.msra.mxu0 0.0
    %407 = vmatprep.subr.mxu0 0.0
    %408 = vmatpush1.msra.mxu0 0.0
    %409 = vmatprep.subr.mxu0 0.0
    %410 = vmatpush1.msra.mxu0 0.0
    %411 = vmatprep.mubr.f32.mxu0 0.0
    %v412 = vand.u32 %v65, 4294901760
    %v413 = vsub.f32 %v65, %v412
    %v414 = vand.u32 %v413, 4294901760
    %415 = vmatmul.mubr.f32.gmra.mrb[0].mxu0 %v414
    %v416 = vpop.f32.mrb[0].mxu0
    %v417 = vadd.f32 %v333, %v416
    %v418 = vpop.f32.mrb[0].mxu0
    %419 = vmatprep.mubr.f32.mxu0 0.0
    %v420 = vand.u32 %v68, 4294901760
    %v421 = vsub.f32 %v68, %v420
    %v422 = vand.u32 %v421, 4294901760
    %423 = vmatmul.mubr.f32.gmra.mrb[0].mxu0 %v422
    %v424 = vpop.f32.mrb[0].mxu0
    %v425 = vadd.f32 %v340, %v424
    %v426 = vpop.f32.mrb[0].mxu0
    %427 = vdwg.mxu0
    %428 = vmatprep.subr.mxu0 0.0
    %v429 = vand.u32 %v17, 4294901760
    %v430 = vsub.f32 %v17, %v429
    %v431 = vand.u32 %v430, 4294901760
    %432 = vmatpush1.msra.mxu0 %v431
    %433 = vmatprep.subr.mxu0 0.0
    %v434 = vand.u32 %v18, 4294901760
    %v435 = vsub.f32 %v18, %v434
    %v436 = vand.u32 %v435, 4294901760
    %437 = vmatpush1.msra.mxu0 %v436
    %438 = vmatprep.subr.mxu0 0.0
    %v439 = vand.u32 %v19, 4294901760
    %v440 = vsub.f32 %v19, %v439
    %v441 = vand.u32 %v440, 4294901760
    %442 = vmatpush1.msra.mxu0 %v441
    %443 = vmatprep.subr.mxu0 0.0
    %v444 = vand.u32 %v20, 4294901760
    %v445 = vsub.f32 %v20, %v444
    %v446 = vand.u32 %v445, 4294901760
    %447 = vmatpush1.msra.mxu0 %v446
    %448 = vmatprep.subr.mxu0 0.0
    %449 = vmatpush1.msra.mxu0 0.0
    %450 = vmatprep.subr.mxu0 0.0
    %451 = vmatpush1.msra.mxu0 0.0
    %452 = vmatprep.subr.mxu0 0.0
    %453 = vmatpush1.msra.mxu0 0.0
    %454 = vmatprep.subr.mxu0 0.0
    %455 = vmatpush1.msra.mxu0 0.0
    %456 = vmatprep.subr.mxu0 0.0
    %457 = vmatpush1.msra.mxu0 0.0
    %458 = vmatprep.subr.mxu0 0.0
    %459 = vmatpush1.msra.mxu0 0.0
    %460 = vmatprep.subr.mxu0 0.0
    %461 = vmatpush1.msra.mxu0 0.0
    %462 = vmatprep.subr.mxu0 0.0
    %463 = vmatpush1.msra.mxu0 0.0
    %464 = vmatprep.subr.mxu0 0.0
    %465 = vmatpush1.msra.mxu0 0.0
    %466 = vmatprep.subr.mxu0 0.0
    %467 = vmatpush1.msra.mxu0 0.0
    %468 = vmatprep.subr.mxu0 0.0
    %469 = vmatpush1.msra.mxu0 0.0
    %470 = vmatprep.subr.mxu0 0.0
    %471 = vmatpush1.msra.mxu0 0.0
    %472 = vmatprep.subr.mxu0 0.0
    %473 = vmatpush1.msra.mxu0 0.0
    %474 = vmatprep.subr.mxu0 0.0
    %475 = vmatpush1.msra.mxu0 0.0
    %476 = vmatprep.subr.mxu0 0.0
    %477 = vmatpush1.msra.mxu0 0.0
    %478 = vmatprep.subr.mxu0 0.0
    %479 = vmatpush1.msra.mxu0 0.0
    %480 = vmatprep.subr.mxu0 0.0
    %481 = vmatpush1.msra.mxu0 0.0
    %482 = vmatprep.subr.mxu0 0.0
    %483 = vmatpush1.msra.mxu0 0.0
    %484 = vmatprep.subr.mxu0 0.0
    %485 = vmatpush1.msra.mxu0 0.0
    %486 = vmatprep.subr.mxu0 0.0
    %487 = vmatpush1.msra.mxu0 0.0
    %488 = vmatprep.subr.mxu0 0.0
    %489 = vmatpush1.msra.mxu0 0.0
    %490 = vmatprep.subr.mxu0 0.0
    %491 = vmatpush1.msra.mxu0 0.0
    %492 = vmatprep.subr.mxu0 0.0
    %493 = vmatpush1.msra.mxu0 0.0
    %494 = vmatprep.subr.mxu0 0.0
    %495 = vmatpush1.msra.mxu0 0.0
    %496 = vmatprep.subr.mxu0 0.0
    %497 = vmatpush1.msra.mxu0 0.0
    %498 = vmatprep.subr.mxu0 0.0
    %499 = vmatpush1.msra.mxu0 0.0
    %500 = vmatprep.subr.mxu0 0.0
    %501 = vmatpush1.msra.mxu0 0.0
    %502 = vmatprep.subr.mxu0 0.0
    %503 = vmatpush1.msra.mxu0 0.0
    %504 = vmatprep.mubr.f32.mxu0 0.0
    %v505 = vand.u32 %v65, 4294901760
    %506 = vmatmul.mubr.f32.gmra.mrb[0].mxu0 %v505
    %v507 = vpop.f32.mrb[0].mxu0
    %v508 = vadd.f32 %v417, %v507
    %v509 = vpop.f32.mrb[0].mxu0
    %510 = vmatprep.mubr.f32.mxu0 0.0
    %v511 = vand.u32 %v68, 4294901760
    %512 = vmatmul.mubr.f32.gmra.mrb[0].mxu0 %v511
    %v513 = vpop.f32.mrb[0].mxu0
    %v514 = vadd.f32 %v425, %v513
    %v515 = vpop.f32.mrb[0].mxu0
    %516 = vdwg.mxu0
    %517 = vmatprep.subr.mxu0 0.0
    %v518 = vand.u32 %v17, 4294901760
    %519 = vmatpush1.msra.mxu0 %v518
    %520 = vmatprep.subr.mxu0 0.0
    %v521 = vand.u32 %v18, 4294901760
    %522 = vmatpush1.msra.mxu0 %v521
    %523 = vmatprep.subr.mxu0 0.0
    %v524 = vand.u32 %v19, 4294901760
    %525 = vmatpush1.msra.mxu0 %v524
    %526 = vmatprep.subr.mxu0 0.0
    %v527 = vand.u32 %v20, 4294901760
    %528 = vmatpush1.msra.mxu0 %v527
    %529 = vmatprep.subr.mxu0 0.0
    %530 = vmatpush1.msra.mxu0 0.0
    %531 = vmatprep.subr.mxu0 0.0
    %532 = vmatpush1.msra.mxu0 0.0
    %533 = vmatprep.subr.mxu0 0.0
    %534 = vmatpush1.msra.mxu0 0.0
    %535 = vmatprep.subr.mxu0 0.0
    %536 = vmatpush1.msra.mxu0 0.0
    %537 = vmatprep.subr.mxu0 0.0
    %538 = vmatpush1.msra.mxu0 0.0
    %539 = vmatprep.subr.mxu0 0.0
    %540 = vmatpush1.msra.mxu0 0.0
    %541 = vmatprep.subr.mxu0 0.0
    %542 = vmatpush1.msra.mxu0 0.0
    %543 = vmatprep.subr.mxu0 0.0
    %544 = vmatpush1.msra.mxu0 0.0
    %545 = vmatprep.subr.mxu0 0.0
    %546 = vmatpush1.msra.mxu0 0.0
    %547 = vmatprep.subr.mxu0 0.0
    %548 = vmatpush1.msra.mxu0 0.0
    %549 = vmatprep.subr.mxu0 0.0
    %550 = vmatpush1.msra.mxu0 0.0
    %551 = vmatprep.subr.mxu0 0.0
    %552 = vmatpush1.msra.mxu0 0.0
    %553 = vmatprep.subr.mxu0 0.0
    %554 = vmatpush1.msra.mxu0 0.0
    %555 = vmatprep.subr.mxu0 0.0
    %556 = vmatpush1.msra.mxu0 0.0
    %557 = vmatprep.subr.mxu0 0.0
    %558 = vmatpush1.msra.mxu0 0.0
    %559 = vmatprep.subr.mxu0 0.0
    %560 = vmatpush1.msra.mxu0 0.0
    %561 = vmatprep.subr.mxu0 0.0
    %562 = vmatpush1.msra.mxu0 0.0
    %563 = vmatprep.subr.mxu0 0.0
    %564 = vmatpush1.msra.mxu0 0.0
    %565 = vmatprep.subr.mxu0 0.0
    %566 = vmatpush1.msra.mxu0 0.0
    %567 = vmatprep.subr.mxu0 0.0
    %568 = vmatpush1.msra.mxu0 0.0
    %569 = vmatprep.subr.mxu0 0.0
    %570 = vmatpush1.msra.mxu0 0.0
    %571 = vmatprep.subr.mxu0 0.0
    %572 = vmatpush1.msra.mxu0 0.0
    %573 = vmatprep.subr.mxu0 0.0
    %574 = vmatpush1.msra.mxu0 0.0
    %575 = vmatprep.subr.mxu0 0.0
    %576 = vmatpush1.msra.mxu0 0.0
    %577 = vmatprep.subr.mxu0 0.0
    %578 = vmatpush1.msra.mxu0 0.0
    %579 = vmatprep.subr.mxu0 0.0
    %580 = vmatpush1.msra.mxu0 0.0
    %581 = vmatprep.subr.mxu0 0.0
    %582 = vmatpush1.msra.mxu0 0.0
    %583 = vmatprep.subr.mxu0 0.0
    %584 = vmatpush1.msra.mxu0 0.0
    %585 = vmatprep.mubr.f32.mxu0 0.0
    %v586 = vand.u32 %v65, 4294901760
    %587 = vmatmul.mubr.f32.gmra.mrb[0].mxu0 %v586
    %v588 = vpop.f32.mrb[0].mxu0
    %v589 = vadd.f32 %v508, %v588
    %v590 = vpop.f32.mrb[0].mxu0
    %591 = vmatprep.mubr.f32.mxu0 0.0
    %v592 = vand.u32 %v68, 4294901760
    %593 = vmatmul.mubr.f32.gmra.mrb[0].mxu0 %v592
    %v594 = vpop.f32.mrb[0].mxu0
    %v595 = vadd.f32 %v514, %v594
    %v596 = vpop.f32.mrb[0].mxu0
    %597 = vdwg.mxu0
    %600 = vrot.lane.b32.xlu0 %v589, 96
    %v601 = vpop.permute.xlu0 %600
    %602 = vrot.lane.b32.xlu0 %v595, 96
    %v603 = vpop.permute.xlu0 %602
    %vm604 = vcmask 64512
    %v605 = vsel %vm604, %v589, 0
    %v607 = vsel %vm604, %v595, 0
    %v609 = vsel %vm604, %v601, 0
    %v611 = vsel %vm604, %v603, 0
    %613 = vmatprep.subr.mxu0 0.0
    %v614 = vand.u32 %v609, 4294901760
    %615 = vmatpush1.xpose.msra.mxu0 %v614
    %616 = vmatprep.subr.mxu0 0.0
    %v617 = vand.u32 %v611, 4294901760
    %618 = vmatpush1.xpose.msra.mxu0 %v617
    %619 = vmatprep.subr.mxu0 0.0
    %620 = vmatpush1.xpose.msra.mxu0 0.0
    %621 = vmatprep.subr.mxu0 0.0
    %622 = vmatpush1.xpose.msra.mxu0 0.0
    %623 = vmatprep.subr.mxu0 0.0
    %624 = vmatpush1.xpose.msra.mxu0 0.0
    %625 = vmatprep.subr.mxu0 0.0
    %626 = vmatpush1.xpose.msra.mxu0 0.0
    %627 = vmatprep.subr.mxu0 0.0
    %628 = vmatpush1.xpose.msra.mxu0 0.0
    %629 = vmatprep.subr.mxu0 0.0
    %630 = vmatpush1.xpose.msra.mxu0 0.0
    %631 = vmatprep.subr.mxu0 0.0
    %632 = vmatpush1.xpose.msra.mxu0 0.0
    %633 = vmatprep.subr.mxu0 0.0
    %634 = vmatpush1.xpose.msra.mxu0 0.0
    %635 = vmatprep.subr.mxu0 0.0
    %636 = vmatpush1.xpose.msra.mxu0 0.0
    %637 = vmatprep.subr.mxu0 0.0
    %638 = vmatpush1.xpose.msra.mxu0 0.0
    %639 = vmatprep.subr.mxu0 0.0
    %640 = vmatpush1.xpose.msra.mxu0 0.0
    %641 = vmatprep.subr.mxu0 0.0
    %642 = vmatpush1.xpose.msra.mxu0 0.0
    %643 = vmatprep.subr.mxu0 0.0
    %644 = vmatpush1.xpose.msra.mxu0 0.0
    %645 = vmatprep.subr.mxu0 0.0
    %646 = vmatpush1.xpose.msra.mxu0 0.0
    %647 = vmatprep.subr.mxu0 0.0
    %648 = vmatpush1.xpose.msra.mxu0 0.0
    %649 = vmatprep.subr.mxu0 0.0
    %650 = vmatpush1.xpose.msra.mxu0 0.0
    %651 = vmatprep.subr.mxu0 0.0
    %652 = vmatpush1.xpose.msra.mxu0 0.0
    %653 = vmatprep.subr.mxu0 0.0
    %654 = vmatpush1.xpose.msra.mxu0 0.0
    %655 = vmatprep.subr.mxu0 0.0
    %656 = vmatpush1.xpose.msra.mxu0 0.0
    %657 = vmatprep.subr.mxu0 0.0
    %658 = vmatpush1.xpose.msra.mxu0 0.0
    %659 = vmatprep.subr.mxu0 0.0
    %660 = vmatpush1.xpose.msra.mxu0 0.0
    %661 = vmatprep.subr.mxu0 0.0
    %662 = vmatpush1.xpose.msra.mxu0 0.0
    %663 = vmatprep.subr.mxu0 0.0
    %664 = vmatpush1.xpose.msra.mxu0 0.0
    %665 = vmatprep.subr.mxu0 0.0
    %666 = vmatpush1.xpose.msra.mxu0 0.0
    %667 = vmatprep.subr.mxu0 0.0
    %668 = vmatpush1.xpose.msra.mxu0 0.0
    %669 = vmatprep.subr.mxu0 0.0
    %670 = vmatpush1.xpose.msra.mxu0 0.0
    %671 = vmatprep.subr.mxu0 0.0
    %672 = vmatpush1.xpose.msra.mxu0 0.0
    %673 = vmatprep.subr.mxu0 0.0
    %674 = vmatpush1.xpose.msra.mxu0 0.0
    %675 = vmatprep.subr.mxu0 0.0
    %676 = vmatpush1.xpose.msra.mxu0 0.0
    %677 = vmatprep.subr.mxu0 0.0
    %678 = vmatpush1.xpose.msra.mxu0 0.0
    %679 = vmatprep.mubr.f32.mxu0 0.0
    %v680 = vand.u32 %v605, 4294901760
    %v681 = vsub.f32 %v605, %v680
    %v682 = vand.u32 %v681, 4294901760
    %v683 = vsub.f32 %v681, %v682
    %v684 = vand.u32 %v683, 4294901760
    %685 = vmatmul.mubr.f32.gmra.mrb[0].mxu0 %v684
    %v686 = vpop.f32.mrb[0].mxu0
    %v687 = vadd.f32 0.0, %v686
    %v688 = vpop.f32.mrb[0].mxu0
    %689 = vmatprep.mubr.f32.mxu0 0.0
    %v690 = vand.u32 %v607, 4294901760
    %v691 = vsub.f32 %v607, %v690
    %v692 = vand.u32 %v691, 4294901760
    %v693 = vsub.f32 %v691, %v692
    %v694 = vand.u32 %v693, 4294901760
    %695 = vmatmul.mubr.f32.gmra.mrb[0].mxu0 %v694
    %v696 = vpop.f32.mrb[0].mxu0
    %v697 = vadd.f32 0.0, %v696
    %v698 = vpop.f32.mrb[0].mxu0
    %699 = vdwg.mxu0
    %700 = vmatprep.subr.mxu0 0.0
    %v701 = vand.u32 %v609, 4294901760
    %v702 = vsub.f32 %v609, %v701
    %v703 = vand.u32 %v702, 4294901760
    %v704 = vsub.f32 %v702, %v703
    %v705 = vand.u32 %v704, 4294901760
    %706 = vmatpush1.xpose.msra.mxu0 %v705
    %707 = vmatprep.subr.mxu0 0.0
    %v708 = vand.u32 %v611, 4294901760
    %v709 = vsub.f32 %v611, %v708
    %v710 = vand.u32 %v709, 4294901760
    %v711 = vsub.f32 %v709, %v710
    %v712 = vand.u32 %v711, 4294901760
    %713 = vmatpush1.xpose.msra.mxu0 %v712
    %714 = vmatprep.subr.mxu0 0.0
    %715 = vmatpush1.xpose.msra.mxu0 0.0
    %716 = vmatprep.subr.mxu0 0.0
    %717 = vmatpush1.xpose.msra.mxu0 0.0
    %718 = vmatprep.subr.mxu0 0.0
    %719 = vmatpush1.xpose.msra.mxu0 0.0
    %720 = vmatprep.subr.mxu0 0.0
    %721 = vmatpush1.xpose.msra.mxu0 0.0
    %722 = vmatprep.subr.mxu0 0.0
    %723 = vmatpush1.xpose.msra.mxu0 0.0
    %724 = vmatprep.subr.mxu0 0.0
    %725 = vmatpush1.xpose.msra.mxu0 0.0
    %726 = vmatprep.subr.mxu0 0.0
    %727 = vmatpush1.xpose.msra.mxu0 0.0
    %728 = vmatprep.subr.mxu0 0.0
    %729 = vmatpush1.xpose.msra.mxu0 0.0
    %730 = vmatprep.subr.mxu0 0.0
    %731 = vmatpush1.xpose.msra.mxu0 0.0
    %732 = vmatprep.subr.mxu0 0.0
    %733 = vmatpush1.xpose.msra.mxu0 0.0
    %734 = vmatprep.subr.mxu0 0.0
    %735 = vmatpush1.xpose.msra.mxu0 0.0
    %736 = vmatprep.subr.mxu0 0.0
    %737 = vmatpush1.xpose.msra.mxu0 0.0
    %738 = vmatprep.subr.mxu0 0.0
    %739 = vmatpush1.xpose.msra.mxu0 0.0
    %740 = vmatprep.subr.mxu0 0.0
    %741 = vmatpush1.xpose.msra.mxu0 0.0
    %742 = vmatprep.subr.mxu0 0.0
    %743 = vmatpush1.xpose.msra.mxu0 0.0
    %744 = vmatprep.subr.mxu0 0.0
    %745 = vmatpush1.xpose.msra.mxu0 0.0
    %746 = vmatprep.subr.mxu0 0.0
    %747 = vmatpush1.xpose.msra.mxu0 0.0
    %748 = vmatprep.subr.mxu0 0.0
    %749 = vmatpush1.xpose.msra.mxu0 0.0
    %750 = vmatprep.subr.mxu0 0.0
    %751 = vmatpush1.xpose.msra.mxu0 0.0
    %752 = vmatprep.subr.mxu0 0.0
    %753 = vmatpush1.xpose.msra.mxu0 0.0
    %754 = vmatprep.subr.mxu0 0.0
    %755 = vmatpush1.xpose.msra.mxu0 0.0
    %756 = vmatprep.subr.mxu0 0.0
    %757 = vmatpush1.xpose.msra.mxu0 0.0
    %758 = vmatprep.subr.mxu0 0.0
    %759 = vmatpush1.xpose.msra.mxu0 0.0
    %760 = vmatprep.subr.mxu0 0.0
    %761 = vmatpush1.xpose.msra.mxu0 0.0
    %762 = vmatprep.subr.mxu0 0.0
    %763 = vmatpush1.xpose.msra.mxu0 0.0
    %764 = vmatprep.subr.mxu0 0.0
    %765 = vmatpush1.xpose.msra.mxu0 0.0
    %766 = vmatprep.subr.mxu0 0.0
    %767 = vmatpush1.xpose.msra.mxu0 0.0
    %768 = vmatprep.subr.mxu0 0.0
    %769 = vmatpush1.xpose.msra.mxu0 0.0
    %770 = vmatprep.subr.mxu0 0.0
    %771 = vmatpush1.xpose.msra.mxu0 0.0
    %772 = vmatprep.subr.mxu0 0.0
    %773 = vmatpush1.xpose.msra.mxu0 0.0
    %774 = vmatprep.mubr.f32.mxu0 0.0
    %v775 = vand.u32 %v605, 4294901760
    %776 = vmatmul.mubr.f32.gmra.mrb[0].mxu0 %v775
    %v777 = vpop.f32.mrb[0].mxu0
    %v778 = vadd.f32 %v687, %v777
    %v779 = vpop.f32.mrb[0].mxu0
    %780 = vmatprep.mubr.f32.mxu0 0.0
    %v781 = vand.u32 %v607, 4294901760
    %782 = vmatmul.mubr.f32.gmra.mrb[0].mxu0 %v781
    %v783 = vpop.f32.mrb[0].mxu0
    %v784 = vadd.f32 %v697, %v783
    %v785 = vpop.f32.mrb[0].mxu0
    %786 = vdwg.mxu0
    %787 = vmatprep.subr.mxu0 0.0
    %v788 = vand.u32 %v609, 4294901760
    %v789 = vsub.f32 %v609, %v788
    %790 = vmatpush1.xpose.msra.mxu0 %v789
    %791 = vmatprep.subr.mxu0 0.0
    %v792 = vand.u32 %v611, 4294901760
    %v793 = vsub.f32 %v611, %v792
    %794 = vmatpush1.xpose.msra.mxu0 %v793
    %795 = vmatprep.subr.mxu0 0.0
    %796 = vmatpush1.xpose.msra.mxu0 0.0
    %797 = vmatprep.subr.mxu0 0.0
    %798 = vmatpush1.xpose.msra.mxu0 0.0
    %799 = vmatprep.subr.mxu0 0.0
    %800 = vmatpush1.xpose.msra.mxu0 0.0
    %801 = vmatprep.subr.mxu0 0.0
    %802 = vmatpush1.xpose.msra.mxu0 0.0
    %803 = vmatprep.subr.mxu0 0.0
    %804 = vmatpush1.xpose.msra.mxu0 0.0
    %805 = vmatprep.subr.mxu0 0.0
    %806 = vmatpush1.xpose.msra.mxu0 0.0
    %807 = vmatprep.subr.mxu0 0.0
    %808 = vmatpush1.xpose.msra.mxu0 0.0
    %809 = vmatprep.subr.mxu0 0.0
    %810 = vmatpush1.xpose.msra.mxu0 0.0
    %811 = vmatprep.subr.mxu0 0.0
    %812 = vmatpush1.xpose.msra.mxu0 0.0
    %813 = vmatprep.subr.mxu0 0.0
    %814 = vmatpush1.xpose.msra.mxu0 0.0
    %815 = vmatprep.subr.mxu0 0.0
    %816 = vmatpush1.xpose.msra.mxu0 0.0
    %817 = vmatprep.subr.mxu0 0.0
    %818 = vmatpush1.xpose.msra.mxu0 0.0
    %819 = vmatprep.subr.mxu0 0.0
    %820 = vmatpush1.xpose.msra.mxu0 0.0
    %821 = vmatprep.subr.mxu0 0.0
    %822 = vmatpush1.xpose.msra.mxu0 0.0
    %823 = vmatprep.subr.mxu0 0.0
    %824 = vmatpush1.xpose.msra.mxu0 0.0
    %825 = vmatprep.subr.mxu0 0.0
    %826 = vmatpush1.xpose.msra.mxu0 0.0
    %827 = vmatprep.subr.mxu0 0.0
    %828 = vmatpush1.xpose.msra.mxu0 0.0
    %829 = vmatprep.subr.mxu0 0.0
    %830 = vmatpush1.xpose.msra.mxu0 0.0
    %831 = vmatprep.subr.mxu0 0.0
    %832 = vmatpush1.xpose.msra.mxu0 0.0
    %833 = vmatprep.subr.mxu0 0.0
    %834 = vmatpush1.xpose.msra.mxu0 0.0
    %835 = vmatprep.subr.mxu0 0.0
    %836 = vmatpush1.xpose.msra.mxu0 0.0
    %837 = vmatprep.subr.mxu0 0.0
    %838 = vmatpush1.xpose.msra.mxu0 0.0
    %839 = vmatprep.subr.mxu0 0.0
    %840 = vmatpush1.xpose.msra.mxu0 0.0
    %841 = vmatprep.subr.mxu0 0.0
    %842 = vmatpush1.xpose.msra.mxu0 0.0
    %843 = vmatprep.subr.mxu0 0.0
    %844 = vmatpush1.xpose.msra.mxu0 0.0
    %845 = vmatprep.subr.mxu0 0.0
    %846 = vmatpush1.xpose.msra.mxu0 0.0
    %847 = vmatprep.subr.mxu0 0.0
    %848 = vmatpush1.xpose.msra.mxu0 0.0
    %849 = vmatprep.subr.mxu0 0.0
    %850 = vmatpush1.xpose.msra.mxu0 0.0
    %851 = vmatprep.subr.mxu0 0.0
    %852 = vmatpush1.xpose.msra.mxu0 0.0
    %853 = vmatprep.subr.mxu0 0.0
    %854 = vmatpush1.xpose.msra.mxu0 0.0
    %855 = vmatprep.mubr.f32.mxu0 0.0
    %v856 = vand.u32 %v605, 4294901760
    %v857 = vsub.f32 %v605, %v856
    %858 = vmatmul.mubr.f32.gmra.mrb[0].mxu0 %v857
    %v859 = vpop.f32.mrb[0].mxu0
    %v860 = vadd.f32 %v778, %v859
    %v861 = vpop.f32.mrb[0].mxu0
    %862 = vmatprep.mubr.f32.mxu0 0.0
    %v863 = vand.u32 %v607, 4294901760
    %v864 = vsub.f32 %v607, %v863
    %865 = vmatmul.mubr.f32.gmra.mrb[0].mxu0 %v864
    %v866 = vpop.f32.mrb[0].mxu0
    %v867 = vadd.f32 %v784, %v866
    %v868 = vpop.f32.mrb[0].mxu0
    %869 = vdwg.mxu0
    %870 = vmatprep.subr.mxu0 0.0
    %v871 = vand.u32 %v609, 4294901760
    %872 = vmatpush1.xpose.msra.mxu0 %v871
    %873 = vmatprep.subr.mxu0 0.0
    %v874 = vand.u32 %v611, 4294901760
    %875 = vmatpush1.xpose.msra.mxu0 %v874
    %876 = vmatprep.subr.mxu0 0.0
    %877 = vmatpush1.xpose.msra.mxu0 0.0
    %878 = vmatprep.subr.mxu0 0.0
    %879 = vmatpush1.xpose.msra.mxu0 0.0
    %880 = vmatprep.subr.mxu0 0.0
    %881 = vmatpush1.xpose.msra.mxu0 0.0
    %882 = vmatprep.subr.mxu0 0.0
    %883 = vmatpush1.xpose.msra.mxu0 0.0
    %884 = vmatprep.subr.mxu0 0.0
    %885 = vmatpush1.xpose.msra.mxu0 0.0
    %886 = vmatprep.subr.mxu0 0.0
    %887 = vmatpush1.xpose.msra.mxu0 0.0
    %888 = vmatprep.subr.mxu0 0.0
    %889 = vmatpush1.xpose.msra.mxu0 0.0
    %890 = vmatprep.subr.mxu0 0.0
    %891 = vmatpush1.xpose.msra.mxu0 0.0
    %892 = vmatprep.subr.mxu0 0.0
    %893 = vmatpush1.xpose.msra.mxu0 0.0
    %894 = vmatprep.subr.mxu0 0.0
    %895 = vmatpush1.xpose.msra.mxu0 0.0
    %896 = vmatprep.subr.mxu0 0.0
    %897 = vmatpush1.xpose.msra.mxu0 0.0
    %898 = vmatprep.subr.mxu0 0.0
    %899 = vmatpush1.xpose.msra.mxu0 0.0
    %900 = vmatprep.subr.mxu0 0.0
    %901 = vmatpush1.xpose.msra.mxu0 0.0
    %902 = vmatprep.subr.mxu0 0.0
    %903 = vmatpush1.xpose.msra.mxu0 0.0
    %904 = vmatprep.subr.mxu0 0.0
    %905 = vmatpush1.xpose.msra.mxu0 0.0
    %906 = vmatprep.subr.mxu0 0.0
    %907 = vmatpush1.xpose.msra.mxu0 0.0
    %908 = vmatprep.subr.mxu0 0.0
    %909 = vmatpush1.xpose.msra.mxu0 0.0
    %910 = vmatprep.subr.mxu0 0.0
    %911 = vmatpush1.xpose.msra.mxu0 0.0
    %912 = vmatprep.subr.mxu0 0.0
    %913 = vmatpush1.xpose.msra.mxu0 0.0
    %914 = vmatprep.subr.mxu0 0.0
    %915 = vmatpush1.xpose.msra.mxu0 0.0
    %916 = vmatprep.subr.mxu0 0.0
    %917 = vmatpush1.xpose.msra.mxu0 0.0
    %918 = vmatprep.subr.mxu0 0.0
    %919 = vmatpush1.xpose.msra.mxu0 0.0
    %920 = vmatprep.subr.mxu0 0.0
    %921 = vmatpush1.xpose.msra.mxu0 0.0
    %922 = vmatprep.subr.mxu0 0.0
    %923 = vmatpush1.xpose.msra.mxu0 0.0
    %924 = vmatprep.subr.mxu0 0.0
    %925 = vmatpush1.xpose.msra.mxu0 0.0
    %926 = vmatprep.subr.mxu0 0.0
    %927 = vmatpush1.xpose.msra.mxu0 0.0
    %928 = vmatprep.subr.mxu0 0.0
    %929 = vmatpush1.xpose.msra.mxu0 0.0
    %930 = vmatprep.subr.mxu0 0.0
    %931 = vmatpush1.xpose.msra.mxu0 0.0
    %932 = vmatprep.subr.mxu0 0.0
    %933 = vmatpush1.xpose.msra.mxu0 0.0
    %934 = vmatprep.subr.mxu0 0.0
    %935 = vmatpush1.xpose.msra.mxu0 0.0
    %936 = vmatprep.mubr.f32.mxu0 0.0
    %v937 = vand.u32 %v605, 4294901760
    %v938 = vsub.f32 %v605, %v937
    %v939 = vand.u32 %v938, 4294901760
    %940 = vmatmul.mubr.f32.gmra.mrb[0].mxu0 %v939
    %v941 = vpop.f32.mrb[0].mxu0
    %v942 = vadd.f32 %v860, %v941
    %v943 = vpop.f32.mrb[0].mxu0
    %944 = vmatprep.mubr.f32.mxu0 0.0
    %v945 = vand.u32 %v607, 4294901760
    %v946 = vsub.f32 %v607, %v945
    %v947 = vand.u32 %v946, 4294901760
    %948 = vmatmul.mubr.f32.gmra.mrb[0].mxu0 %v947
    %v949 = vpop.f32.mrb[0].mxu0
    %v950 = vadd.f32 %v867, %v949
    %v951 = vpop.f32.mrb[0].mxu0
    %952 = vdwg.mxu0
    %953 = vmatprep.subr.mxu0 0.0
    %v954 = vand.u32 %v609, 4294901760
    %v955 = vsub.f32 %v609, %v954
    %v956 = vand.u32 %v955, 4294901760
    %957 = vmatpush1.xpose.msra.mxu0 %v956
    %958 = vmatprep.subr.mxu0 0.0
    %v959 = vand.u32 %v611, 4294901760
    %v960 = vsub.f32 %v611, %v959
    %v961 = vand.u32 %v960, 4294901760
    %962 = vmatpush1.xpose.msra.mxu0 %v961
    %963 = vmatprep.subr.mxu0 0.0
    %964 = vmatpush1.xpose.msra.mxu0 0.0
    %965 = vmatprep.subr.mxu0 0.0
    %966 = vmatpush1.xpose.msra.mxu0 0.0
    %967 = vmatprep.subr.mxu0 0.0
    %968 = vmatpush1.xpose.msra.mxu0 0.0
    %969 = vmatprep.subr.mxu0 0.0
    %970 = vmatpush1.xpose.msra.mxu0 0.0
    %971 = vmatprep.subr.mxu0 0.0
    %972 = vmatpush1.xpose.msra.mxu0 0.0
    %973 = vmatprep.subr.mxu0 0.0
    %974 = vmatpush1.xpose.msra.mxu0 0.0
    %975 = vmatprep.subr.mxu0 0.0
    %976 = vmatpush1.xpose.msra.mxu0 0.0
    %977 = vmatprep.subr.mxu0 0.0
    %978 = vmatpush1.xpose.msra.mxu0 0.0
    %979 = vmatprep.subr.mxu0 0.0
    %980 = vmatpush1.xpose.msra.mxu0 0.0
    %981 = vmatprep.subr.mxu0 0.0
    %982 = vmatpush1.xpose.msra.mxu0 0.0
    %983 = vmatprep.subr.mxu0 0.0
    %984 = vmatpush1.xpose.msra.mxu0 0.0
    %985 = vmatprep.subr.mxu0 0.0
    %986 = vmatpush1.xpose.msra.mxu0 0.0
    %987 = vmatprep.subr.mxu0 0.0
    %988 = vmatpush1.xpose.msra.mxu0 0.0
    %989 = vmatprep.subr.mxu0 0.0
    %990 = vmatpush1.xpose.msra.mxu0 0.0
    %991 = vmatprep.subr.mxu0 0.0
    %992 = vmatpush1.xpose.msra.mxu0 0.0
    %993 = vmatprep.subr.mxu0 0.0
    %994 = vmatpush1.xpose.msra.mxu0 0.0
    %995 = vmatprep.subr.mxu0 0.0
    %996 = vmatpush1.xpose.msra.mxu0 0.0
    %997 = vmatprep.subr.mxu0 0.0
    %998 = vmatpush1.xpose.msra.mxu0 0.0
    %999 = vmatprep.subr.mxu0 0.0
    %1000 = vmatpush1.xpose.msra.mxu0 0.0
    %1001 = vmatprep.subr.mxu0 0.0
    %1002 = vmatpush1.xpose.msra.mxu0 0.0
    %1003 = vmatprep.subr.mxu0 0.0
    %1004 = vmatpush1.xpose.msra.mxu0 0.0
    %1005 = vmatprep.subr.mxu0 0.0
    %1006 = vmatpush1.xpose.msra.mxu0 0.0
    %1007 = vmatprep.subr.mxu0 0.0
    %1008 = vmatpush1.xpose.msra.mxu0 0.0
    %1009 = vmatprep.subr.mxu0 0.0
    %1010 = vmatpush1.xpose.msra.mxu0 0.0
    %1011 = vmatprep.subr.mxu0 0.0
    %1012 = vmatpush1.xpose.msra.mxu0 0.0
    %1013 = vmatprep.subr.mxu0 0.0
    %1014 = vmatpush1.xpose.msra.mxu0 0.0
    %1015 = vmatprep.subr.mxu0 0.0
    %1016 = vmatpush1.xpose.msra.mxu0 0.0
    %1017 = vmatprep.subr.mxu0 0.0
    %1018 = vmatpush1.xpose.msra.mxu0 0.0
    %1019 = vmatprep.subr.mxu0 0.0
    %1020 = vmatpush1.xpose.msra.mxu0 0.0
    %1021 = vmatprep.subr.mxu0 0.0
    %1022 = vmatpush1.xpose.msra.mxu0 0.0
    %1023 = vmatprep.mubr.f32.mxu0 0.0
    %v1024 = vand.u32 %v605, 4294901760
    %1025 = vmatmul.mubr.f32.gmra.mrb[0].mxu0 %v1024
    %v1026 = vpop.f32.mrb[0].mxu0
    %v1027 = vadd.f32 %v942, %v1026
    %v1028 = vpop.f32.mrb[0].mxu0
    %1029 = vmatprep.mubr.f32.mxu0 0.0
    %v1030 = vand.u32 %v607, 4294901760
    %1031 = vmatmul.mubr.f32.gmra.mrb[0].mxu0 %v1030
    %v1032 = vpop.f32.mrb[0].mxu0
    %v1033 = vadd.f32 %v950, %v1032
    %v1034 = vpop.f32.mrb[0].mxu0
    %1035 = vdwg.mxu0
    %1036 = vmatprep.subr.mxu0 0.0
    %v1037 = vand.u32 %v609, 4294901760
    %1038 = vmatpush1.xpose.msra.mxu0 %v1037
    %1039 = vmatprep.subr.mxu0 0.0
    %v1040 = vand.u32 %v611, 4294901760
    %1041 = vmatpush1.xpose.msra.mxu0 %v1040
    %1042 = vmatprep.subr.mxu0 0.0
    %1043 = vmatpush1.xpose.msra.mxu0 0.0
    %1044 = vmatprep.subr.mxu0 0.0
    %1045 = vmatpush1.xpose.msra.mxu0 0.0
    %1046 = vmatprep.subr.mxu0 0.0
    %1047 = vmatpush1.xpose.msra.mxu0 0.0
    %1048 = vmatprep.subr.mxu0 0.0
    %1049 = vmatpush1.xpose.msra.mxu0 0.0
    %1050 = vmatprep.subr.mxu0 0.0
    %1051 = vmatpush1.xpose.msra.mxu0 0.0
    %1052 = vmatprep.subr.mxu0 0.0
    %1053 = vmatpush1.xpose.msra.mxu0 0.0
    %1054 = vmatprep.subr.mxu0 0.0
    %1055 = vmatpush1.xpose.msra.mxu0 0.0
    %1056 = vmatprep.subr.mxu0 0.0
    %1057 = vmatpush1.xpose.msra.mxu0 0.0
    %1058 = vmatprep.subr.mxu0 0.0
    %1059 = vmatpush1.xpose.msra.mxu0 0.0
    %1060 = vmatprep.subr.mxu0 0.0
    %1061 = vmatpush1.xpose.msra.mxu0 0.0
    %1062 = vmatprep.subr.mxu0 0.0
    %1063 = vmatpush1.xpose.msra.mxu0 0.0
    %1064 = vmatprep.subr.mxu0 0.0
    %1065 = vmatpush1.xpose.msra.mxu0 0.0
    %1066 = vmatprep.subr.mxu0 0.0
    %1067 = vmatpush1.xpose.msra.mxu0 0.0
    %1068 = vmatprep.subr.mxu0 0.0
    %1069 = vmatpush1.xpose.msra.mxu0 0.0
    %1070 = vmatprep.subr.mxu0 0.0
    %1071 = vmatpush1.xpose.msra.mxu0 0.0
    %1072 = vmatprep.subr.mxu0 0.0
    %1073 = vmatpush1.xpose.msra.mxu0 0.0
    %1074 = vmatprep.subr.mxu0 0.0
    %1075 = vmatpush1.xpose.msra.mxu0 0.0
    %1076 = vmatprep.subr.mxu0 0.0
    %1077 = vmatpush1.xpose.msra.mxu0 0.0
    %1078 = vmatprep.subr.mxu0 0.0
    %1079 = vmatpush1.xpose.msra.mxu0 0.0
    %1080 = vmatprep.subr.mxu0 0.0
    %1081 = vmatpush1.xpose.msra.mxu0 0.0
    %1082 = vmatprep.subr.mxu0 0.0
    %1083 = vmatpush1.xpose.msra.mxu0 0.0
    %1084 = vmatprep.subr.mxu0 0.0
    %1085 = vmatpush1.xpose.msra.mxu0 0.0
    %1086 = vmatprep.subr.mxu0 0.0
    %1087 = vmatpush1.xpose.msra.mxu0 0.0
    %1088 = vmatprep.subr.mxu0 0.0
    %1089 = vmatpush1.xpose.msra.mxu0 0.0
    %1090 = vmatprep.subr.mxu0 0.0
    %1091 = vmatpush1.xpose.msra.mxu0 0.0
    %1092 = vmatprep.subr.mxu0 0.0
    %1093 = vmatpush1.xpose.msra.mxu0 0.0
    %1094 = vmatprep.subr.mxu0 0.0
    %1095 = vmatpush1.xpose.msra.mxu0 0.0
    %1096 = vmatprep.subr.mxu0 0.0
    %1097 = vmatpush1.xpose.msra.mxu0 0.0
    %1098 = vmatprep.subr.mxu0 0.0
    %1099 = vmatpush1.xpose.msra.mxu0 0.0
    %1100 = vmatprep.subr.mxu0 0.0
    %1101 = vmatpush1.xpose.msra.mxu0 0.0
    %1102 = vmatprep.mubr.f32.mxu0 0.0
    %v1103 = vand.u32 %v605, 4294901760
    %1104 = vmatmul.mubr.f32.gmra.mrb[0].mxu0 %v1103
    %v1105 = vpop.f32.mrb[0].mxu0
    %v1106 = vadd.f32 %v1027, %v1105
    %v1107 = vpop.f32.mrb[0].mxu0
    %1108 = vmatprep.mubr.f32.mxu0 0.0
    %v1109 = vand.u32 %v607, 4294901760
    %1110 = vmatmul.mubr.f32.gmra.mrb[0].mxu0 %v1109
    %v1111 = vpop.f32.mrb[0].mxu0
    %v1112 = vadd.f32 %v1033, %v1111
    %v1113 = vpop.f32.mrb[0].mxu0
    %1114 = vdwg.mxu0
    %v1115 = vmul.f32 %v1106, 0.35355338
    %v1116 = vmul.f32 %v1112, 0.35355338
    %1119 = vrot.lane.b32.xlu0 %v15, 96
    %v1120 = vpop.permute.xlu0 %1119
    %1121 = vrot.lane.b32.xlu0 %v16, 96
    %v1122 = vpop.permute.xlu0 %1121
    %v1125 = vadd.f32 %v1115, %v1120
    %v1126 = vadd.f32 %v1116, %v1122
    %vm1127 = vcmask 130048
    %v1128 = vsel %vm1127, %v1125, -inf
    %1129 = vmax.xlane.f32.xlu0 %v1128
    %v1130 = vpop.xlane.xlu0 %1129
    %v1131 = vsel %vm1127, %v1126, -inf
    %1132 = vmax.xlane.f32.xlu0 %v1131
    %v1133 = vpop.xlane.xlu0 %1132
    %v1134 = vsub.f32 %v1125, %v1130
    %v1135 = vsub.f32 %v1126, %v1133
    %v1136 = vmul.f32 %v1134, 1.442695
    %v1137 = vpow.pop %v1136
    %v1138 = vmul.f32 %v1135, 1.442695
    %v1139 = vpow.pop %v1138
    %v1140 = vsel %vm1127, %v1137, 0.0
    %1141 = vadd.xlane.f32.xlu0 %v1140
    %v1142 = vpop.xlane.xlu0 %1141
    %v1143 = vsel %vm1127, %v1139, 0.0
    %1144 = vadd.xlane.f32.xlu0 %v1143
    %v1145 = vpop.xlane.xlu0 %1144
    %v1146 = vrcp.pop %v1142
    %v1147 = vmul.f32 %v1137, %v1146
    %v1148 = vrcp.pop %v1145
    %v1149 = vmul.f32 %v1139, %v1148
    %1150 = vrot.lane.b32.xlu0 %v589, 64
    %v1151 = vpop.permute.xlu0 %1150
    %1152 = vrot.lane.b32.xlu0 %v595, 64
    %v1153 = vpop.permute.xlu0 %1152
    %v1157 = vsel %vm1127, %v1147, 0
    %v1160 = vsel %vm1127, %v1149, 0
    %1162 = vmatprep.subr.mxu0 0.0
    %v1163 = vand.u32 %v1151, 4294901760
    %1164 = vmatpush1.msra.mxu0 %v1163
    %1165 = vmatprep.subr.mxu0 0.0
    %v1166 = vand.u32 %v1153, 4294901760
    %1167 = vmatpush1.msra.mxu0 %v1166
    %1168 = vmatprep.subr.mxu0 0.0
    %1169 = vmatpush1.msra.mxu0 0.0
    %1170 = vmatprep.subr.mxu0 0.0
    %1171 = vmatpush1.msra.mxu0 0.0
    %1172 = vmatprep.subr.mxu0 0.0
    %1173 = vmatpush1.msra.mxu0 0.0
    %1174 = vmatprep.subr.mxu0 0.0
    %1175 = vmatpush1.msra.mxu0 0.0
    %1176 = vmatprep.subr.mxu0 0.0
    %1177 = vmatpush1.msra.mxu0 0.0
    %1178 = vmatprep.subr.mxu0 0.0
    %1179 = vmatpush1.msra.mxu0 0.0
    %1180 = vmatprep.subr.mxu0 0.0
    %1181 = vmatpush1.msra.mxu0 0.0
    %1182 = vmatprep.subr.mxu0 0.0
    %1183 = vmatpush1.msra.mxu0 0.0
    %1184 = vmatprep.subr.mxu0 0.0
    %1185 = vmatpush1.msra.mxu0 0.0
    %1186 = vmatprep.subr.mxu0 0.0
    %1187 = vmatpush1.msra.mxu0 0.0
    %1188 = vmatprep.subr.mxu0 0.0
    %1189 = vmatpush1.msra.mxu0 0.0
    %1190 = vmatprep.subr.mxu0 0.0
    %1191 = vmatpush1.msra.mxu0 0.0
    %1192 = vmatprep.subr.mxu0 0.0
    %1193 = vmatpush1.msra.mxu0 0.0
    %1194 = vmatprep.subr.mxu0 0.0
    %1195 = vmatpush1.msra.mxu0 0.0
    %1196 = vmatprep.subr.mxu0 0.0
    %1197 = vmatpush1.msra.mxu0 0.0
    %1198 = vmatprep.subr.mxu0 0.0
    %1199 = vmatpush1.msra.mxu0 0.0
    %1200 = vmatprep.subr.mxu0 0.0
    %1201 = vmatpush1.msra.mxu0 0.0
    %1202 = vmatprep.subr.mxu0 0.0
    %1203 = vmatpush1.msra.mxu0 0.0
    %1204 = vmatprep.subr.mxu0 0.0
    %1205 = vmatpush1.msra.mxu0 0.0
    %1206 = vmatprep.subr.mxu0 0.0
    %1207 = vmatpush1.msra.mxu0 0.0
    %1208 = vmatprep.subr.mxu0 0.0
    %1209 = vmatpush1.msra.mxu0 0.0
    %1210 = vmatprep.subr.mxu0 0.0
    %1211 = vmatpush1.msra.mxu0 0.0
    %1212 = vmatprep.subr.mxu0 0.0
    %1213 = vmatpush1.msra.mxu0 0.0
    %1214 = vmatprep.subr.mxu0 0.0
    %1215 = vmatpush1.msra.mxu0 0.0
    %1216 = vmatprep.subr.mxu0 0.0
    %1217 = vmatpush1.msra.mxu0 0.0
    %1218 = vmatprep.subr.mxu0 0.0
    %1219 = vmatpush1.msra.mxu0 0.0
    %1220 = vmatprep.subr.mxu0 0.0
    %1221 = vmatpush1.msra.mxu0 0.0
    %1222 = vmatprep.subr.mxu0 0.0
    %1223 = vmatpush1.msra.mxu0 0.0
    %1224 = vmatprep.subr.mxu0 0.0
    %1225 = vmatpush1.msra.mxu0 0.0
    %1226 = vmatprep.subr.mxu0 0.0
    %1227 = vmatpush1.msra.mxu0 0.0
    %1228 = vmatprep.mubr.f32.mxu0 0.0
    %v1229 = vand.u32 %v1157, 4294901760
    %v1230 = vsub.f32 %v1157, %v1229
    %v1231 = vand.u32 %v1230, 4294901760
    %v1232 = vsub.f32 %v1230, %v1231
    %v1233 = vand.u32 %v1232, 4294901760
    %1234 = vmatmul.mubr.f32.gmra.mrb[0].mxu0 %v1233
    %v1235 = vpop.f32.mrb[0].mxu0
    %v1236 = vadd.f32 0.0, %v1235
    %v1237 = vpop.f32.mrb[0].mxu0
    %1238 = vmatprep.mubr.f32.mxu0 0.0
    %v1239 = vand.u32 %v1160, 4294901760
    %v1240 = vsub.f32 %v1160, %v1239
    %v1241 = vand.u32 %v1240, 4294901760
    %v1242 = vsub.f32 %v1240, %v1241
    %v1243 = vand.u32 %v1242, 4294901760
    %1244 = vmatmul.mubr.f32.gmra.mrb[0].mxu0 %v1243
    %v1245 = vpop.f32.mrb[0].mxu0
    %v1246 = vadd.f32 0.0, %v1245
    %v1247 = vpop.f32.mrb[0].mxu0
    %1248 = vdwg.mxu0
    %1249 = vmatprep.subr.mxu0 0.0
    %v1250 = vand.u32 %v1151, 4294901760
    %v1251 = vsub.f32 %v1151, %v1250
    %v1252 = vand.u32 %v1251, 4294901760
    %v1253 = vsub.f32 %v1251, %v1252
    %v1254 = vand.u32 %v1253, 4294901760
    %1255 = vmatpush1.msra.mxu0 %v1254
    %1256 = vmatprep.subr.mxu0 0.0
    %v1257 = vand.u32 %v1153, 4294901760
    %v1258 = vsub.f32 %v1153, %v1257
    %v1259 = vand.u32 %v1258, 4294901760
    %v1260 = vsub.f32 %v1258, %v1259
    %v1261 = vand.u32 %v1260, 4294901760
    %1262 = vmatpush1.msra.mxu0 %v1261
    %1263 = vmatprep.subr.mxu0 0.0
    %1264 = vmatpush1.msra.mxu0 0.0
    %1265 = vmatprep.subr.mxu0 0.0
    %1266 = vmatpush1.msra.mxu0 0.0
    %1267 = vmatprep.subr.mxu0 0.0
    %1268 = vmatpush1.msra.mxu0 0.0
    %1269 = vmatprep.subr.mxu0 0.0
    %1270 = vmatpush1.msra.mxu0 0.0
    %1271 = vmatprep.subr.mxu0 0.0
    %1272 = vmatpush1.msra.mxu0 0.0
    %1273 = vmatprep.subr.mxu0 0.0
    %1274 = vmatpush1.msra.mxu0 0.0
    %1275 = vmatprep.subr.mxu0 0.0
    %1276 = vmatpush1.msra.mxu0 0.0
    %1277 = vmatprep.subr.mxu0 0.0
    %1278 = vmatpush1.msra.mxu0 0.0
    %1279 = vmatprep.subr.mxu0 0.0
    %1280 = vmatpush1.msra.mxu0 0.0
    %1281 = vmatprep.subr.mxu0 0.0
    %1282 = vmatpush1.msra.mxu0 0.0
    %1283 = vmatprep.subr.mxu0 0.0
    %1284 = vmatpush1.msra.mxu0 0.0
    %1285 = vmatprep.subr.mxu0 0.0
    %1286 = vmatpush1.msra.mxu0 0.0
    %1287 = vmatprep.subr.mxu0 0.0
    %1288 = vmatpush1.msra.mxu0 0.0
    %1289 = vmatprep.subr.mxu0 0.0
    %1290 = vmatpush1.msra.mxu0 0.0
    %1291 = vmatprep.subr.mxu0 0.0
    %1292 = vmatpush1.msra.mxu0 0.0
    %1293 = vmatprep.subr.mxu0 0.0
    %1294 = vmatpush1.msra.mxu0 0.0
    %1295 = vmatprep.subr.mxu0 0.0
    %1296 = vmatpush1.msra.mxu0 0.0
    %1297 = vmatprep.subr.mxu0 0.0
    %1298 = vmatpush1.msra.mxu0 0.0
    %1299 = vmatprep.subr.mxu0 0.0
    %1300 = vmatpush1.msra.mxu0 0.0
    %1301 = vmatprep.subr.mxu0 0.0
    %1302 = vmatpush1.msra.mxu0 0.0
    %1303 = vmatprep.subr.mxu0 0.0
    %1304 = vmatpush1.msra.mxu0 0.0
    %1305 = vmatprep.subr.mxu0 0.0
    %1306 = vmatpush1.msra.mxu0 0.0
    %1307 = vmatprep.subr.mxu0 0.0
    %1308 = vmatpush1.msra.mxu0 0.0
    %1309 = vmatprep.subr.mxu0 0.0
    %1310 = vmatpush1.msra.mxu0 0.0
    %1311 = vmatprep.subr.mxu0 0.0
    %1312 = vmatpush1.msra.mxu0 0.0
    %1313 = vmatprep.subr.mxu0 0.0
    %1314 = vmatpush1.msra.mxu0 0.0
    %1315 = vmatprep.subr.mxu0 0.0
    %1316 = vmatpush1.msra.mxu0 0.0
    %1317 = vmatprep.subr.mxu0 0.0
    %1318 = vmatpush1.msra.mxu0 0.0
    %1319 = vmatprep.subr.mxu0 0.0
    %1320 = vmatpush1.msra.mxu0 0.0
    %1321 = vmatprep.subr.mxu0 0.0
    %1322 = vmatpush1.msra.mxu0 0.0
    %1323 = vmatprep.mubr.f32.mxu0 0.0
    %v1324 = vand.u32 %v1157, 4294901760
    %1325 = vmatmul.mubr.f32.gmra.mrb[0].mxu0 %v1324
    %v1326 = vpop.f32.mrb[0].mxu0
    %v1327 = vadd.f32 %v1236, %v1326
    %v1328 = vpop.f32.mrb[0].mxu0
    %1329 = vmatprep.mubr.f32.mxu0 0.0
    %v1330 = vand.u32 %v1160, 4294901760
    %1331 = vmatmul.mubr.f32.gmra.mrb[0].mxu0 %v1330
    %v1332 = vpop.f32.mrb[0].mxu0
    %v1333 = vadd.f32 %v1246, %v1332
    %v1334 = vpop.f32.mrb[0].mxu0
    %1335 = vdwg.mxu0
    %1336 = vmatprep.subr.mxu0 0.0
    %v1337 = vand.u32 %v1151, 4294901760
    %v1338 = vsub.f32 %v1151, %v1337
    %1339 = vmatpush1.msra.mxu0 %v1338
    %1340 = vmatprep.subr.mxu0 0.0
    %v1341 = vand.u32 %v1153, 4294901760
    %v1342 = vsub.f32 %v1153, %v1341
    %1343 = vmatpush1.msra.mxu0 %v1342
    %1344 = vmatprep.subr.mxu0 0.0
    %1345 = vmatpush1.msra.mxu0 0.0
    %1346 = vmatprep.subr.mxu0 0.0
    %1347 = vmatpush1.msra.mxu0 0.0
    %1348 = vmatprep.subr.mxu0 0.0
    %1349 = vmatpush1.msra.mxu0 0.0
    %1350 = vmatprep.subr.mxu0 0.0
    %1351 = vmatpush1.msra.mxu0 0.0
    %1352 = vmatprep.subr.mxu0 0.0
    %1353 = vmatpush1.msra.mxu0 0.0
    %1354 = vmatprep.subr.mxu0 0.0
    %1355 = vmatpush1.msra.mxu0 0.0
    %1356 = vmatprep.subr.mxu0 0.0
    %1357 = vmatpush1.msra.mxu0 0.0
    %1358 = vmatprep.subr.mxu0 0.0
    %1359 = vmatpush1.msra.mxu0 0.0
    %1360 = vmatprep.subr.mxu0 0.0
    %1361 = vmatpush1.msra.mxu0 0.0
    %1362 = vmatprep.subr.mxu0 0.0
    %1363 = vmatpush1.msra.mxu0 0.0
    %1364 = vmatprep.subr.mxu0 0.0
    %1365 = vmatpush1.msra.mxu0 0.0
    %1366 = vmatprep.subr.mxu0 0.0
    %1367 = vmatpush1.msra.mxu0 0.0
    %1368 = vmatprep.subr.mxu0 0.0
    %1369 = vmatpush1.msra.mxu0 0.0
    %1370 = vmatprep.subr.mxu0 0.0
    %1371 = vmatpush1.msra.mxu0 0.0
    %1372 = vmatprep.subr.mxu0 0.0
    %1373 = vmatpush1.msra.mxu0 0.0
    %1374 = vmatprep.subr.mxu0 0.0
    %1375 = vmatpush1.msra.mxu0 0.0
    %1376 = vmatprep.subr.mxu0 0.0
    %1377 = vmatpush1.msra.mxu0 0.0
    %1378 = vmatprep.subr.mxu0 0.0
    %1379 = vmatpush1.msra.mxu0 0.0
    %1380 = vmatprep.subr.mxu0 0.0
    %1381 = vmatpush1.msra.mxu0 0.0
    %1382 = vmatprep.subr.mxu0 0.0
    %1383 = vmatpush1.msra.mxu0 0.0
    %1384 = vmatprep.subr.mxu0 0.0
    %1385 = vmatpush1.msra.mxu0 0.0
    %1386 = vmatprep.subr.mxu0 0.0
    %1387 = vmatpush1.msra.mxu0 0.0
    %1388 = vmatprep.subr.mxu0 0.0
    %1389 = vmatpush1.msra.mxu0 0.0
    %1390 = vmatprep.subr.mxu0 0.0
    %1391 = vmatpush1.msra.mxu0 0.0
    %1392 = vmatprep.subr.mxu0 0.0
    %1393 = vmatpush1.msra.mxu0 0.0
    %1394 = vmatprep.subr.mxu0 0.0
    %1395 = vmatpush1.msra.mxu0 0.0
    %1396 = vmatprep.subr.mxu0 0.0
    %1397 = vmatpush1.msra.mxu0 0.0
    %1398 = vmatprep.subr.mxu0 0.0
    %1399 = vmatpush1.msra.mxu0 0.0
    %1400 = vmatprep.subr.mxu0 0.0
    %1401 = vmatpush1.msra.mxu0 0.0
    %1402 = vmatprep.subr.mxu0 0.0
    %1403 = vmatpush1.msra.mxu0 0.0
    %1404 = vmatprep.mubr.f32.mxu0 0.0
    %v1405 = vand.u32 %v1157, 4294901760
    %v1406 = vsub.f32 %v1157, %v1405
    %1407 = vmatmul.mubr.f32.gmra.mrb[0].mxu0 %v1406
    %v1408 = vpop.f32.mrb[0].mxu0
    %v1409 = vadd.f32 %v1327, %v1408
    %v1410 = vpop.f32.mrb[0].mxu0
    %1411 = vmatprep.mubr.f32.mxu0 0.0
    %v1412 = vand.u32 %v1160, 4294901760
    %v1413 = vsub.f32 %v1160, %v1412
    %1414 = vmatmul.mubr.f32.gmra.mrb[0].mxu0 %v1413
    %v1415 = vpop.f32.mrb[0].mxu0
    %v1416 = vadd.f32 %v1333, %v1415
    %v1417 = vpop.f32.mrb[0].mxu0
    %1418 = vdwg.mxu0
    %1419 = vmatprep.subr.mxu0 0.0
    %v1420 = vand.u32 %v1151, 4294901760
    %1421 = vmatpush1.msra.mxu0 %v1420
    %1422 = vmatprep.subr.mxu0 0.0
    %v1423 = vand.u32 %v1153, 4294901760
    %1424 = vmatpush1.msra.mxu0 %v1423
    %1425 = vmatprep.subr.mxu0 0.0
    %1426 = vmatpush1.msra.mxu0 0.0
    %1427 = vmatprep.subr.mxu0 0.0
    %1428 = vmatpush1.msra.mxu0 0.0
    %1429 = vmatprep.subr.mxu0 0.0
    %1430 = vmatpush1.msra.mxu0 0.0
    %1431 = vmatprep.subr.mxu0 0.0
    %1432 = vmatpush1.msra.mxu0 0.0
    %1433 = vmatprep.subr.mxu0 0.0
    %1434 = vmatpush1.msra.mxu0 0.0
    %1435 = vmatprep.subr.mxu0 0.0
    %1436 = vmatpush1.msra.mxu0 0.0
    %1437 = vmatprep.subr.mxu0 0.0
    %1438 = vmatpush1.msra.mxu0 0.0
    %1439 = vmatprep.subr.mxu0 0.0
    %1440 = vmatpush1.msra.mxu0 0.0
    %1441 = vmatprep.subr.mxu0 0.0
    %1442 = vmatpush1.msra.mxu0 0.0
    %1443 = vmatprep.subr.mxu0 0.0
    %1444 = vmatpush1.msra.mxu0 0.0
    %1445 = vmatprep.subr.mxu0 0.0
    %1446 = vmatpush1.msra.mxu0 0.0
    %1447 = vmatprep.subr.mxu0 0.0
    %1448 = vmatpush1.msra.mxu0 0.0
    %1449 = vmatprep.subr.mxu0 0.0
    %1450 = vmatpush1.msra.mxu0 0.0
    %1451 = vmatprep.subr.mxu0 0.0
    %1452 = vmatpush1.msra.mxu0 0.0
    %1453 = vmatprep.subr.mxu0 0.0
    %1454 = vmatpush1.msra.mxu0 0.0
    %1455 = vmatprep.subr.mxu0 0.0
    %1456 = vmatpush1.msra.mxu0 0.0
    %1457 = vmatprep.subr.mxu0 0.0
    %1458 = vmatpush1.msra.mxu0 0.0
    %1459 = vmatprep.subr.mxu0 0.0
    %1460 = vmatpush1.msra.mxu0 0.0
    %1461 = vmatprep.subr.mxu0 0.0
    %1462 = vmatpush1.msra.mxu0 0.0
    %1463 = vmatprep.subr.mxu0 0.0
    %1464 = vmatpush1.msra.mxu0 0.0
    %1465 = vmatprep.subr.mxu0 0.0
    %1466 = vmatpush1.msra.mxu0 0.0
    %1467 = vmatprep.subr.mxu0 0.0
    %1468 = vmatpush1.msra.mxu0 0.0
    %1469 = vmatprep.subr.mxu0 0.0
    %1470 = vmatpush1.msra.mxu0 0.0
    %1471 = vmatprep.subr.mxu0 0.0
    %1472 = vmatpush1.msra.mxu0 0.0
    %1473 = vmatprep.subr.mxu0 0.0
    %1474 = vmatpush1.msra.mxu0 0.0
    %1475 = vmatprep.subr.mxu0 0.0
    %1476 = vmatpush1.msra.mxu0 0.0
    %1477 = vmatprep.subr.mxu0 0.0
    %1478 = vmatpush1.msra.mxu0 0.0
    %1479 = vmatprep.subr.mxu0 0.0
    %1480 = vmatpush1.msra.mxu0 0.0
    %1481 = vmatprep.subr.mxu0 0.0
    %1482 = vmatpush1.msra.mxu0 0.0
    %1483 = vmatprep.subr.mxu0 0.0
    %1484 = vmatpush1.msra.mxu0 0.0
    %1485 = vmatprep.mubr.f32.mxu0 0.0
    %v1486 = vand.u32 %v1157, 4294901760
    %v1487 = vsub.f32 %v1157, %v1486
    %v1488 = vand.u32 %v1487, 4294901760
    %1489 = vmatmul.mubr.f32.gmra.mrb[0].mxu0 %v1488
    %v1490 = vpop.f32.mrb[0].mxu0
    %v1491 = vadd.f32 %v1409, %v1490
    %v1492 = vpop.f32.mrb[0].mxu0
    %1493 = vmatprep.mubr.f32.mxu0 0.0
    %v1494 = vand.u32 %v1160, 4294901760
    %v1495 = vsub.f32 %v1160, %v1494
    %v1496 = vand.u32 %v1495, 4294901760
    %1497 = vmatmul.mubr.f32.gmra.mrb[0].mxu0 %v1496
    %v1498 = vpop.f32.mrb[0].mxu0
    %v1499 = vadd.f32 %v1416, %v1498
    %v1500 = vpop.f32.mrb[0].mxu0
    %1501 = vdwg.mxu0
    %1502 = vmatprep.subr.mxu0 0.0
    %v1503 = vand.u32 %v1151, 4294901760
    %v1504 = vsub.f32 %v1151, %v1503
    %v1505 = vand.u32 %v1504, 4294901760
    %1506 = vmatpush1.msra.mxu0 %v1505
    %1507 = vmatprep.subr.mxu0 0.0
    %v1508 = vand.u32 %v1153, 4294901760
    %v1509 = vsub.f32 %v1153, %v1508
    %v1510 = vand.u32 %v1509, 4294901760
    %1511 = vmatpush1.msra.mxu0 %v1510
    %1512 = vmatprep.subr.mxu0 0.0
    %1513 = vmatpush1.msra.mxu0 0.0
    %1514 = vmatprep.subr.mxu0 0.0
    %1515 = vmatpush1.msra.mxu0 0.0
    %1516 = vmatprep.subr.mxu0 0.0
    %1517 = vmatpush1.msra.mxu0 0.0
    %1518 = vmatprep.subr.mxu0 0.0
    %1519 = vmatpush1.msra.mxu0 0.0
    %1520 = vmatprep.subr.mxu0 0.0
    %1521 = vmatpush1.msra.mxu0 0.0
    %1522 = vmatprep.subr.mxu0 0.0
    %1523 = vmatpush1.msra.mxu0 0.0
    %1524 = vmatprep.subr.mxu0 0.0
    %1525 = vmatpush1.msra.mxu0 0.0
    %1526 = vmatprep.subr.mxu0 0.0
    %1527 = vmatpush1.msra.mxu0 0.0
    %1528 = vmatprep.subr.mxu0 0.0
    %1529 = vmatpush1.msra.mxu0 0.0
    %1530 = vmatprep.subr.mxu0 0.0
    %1531 = vmatpush1.msra.mxu0 0.0
    %1532 = vmatprep.subr.mxu0 0.0
    %1533 = vmatpush1.msra.mxu0 0.0
    %1534 = vmatprep.subr.mxu0 0.0
    %1535 = vmatpush1.msra.mxu0 0.0
    %1536 = vmatprep.subr.mxu0 0.0
    %1537 = vmatpush1.msra.mxu0 0.0
    %1538 = vmatprep.subr.mxu0 0.0
    %1539 = vmatpush1.msra.mxu0 0.0
    %1540 = vmatprep.subr.mxu0 0.0
    %1541 = vmatpush1.msra.mxu0 0.0
    %1542 = vmatprep.subr.mxu0 0.0
    %1543 = vmatpush1.msra.mxu0 0.0
    %1544 = vmatprep.subr.mxu0 0.0
    %1545 = vmatpush1.msra.mxu0 0.0
    %1546 = vmatprep.subr.mxu0 0.0
    %1547 = vmatpush1.msra.mxu0 0.0
    %1548 = vmatprep.subr.mxu0 0.0
    %1549 = vmatpush1.msra.mxu0 0.0
    %1550 = vmatprep.subr.mxu0 0.0
    %1551 = vmatpush1.msra.mxu0 0.0
    %1552 = vmatprep.subr.mxu0 0.0
    %1553 = vmatpush1.msra.mxu0 0.0
    %1554 = vmatprep.subr.mxu0 0.0
    %1555 = vmatpush1.msra.mxu0 0.0
    %1556 = vmatprep.subr.mxu0 0.0
    %1557 = vmatpush1.msra.mxu0 0.0
    %1558 = vmatprep.subr.mxu0 0.0
    %1559 = vmatpush1.msra.mxu0 0.0
    %1560 = vmatprep.subr.mxu0 0.0
    %1561 = vmatpush1.msra.mxu0 0.0
    %1562 = vmatprep.subr.mxu0 0.0
    %1563 = vmatpush1.msra.mxu0 0.0
    %1564 = vmatprep.subr.mxu0 0.0
    %1565 = vmatpush1.msra.mxu0 0.0
    %1566 = vmatprep.subr.mxu0 0.0
    %1567 = vmatpush1.msra.mxu0 0.0
    %1568 = vmatprep.subr.mxu0 0.0
    %1569 = vmatpush1.msra.mxu0 0.0
    %1570 = vmatprep.subr.mxu0 0.0
    %1571 = vmatpush1.msra.mxu0 0.0
    %1572 = vmatprep.mubr.f32.mxu0 0.0
    %v1573 = vand.u32 %v1157, 4294901760
    %1574 = vmatmul.mubr.f32.gmra.mrb[0].mxu0 %v1573
    %v1575 = vpop.f32.mrb[0].mxu0
    %v1576 = vadd.f32 %v1491, %v1575
    %v1577 = vpop.f32.mrb[0].mxu0
    %1578 = vmatprep.mubr.f32.mxu0 0.0
    %v1579 = vand.u32 %v1160, 4294901760
    %1580 = vmatmul.mubr.f32.gmra.mrb[0].mxu0 %v1579
    %v1581 = vpop.f32.mrb[0].mxu0
    %v1582 = vadd.f32 %v1499, %v1581
    %v1583 = vpop.f32.mrb[0].mxu0
    %1584 = vdwg.mxu0
    %1585 = vmatprep.subr.mxu0 0.0
    %v1586 = vand.u32 %v1151, 4294901760
    %1587 = vmatpush1.msra.mxu0 %v1586
    %1588 = vmatprep.subr.mxu0 0.0
    %v1589 = vand.u32 %v1153, 4294901760
    %1590 = vmatpush1.msra.mxu0 %v1589
    %1591 = vmatprep.subr.mxu0 0.0
    %1592 = vmatpush1.msra.mxu0 0.0
    %1593 = vmatprep.subr.mxu0 0.0
    %1594 = vmatpush1.msra.mxu0 0.0
    %1595 = vmatprep.subr.mxu0 0.0
    %1596 = vmatpush1.msra.mxu0 0.0
    %1597 = vmatprep.subr.mxu0 0.0
    %1598 = vmatpush1.msra.mxu0 0.0
    %1599 = vmatprep.subr.mxu0 0.0
    %1600 = vmatpush1.msra.mxu0 0.0
    %1601 = vmatprep.subr.mxu0 0.0
    %1602 = vmatpush1.msra.mxu0 0.0
    %1603 = vmatprep.subr.mxu0 0.0
    %1604 = vmatpush1.msra.mxu0 0.0
    %1605 = vmatprep.subr.mxu0 0.0
    %1606 = vmatpush1.msra.mxu0 0.0
    %1607 = vmatprep.subr.mxu0 0.0
    %1608 = vmatpush1.msra.mxu0 0.0
    %1609 = vmatprep.subr.mxu0 0.0
    %1610 = vmatpush1.msra.mxu0 0.0
    %1611 = vmatprep.subr.mxu0 0.0
    %1612 = vmatpush1.msra.mxu0 0.0
    %1613 = vmatprep.subr.mxu0 0.0
    %1614 = vmatpush1.msra.mxu0 0.0
    %1615 = vmatprep.subr.mxu0 0.0
    %1616 = vmatpush1.msra.mxu0 0.0
    %1617 = vmatprep.subr.mxu0 0.0
    %1618 = vmatpush1.msra.mxu0 0.0
    %1619 = vmatprep.subr.mxu0 0.0
    %1620 = vmatpush1.msra.mxu0 0.0
    %1621 = vmatprep.subr.mxu0 0.0
    %1622 = vmatpush1.msra.mxu0 0.0
    %1623 = vmatprep.subr.mxu0 0.0
    %1624 = vmatpush1.msra.mxu0 0.0
    %1625 = vmatprep.subr.mxu0 0.0
    %1626 = vmatpush1.msra.mxu0 0.0
    %1627 = vmatprep.subr.mxu0 0.0
    %1628 = vmatpush1.msra.mxu0 0.0
    %1629 = vmatprep.subr.mxu0 0.0
    %1630 = vmatpush1.msra.mxu0 0.0
    %1631 = vmatprep.subr.mxu0 0.0
    %1632 = vmatpush1.msra.mxu0 0.0
    %1633 = vmatprep.subr.mxu0 0.0
    %1634 = vmatpush1.msra.mxu0 0.0
    %1635 = vmatprep.subr.mxu0 0.0
    %1636 = vmatpush1.msra.mxu0 0.0
    %1637 = vmatprep.subr.mxu0 0.0
    %1638 = vmatpush1.msra.mxu0 0.0
    %1639 = vmatprep.subr.mxu0 0.0
    %1640 = vmatpush1.msra.mxu0 0.0
    %1641 = vmatprep.subr.mxu0 0.0
    %1642 = vmatpush1.msra.mxu0 0.0
    %1643 = vmatprep.subr.mxu0 0.0
    %1644 = vmatpush1.msra.mxu0 0.0
    %1645 = vmatprep.subr.mxu0 0.0
    %1646 = vmatpush1.msra.mxu0 0.0
    %1647 = vmatprep.subr.mxu0 0.0
    %1648 = vmatpush1.msra.mxu0 0.0
    %1649 = vmatprep.subr.mxu0 0.0
    %1650 = vmatpush1.msra.mxu0 0.0
    %1651 = vmatprep.mubr.f32.mxu0 0.0
    %v1652 = vand.u32 %v1157, 4294901760
    %1653 = vmatmul.mubr.f32.gmra.mrb[0].mxu0 %v1652
    %v1654 = vpop.f32.mrb[0].mxu0
    %v1655 = vadd.f32 %v1576, %v1654
    %v1656 = vpop.f32.mrb[0].mxu0
    %1657 = vmatprep.mubr.f32.mxu0 0.0
    %v1658 = vand.u32 %v1160, 4294901760
    %1659 = vmatmul.mubr.f32.gmra.mrb[0].mxu0 %v1658
    %v1660 = vpop.f32.mrb[0].mxu0
    %v1661 = vadd.f32 %v1582, %v1660
    %v1662 = vpop.f32.mrb[0].mxu0
    %1663 = vdwg.mxu0
    %1664 = vrot.lane.b32.xlu0 %v589, 120
    %v1665 = vpop.permute.xlu0 %1664
    %1666 = vrot.lane.b32.xlu0 %v595, 120
    %v1667 = vpop.permute.xlu0 %1666
    %1668 = vrot.lane.b32.xlu0 %v589, 88
    %v1669 = vpop.permute.xlu0 %1668
    %1670 = vrot.lane.b32.xlu0 %v595, 88
    %v1671 = vpop.permute.xlu0 %1670
    %v1672 = vsel %vm604, %v1665, 0
    %v1674 = vsel %vm604, %v1667, 0
    %v1676 = vsel %vm604, %v1669, 0
    %v1678 = vsel %vm604, %v1671, 0
    %1680 = vmatprep.subr.mxu0 0.0
    %v1681 = vand.u32 %v1676, 4294901760
    %1682 = vmatpush1.xpose.msra.mxu0 %v1681
    %1683 = vmatprep.subr.mxu0 0.0
    %v1684 = vand.u32 %v1678, 4294901760
    %1685 = vmatpush1.xpose.msra.mxu0 %v1684
    %1686 = vmatprep.subr.mxu0 0.0
    %1687 = vmatpush1.xpose.msra.mxu0 0.0
    %1688 = vmatprep.subr.mxu0 0.0
    %1689 = vmatpush1.xpose.msra.mxu0 0.0
    %1690 = vmatprep.subr.mxu0 0.0
    %1691 = vmatpush1.xpose.msra.mxu0 0.0
    %1692 = vmatprep.subr.mxu0 0.0
    %1693 = vmatpush1.xpose.msra.mxu0 0.0
    %1694 = vmatprep.subr.mxu0 0.0
    %1695 = vmatpush1.xpose.msra.mxu0 0.0
    %1696 = vmatprep.subr.mxu0 0.0
    %1697 = vmatpush1.xpose.msra.mxu0 0.0
    %1698 = vmatprep.subr.mxu0 0.0
    %1699 = vmatpush1.xpose.msra.mxu0 0.0
    %1700 = vmatprep.subr.mxu0 0.0
    %1701 = vmatpush1.xpose.msra.mxu0 0.0
    %1702 = vmatprep.subr.mxu0 0.0
    %1703 = vmatpush1.xpose.msra.mxu0 0.0
    %1704 = vmatprep.subr.mxu0 0.0
    %1705 = vmatpush1.xpose.msra.mxu0 0.0
    %1706 = vmatprep.subr.mxu0 0.0
    %1707 = vmatpush1.xpose.msra.mxu0 0.0
    %1708 = vmatprep.subr.mxu0 0.0
    %1709 = vmatpush1.xpose.msra.mxu0 0.0
    %1710 = vmatprep.subr.mxu0 0.0
    %1711 = vmatpush1.xpose.msra.mxu0 0.0
    %1712 = vmatprep.subr.mxu0 0.0
    %1713 = vmatpush1.xpose.msra.mxu0 0.0
    %1714 = vmatprep.subr.mxu0 0.0
    %1715 = vmatpush1.xpose.msra.mxu0 0.0
    %1716 = vmatprep.subr.mxu0 0.0
    %1717 = vmatpush1.xpose.msra.mxu0 0.0
    %1718 = vmatprep.subr.mxu0 0.0
    %1719 = vmatpush1.xpose.msra.mxu0 0.0
    %1720 = vmatprep.subr.mxu0 0.0
    %1721 = vmatpush1.xpose.msra.mxu0 0.0
    %1722 = vmatprep.subr.mxu0 0.0
    %1723 = vmatpush1.xpose.msra.mxu0 0.0
    %1724 = vmatprep.subr.mxu0 0.0
    %1725 = vmatpush1.xpose.msra.mxu0 0.0
    %1726 = vmatprep.subr.mxu0 0.0
    %1727 = vmatpush1.xpose.msra.mxu0 0.0
    %1728 = vmatprep.subr.mxu0 0.0
    %1729 = vmatpush1.xpose.msra.mxu0 0.0
    %1730 = vmatprep.subr.mxu0 0.0
    %1731 = vmatpush1.xpose.msra.mxu0 0.0
    %1732 = vmatprep.subr.mxu0 0.0
    %1733 = vmatpush1.xpose.msra.mxu0 0.0
    %1734 = vmatprep.subr.mxu0 0.0
    %1735 = vmatpush1.xpose.msra.mxu0 0.0
    %1736 = vmatprep.subr.mxu0 0.0
    %1737 = vmatpush1.xpose.msra.mxu0 0.0
    %1738 = vmatprep.subr.mxu0 0.0
    %1739 = vmatpush1.xpose.msra.mxu0 0.0
    %1740 = vmatprep.subr.mxu0 0.0
    %1741 = vmatpush1.xpose.msra.mxu0 0.0
    %1742 = vmatprep.subr.mxu0 0.0
    %1743 = vmatpush1.xpose.msra.mxu0 0.0
    %1744 = vmatprep.subr.mxu0 0.0
    %1745 = vmatpush1.xpose.msra.mxu0 0.0
    %1746 = vmatprep.mubr.f32.mxu0 0.0
    %v1747 = vand.u32 %v1672, 4294901760
    %v1748 = vsub.f32 %v1672, %v1747
    %v1749 = vand.u32 %v1748, 4294901760
    %v1750 = vsub.f32 %v1748, %v1749
    %v1751 = vand.u32 %v1750, 4294901760
    %1752 = vmatmul.mubr.f32.gmra.mrb[0].mxu0 %v1751
    %v1753 = vpop.f32.mrb[0].mxu0
    %v1754 = vadd.f32 0.0, %v1753
    %v1755 = vpop.f32.mrb[0].mxu0
    %1756 = vmatprep.mubr.f32.mxu0 0.0
    %v1757 = vand.u32 %v1674, 4294901760
    %v1758 = vsub.f32 %v1674, %v1757
    %v1759 = vand.u32 %v1758, 4294901760
    %v1760 = vsub.f32 %v1758, %v1759
    %v1761 = vand.u32 %v1760, 4294901760
    %1762 = vmatmul.mubr.f32.gmra.mrb[0].mxu0 %v1761
    %v1763 = vpop.f32.mrb[0].mxu0
    %v1764 = vadd.f32 0.0, %v1763
    %v1765 = vpop.f32.mrb[0].mxu0
    %1766 = vdwg.mxu0
    %1767 = vmatprep.subr.mxu0 0.0
    %v1768 = vand.u32 %v1676, 4294901760
    %v1769 = vsub.f32 %v1676, %v1768
    %v1770 = vand.u32 %v1769, 4294901760
    %v1771 = vsub.f32 %v1769, %v1770
    %v1772 = vand.u32 %v1771, 4294901760
    %1773 = vmatpush1.xpose.msra.mxu0 %v1772
    %1774 = vmatprep.subr.mxu0 0.0
    %v1775 = vand.u32 %v1678, 4294901760
    %v1776 = vsub.f32 %v1678, %v1775
    %v1777 = vand.u32 %v1776, 4294901760
    %v1778 = vsub.f32 %v1776, %v1777
    %v1779 = vand.u32 %v1778, 4294901760
    %1780 = vmatpush1.xpose.msra.mxu0 %v1779
    %1781 = vmatprep.subr.mxu0 0.0
    %1782 = vmatpush1.xpose.msra.mxu0 0.0
    %1783 = vmatprep.subr.mxu0 0.0
    %1784 = vmatpush1.xpose.msra.mxu0 0.0
    %1785 = vmatprep.subr.mxu0 0.0
    %1786 = vmatpush1.xpose.msra.mxu0 0.0
    %1787 = vmatprep.subr.mxu0 0.0
    %1788 = vmatpush1.xpose.msra.mxu0 0.0
    %1789 = vmatprep.subr.mxu0 0.0
    %1790 = vmatpush1.xpose.msra.mxu0 0.0
    %1791 = vmatprep.subr.mxu0 0.0
    %1792 = vmatpush1.xpose.msra.mxu0 0.0
    %1793 = vmatprep.subr.mxu0 0.0
    %1794 = vmatpush1.xpose.msra.mxu0 0.0
    %1795 = vmatprep.subr.mxu0 0.0
    %1796 = vmatpush1.xpose.msra.mxu0 0.0
    %1797 = vmatprep.subr.mxu0 0.0
    %1798 = vmatpush1.xpose.msra.mxu0 0.0
    %1799 = vmatprep.subr.mxu0 0.0
    %1800 = vmatpush1.xpose.msra.mxu0 0.0
    %1801 = vmatprep.subr.mxu0 0.0
    %1802 = vmatpush1.xpose.msra.mxu0 0.0
    %1803 = vmatprep.subr.mxu0 0.0
    %1804 = vmatpush1.xpose.msra.mxu0 0.0
    %1805 = vmatprep.subr.mxu0 0.0
    %1806 = vmatpush1.xpose.msra.mxu0 0.0
    %1807 = vmatprep.subr.mxu0 0.0
    %1808 = vmatpush1.xpose.msra.mxu0 0.0
    %1809 = vmatprep.subr.mxu0 0.0
    %1810 = vmatpush1.xpose.msra.mxu0 0.0
    %1811 = vmatprep.subr.mxu0 0.0
    %1812 = vmatpush1.xpose.msra.mxu0 0.0
    %1813 = vmatprep.subr.mxu0 0.0
    %1814 = vmatpush1.xpose.msra.mxu0 0.0
    %1815 = vmatprep.subr.mxu0 0.0
    %1816 = vmatpush1.xpose.msra.mxu0 0.0
    %1817 = vmatprep.subr.mxu0 0.0
    %1818 = vmatpush1.xpose.msra.mxu0 0.0
    %1819 = vmatprep.subr.mxu0 0.0
    %1820 = vmatpush1.xpose.msra.mxu0 0.0
    %1821 = vmatprep.subr.mxu0 0.0
    %1822 = vmatpush1.xpose.msra.mxu0 0.0
    %1823 = vmatprep.subr.mxu0 0.0
    %1824 = vmatpush1.xpose.msra.mxu0 0.0
    %1825 = vmatprep.subr.mxu0 0.0
    %1826 = vmatpush1.xpose.msra.mxu0 0.0
    %1827 = vmatprep.subr.mxu0 0.0
    %1828 = vmatpush1.xpose.msra.mxu0 0.0
    %1829 = vmatprep.subr.mxu0 0.0
    %1830 = vmatpush1.xpose.msra.mxu0 0.0
    %1831 = vmatprep.subr.mxu0 0.0
    %1832 = vmatpush1.xpose.msra.mxu0 0.0
    %1833 = vmatprep.subr.mxu0 0.0
    %1834 = vmatpush1.xpose.msra.mxu0 0.0
    %1835 = vmatprep.subr.mxu0 0.0
    %1836 = vmatpush1.xpose.msra.mxu0 0.0
    %1837 = vmatprep.subr.mxu0 0.0
    %1838 = vmatpush1.xpose.msra.mxu0 0.0
    %1839 = vmatprep.subr.mxu0 0.0
    %1840 = vmatpush1.xpose.msra.mxu0 0.0
    %1841 = vmatprep.mubr.f32.mxu0 0.0
    %v1842 = vand.u32 %v1672, 4294901760
    %1843 = vmatmul.mubr.f32.gmra.mrb[0].mxu0 %v1842
    %v1844 = vpop.f32.mrb[0].mxu0
    %v1845 = vadd.f32 %v1754, %v1844
    %v1846 = vpop.f32.mrb[0].mxu0
    %1847 = vmatprep.mubr.f32.mxu0 0.0
    %v1848 = vand.u32 %v1674, 4294901760
    %1849 = vmatmul.mubr.f32.gmra.mrb[0].mxu0 %v1848
    %v1850 = vpop.f32.mrb[0].mxu0
    %v1851 = vadd.f32 %v1764, %v1850
    %v1852 = vpop.f32.mrb[0].mxu0
    %1853 = vdwg.mxu0
    %1854 = vmatprep.subr.mxu0 0.0
    %v1855 = vand.u32 %v1676, 4294901760
    %v1856 = vsub.f32 %v1676, %v1855
    %1857 = vmatpush1.xpose.msra.mxu0 %v1856
    %1858 = vmatprep.subr.mxu0 0.0
    %v1859 = vand.u32 %v1678, 4294901760
    %v1860 = vsub.f32 %v1678, %v1859
    %1861 = vmatpush1.xpose.msra.mxu0 %v1860
    %1862 = vmatprep.subr.mxu0 0.0
    %1863 = vmatpush1.xpose.msra.mxu0 0.0
    %1864 = vmatprep.subr.mxu0 0.0
    %1865 = vmatpush1.xpose.msra.mxu0 0.0
    %1866 = vmatprep.subr.mxu0 0.0
    %1867 = vmatpush1.xpose.msra.mxu0 0.0
    %1868 = vmatprep.subr.mxu0 0.0
    %1869 = vmatpush1.xpose.msra.mxu0 0.0
    %1870 = vmatprep.subr.mxu0 0.0
    %1871 = vmatpush1.xpose.msra.mxu0 0.0
    %1872 = vmatprep.subr.mxu0 0.0
    %1873 = vmatpush1.xpose.msra.mxu0 0.0
    %1874 = vmatprep.subr.mxu0 0.0
    %1875 = vmatpush1.xpose.msra.mxu0 0.0
    %1876 = vmatprep.subr.mxu0 0.0
    %1877 = vmatpush1.xpose.msra.mxu0 0.0
    %1878 = vmatprep.subr.mxu0 0.0
    %1879 = vmatpush1.xpose.msra.mxu0 0.0
    %1880 = vmatprep.subr.mxu0 0.0
    %1881 = vmatpush1.xpose.msra.mxu0 0.0
    %1882 = vmatprep.subr.mxu0 0.0
    %1883 = vmatpush1.xpose.msra.mxu0 0.0
    %1884 = vmatprep.subr.mxu0 0.0
    %1885 = vmatpush1.xpose.msra.mxu0 0.0
    %1886 = vmatprep.subr.mxu0 0.0
    %1887 = vmatpush1.xpose.msra.mxu0 0.0
    %1888 = vmatprep.subr.mxu0 0.0
    %1889 = vmatpush1.xpose.msra.mxu0 0.0
    %1890 = vmatprep.subr.mxu0 0.0
    %1891 = vmatpush1.xpose.msra.mxu0 0.0
    %1892 = vmatprep.subr.mxu0 0.0
    %1893 = vmatpush1.xpose.msra.mxu0 0.0
    %1894 = vmatprep.subr.mxu0 0.0
    %1895 = vmatpush1.xpose.msra.mxu0 0.0
    %1896 = vmatprep.subr.mxu0 0.0
    %1897 = vmatpush1.xpose.msra.mxu0 0.0
    %1898 = vmatprep.subr.mxu0 0.0
    %1899 = vmatpush1.xpose.msra.mxu0 0.0
    %1900 = vmatprep.subr.mxu0 0.0
    %1901 = vmatpush1.xpose.msra.mxu0 0.0
    %1902 = vmatprep.subr.mxu0 0.0
    %1903 = vmatpush1.xpose.msra.mxu0 0.0
    %1904 = vmatprep.subr.mxu0 0.0
    %1905 = vmatpush1.xpose.msra.mxu0 0.0
    %1906 = vmatprep.subr.mxu0 0.0
    %1907 = vmatpush1.xpose.msra.mxu0 0.0
    %1908 = vmatprep.subr.mxu0 0.0
    %1909 = vmatpush1.xpose.msra.mxu0 0.0
    %1910 = vmatprep.subr.mxu0 0.0
    %1911 = vmatpush1.xpose.msra.mxu0 0.0
    %1912 = vmatprep.subr.mxu0 0.0
    %1913 = vmatpush1.xpose.msra.mxu0 0.0
    %1914 = vmatprep.subr.mxu0 0.0
    %1915 = vmatpush1.xpose.msra.mxu0 0.0
    %1916 = vmatprep.subr.mxu0 0.0
    %1917 = vmatpush1.xpose.msra.mxu0 0.0
    %1918 = vmatprep.subr.mxu0 0.0
    %1919 = vmatpush1.xpose.msra.mxu0 0.0
    %1920 = vmatprep.subr.mxu0 0.0
    %1921 = vmatpush1.xpose.msra.mxu0 0.0
    %1922 = vmatprep.mubr.f32.mxu0 0.0
    %v1923 = vand.u32 %v1672, 4294901760
    %v1924 = vsub.f32 %v1672, %v1923
    %1925 = vmatmul.mubr.f32.gmra.mrb[0].mxu0 %v1924
    %v1926 = vpop.f32.mrb[0].mxu0
    %v1927 = vadd.f32 %v1845, %v1926
    %v1928 = vpop.f32.mrb[0].mxu0
    %1929 = vmatprep.mubr.f32.mxu0 0.0
    %v1930 = vand.u32 %v1674, 4294901760
    %v1931 = vsub.f32 %v1674, %v1930
    %1932 = vmatmul.mubr.f32.gmra.mrb[0].mxu0 %v1931
    %v1933 = vpop.f32.mrb[0].mxu0
    %v1934 = vadd.f32 %v1851, %v1933
    %v1935 = vpop.f32.mrb[0].mxu0
    %1936 = vdwg.mxu0
    %1937 = vmatprep.subr.mxu0 0.0
    %v1938 = vand.u32 %v1676, 4294901760
    %1939 = vmatpush1.xpose.msra.mxu0 %v1938
    %1940 = vmatprep.subr.mxu0 0.0
    %v1941 = vand.u32 %v1678, 4294901760
    %1942 = vmatpush1.xpose.msra.mxu0 %v1941
    %1943 = vmatprep.subr.mxu0 0.0
    %1944 = vmatpush1.xpose.msra.mxu0 0.0
    %1945 = vmatprep.subr.mxu0 0.0
    %1946 = vmatpush1.xpose.msra.mxu0 0.0
    %1947 = vmatprep.subr.mxu0 0.0
    %1948 = vmatpush1.xpose.msra.mxu0 0.0
    %1949 = vmatprep.subr.mxu0 0.0
    %1950 = vmatpush1.xpose.msra.mxu0 0.0
    %1951 = vmatprep.subr.mxu0 0.0
    %1952 = vmatpush1.xpose.msra.mxu0 0.0
    %1953 = vmatprep.subr.mxu0 0.0
    %1954 = vmatpush1.xpose.msra.mxu0 0.0
    %1955 = vmatprep.subr.mxu0 0.0
    %1956 = vmatpush1.xpose.msra.mxu0 0.0
    %1957 = vmatprep.subr.mxu0 0.0
    %1958 = vmatpush1.xpose.msra.mxu0 0.0
    %1959 = vmatprep.subr.mxu0 0.0
    %1960 = vmatpush1.xpose.msra.mxu0 0.0
    %1961 = vmatprep.subr.mxu0 0.0
    %1962 = vmatpush1.xpose.msra.mxu0 0.0
    %1963 = vmatprep.subr.mxu0 0.0
    %1964 = vmatpush1.xpose.msra.mxu0 0.0
    %1965 = vmatprep.subr.mxu0 0.0
    %1966 = vmatpush1.xpose.msra.mxu0 0.0
    %1967 = vmatprep.subr.mxu0 0.0
    %1968 = vmatpush1.xpose.msra.mxu0 0.0
    %1969 = vmatprep.subr.mxu0 0.0
    %1970 = vmatpush1.xpose.msra.mxu0 0.0
    %1971 = vmatprep.subr.mxu0 0.0
    %1972 = vmatpush1.xpose.msra.mxu0 0.0
    %1973 = vmatprep.subr.mxu0 0.0
    %1974 = vmatpush1.xpose.msra.mxu0 0.0
    %1975 = vmatprep.subr.mxu0 0.0
    %1976 = vmatpush1.xpose.msra.mxu0 0.0
    %1977 = vmatprep.subr.mxu0 0.0
    %1978 = vmatpush1.xpose.msra.mxu0 0.0
    %1979 = vmatprep.subr.mxu0 0.0
    %1980 = vmatpush1.xpose.msra.mxu0 0.0
    %1981 = vmatprep.subr.mxu0 0.0
    %1982 = vmatpush1.xpose.msra.mxu0 0.0
    %1983 = vmatprep.subr.mxu0 0.0
    %1984 = vmatpush1.xpose.msra.mxu0 0.0
    %1985 = vmatprep.subr.mxu0 0.0
    %1986 = vmatpush1.xpose.msra.mxu0 0.0
    %1987 = vmatprep.subr.mxu0 0.0
    %1988 = vmatpush1.xpose.msra.mxu0 0.0
    %1989 = vmatprep.subr.mxu0 0.0
    %1990 = vmatpush1.xpose.msra.mxu0 0.0
    %1991 = vmatprep.subr.mxu0 0.0
    %1992 = vmatpush1.xpose.msra.mxu0 0.0
    %1993 = vmatprep.subr.mxu0 0.0
    %1994 = vmatpush1.xpose.msra.mxu0 0.0
    %1995 = vmatprep.subr.mxu0 0.0
    %1996 = vmatpush1.xpose.msra.mxu0 0.0
    %1997 = vmatprep.subr.mxu0 0.0
    %1998 = vmatpush1.xpose.msra.mxu0 0.0
    %1999 = vmatprep.subr.mxu0 0.0
    %2000 = vmatpush1.xpose.msra.mxu0 0.0
    %2001 = vmatprep.subr.mxu0 0.0
    %2002 = vmatpush1.xpose.msra.mxu0 0.0
    %2003 = vmatprep.mubr.f32.mxu0 0.0
    %v2004 = vand.u32 %v1672, 4294901760
    %v2005 = vsub.f32 %v1672, %v2004
    %v2006 = vand.u32 %v2005, 4294901760
    %2007 = vmatmul.mubr.f32.gmra.mrb[0].mxu0 %v2006
    %v2008 = vpop.f32.mrb[0].mxu0
    %v2009 = vadd.f32 %v1927, %v2008
    %v2010 = vpop.f32.mrb[0].mxu0
    %2011 = vmatprep.mubr.f32.mxu0 0.0
    %v2012 = vand.u32 %v1674, 4294901760
    %v2013 = vsub.f32 %v1674, %v2012
    %v2014 = vand.u32 %v2013, 4294901760
    %2015 = vmatmul.mubr.f32.gmra.mrb[0].mxu0 %v2014
    %v2016 = vpop.f32.mrb[0].mxu0
    %v2017 = vadd.f32 %v1934, %v2016
    %v2018 = vpop.f32.mrb[0].mxu0
    %2019 = vdwg.mxu0
    %2020 = vmatprep.subr.mxu0 0.0
    %v2021 = vand.u32 %v1676, 4294901760
    %v2022 = vsub.f32 %v1676, %v2021
    %v2023 = vand.u32 %v2022, 4294901760
    %2024 = vmatpush1.xpose.msra.mxu0 %v2023
    %2025 = vmatprep.subr.mxu0 0.0
    %v2026 = vand.u32 %v1678, 4294901760
    %v2027 = vsub.f32 %v1678, %v2026
    %v2028 = vand.u32 %v2027, 4294901760
    %2029 = vmatpush1.xpose.msra.mxu0 %v2028
    %2030 = vmatprep.subr.mxu0 0.0
    %2031 = vmatpush1.xpose.msra.mxu0 0.0
    %2032 = vmatprep.subr.mxu0 0.0
    %2033 = vmatpush1.xpose.msra.mxu0 0.0
    %2034 = vmatprep.subr.mxu0 0.0
    %2035 = vmatpush1.xpose.msra.mxu0 0.0
    %2036 = vmatprep.subr.mxu0 0.0
    %2037 = vmatpush1.xpose.msra.mxu0 0.0
    %2038 = vmatprep.subr.mxu0 0.0
    %2039 = vmatpush1.xpose.msra.mxu0 0.0
    %2040 = vmatprep.subr.mxu0 0.0
    %2041 = vmatpush1.xpose.msra.mxu0 0.0
    %2042 = vmatprep.subr.mxu0 0.0
    %2043 = vmatpush1.xpose.msra.mxu0 0.0
    %2044 = vmatprep.subr.mxu0 0.0
    %2045 = vmatpush1.xpose.msra.mxu0 0.0
    %2046 = vmatprep.subr.mxu0 0.0
    %2047 = vmatpush1.xpose.msra.mxu0 0.0
    %2048 = vmatprep.subr.mxu0 0.0
    %2049 = vmatpush1.xpose.msra.mxu0 0.0
    %2050 = vmatprep.subr.mxu0 0.0
    %2051 = vmatpush1.xpose.msra.mxu0 0.0
    %2052 = vmatprep.subr.mxu0 0.0
    %2053 = vmatpush1.xpose.msra.mxu0 0.0
    %2054 = vmatprep.subr.mxu0 0.0
    %2055 = vmatpush1.xpose.msra.mxu0 0.0
    %2056 = vmatprep.subr.mxu0 0.0
    %2057 = vmatpush1.xpose.msra.mxu0 0.0
    %2058 = vmatprep.subr.mxu0 0.0
    %2059 = vmatpush1.xpose.msra.mxu0 0.0
    %2060 = vmatprep.subr.mxu0 0.0
    %2061 = vmatpush1.xpose.msra.mxu0 0.0
    %2062 = vmatprep.subr.mxu0 0.0
    %2063 = vmatpush1.xpose.msra.mxu0 0.0
    %2064 = vmatprep.subr.mxu0 0.0
    %2065 = vmatpush1.xpose.msra.mxu0 0.0
    %2066 = vmatprep.subr.mxu0 0.0
    %2067 = vmatpush1.xpose.msra.mxu0 0.0
    %2068 = vmatprep.subr.mxu0 0.0
    %2069 = vmatpush1.xpose.msra.mxu0 0.0
    %2070 = vmatprep.subr.mxu0 0.0
    %2071 = vmatpush1.xpose.msra.mxu0 0.0
    %2072 = vmatprep.subr.mxu0 0.0
    %2073 = vmatpush1.xpose.msra.mxu0 0.0
    %2074 = vmatprep.subr.mxu0 0.0
    %2075 = vmatpush1.xpose.msra.mxu0 0.0
    %2076 = vmatprep.subr.mxu0 0.0
    %2077 = vmatpush1.xpose.msra.mxu0 0.0
    %2078 = vmatprep.subr.mxu0 0.0
    %2079 = vmatpush1.xpose.msra.mxu0 0.0
    %2080 = vmatprep.subr.mxu0 0.0
    %2081 = vmatpush1.xpose.msra.mxu0 0.0
    %2082 = vmatprep.subr.mxu0 0.0
    %2083 = vmatpush1.xpose.msra.mxu0 0.0
    %2084 = vmatprep.subr.mxu0 0.0
    %2085 = vmatpush1.xpose.msra.mxu0 0.0
    %2086 = vmatprep.subr.mxu0 0.0
    %2087 = vmatpush1.xpose.msra.mxu0 0.0
    %2088 = vmatprep.subr.mxu0 0.0
    %2089 = vmatpush1.xpose.msra.mxu0 0.0
    %2090 = vmatprep.mubr.f32.mxu0 0.0
    %v2091 = vand.u32 %v1672, 4294901760
    %2092 = vmatmul.mubr.f32.gmra.mrb[0].mxu0 %v2091
    %v2093 = vpop.f32.mrb[0].mxu0
    %v2094 = vadd.f32 %v2009, %v2093
    %v2095 = vpop.f32.mrb[0].mxu0
    %2096 = vmatprep.mubr.f32.mxu0 0.0
    %v2097 = vand.u32 %v1674, 4294901760
    %2098 = vmatmul.mubr.f32.gmra.mrb[0].mxu0 %v2097
    %v2099 = vpop.f32.mrb[0].mxu0
    %v2100 = vadd.f32 %v2017, %v2099
    %v2101 = vpop.f32.mrb[0].mxu0
    %2102 = vdwg.mxu0
    %2103 = vmatprep.subr.mxu0 0.0
    %v2104 = vand.u32 %v1676, 4294901760
    %2105 = vmatpush1.xpose.msra.mxu0 %v2104
    %2106 = vmatprep.subr.mxu0 0.0
    %v2107 = vand.u32 %v1678, 4294901760
    %2108 = vmatpush1.xpose.msra.mxu0 %v2107
    %2109 = vmatprep.subr.mxu0 0.0
    %2110 = vmatpush1.xpose.msra.mxu0 0.0
    %2111 = vmatprep.subr.mxu0 0.0
    %2112 = vmatpush1.xpose.msra.mxu0 0.0
    %2113 = vmatprep.subr.mxu0 0.0
    %2114 = vmatpush1.xpose.msra.mxu0 0.0
    %2115 = vmatprep.subr.mxu0 0.0
    %2116 = vmatpush1.xpose.msra.mxu0 0.0
    %2117 = vmatprep.subr.mxu0 0.0
    %2118 = vmatpush1.xpose.msra.mxu0 0.0
    %2119 = vmatprep.subr.mxu0 0.0
    %2120 = vmatpush1.xpose.msra.mxu0 0.0
    %2121 = vmatprep.subr.mxu0 0.0
    %2122 = vmatpush1.xpose.msra.mxu0 0.0
    %2123 = vmatprep.subr.mxu0 0.0
    %2124 = vmatpush1.xpose.msra.mxu0 0.0
    %2125 = vmatprep.subr.mxu0 0.0
    %2126 = vmatpush1.xpose.msra.mxu0 0.0
    %2127 = vmatprep.subr.mxu0 0.0
    %2128 = vmatpush1.xpose.msra.mxu0 0.0
    %2129 = vmatprep.subr.mxu0 0.0
    %2130 = vmatpush1.xpose.msra.mxu0 0.0
    %2131 = vmatprep.subr.mxu0 0.0
    %2132 = vmatpush1.xpose.msra.mxu0 0.0
    %2133 = vmatprep.subr.mxu0 0.0
    %2134 = vmatpush1.xpose.msra.mxu0 0.0
    %2135 = vmatprep.subr.mxu0 0.0
    %2136 = vmatpush1.xpose.msra.mxu0 0.0
    %2137 = vmatprep.subr.mxu0 0.0
    %2138 = vmatpush1.xpose.msra.mxu0 0.0
    %2139 = vmatprep.subr.mxu0 0.0
    %2140 = vmatpush1.xpose.msra.mxu0 0.0
    %2141 = vmatprep.subr.mxu0 0.0
    %2142 = vmatpush1.xpose.msra.mxu0 0.0
    %2143 = vmatprep.subr.mxu0 0.0
    %2144 = vmatpush1.xpose.msra.mxu0 0.0
    %2145 = vmatprep.subr.mxu0 0.0
    %2146 = vmatpush1.xpose.msra.mxu0 0.0
    %2147 = vmatprep.subr.mxu0 0.0
    %2148 = vmatpush1.xpose.msra.mxu0 0.0
    %2149 = vmatprep.subr.mxu0 0.0
    %2150 = vmatpush1.xpose.msra.mxu0 0.0
    %2151 = vmatprep.subr.mxu0 0.0
    %2152 = vmatpush1.xpose.msra.mxu0 0.0
    %2153 = vmatprep.subr.mxu0 0.0
    %2154 = vmatpush1.xpose.msra.mxu0 0.0
    %2155 = vmatprep.subr.mxu0 0.0
    %2156 = vmatpush1.xpose.msra.mxu0 0.0
    %2157 = vmatprep.subr.mxu0 0.0
    %2158 = vmatpush1.xpose.msra.mxu0 0.0
    %2159 = vmatprep.subr.mxu0 0.0
    %2160 = vmatpush1.xpose.msra.mxu0 0.0
    %2161 = vmatprep.subr.mxu0 0.0
    %2162 = vmatpush1.xpose.msra.mxu0 0.0
    %2163 = vmatprep.subr.mxu0 0.0
    %2164 = vmatpush1.xpose.msra.mxu0 0.0
    %2165 = vmatprep.subr.mxu0 0.0
    %2166 = vmatpush1.xpose.msra.mxu0 0.0
    %2167 = vmatprep.subr.mxu0 0.0
    %2168 = vmatpush1.xpose.msra.mxu0 0.0
    %2169 = vmatprep.mubr.f32.mxu0 0.0
    %v2170 = vand.u32 %v1672, 4294901760
    %2171 = vmatmul.mubr.f32.gmra.mrb[0].mxu0 %v2170
    %v2172 = vpop.f32.mrb[0].mxu0
    %v2173 = vadd.f32 %v2094, %v2172
    %v2174 = vpop.f32.mrb[0].mxu0
    %2175 = vmatprep.mubr.f32.mxu0 0.0
    %v2176 = vand.u32 %v1674, 4294901760
    %2177 = vmatmul.mubr.f32.gmra.mrb[0].mxu0 %v2176
    %v2178 = vpop.f32.mrb[0].mxu0
    %v2179 = vadd.f32 %v2100, %v2178
    %v2180 = vpop.f32.mrb[0].mxu0
    %2181 = vdwg.mxu0
    %v2182 = vmul.f32 %v2173, 0.35355338
    %v2183 = vmul.f32 %v2179, 0.35355338
    %v2184 = vadd.f32 %v2182, %v1120
    %v2185 = vadd.f32 %v2183, %v1122
    %v2186 = vsel %vm1127, %v2184, -inf
    %2187 = vmax.xlane.f32.xlu0 %v2186
    %v2188 = vpop.xlane.xlu0 %2187
    %v2189 = vsel %vm1127, %v2185, -inf
    %2190 = vmax.xlane.f32.xlu0 %v2189
    %v2191 = vpop.xlane.xlu0 %2190
    %v2192 = vsub.f32 %v2184, %v2188
    %v2193 = vsub.f32 %v2185, %v2191
    %v2194 = vmul.f32 %v2192, 1.442695
    %v2195 = vpow.pop %v2194
    %v2196 = vmul.f32 %v2193, 1.442695
    %v2197 = vpow.pop %v2196
    %v2198 = vsel %vm1127, %v2195, 0.0
    %2199 = vadd.xlane.f32.xlu0 %v2198
    %v2200 = vpop.xlane.xlu0 %2199
    %v2201 = vsel %vm1127, %v2197, 0.0
    %2202 = vadd.xlane.f32.xlu0 %v2201
    %v2203 = vpop.xlane.xlu0 %2202
    %v2204 = vrcp.pop %v2200
    %v2205 = vmul.f32 %v2195, %v2204
    %v2206 = vrcp.pop %v2203
    %v2207 = vmul.f32 %v2197, %v2206
    %2208 = vrot.lane.b32.xlu0 %v589, 56
    %v2209 = vpop.permute.xlu0 %2208
    %2210 = vrot.lane.b32.xlu0 %v595, 56
    %v2211 = vpop.permute.xlu0 %2210
    %v2215 = vsel %vm1127, %v2205, 0
    %v2218 = vsel %vm1127, %v2207, 0
    %2220 = vmatprep.subr.mxu0 0.0
    %v2221 = vand.u32 %v2209, 4294901760
    %2222 = vmatpush1.msra.mxu0 %v2221
    %2223 = vmatprep.subr.mxu0 0.0
    %v2224 = vand.u32 %v2211, 4294901760
    %2225 = vmatpush1.msra.mxu0 %v2224
    %2226 = vmatprep.subr.mxu0 0.0
    %2227 = vmatpush1.msra.mxu0 0.0
    %2228 = vmatprep.subr.mxu0 0.0
    %2229 = vmatpush1.msra.mxu0 0.0
    %2230 = vmatprep.subr.mxu0 0.0
    %2231 = vmatpush1.msra.mxu0 0.0
    %2232 = vmatprep.subr.mxu0 0.0
    %2233 = vmatpush1.msra.mxu0 0.0
    %2234 = vmatprep.subr.mxu0 0.0
    %2235 = vmatpush1.msra.mxu0 0.0
    %2236 = vmatprep.subr.mxu0 0.0
    %2237 = vmatpush1.msra.mxu0 0.0
    %2238 = vmatprep.subr.mxu0 0.0
    %2239 = vmatpush1.msra.mxu0 0.0
    %2240 = vmatprep.subr.mxu0 0.0
    %2241 = vmatpush1.msra.mxu0 0.0
    %2242 = vmatprep.subr.mxu0 0.0
    %2243 = vmatpush1.msra.mxu0 0.0
    %2244 = vmatprep.subr.mxu0 0.0
    %2245 = vmatpush1.msra.mxu0 0.0
    %2246 = vmatprep.subr.mxu0 0.0
    %2247 = vmatpush1.msra.mxu0 0.0
    %2248 = vmatprep.subr.mxu0 0.0
    %2249 = vmatpush1.msra.mxu0 0.0
    %2250 = vmatprep.subr.mxu0 0.0
    %2251 = vmatpush1.msra.mxu0 0.0
    %2252 = vmatprep.subr.mxu0 0.0
    %2253 = vmatpush1.msra.mxu0 0.0
    %2254 = vmatprep.subr.mxu0 0.0
    %2255 = vmatpush1.msra.mxu0 0.0
    %2256 = vmatprep.subr.mxu0 0.0
    %2257 = vmatpush1.msra.mxu0 0.0
    %2258 = vmatprep.subr.mxu0 0.0
    %2259 = vmatpush1.msra.mxu0 0.0
    %2260 = vmatprep.subr.mxu0 0.0
    %2261 = vmatpush1.msra.mxu0 0.0
    %2262 = vmatprep.subr.mxu0 0.0
    %2263 = vmatpush1.msra.mxu0 0.0
    %2264 = vmatprep.subr.mxu0 0.0
    %2265 = vmatpush1.msra.mxu0 0.0
    %2266 = vmatprep.subr.mxu0 0.0
    %2267 = vmatpush1.msra.mxu0 0.0
    %2268 = vmatprep.subr.mxu0 0.0
    %2269 = vmatpush1.msra.mxu0 0.0
    %2270 = vmatprep.subr.mxu0 0.0
    %2271 = vmatpush1.msra.mxu0 0.0
    %2272 = vmatprep.subr.mxu0 0.0
    %2273 = vmatpush1.msra.mxu0 0.0
    %2274 = vmatprep.subr.mxu0 0.0
    %2275 = vmatpush1.msra.mxu0 0.0
    %2276 = vmatprep.subr.mxu0 0.0
    %2277 = vmatpush1.msra.mxu0 0.0
    %2278 = vmatprep.subr.mxu0 0.0
    %2279 = vmatpush1.msra.mxu0 0.0
    %2280 = vmatprep.subr.mxu0 0.0
    %2281 = vmatpush1.msra.mxu0 0.0
    %2282 = vmatprep.subr.mxu0 0.0
    %2283 = vmatpush1.msra.mxu0 0.0
    %2284 = vmatprep.subr.mxu0 0.0
    %2285 = vmatpush1.msra.mxu0 0.0
    %2286 = vmatprep.mubr.f32.mxu0 0.0
    %v2287 = vand.u32 %v2215, 4294901760
    %v2288 = vsub.f32 %v2215, %v2287
    %v2289 = vand.u32 %v2288, 4294901760
    %v2290 = vsub.f32 %v2288, %v2289
    %v2291 = vand.u32 %v2290, 4294901760
    %2292 = vmatmul.mubr.f32.gmra.mrb[0].mxu0 %v2291
    %v2293 = vpop.f32.mrb[0].mxu0
    %v2294 = vadd.f32 0.0, %v2293
    %v2295 = vpop.f32.mrb[0].mxu0
    %2296 = vmatprep.mubr.f32.mxu0 0.0
    %v2297 = vand.u32 %v2218, 4294901760
    %v2298 = vsub.f32 %v2218, %v2297
    %v2299 = vand.u32 %v2298, 4294901760
    %v2300 = vsub.f32 %v2298, %v2299
    %v2301 = vand.u32 %v2300, 4294901760
    %2302 = vmatmul.mubr.f32.gmra.mrb[0].mxu0 %v2301
    %v2303 = vpop.f32.mrb[0].mxu0
    %v2304 = vadd.f32 0.0, %v2303
    %v2305 = vpop.f32.mrb[0].mxu0
    %2306 = vdwg.mxu0
    %2307 = vmatprep.subr.mxu0 0.0
    %v2308 = vand.u32 %v2209, 4294901760
    %v2309 = vsub.f32 %v2209, %v2308
    %v2310 = vand.u32 %v2309, 4294901760
    %v2311 = vsub.f32 %v2309, %v2310
    %v2312 = vand.u32 %v2311, 4294901760
    %2313 = vmatpush1.msra.mxu0 %v2312
    %2314 = vmatprep.subr.mxu0 0.0
    %v2315 = vand.u32 %v2211, 4294901760
    %v2316 = vsub.f32 %v2211, %v2315
    %v2317 = vand.u32 %v2316, 4294901760
    %v2318 = vsub.f32 %v2316, %v2317
    %v2319 = vand.u32 %v2318, 4294901760
    %2320 = vmatpush1.msra.mxu0 %v2319
    %2321 = vmatprep.subr.mxu0 0.0
    %2322 = vmatpush1.msra.mxu0 0.0
    %2323 = vmatprep.subr.mxu0 0.0
    %2324 = vmatpush1.msra.mxu0 0.0
    %2325 = vmatprep.subr.mxu0 0.0
    %2326 = vmatpush1.msra.mxu0 0.0
    %2327 = vmatprep.subr.mxu0 0.0
    %2328 = vmatpush1.msra.mxu0 0.0
    %2329 = vmatprep.subr.mxu0 0.0
    %2330 = vmatpush1.msra.mxu0 0.0
    %2331 = vmatprep.subr.mxu0 0.0
    %2332 = vmatpush1.msra.mxu0 0.0
    %2333 = vmatprep.subr.mxu0 0.0
    %2334 = vmatpush1.msra.mxu0 0.0
    %2335 = vmatprep.subr.mxu0 0.0
    %2336 = vmatpush1.msra.mxu0 0.0
    %2337 = vmatprep.subr.mxu0 0.0
    %2338 = vmatpush1.msra.mxu0 0.0
    %2339 = vmatprep.subr.mxu0 0.0
    %2340 = vmatpush1.msra.mxu0 0.0
    %2341 = vmatprep.subr.mxu0 0.0
    %2342 = vmatpush1.msra.mxu0 0.0
    %2343 = vmatprep.subr.mxu0 0.0
    %2344 = vmatpush1.msra.mxu0 0.0
    %2345 = vmatprep.subr.mxu0 0.0
    %2346 = vmatpush1.msra.mxu0 0.0
    %2347 = vmatprep.subr.mxu0 0.0
    %2348 = vmatpush1.msra.mxu0 0.0
    %2349 = vmatprep.subr.mxu0 0.0
    %2350 = vmatpush1.msra.mxu0 0.0
    %2351 = vmatprep.subr.mxu0 0.0
    %2352 = vmatpush1.msra.mxu0 0.0
    %2353 = vmatprep.subr.mxu0 0.0
    %2354 = vmatpush1.msra.mxu0 0.0
    %2355 = vmatprep.subr.mxu0 0.0
    %2356 = vmatpush1.msra.mxu0 0.0
    %2357 = vmatprep.subr.mxu0 0.0
    %2358 = vmatpush1.msra.mxu0 0.0
    %2359 = vmatprep.subr.mxu0 0.0
    %2360 = vmatpush1.msra.mxu0 0.0
    %2361 = vmatprep.subr.mxu0 0.0
    %2362 = vmatpush1.msra.mxu0 0.0
    %2363 = vmatprep.subr.mxu0 0.0
    %2364 = vmatpush1.msra.mxu0 0.0
    %2365 = vmatprep.subr.mxu0 0.0
    %2366 = vmatpush1.msra.mxu0 0.0
    %2367 = vmatprep.subr.mxu0 0.0
    %2368 = vmatpush1.msra.mxu0 0.0
    %2369 = vmatprep.subr.mxu0 0.0
    %2370 = vmatpush1.msra.mxu0 0.0
    %2371 = vmatprep.subr.mxu0 0.0
    %2372 = vmatpush1.msra.mxu0 0.0
    %2373 = vmatprep.subr.mxu0 0.0
    %2374 = vmatpush1.msra.mxu0 0.0
    %2375 = vmatprep.subr.mxu0 0.0
    %2376 = vmatpush1.msra.mxu0 0.0
    %2377 = vmatprep.subr.mxu0 0.0
    %2378 = vmatpush1.msra.mxu0 0.0
    %2379 = vmatprep.subr.mxu0 0.0
    %2380 = vmatpush1.msra.mxu0 0.0
    %2381 = vmatprep.mubr.f32.mxu0 0.0
    %v2382 = vand.u32 %v2215, 4294901760
    %2383 = vmatmul.mubr.f32.gmra.mrb[0].mxu0 %v2382
    %v2384 = vpop.f32.mrb[0].mxu0
    %v2385 = vadd.f32 %v2294, %v2384
    %v2386 = vpop.f32.mrb[0].mxu0
    %2387 = vmatprep.mubr.f32.mxu0 0.0
    %v2388 = vand.u32 %v2218, 4294901760
    %2389 = vmatmul.mubr.f32.gmra.mrb[0].mxu0 %v2388
    %v2390 = vpop.f32.mrb[0].mxu0
    %v2391 = vadd.f32 %v2304, %v2390
    %v2392 = vpop.f32.mrb[0].mxu0
    %2393 = vdwg.mxu0
    %2394 = vmatprep.subr.mxu0 0.0
    %v2395 = vand.u32 %v2209, 4294901760
    %v2396 = vsub.f32 %v2209, %v2395
    %2397 = vmatpush1.msra.mxu0 %v2396
    %2398 = vmatprep.subr.mxu0 0.0
    %v2399 = vand.u32 %v2211, 4294901760
    %v2400 = vsub.f32 %v2211, %v2399
    %2401 = vmatpush1.msra.mxu0 %v2400
    %2402 = vmatprep.subr.mxu0 0.0
    %2403 = vmatpush1.msra.mxu0 0.0
    %2404 = vmatprep.subr.mxu0 0.0
    %2405 = vmatpush1.msra.mxu0 0.0
    %2406 = vmatprep.subr.mxu0 0.0
    %2407 = vmatpush1.msra.mxu0 0.0
    %2408 = vmatprep.subr.mxu0 0.0
    %2409 = vmatpush1.msra.mxu0 0.0
    %2410 = vmatprep.subr.mxu0 0.0
    %2411 = vmatpush1.msra.mxu0 0.0
    %2412 = vmatprep.subr.mxu0 0.0
    %2413 = vmatpush1.msra.mxu0 0.0
    %2414 = vmatprep.subr.mxu0 0.0
    %2415 = vmatpush1.msra.mxu0 0.0
    %2416 = vmatprep.subr.mxu0 0.0
    %2417 = vmatpush1.msra.mxu0 0.0
    %2418 = vmatprep.subr.mxu0 0.0
    %2419 = vmatpush1.msra.mxu0 0.0
    %2420 = vmatprep.subr.mxu0 0.0
    %2421 = vmatpush1.msra.mxu0 0.0
    %2422 = vmatprep.subr.mxu0 0.0
    %2423 = vmatpush1.msra.mxu0 0.0
    %2424 = vmatprep.subr.mxu0 0.0
    %2425 = vmatpush1.msra.mxu0 0.0
    %2426 = vmatprep.subr.mxu0 0.0
    %2427 = vmatpush1.msra.mxu0 0.0
    %2428 = vmatprep.subr.mxu0 0.0
    %2429 = vmatpush1.msra.mxu0 0.0
    %2430 = vmatprep.subr.mxu0 0.0
    %2431 = vmatpush1.msra.mxu0 0.0
    %2432 = vmatprep.subr.mxu0 0.0
    %2433 = vmatpush1.msra.mxu0 0.0
    %2434 = vmatprep.subr.mxu0 0.0
    %2435 = vmatpush1.msra.mxu0 0.0
    %2436 = vmatprep.subr.mxu0 0.0
    %2437 = vmatpush1.msra.mxu0 0.0
    %2438 = vmatprep.subr.mxu0 0.0
    %2439 = vmatpush1.msra.mxu0 0.0
    %2440 = vmatprep.subr.mxu0 0.0
    %2441 = vmatpush1.msra.mxu0 0.0
    %2442 = vmatprep.subr.mxu0 0.0
    %2443 = vmatpush1.msra.mxu0 0.0
    %2444 = vmatprep.subr.mxu0 0.0
    %2445 = vmatpush1.msra.mxu0 0.0
    %2446 = vmatprep.subr.mxu0 0.0
    %2447 = vmatpush1.msra.mxu0 0.0
    %2448 = vmatprep.subr.mxu0 0.0
    %2449 = vmatpush1.msra.mxu0 0.0
    %2450 = vmatprep.subr.mxu0 0.0
    %2451 = vmatpush1.msra.mxu0 0.0
    %2452 = vmatprep.subr.mxu0 0.0
    %2453 = vmatpush1.msra.mxu0 0.0
    %2454 = vmatprep.subr.mxu0 0.0
    %2455 = vmatpush1.msra.mxu0 0.0
    %2456 = vmatprep.subr.mxu0 0.0
    %2457 = vmatpush1.msra.mxu0 0.0
    %2458 = vmatprep.subr.mxu0 0.0
    %2459 = vmatpush1.msra.mxu0 0.0
    %2460 = vmatprep.subr.mxu0 0.0
    %2461 = vmatpush1.msra.mxu0 0.0
    %2462 = vmatprep.mubr.f32.mxu0 0.0
    %v2463 = vand.u32 %v2215, 4294901760
    %v2464 = vsub.f32 %v2215, %v2463
    %2465 = vmatmul.mubr.f32.gmra.mrb[0].mxu0 %v2464
    %v2466 = vpop.f32.mrb[0].mxu0
    %v2467 = vadd.f32 %v2385, %v2466
    %v2468 = vpop.f32.mrb[0].mxu0
    %2469 = vmatprep.mubr.f32.mxu0 0.0
    %v2470 = vand.u32 %v2218, 4294901760
    %v2471 = vsub.f32 %v2218, %v2470
    %2472 = vmatmul.mubr.f32.gmra.mrb[0].mxu0 %v2471
    %v2473 = vpop.f32.mrb[0].mxu0
    %v2474 = vadd.f32 %v2391, %v2473
    %v2475 = vpop.f32.mrb[0].mxu0
    %2476 = vdwg.mxu0
    %2477 = vmatprep.subr.mxu0 0.0
    %v2478 = vand.u32 %v2209, 4294901760
    %2479 = vmatpush1.msra.mxu0 %v2478
    %2480 = vmatprep.subr.mxu0 0.0
    %v2481 = vand.u32 %v2211, 4294901760
    %2482 = vmatpush1.msra.mxu0 %v2481
    %2483 = vmatprep.subr.mxu0 0.0
    %2484 = vmatpush1.msra.mxu0 0.0
    %2485 = vmatprep.subr.mxu0 0.0
    %2486 = vmatpush1.msra.mxu0 0.0
    %2487 = vmatprep.subr.mxu0 0.0
    %2488 = vmatpush1.msra.mxu0 0.0
    %2489 = vmatprep.subr.mxu0 0.0
    %2490 = vmatpush1.msra.mxu0 0.0
    %2491 = vmatprep.subr.mxu0 0.0
    %2492 = vmatpush1.msra.mxu0 0.0
    %2493 = vmatprep.subr.mxu0 0.0
    %2494 = vmatpush1.msra.mxu0 0.0
    %2495 = vmatprep.subr.mxu0 0.0
    %2496 = vmatpush1.msra.mxu0 0.0
    %2497 = vmatprep.subr.mxu0 0.0
    %2498 = vmatpush1.msra.mxu0 0.0
    %2499 = vmatprep.subr.mxu0 0.0
    %2500 = vmatpush1.msra.mxu0 0.0
    %2501 = vmatprep.subr.mxu0 0.0
    %2502 = vmatpush1.msra.mxu0 0.0
    %2503 = vmatprep.subr.mxu0 0.0
    %2504 = vmatpush1.msra.mxu0 0.0
    %2505 = vmatprep.subr.mxu0 0.0
    %2506 = vmatpush1.msra.mxu0 0.0
    %2507 = vmatprep.subr.mxu0 0.0
    %2508 = vmatpush1.msra.mxu0 0.0
    %2509 = vmatprep.subr.mxu0 0.0
    %2510 = vmatpush1.msra.mxu0 0.0
    %2511 = vmatprep.subr.mxu0 0.0
    %2512 = vmatpush1.msra.mxu0 0.0
    %2513 = vmatprep.subr.mxu0 0.0
    %2514 = vmatpush1.msra.mxu0 0.0
    %2515 = vmatprep.subr.mxu0 0.0
    %2516 = vmatpush1.msra.mxu0 0.0
    %2517 = vmatprep.subr.mxu0 0.0
    %2518 = vmatpush1.msra.mxu0 0.0
    %2519 = vmatprep.subr.mxu0 0.0
    %2520 = vmatpush1.msra.mxu0 0.0
    %2521 = vmatprep.subr.mxu0 0.0
    %2522 = vmatpush1.msra.mxu0 0.0
    %2523 = vmatprep.subr.mxu0 0.0
    %2524 = vmatpush1.msra.mxu0 0.0
    %2525 = vmatprep.subr.mxu0 0.0
    %2526 = vmatpush1.msra.mxu0 0.0
    %2527 = vmatprep.subr.mxu0 0.0
    %2528 = vmatpush1.msra.mxu0 0.0
    %2529 = vmatprep.subr.mxu0 0.0
    %2530 = vmatpush1.msra.mxu0 0.0
    %2531 = vmatprep.subr.mxu0 0.0
    %2532 = vmatpush1.msra.mxu0 0.0
    %2533 = vmatprep.subr.mxu0 0.0
    %2534 = vmatpush1.msra.mxu0 0.0
    %2535 = vmatprep.subr.mxu0 0.0
    %2536 = vmatpush1.msra.mxu0 0.0
    %2537 = vmatprep.subr.mxu0 0.0
    %2538 = vmatpush1.msra.mxu0 0.0
    %2539 = vmatprep.subr.mxu0 0.0
    %2540 = vmatpush1.msra.mxu0 0.0
    %2541 = vmatprep.subr.mxu0 0.0
    %2542 = vmatpush1.msra.mxu0 0.0
    %2543 = vmatprep.mubr.f32.mxu0 0.0
    %v2544 = vand.u32 %v2215, 4294901760
    %v2545 = vsub.f32 %v2215, %v2544
    %v2546 = vand.u32 %v2545, 4294901760
    %2547 = vmatmul.mubr.f32.gmra.mrb[0].mxu0 %v2546
    %v2548 = vpop.f32.mrb[0].mxu0
    %v2549 = vadd.f32 %v2467, %v2548
    %v2550 = vpop.f32.mrb[0].mxu0
    %2551 = vmatprep.mubr.f32.mxu0 0.0
    %v2552 = vand.u32 %v2218, 4294901760
    %v2553 = vsub.f32 %v2218, %v2552
    %v2554 = vand.u32 %v2553, 4294901760
    %2555 = vmatmul.mubr.f32.gmra.mrb[0].mxu0 %v2554
    %v2556 = vpop.f32.mrb[0].mxu0
    %v2557 = vadd.f32 %v2474, %v2556
    %v2558 = vpop.f32.mrb[0].mxu0
    %2559 = vdwg.mxu0
    %2560 = vmatprep.subr.mxu0 0.0
    %v2561 = vand.u32 %v2209, 4294901760
    %v2562 = vsub.f32 %v2209, %v2561
    %v2563 = vand.u32 %v2562, 4294901760
    %2564 = vmatpush1.msra.mxu0 %v2563
    %2565 = vmatprep.subr.mxu0 0.0
    %v2566 = vand.u32 %v2211, 4294901760
    %v2567 = vsub.f32 %v2211, %v2566
    %v2568 = vand.u32 %v2567, 4294901760
    %2569 = vmatpush1.msra.mxu0 %v2568
    %2570 = vmatprep.subr.mxu0 0.0
    %2571 = vmatpush1.msra.mxu0 0.0
    %2572 = vmatprep.subr.mxu0 0.0
    %2573 = vmatpush1.msra.mxu0 0.0
    %2574 = vmatprep.subr.mxu0 0.0
    %2575 = vmatpush1.msra.mxu0 0.0
    %2576 = vmatprep.subr.mxu0 0.0
    %2577 = vmatpush1.msra.mxu0 0.0
    %2578 = vmatprep.subr.mxu0 0.0
    %2579 = vmatpush1.msra.mxu0 0.0
    %2580 = vmatprep.subr.mxu0 0.0
    %2581 = vmatpush1.msra.mxu0 0.0
    %2582 = vmatprep.subr.mxu0 0.0
    %2583 = vmatpush1.msra.mxu0 0.0
    %2584 = vmatprep.subr.mxu0 0.0
    %2585 = vmatpush1.msra.mxu0 0.0
    %2586 = vmatprep.subr.mxu0 0.0
    %2587 = vmatpush1.msra.mxu0 0.0
    %2588 = vmatprep.subr.mxu0 0.0
    %2589 = vmatpush1.msra.mxu0 0.0
    %2590 = vmatprep.subr.mxu0 0.0
    %2591 = vmatpush1.msra.mxu0 0.0
    %2592 = vmatprep.subr.mxu0 0.0
    %2593 = vmatpush1.msra.mxu0 0.0
    %2594 = vmatprep.subr.mxu0 0.0
    %2595 = vmatpush1.msra.mxu0 0.0
    %2596 = vmatprep.subr.mxu0 0.0
    %2597 = vmatpush1.msra.mxu0 0.0
    %2598 = vmatprep.subr.mxu0 0.0
    %2599 = vmatpush1.msra.mxu0 0.0
    %2600 = vmatprep.subr.mxu0 0.0
    %2601 = vmatpush1.msra.mxu0 0.0
    %2602 = vmatprep.subr.mxu0 0.0
    %2603 = vmatpush1.msra.mxu0 0.0
    %2604 = vmatprep.subr.mxu0 0.0
    %2605 = vmatpush1.msra.mxu0 0.0
    %2606 = vmatprep.subr.mxu0 0.0
    %2607 = vmatpush1.msra.mxu0 0.0
    %2608 = vmatprep.subr.mxu0 0.0
    %2609 = vmatpush1.msra.mxu0 0.0
    %2610 = vmatprep.subr.mxu0 0.0
    %2611 = vmatpush1.msra.mxu0 0.0
    %2612 = vmatprep.subr.mxu0 0.0
    %2613 = vmatpush1.msra.mxu0 0.0
    %2614 = vmatprep.subr.mxu0 0.0
    %2615 = vmatpush1.msra.mxu0 0.0
    %2616 = vmatprep.subr.mxu0 0.0
    %2617 = vmatpush1.msra.mxu0 0.0
    %2618 = vmatprep.subr.mxu0 0.0
    %2619 = vmatpush1.msra.mxu0 0.0
    %2620 = vmatprep.subr.mxu0 0.0
    %2621 = vmatpush1.msra.mxu0 0.0
    %2622 = vmatprep.subr.mxu0 0.0
    %2623 = vmatpush1.msra.mxu0 0.0
    %2624 = vmatprep.subr.mxu0 0.0
    %2625 = vmatpush1.msra.mxu0 0.0
    %2626 = vmatprep.subr.mxu0 0.0
    %2627 = vmatpush1.msra.mxu0 0.0
    %2628 = vmatprep.subr.mxu0 0.0
    %2629 = vmatpush1.msra.mxu0 0.0
    %2630 = vmatprep.mubr.f32.mxu0 0.0
    %v2631 = vand.u32 %v2215, 4294901760
    %2632 = vmatmul.mubr.f32.gmra.mrb[0].mxu0 %v2631
    %v2633 = vpop.f32.mrb[0].mxu0
    %v2634 = vadd.f32 %v2549, %v2633
    %v2635 = vpop.f32.mrb[0].mxu0
    %2636 = vmatprep.mubr.f32.mxu0 0.0
    %v2637 = vand.u32 %v2218, 4294901760
    %2638 = vmatmul.mubr.f32.gmra.mrb[0].mxu0 %v2637
    %v2639 = vpop.f32.mrb[0].mxu0
    %v2640 = vadd.f32 %v2557, %v2639
    %v2641 = vpop.f32.mrb[0].mxu0
    %2642 = vdwg.mxu0
    %2643 = vmatprep.subr.mxu0 0.0
    %v2644 = vand.u32 %v2209, 4294901760
    %2645 = vmatpush1.msra.mxu0 %v2644
    %2646 = vmatprep.subr.mxu0 0.0
    %v2647 = vand.u32 %v2211, 4294901760
    %2648 = vmatpush1.msra.mxu0 %v2647
    %2649 = vmatprep.subr.mxu0 0.0
    %2650 = vmatpush1.msra.mxu0 0.0
    %2651 = vmatprep.subr.mxu0 0.0
    %2652 = vmatpush1.msra.mxu0 0.0
    %2653 = vmatprep.subr.mxu0 0.0
    %2654 = vmatpush1.msra.mxu0 0.0
    %2655 = vmatprep.subr.mxu0 0.0
    %2656 = vmatpush1.msra.mxu0 0.0
    %2657 = vmatprep.subr.mxu0 0.0
    %2658 = vmatpush1.msra.mxu0 0.0
    %2659 = vmatprep.subr.mxu0 0.0
    %2660 = vmatpush1.msra.mxu0 0.0
    %2661 = vmatprep.subr.mxu0 0.0
    %2662 = vmatpush1.msra.mxu0 0.0
    %2663 = vmatprep.subr.mxu0 0.0
    %2664 = vmatpush1.msra.mxu0 0.0
    %2665 = vmatprep.subr.mxu0 0.0
    %2666 = vmatpush1.msra.mxu0 0.0
    %2667 = vmatprep.subr.mxu0 0.0
    %2668 = vmatpush1.msra.mxu0 0.0
    %2669 = vmatprep.subr.mxu0 0.0
    %2670 = vmatpush1.msra.mxu0 0.0
    %2671 = vmatprep.subr.mxu0 0.0
    %2672 = vmatpush1.msra.mxu0 0.0
    %2673 = vmatprep.subr.mxu0 0.0
    %2674 = vmatpush1.msra.mxu0 0.0
    %2675 = vmatprep.subr.mxu0 0.0
    %2676 = vmatpush1.msra.mxu0 0.0
    %2677 = vmatprep.subr.mxu0 0.0
    %2678 = vmatpush1.msra.mxu0 0.0
    %2679 = vmatprep.subr.mxu0 0.0
    %2680 = vmatpush1.msra.mxu0 0.0
    %2681 = vmatprep.subr.mxu0 0.0
    %2682 = vmatpush1.msra.mxu0 0.0
    %2683 = vmatprep.subr.mxu0 0.0
    %2684 = vmatpush1.msra.mxu0 0.0
    %2685 = vmatprep.subr.mxu0 0.0
    %2686 = vmatpush1.msra.mxu0 0.0
    %2687 = vmatprep.subr.mxu0 0.0
    %2688 = vmatpush1.msra.mxu0 0.0
    %2689 = vmatprep.subr.mxu0 0.0
    %2690 = vmatpush1.msra.mxu0 0.0
    %2691 = vmatprep.subr.mxu0 0.0
    %2692 = vmatpush1.msra.mxu0 0.0
    %2693 = vmatprep.subr.mxu0 0.0
    %2694 = vmatpush1.msra.mxu0 0.0
    %2695 = vmatprep.subr.mxu0 0.0
    %2696 = vmatpush1.msra.mxu0 0.0
    %2697 = vmatprep.subr.mxu0 0.0
    %2698 = vmatpush1.msra.mxu0 0.0
    %2699 = vmatprep.subr.mxu0 0.0
    %2700 = vmatpush1.msra.mxu0 0.0
    %2701 = vmatprep.subr.mxu0 0.0
    %2702 = vmatpush1.msra.mxu0 0.0
    %2703 = vmatprep.subr.mxu0 0.0
    %2704 = vmatpush1.msra.mxu0 0.0
    %2705 = vmatprep.subr.mxu0 0.0
    %2706 = vmatpush1.msra.mxu0 0.0
    %2707 = vmatprep.subr.mxu0 0.0
    %2708 = vmatpush1.msra.mxu0 0.0
    %2709 = vmatprep.mubr.f32.mxu0 0.0
    %v2710 = vand.u32 %v2215, 4294901760
    %2711 = vmatmul.mubr.f32.gmra.mrb[0].mxu0 %v2710
    %v2712 = vpop.f32.mrb[0].mxu0
    %v2713 = vadd.f32 %v2634, %v2712
    %v2714 = vpop.f32.mrb[0].mxu0
    %2715 = vmatprep.mubr.f32.mxu0 0.0
    %v2716 = vand.u32 %v2218, 4294901760
    %2717 = vmatmul.mubr.f32.gmra.mrb[0].mxu0 %v2716
    %v2718 = vpop.f32.mrb[0].mxu0
    %v2719 = vadd.f32 %v2640, %v2718
    %v2720 = vpop.f32.mrb[0].mxu0
    %2721 = vdwg.mxu0
    %2722 = vrot.lane.b32.xlu0 %v589, 112
    %v2723 = vpop.permute.xlu0 %2722
    %2724 = vrot.lane.b32.xlu0 %v595, 112
    %v2725 = vpop.permute.xlu0 %2724
    %2726 = vrot.lane.b32.xlu0 %v589, 80
    %v2727 = vpop.permute.xlu0 %2726
    %2728 = vrot.lane.b32.xlu0 %v595, 80
    %v2729 = vpop.permute.xlu0 %2728
    %v2730 = vsel %vm604, %v2723, 0
    %v2732 = vsel %vm604, %v2725, 0
    %v2734 = vsel %vm604, %v2727, 0
    %v2736 = vsel %vm604, %v2729, 0
    %2738 = vmatprep.subr.mxu0 0.0
    %v2739 = vand.u32 %v2734, 4294901760
    %2740 = vmatpush1.xpose.msra.mxu0 %v2739
    %2741 = vmatprep.subr.mxu0 0.0
    %v2742 = vand.u32 %v2736, 4294901760
    %2743 = vmatpush1.xpose.msra.mxu0 %v2742
    %2744 = vmatprep.subr.mxu0 0.0
    %2745 = vmatpush1.xpose.msra.mxu0 0.0
    %2746 = vmatprep.subr.mxu0 0.0
    %2747 = vmatpush1.xpose.msra.mxu0 0.0
    %2748 = vmatprep.subr.mxu0 0.0
    %2749 = vmatpush1.xpose.msra.mxu0 0.0
    %2750 = vmatprep.subr.mxu0 0.0
    %2751 = vmatpush1.xpose.msra.mxu0 0.0
    %2752 = vmatprep.subr.mxu0 0.0
    %2753 = vmatpush1.xpose.msra.mxu0 0.0
    %2754 = vmatprep.subr.mxu0 0.0
    %2755 = vmatpush1.xpose.msra.mxu0 0.0
    %2756 = vmatprep.subr.mxu0 0.0
    %2757 = vmatpush1.xpose.msra.mxu0 0.0
    %2758 = vmatprep.subr.mxu0 0.0
    %2759 = vmatpush1.xpose.msra.mxu0 0.0
    %2760 = vmatprep.subr.mxu0 0.0
    %2761 = vmatpush1.xpose.msra.mxu0 0.0
    %2762 = vmatprep.subr.mxu0 0.0
    %2763 = vmatpush1.xpose.msra.mxu0 0.0
    %2764 = vmatprep.subr.mxu0 0.0
    %2765 = vmatpush1.xpose.msra.mxu0 0.0
    %2766 = vmatprep.subr.mxu0 0.0
    %2767 = vmatpush1.xpose.msra.mxu0 0.0
    %2768 = vmatprep.subr.mxu0 0.0
    %2769 = vmatpush1.xpose.msra.mxu0 0.0
    %2770 = vmatprep.subr.mxu0 0.0
    %2771 = vmatpush1.xpose.msra.mxu0 0.0
    %2772 = vmatprep.subr.mxu0 0.0
    %2773 = vmatpush1.xpose.msra.mxu0 0.0
    %2774 = vmatprep.subr.mxu0 0.0
    %2775 = vmatpush1.xpose.msra.mxu0 0.0
    %2776 = vmatprep.subr.mxu0 0.0
    %2777 = vmatpush1.xpose.msra.mxu0 0.0
    %2778 = vmatprep.subr.mxu0 0.0
    %2779 = vmatpush1.xpose.msra.mxu0 0.0
    %2780 = vmatprep.subr.mxu0 0.0
    %2781 = vmatpush1.xpose.msra.mxu0 0.0
    %2782 = vmatprep.subr.mxu0 0.0
    %2783 = vmatpush1.xpose.msra.mxu0 0.0
    %2784 = vmatprep.subr.mxu0 0.0
    %2785 = vmatpush1.xpose.msra.mxu0 0.0
    %2786 = vmatprep.subr.mxu0 0.0
    %2787 = vmatpush1.xpose.msra.mxu0 0.0
    %2788 = vmatprep.subr.mxu0 0.0
    %2789 = vmatpush1.xpose.msra.mxu0 0.0
    %2790 = vmatprep.subr.mxu0 0.0
    %2791 = vmatpush1.xpose.msra.mxu0 0.0
    %2792 = vmatprep.subr.mxu0 0.0
    %2793 = vmatpush1.xpose.msra.mxu0 0.0
    %2794 = vmatprep.subr.mxu0 0.0
    %2795 = vmatpush1.xpose.msra.mxu0 0.0
    %2796 = vmatprep.subr.mxu0 0.0
    %2797 = vmatpush1.xpose.msra.mxu0 0.0
    %2798 = vmatprep.subr.mxu0 0.0
    %2799 = vmatpush1.xpose.msra.mxu0 0.0
    %2800 = vmatprep.subr.mxu0 0.0
    %2801 = vmatpush1.xpose.msra.mxu0 0.0
    %2802 = vmatprep.subr.mxu0 0.0
    %2803 = vmatpush1.xpose.msra.mxu0 0.0
    %2804 = vmatprep.mubr.f32.mxu0 0.0
    %v2805 = vand.u32 %v2730, 4294901760
    %v2806 = vsub.f32 %v2730, %v2805
    %v2807 = vand.u32 %v2806, 4294901760
    %v2808 = vsub.f32 %v2806, %v2807
    %v2809 = vand.u32 %v2808, 4294901760
    %2810 = vmatmul.mubr.f32.gmra.mrb[0].mxu0 %v2809
    %v2811 = vpop.f32.mrb[0].mxu0
    %v2812 = vadd.f32 0.0, %v2811
    %v2813 = vpop.f32.mrb[0].mxu0
    %2814 = vmatprep.mubr.f32.mxu0 0.0
    %v2815 = vand.u32 %v2732, 4294901760
    %v2816 = vsub.f32 %v2732, %v2815
    %v2817 = vand.u32 %v2816, 4294901760
    %v2818 = vsub.f32 %v2816, %v2817
    %v2819 = vand.u32 %v2818, 4294901760
    %2820 = vmatmul.mubr.f32.gmra.mrb[0].mxu0 %v2819
    %v2821 = vpop.f32.mrb[0].mxu0
    %v2822 = vadd.f32 0.0, %v2821
    %v2823 = vpop.f32.mrb[0].mxu0
    %2824 = vdwg.mxu0
    %2825 = vmatprep.subr.mxu0 0.0
    %v2826 = vand.u32 %v2734, 4294901760
    %v2827 = vsub.f32 %v2734, %v2826
    %v2828 = vand.u32 %v2827, 4294901760
    %v2829 = vsub.f32 %v2827, %v2828
    %v2830 = vand.u32 %v2829, 4294901760
    %2831 = vmatpush1.xpose.msra.mxu0 %v2830
    %2832 = vmatprep.subr.mxu0 0.0
    %v2833 = vand.u32 %v2736, 4294901760
    %v2834 = vsub.f32 %v2736, %v2833
    %v2835 = vand.u32 %v2834, 4294901760
    %v2836 = vsub.f32 %v2834, %v2835
    %v2837 = vand.u32 %v2836, 4294901760
    %2838 = vmatpush1.xpose.msra.mxu0 %v2837
    %2839 = vmatprep.subr.mxu0 0.0
    %2840 = vmatpush1.xpose.msra.mxu0 0.0
    %2841 = vmatprep.subr.mxu0 0.0
    %2842 = vmatpush1.xpose.msra.mxu0 0.0
    %2843 = vmatprep.subr.mxu0 0.0
    %2844 = vmatpush1.xpose.msra.mxu0 0.0
    %2845 = vmatprep.subr.mxu0 0.0
    %2846 = vmatpush1.xpose.msra.mxu0 0.0
    %2847 = vmatprep.subr.mxu0 0.0
    %2848 = vmatpush1.xpose.msra.mxu0 0.0
    %2849 = vmatprep.subr.mxu0 0.0
    %2850 = vmatpush1.xpose.msra.mxu0 0.0
    %2851 = vmatprep.subr.mxu0 0.0
    %2852 = vmatpush1.xpose.msra.mxu0 0.0
    %2853 = vmatprep.subr.mxu0 0.0
    %2854 = vmatpush1.xpose.msra.mxu0 0.0
    %2855 = vmatprep.subr.mxu0 0.0
    %2856 = vmatpush1.xpose.msra.mxu0 0.0
    %2857 = vmatprep.subr.mxu0 0.0
    %2858 = vmatpush1.xpose.msra.mxu0 0.0
    %2859 = vmatprep.subr.mxu0 0.0
    %2860 = vmatpush1.xpose.msra.mxu0 0.0
    %2861 = vmatprep.subr.mxu0 0.0
    %2862 = vmatpush1.xpose.msra.mxu0 0.0
    %2863 = vmatprep.subr.mxu0 0.0
    %2864 = vmatpush1.xpose.msra.mxu0 0.0
    %2865 = vmatprep.subr.mxu0 0.0
    %2866 = vmatpush1.xpose.msra.mxu0 0.0
    %2867 = vmatprep.subr.mxu0 0.0
    %2868 = vmatpush1.xpose.msra.mxu0 0.0
    %2869 = vmatprep.subr.mxu0 0.0
    %2870 = vmatpush1.xpose.msra.mxu0 0.0
    %2871 = vmatprep.subr.mxu0 0.0
    %2872 = vmatpush1.xpose.msra.mxu0 0.0
    %2873 = vmatprep.subr.mxu0 0.0
    %2874 = vmatpush1.xpose.msra.mxu0 0.0
    %2875 = vmatprep.subr.mxu0 0.0
    %2876 = vmatpush1.xpose.msra.mxu0 0.0
    %2877 = vmatprep.subr.mxu0 0.0
    %2878 = vmatpush1.xpose.msra.mxu0 0.0
    %2879 = vmatprep.subr.mxu0 0.0
    %2880 = vmatpush1.xpose.msra.mxu0 0.0
    %2881 = vmatprep.subr.mxu0 0.0
    %2882 = vmatpush1.xpose.msra.mxu0 0.0
    %2883 = vmatprep.subr.mxu0 0.0
    %2884 = vmatpush1.xpose.msra.mxu0 0.0
    %2885 = vmatprep.subr.mxu0 0.0
    %2886 = vmatpush1.xpose.msra.mxu0 0.0
    %2887 = vmatprep.subr.mxu0 0.0
    %2888 = vmatpush1.xpose.msra.mxu0 0.0
    %2889 = vmatprep.subr.mxu0 0.0
    %2890 = vmatpush1.xpose.msra.mxu0 0.0
    %2891 = vmatprep.subr.mxu0 0.0
    %2892 = vmatpush1.xpose.msra.mxu0 0.0
    %2893 = vmatprep.subr.mxu0 0.0
    %2894 = vmatpush1.xpose.msra.mxu0 0.0
    %2895 = vmatprep.subr.mxu0 0.0
    %2896 = vmatpush1.xpose.msra.mxu0 0.0
    %2897 = vmatprep.subr.mxu0 0.0
    %2898 = vmatpush1.xpose.msra.mxu0 0.0
    %2899 = vmatprep.mubr.f32.mxu0 0.0
    %v2900 = vand.u32 %v2730, 4294901760
    %2901 = vmatmul.mubr.f32.gmra.mrb[0].mxu0 %v2900
    %v2902 = vpop.f32.mrb[0].mxu0
    %v2903 = vadd.f32 %v2812, %v2902
    %v2904 = vpop.f32.mrb[0].mxu0
    %2905 = vmatprep.mubr.f32.mxu0 0.0
    %v2906 = vand.u32 %v2732, 4294901760
    %2907 = vmatmul.mubr.f32.gmra.mrb[0].mxu0 %v2906
    %v2908 = vpop.f32.mrb[0].mxu0
    %v2909 = vadd.f32 %v2822, %v2908
    %v2910 = vpop.f32.mrb[0].mxu0
    %2911 = vdwg.mxu0
    %2912 = vmatprep.subr.mxu0 0.0
    %v2913 = vand.u32 %v2734, 4294901760
    %v2914 = vsub.f32 %v2734, %v2913
    %2915 = vmatpush1.xpose.msra.mxu0 %v2914
    %2916 = vmatprep.subr.mxu0 0.0
    %v2917 = vand.u32 %v2736, 4294901760
    %v2918 = vsub.f32 %v2736, %v2917
    %2919 = vmatpush1.xpose.msra.mxu0 %v2918
    %2920 = vmatprep.subr.mxu0 0.0
    %2921 = vmatpush1.xpose.msra.mxu0 0.0
    %2922 = vmatprep.subr.mxu0 0.0
    %2923 = vmatpush1.xpose.msra.mxu0 0.0
    %2924 = vmatprep.subr.mxu0 0.0
    %2925 = vmatpush1.xpose.msra.mxu0 0.0
    %2926 = vmatprep.subr.mxu0 0.0
    %2927 = vmatpush1.xpose.msra.mxu0 0.0
    %2928 = vmatprep.subr.mxu0 0.0
    %2929 = vmatpush1.xpose.msra.mxu0 0.0
    %2930 = vmatprep.subr.mxu0 0.0
    %2931 = vmatpush1.xpose.msra.mxu0 0.0
    %2932 = vmatprep.subr.mxu0 0.0
    %2933 = vmatpush1.xpose.msra.mxu0 0.0
    %2934 = vmatprep.subr.mxu0 0.0
    %2935 = vmatpush1.xpose.msra.mxu0 0.0
    %2936 = vmatprep.subr.mxu0 0.0
    %2937 = vmatpush1.xpose.msra.mxu0 0.0
    %2938 = vmatprep.subr.mxu0 0.0
    %2939 = vmatpush1.xpose.msra.mxu0 0.0
    %2940 = vmatprep.subr.mxu0 0.0
    %2941 = vmatpush1.xpose.msra.mxu0 0.0
    %2942 = vmatprep.subr.mxu0 0.0
    %2943 = vmatpush1.xpose.msra.mxu0 0.0
    %2944 = vmatprep.subr.mxu0 0.0
    %2945 = vmatpush1.xpose.msra.mxu0 0.0
    %2946 = vmatprep.subr.mxu0 0.0
    %2947 = vmatpush1.xpose.msra.mxu0 0.0
    %2948 = vmatprep.subr.mxu0 0.0
    %2949 = vmatpush1.xpose.msra.mxu0 0.0
    %2950 = vmatprep.subr.mxu0 0.0
    %2951 = vmatpush1.xpose.msra.mxu0 0.0
    %2952 = vmatprep.subr.mxu0 0.0
    %2953 = vmatpush1.xpose.msra.mxu0 0.0
    %2954 = vmatprep.subr.mxu0 0.0
    %2955 = vmatpush1.xpose.msra.mxu0 0.0
    %2956 = vmatprep.subr.mxu0 0.0
    %2957 = vmatpush1.xpose.msra.mxu0 0.0
    %2958 = vmatprep.subr.mxu0 0.0
    %2959 = vmatpush1.xpose.msra.mxu0 0.0
    %2960 = vmatprep.subr.mxu0 0.0
    %2961 = vmatpush1.xpose.msra.mxu0 0.0
    %2962 = vmatprep.subr.mxu0 0.0
    %2963 = vmatpush1.xpose.msra.mxu0 0.0
    %2964 = vmatprep.subr.mxu0 0.0
    %2965 = vmatpush1.xpose.msra.mxu0 0.0
    %2966 = vmatprep.subr.mxu0 0.0
    %2967 = vmatpush1.xpose.msra.mxu0 0.0
    %2968 = vmatprep.subr.mxu0 0.0
    %2969 = vmatpush1.xpose.msra.mxu0 0.0
    %2970 = vmatprep.subr.mxu0 0.0
    %2971 = vmatpush1.xpose.msra.mxu0 0.0
    %2972 = vmatprep.subr.mxu0 0.0
    %2973 = vmatpush1.xpose.msra.mxu0 0.0
    %2974 = vmatprep.subr.mxu0 0.0
    %2975 = vmatpush1.xpose.msra.mxu0 0.0
    %2976 = vmatprep.subr.mxu0 0.0
    %2977 = vmatpush1.xpose.msra.mxu0 0.0
    %2978 = vmatprep.subr.mxu0 0.0
    %2979 = vmatpush1.xpose.msra.mxu0 0.0
    %2980 = vmatprep.mubr.f32.mxu0 0.0
    %v2981 = vand.u32 %v2730, 4294901760
    %v2982 = vsub.f32 %v2730, %v2981
    %2983 = vmatmul.mubr.f32.gmra.mrb[0].mxu0 %v2982
    %v2984 = vpop.f32.mrb[0].mxu0
    %v2985 = vadd.f32 %v2903, %v2984
    %v2986 = vpop.f32.mrb[0].mxu0
    %2987 = vmatprep.mubr.f32.mxu0 0.0
    %v2988 = vand.u32 %v2732, 4294901760
    %v2989 = vsub.f32 %v2732, %v2988
    %2990 = vmatmul.mubr.f32.gmra.mrb[0].mxu0 %v2989
    %v2991 = vpop.f32.mrb[0].mxu0
    %v2992 = vadd.f32 %v2909, %v2991
    %v2993 = vpop.f32.mrb[0].mxu0
    %2994 = vdwg.mxu0
    %2995 = vmatprep.subr.mxu0 0.0
    %v2996 = vand.u32 %v2734, 4294901760
    %2997 = vmatpush1.xpose.msra.mxu0 %v2996
    %2998 = vmatprep.subr.mxu0 0.0
    %v2999 = vand.u32 %v2736, 4294901760
    %3000 = vmatpush1.xpose.msra.mxu0 %v2999
    %3001 = vmatprep.subr.mxu0 0.0
    %3002 = vmatpush1.xpose.msra.mxu0 0.0
    %3003 = vmatprep.subr.mxu0 0.0
    %3004 = vmatpush1.xpose.msra.mxu0 0.0
    %3005 = vmatprep.subr.mxu0 0.0
    %3006 = vmatpush1.xpose.msra.mxu0 0.0
    %3007 = vmatprep.subr.mxu0 0.0
    %3008 = vmatpush1.xpose.msra.mxu0 0.0
    %3009 = vmatprep.subr.mxu0 0.0
    %3010 = vmatpush1.xpose.msra.mxu0 0.0
    %3011 = vmatprep.subr.mxu0 0.0
    %3012 = vmatpush1.xpose.msra.mxu0 0.0
    %3013 = vmatprep.subr.mxu0 0.0
    %3014 = vmatpush1.xpose.msra.mxu0 0.0
    %3015 = vmatprep.subr.mxu0 0.0
    %3016 = vmatpush1.xpose.msra.mxu0 0.0
    %3017 = vmatprep.subr.mxu0 0.0
    %3018 = vmatpush1.xpose.msra.mxu0 0.0
    %3019 = vmatprep.subr.mxu0 0.0
    %3020 = vmatpush1.xpose.msra.mxu0 0.0
    %3021 = vmatprep.subr.mxu0 0.0
    %3022 = vmatpush1.xpose.msra.mxu0 0.0
    %3023 = vmatprep.subr.mxu0 0.0
    %3024 = vmatpush1.xpose.msra.mxu0 0.0
    %3025 = vmatprep.subr.mxu0 0.0
    %3026 = vmatpush1.xpose.msra.mxu0 0.0
    %3027 = vmatprep.subr.mxu0 0.0
    %3028 = vmatpush1.xpose.msra.mxu0 0.0
    %3029 = vmatprep.subr.mxu0 0.0
    %3030 = vmatpush1.xpose.msra.mxu0 0.0
    %3031 = vmatprep.subr.mxu0 0.0
    %3032 = vmatpush1.xpose.msra.mxu0 0.0
    %3033 = vmatprep.subr.mxu0 0.0
    %3034 = vmatpush1.xpose.msra.mxu0 0.0
    %3035 = vmatprep.subr.mxu0 0.0
    %3036 = vmatpush1.xpose.msra.mxu0 0.0
    %3037 = vmatprep.subr.mxu0 0.0
    %3038 = vmatpush1.xpose.msra.mxu0 0.0
    %3039 = vmatprep.subr.mxu0 0.0
    %3040 = vmatpush1.xpose.msra.mxu0 0.0
    %3041 = vmatprep.subr.mxu0 0.0
    %3042 = vmatpush1.xpose.msra.mxu0 0.0
    %3043 = vmatprep.subr.mxu0 0.0
    %3044 = vmatpush1.xpose.msra.mxu0 0.0
    %3045 = vmatprep.subr.mxu0 0.0
    %3046 = vmatpush1.xpose.msra.mxu0 0.0
    %3047 = vmatprep.subr.mxu0 0.0
    %3048 = vmatpush1.xpose.msra.mxu0 0.0
    %3049 = vmatprep.subr.mxu0 0.0
    %3050 = vmatpush1.xpose.msra.mxu0 0.0
    %3051 = vmatprep.subr.mxu0 0.0
    %3052 = vmatpush1.xpose.msra.mxu0 0.0
    %3053 = vmatprep.subr.mxu0 0.0
    %3054 = vmatpush1.xpose.msra.mxu0 0.0
    %3055 = vmatprep.subr.mxu0 0.0
    %3056 = vmatpush1.xpose.msra.mxu0 0.0
    %3057 = vmatprep.subr.mxu0 0.0
    %3058 = vmatpush1.xpose.msra.mxu0 0.0
    %3059 = vmatprep.subr.mxu0 0.0
    %3060 = vmatpush1.xpose.msra.mxu0 0.0
    %3061 = vmatprep.mubr.f32.mxu0 0.0
    %v3062 = vand.u32 %v2730, 4294901760
    %v3063 = vsub.f32 %v2730, %v3062
    %v3064 = vand.u32 %v3063, 4294901760
    %3065 = vmatmul.mubr.f32.gmra.mrb[0].mxu0 %v3064
    %v3066 = vpop.f32.mrb[0].mxu0
    %v3067 = vadd.f32 %v2985, %v3066
    %v3068 = vpop.f32.mrb[0].mxu0
    %3069 = vmatprep.mubr.f32.mxu0 0.0
    %v3070 = vand.u32 %v2732, 4294901760
    %v3071 = vsub.f32 %v2732, %v3070
    %v3072 = vand.u32 %v3071, 4294901760
    %3073 = vmatmul.mubr.f32.gmra.mrb[0].mxu0 %v3072
    %v3074 = vpop.f32.mrb[0].mxu0
    %v3075 = vadd.f32 %v2992, %v3074
    %v3076 = vpop.f32.mrb[0].mxu0
    %3077 = vdwg.mxu0
    %3078 = vmatprep.subr.mxu0 0.0
    %v3079 = vand.u32 %v2734, 4294901760
    %v3080 = vsub.f32 %v2734, %v3079
    %v3081 = vand.u32 %v3080, 4294901760
    %3082 = vmatpush1.xpose.msra.mxu0 %v3081
    %3083 = vmatprep.subr.mxu0 0.0
    %v3084 = vand.u32 %v2736, 4294901760
    %v3085 = vsub.f32 %v2736, %v3084
    %v3086 = vand.u32 %v3085, 4294901760
    %3087 = vmatpush1.xpose.msra.mxu0 %v3086
    %3088 = vmatprep.subr.mxu0 0.0
    %3089 = vmatpush1.xpose.msra.mxu0 0.0
    %3090 = vmatprep.subr.mxu0 0.0
    %3091 = vmatpush1.xpose.msra.mxu0 0.0
    %3092 = vmatprep.subr.mxu0 0.0
    %3093 = vmatpush1.xpose.msra.mxu0 0.0
    %3094 = vmatprep.subr.mxu0 0.0
    %3095 = vmatpush1.xpose.msra.mxu0 0.0
    %3096 = vmatprep.subr.mxu0 0.0
    %3097 = vmatpush1.xpose.msra.mxu0 0.0
    %3098 = vmatprep.subr.mxu0 0.0
    %3099 = vmatpush1.xpose.msra.mxu0 0.0
    %3100 = vmatprep.subr.mxu0 0.0
    %3101 = vmatpush1.xpose.msra.mxu0 0.0
    %3102 = vmatprep.subr.mxu0 0.0
    %3103 = vmatpush1.xpose.msra.mxu0 0.0
    %3104 = vmatprep.subr.mxu0 0.0
    %3105 = vmatpush1.xpose.msra.mxu0 0.0
    %3106 = vmatprep.subr.mxu0 0.0
    %3107 = vmatpush1.xpose.msra.mxu0 0.0
    %3108 = vmatprep.subr.mxu0 0.0
    %3109 = vmatpush1.xpose.msra.mxu0 0.0
    %3110 = vmatprep.subr.mxu0 0.0
    %3111 = vmatpush1.xpose.msra.mxu0 0.0
    %3112 = vmatprep.subr.mxu0 0.0
    %3113 = vmatpush1.xpose.msra.mxu0 0.0
    %3114 = vmatprep.subr.mxu0 0.0
    %3115 = vmatpush1.xpose.msra.mxu0 0.0
    %3116 = vmatprep.subr.mxu0 0.0
    %3117 = vmatpush1.xpose.msra.mxu0 0.0
    %3118 = vmatprep.subr.mxu0 0.0
    %3119 = vmatpush1.xpose.msra.mxu0 0.0
    %3120 = vmatprep.subr.mxu0 0.0
    %3121 = vmatpush1.xpose.msra.mxu0 0.0
    %3122 = vmatprep.subr.mxu0 0.0
    %3123 = vmatpush1.xpose.msra.mxu0 0.0
    %3124 = vmatprep.subr.mxu0 0.0
    %3125 = vmatpush1.xpose.msra.mxu0 0.0
    %3126 = vmatprep.subr.mxu0 0.0
    %3127 = vmatpush1.xpose.msra.mxu0 0.0
    %3128 = vmatprep.subr.mxu0 0.0
    %3129 = vmatpush1.xpose.msra.mxu0 0.0
    %3130 = vmatprep.subr.mxu0 0.0
    %3131 = vmatpush1.xpose.msra.mxu0 0.0
    %3132 = vmatprep.subr.mxu0 0.0
    %3133 = vmatpush1.xpose.msra.mxu0 0.0
    %3134 = vmatprep.subr.mxu0 0.0
    %3135 = vmatpush1.xpose.msra.mxu0 0.0
    %3136 = vmatprep.subr.mxu0 0.0
    %3137 = vmatpush1.xpose.msra.mxu0 0.0
    %3138 = vmatprep.subr.mxu0 0.0
    %3139 = vmatpush1.xpose.msra.mxu0 0.0
    %3140 = vmatprep.subr.mxu0 0.0
    %3141 = vmatpush1.xpose.msra.mxu0 0.0
    %3142 = vmatprep.subr.mxu0 0.0
    %3143 = vmatpush1.xpose.msra.mxu0 0.0
    %3144 = vmatprep.subr.mxu0 0.0
    %3145 = vmatpush1.xpose.msra.mxu0 0.0
    %3146 = vmatprep.subr.mxu0 0.0
    %3147 = vmatpush1.xpose.msra.mxu0 0.0
    %3148 = vmatprep.mubr.f32.mxu0 0.0
    %v3149 = vand.u32 %v2730, 4294901760
    %3150 = vmatmul.mubr.f32.gmra.mrb[0].mxu0 %v3149
    %v3151 = vpop.f32.mrb[0].mxu0
    %v3152 = vadd.f32 %v3067, %v3151
    %v3153 = vpop.f32.mrb[0].mxu0
    %3154 = vmatprep.mubr.f32.mxu0 0.0
    %v3155 = vand.u32 %v2732, 4294901760
    %3156 = vmatmul.mubr.f32.gmra.mrb[0].mxu0 %v3155
    %v3157 = vpop.f32.mrb[0].mxu0
    %v3158 = vadd.f32 %v3075, %v3157
    %v3159 = vpop.f32.mrb[0].mxu0
    %3160 = vdwg.mxu0
    %3161 = vmatprep.subr.mxu0 0.0
    %v3162 = vand.u32 %v2734, 4294901760
    %3163 = vmatpush1.xpose.msra.mxu0 %v3162
    %3164 = vmatprep.subr.mxu0 0.0
    %v3165 = vand.u32 %v2736, 4294901760
    %3166 = vmatpush1.xpose.msra.mxu0 %v3165
    %3167 = vmatprep.subr.mxu0 0.0
    %3168 = vmatpush1.xpose.msra.mxu0 0.0
    %3169 = vmatprep.subr.mxu0 0.0
    %3170 = vmatpush1.xpose.msra.mxu0 0.0
    %3171 = vmatprep.subr.mxu0 0.0
    %3172 = vmatpush1.xpose.msra.mxu0 0.0
    %3173 = vmatprep.subr.mxu0 0.0
    %3174 = vmatpush1.xpose.msra.mxu0 0.0
    %3175 = vmatprep.subr.mxu0 0.0
    %3176 = vmatpush1.xpose.msra.mxu0 0.0
    %3177 = vmatprep.subr.mxu0 0.0
    %3178 = vmatpush1.xpose.msra.mxu0 0.0
    %3179 = vmatprep.subr.mxu0 0.0
    %3180 = vmatpush1.xpose.msra.mxu0 0.0
    %3181 = vmatprep.subr.mxu0 0.0
    %3182 = vmatpush1.xpose.msra.mxu0 0.0
    %3183 = vmatprep.subr.mxu0 0.0
    %3184 = vmatpush1.xpose.msra.mxu0 0.0
    %3185 = vmatprep.subr.mxu0 0.0
    %3186 = vmatpush1.xpose.msra.mxu0 0.0
    %3187 = vmatprep.subr.mxu0 0.0
    %3188 = vmatpush1.xpose.msra.mxu0 0.0
    %3189 = vmatprep.subr.mxu0 0.0
    %3190 = vmatpush1.xpose.msra.mxu0 0.0
    %3191 = vmatprep.subr.mxu0 0.0
    %3192 = vmatpush1.xpose.msra.mxu0 0.0
    %3193 = vmatprep.subr.mxu0 0.0
    %3194 = vmatpush1.xpose.msra.mxu0 0.0
    %3195 = vmatprep.subr.mxu0 0.0
    %3196 = vmatpush1.xpose.msra.mxu0 0.0
    %3197 = vmatprep.subr.mxu0 0.0
    %3198 = vmatpush1.xpose.msra.mxu0 0.0
    %3199 = vmatprep.subr.mxu0 0.0
    %3200 = vmatpush1.xpose.msra.mxu0 0.0
    %3201 = vmatprep.subr.mxu0 0.0
    %3202 = vmatpush1.xpose.msra.mxu0 0.0
    %3203 = vmatprep.subr.mxu0 0.0
    %3204 = vmatpush1.xpose.msra.mxu0 0.0
    %3205 = vmatprep.subr.mxu0 0.0
    %3206 = vmatpush1.xpose.msra.mxu0 0.0
    %3207 = vmatprep.subr.mxu0 0.0
    %3208 = vmatpush1.xpose.msra.mxu0 0.0
    %3209 = vmatprep.subr.mxu0 0.0
    %3210 = vmatpush1.xpose.msra.mxu0 0.0
    %3211 = vmatprep.subr.mxu0 0.0
    %3212 = vmatpush1.xpose.msra.mxu0 0.0
    %3213 = vmatprep.subr.mxu0 0.0
    %3214 = vmatpush1.xpose.msra.mxu0 0.0
    %3215 = vmatprep.subr.mxu0 0.0
    %3216 = vmatpush1.xpose.msra.mxu0 0.0
    %3217 = vmatprep.subr.mxu0 0.0
    %3218 = vmatpush1.xpose.msra.mxu0 0.0
    %3219 = vmatprep.subr.mxu0 0.0
    %3220 = vmatpush1.xpose.msra.mxu0 0.0
    %3221 = vmatprep.subr.mxu0 0.0
    %3222 = vmatpush1.xpose.msra.mxu0 0.0
    %3223 = vmatprep.subr.mxu0 0.0
    %3224 = vmatpush1.xpose.msra.mxu0 0.0
    %3225 = vmatprep.subr.mxu0 0.0
    %3226 = vmatpush1.xpose.msra.mxu0 0.0
    %3227 = vmatprep.mubr.f32.mxu0 0.0
    %v3228 = vand.u32 %v2730, 4294901760
    %3229 = vmatmul.mubr.f32.gmra.mrb[0].mxu0 %v3228
    %v3230 = vpop.f32.mrb[0].mxu0
    %v3231 = vadd.f32 %v3152, %v3230
    %v3232 = vpop.f32.mrb[0].mxu0
    %3233 = vmatprep.mubr.f32.mxu0 0.0
    %v3234 = vand.u32 %v2732, 4294901760
    %3235 = vmatmul.mubr.f32.gmra.mrb[0].mxu0 %v3234
    %v3236 = vpop.f32.mrb[0].mxu0
    %v3237 = vadd.f32 %v3158, %v3236
    %v3238 = vpop.f32.mrb[0].mxu0
    %3239 = vdwg.mxu0
    %v3240 = vmul.f32 %v3231, 0.35355338
    %v3241 = vmul.f32 %v3237, 0.35355338
    %v3242 = vadd.f32 %v3240, %v1120
    %v3243 = vadd.f32 %v3241, %v1122
    %v3244 = vsel %vm1127, %v3242, -inf
    %3245 = vmax.xlane.f32.xlu0 %v3244
    %v3246 = vpop.xlane.xlu0 %3245
    %v3247 = vsel %vm1127, %v3243, -inf
    %3248 = vmax.xlane.f32.xlu0 %v3247
    %v3249 = vpop.xlane.xlu0 %3248
    %v3250 = vsub.f32 %v3242, %v3246
    %v3251 = vsub.f32 %v3243, %v3249
    %v3252 = vmul.f32 %v3250, 1.442695
    %v3253 = vpow.pop %v3252
    %v3254 = vmul.f32 %v3251, 1.442695
    %v3255 = vpow.pop %v3254
    %v3256 = vsel %vm1127, %v3253, 0.0
    %3257 = vadd.xlane.f32.xlu0 %v3256
    %v3258 = vpop.xlane.xlu0 %3257
    %v3259 = vsel %vm1127, %v3255, 0.0
    %3260 = vadd.xlane.f32.xlu0 %v3259
    %v3261 = vpop.xlane.xlu0 %3260
    %v3262 = vrcp.pop %v3258
    %v3263 = vmul.f32 %v3253, %v3262
    %v3264 = vrcp.pop %v3261
    %v3265 = vmul.f32 %v3255, %v3264
    %3266 = vrot.lane.b32.xlu0 %v589, 48
    %v3267 = vpop.permute.xlu0 %3266
    %3268 = vrot.lane.b32.xlu0 %v595, 48
    %v3269 = vpop.permute.xlu0 %3268
    %v3273 = vsel %vm1127, %v3263, 0
    %v3276 = vsel %vm1127, %v3265, 0
    %3278 = vmatprep.subr.mxu0 0.0
    %v3279 = vand.u32 %v3267, 4294901760
    %3280 = vmatpush1.msra.mxu0 %v3279
    %3281 = vmatprep.subr.mxu0 0.0
    %v3282 = vand.u32 %v3269, 4294901760
    %3283 = vmatpush1.msra.mxu0 %v3282
    %3284 = vmatprep.subr.mxu0 0.0
    %3285 = vmatpush1.msra.mxu0 0.0
    %3286 = vmatprep.subr.mxu0 0.0
    %3287 = vmatpush1.msra.mxu0 0.0
    %3288 = vmatprep.subr.mxu0 0.0
    %3289 = vmatpush1.msra.mxu0 0.0
    %3290 = vmatprep.subr.mxu0 0.0
    %3291 = vmatpush1.msra.mxu0 0.0
    %3292 = vmatprep.subr.mxu0 0.0
    %3293 = vmatpush1.msra.mxu0 0.0
    %3294 = vmatprep.subr.mxu0 0.0
    %3295 = vmatpush1.msra.mxu0 0.0
    %3296 = vmatprep.subr.mxu0 0.0
    %3297 = vmatpush1.msra.mxu0 0.0
    %3298 = vmatprep.subr.mxu0 0.0
    %3299 = vmatpush1.msra.mxu0 0.0
    %3300 = vmatprep.subr.mxu0 0.0
    %3301 = vmatpush1.msra.mxu0 0.0
    %3302 = vmatprep.subr.mxu0 0.0
    %3303 = vmatpush1.msra.mxu0 0.0
    %3304 = vmatprep.subr.mxu0 0.0
    %3305 = vmatpush1.msra.mxu0 0.0
    %3306 = vmatprep.subr.mxu0 0.0
    %3307 = vmatpush1.msra.mxu0 0.0
    %3308 = vmatprep.subr.mxu0 0.0
    %3309 = vmatpush1.msra.mxu0 0.0
    %3310 = vmatprep.subr.mxu0 0.0
    %3311 = vmatpush1.msra.mxu0 0.0
    %3312 = vmatprep.subr.mxu0 0.0
    %3313 = vmatpush1.msra.mxu0 0.0
    %3314 = vmatprep.subr.mxu0 0.0
    %3315 = vmatpush1.msra.mxu0 0.0
    %3316 = vmatprep.subr.mxu0 0.0
    %3317 = vmatpush1.msra.mxu0 0.0
    %3318 = vmatprep.subr.mxu0 0.0
    %3319 = vmatpush1.msra.mxu0 0.0
    %3320 = vmatprep.subr.mxu0 0.0
    %3321 = vmatpush1.msra.mxu0 0.0
    %3322 = vmatprep.subr.mxu0 0.0
    %3323 = vmatpush1.msra.mxu0 0.0
    %3324 = vmatprep.subr.mxu0 0.0
    %3325 = vmatpush1.msra.mxu0 0.0
    %3326 = vmatprep.subr.mxu0 0.0
    %3327 = vmatpush1.msra.mxu0 0.0
    %3328 = vmatprep.subr.mxu0 0.0
    %3329 = vmatpush1.msra.mxu0 0.0
    %3330 = vmatprep.subr.mxu0 0.0
    %3331 = vmatpush1.msra.mxu0 0.0
    %3332 = vmatprep.subr.mxu0 0.0
    %3333 = vmatpush1.msra.mxu0 0.0
    %3334 = vmatprep.subr.mxu0 0.0
    %3335 = vmatpush1.msra.mxu0 0.0
    %3336 = vmatprep.subr.mxu0 0.0
    %3337 = vmatpush1.msra.mxu0 0.0
    %3338 = vmatprep.subr.mxu0 0.0
    %3339 = vmatpush1.msra.mxu0 0.0
    %3340 = vmatprep.subr.mxu0 0.0
    %3341 = vmatpush1.msra.mxu0 0.0
    %3342 = vmatprep.subr.mxu0 0.0
    %3343 = vmatpush1.msra.mxu0 0.0
    %3344 = vmatprep.mubr.f32.mxu0 0.0
    %v3345 = vand.u32 %v3273, 4294901760
    %v3346 = vsub.f32 %v3273, %v3345
    %v3347 = vand.u32 %v3346, 4294901760
    %v3348 = vsub.f32 %v3346, %v3347
    %v3349 = vand.u32 %v3348, 4294901760
    %3350 = vmatmul.mubr.f32.gmra.mrb[0].mxu0 %v3349
    %v3351 = vpop.f32.mrb[0].mxu0
    %v3352 = vadd.f32 0.0, %v3351
    %v3353 = vpop.f32.mrb[0].mxu0
    %3354 = vmatprep.mubr.f32.mxu0 0.0
    %v3355 = vand.u32 %v3276, 4294901760
    %v3356 = vsub.f32 %v3276, %v3355
    %v3357 = vand.u32 %v3356, 4294901760
    %v3358 = vsub.f32 %v3356, %v3357
    %v3359 = vand.u32 %v3358, 4294901760
    %3360 = vmatmul.mubr.f32.gmra.mrb[0].mxu0 %v3359
    %v3361 = vpop.f32.mrb[0].mxu0
    %v3362 = vadd.f32 0.0, %v3361
    %v3363 = vpop.f32.mrb[0].mxu0
    %3364 = vdwg.mxu0
    %3365 = vmatprep.subr.mxu0 0.0
    %v3366 = vand.u32 %v3267, 4294901760
    %v3367 = vsub.f32 %v3267, %v3366
    %v3368 = vand.u32 %v3367, 4294901760
    %v3369 = vsub.f32 %v3367, %v3368
    %v3370 = vand.u32 %v3369, 4294901760
    %3371 = vmatpush1.msra.mxu0 %v3370
    %3372 = vmatprep.subr.mxu0 0.0
    %v3373 = vand.u32 %v3269, 4294901760
    %v3374 = vsub.f32 %v3269, %v3373
    %v3375 = vand.u32 %v3374, 4294901760
    %v3376 = vsub.f32 %v3374, %v3375
    %v3377 = vand.u32 %v3376, 4294901760
    %3378 = vmatpush1.msra.mxu0 %v3377
    %3379 = vmatprep.subr.mxu0 0.0
    %3380 = vmatpush1.msra.mxu0 0.0
    %3381 = vmatprep.subr.mxu0 0.0
    %3382 = vmatpush1.msra.mxu0 0.0
    %3383 = vmatprep.subr.mxu0 0.0
    %3384 = vmatpush1.msra.mxu0 0.0
    %3385 = vmatprep.subr.mxu0 0.0
    %3386 = vmatpush1.msra.mxu0 0.0
    %3387 = vmatprep.subr.mxu0 0.0
    %3388 = vmatpush1.msra.mxu0 0.0
    %3389 = vmatprep.subr.mxu0 0.0
    %3390 = vmatpush1.msra.mxu0 0.0
    %3391 = vmatprep.subr.mxu0 0.0
    %3392 = vmatpush1.msra.mxu0 0.0
    %3393 = vmatprep.subr.mxu0 0.0
    %3394 = vmatpush1.msra.mxu0 0.0
    %3395 = vmatprep.subr.mxu0 0.0
    %3396 = vmatpush1.msra.mxu0 0.0
    %3397 = vmatprep.subr.mxu0 0.0
    %3398 = vmatpush1.msra.mxu0 0.0
    %3399 = vmatprep.subr.mxu0 0.0
    %3400 = vmatpush1.msra.mxu0 0.0
    %3401 = vmatprep.subr.mxu0 0.0
    %3402 = vmatpush1.msra.mxu0 0.0
    %3403 = vmatprep.subr.mxu0 0.0
    %3404 = vmatpush1.msra.mxu0 0.0
    %3405 = vmatprep.subr.mxu0 0.0
    %3406 = vmatpush1.msra.mxu0 0.0
    %3407 = vmatprep.subr.mxu0 0.0
    %3408 = vmatpush1.msra.mxu0 0.0
    %3409 = vmatprep.subr.mxu0 0.0
    %3410 = vmatpush1.msra.mxu0 0.0
    %3411 = vmatprep.subr.mxu0 0.0
    %3412 = vmatpush1.msra.mxu0 0.0
    %3413 = vmatprep.subr.mxu0 0.0
    %3414 = vmatpush1.msra.mxu0 0.0
    %3415 = vmatprep.subr.mxu0 0.0
    %3416 = vmatpush1.msra.mxu0 0.0
    %3417 = vmatprep.subr.mxu0 0.0
    %3418 = vmatpush1.msra.mxu0 0.0
    %3419 = vmatprep.subr.mxu0 0.0
    %3420 = vmatpush1.msra.mxu0 0.0
    %3421 = vmatprep.subr.mxu0 0.0
    %3422 = vmatpush1.msra.mxu0 0.0
    %3423 = vmatprep.subr.mxu0 0.0
    %3424 = vmatpush1.msra.mxu0 0.0
    %3425 = vmatprep.subr.mxu0 0.0
    %3426 = vmatpush1.msra.mxu0 0.0
    %3427 = vmatprep.subr.mxu0 0.0
    %3428 = vmatpush1.msra.mxu0 0.0
    %3429 = vmatprep.subr.mxu0 0.0
    %3430 = vmatpush1.msra.mxu0 0.0
    %3431 = vmatprep.subr.mxu0 0.0
    %3432 = vmatpush1.msra.mxu0 0.0
    %3433 = vmatprep.subr.mxu0 0.0
    %3434 = vmatpush1.msra.mxu0 0.0
    %3435 = vmatprep.subr.mxu0 0.0
    %3436 = vmatpush1.msra.mxu0 0.0
    %3437 = vmatprep.subr.mxu0 0.0
    %3438 = vmatpush1.msra.mxu0 0.0
    %3439 = vmatprep.mubr.f32.mxu0 0.0
    %v3440 = vand.u32 %v3273, 4294901760
    %3441 = vmatmul.mubr.f32.gmra.mrb[0].mxu0 %v3440
    %v3442 = vpop.f32.mrb[0].mxu0
    %v3443 = vadd.f32 %v3352, %v3442
    %v3444 = vpop.f32.mrb[0].mxu0
    %3445 = vmatprep.mubr.f32.mxu0 0.0
    %v3446 = vand.u32 %v3276, 4294901760
    %3447 = vmatmul.mubr.f32.gmra.mrb[0].mxu0 %v3446
    %v3448 = vpop.f32.mrb[0].mxu0
    %v3449 = vadd.f32 %v3362, %v3448
    %v3450 = vpop.f32.mrb[0].mxu0
    %3451 = vdwg.mxu0
    %3452 = vmatprep.subr.mxu0 0.0
    %v3453 = vand.u32 %v3267, 4294901760
    %v3454 = vsub.f32 %v3267, %v3453
    %3455 = vmatpush1.msra.mxu0 %v3454
    %3456 = vmatprep.subr.mxu0 0.0
    %v3457 = vand.u32 %v3269, 4294901760
    %v3458 = vsub.f32 %v3269, %v3457
    %3459 = vmatpush1.msra.mxu0 %v3458
    %3460 = vmatprep.subr.mxu0 0.0
    %3461 = vmatpush1.msra.mxu0 0.0
    %3462 = vmatprep.subr.mxu0 0.0
    %3463 = vmatpush1.msra.mxu0 0.0
    %3464 = vmatprep.subr.mxu0 0.0
    %3465 = vmatpush1.msra.mxu0 0.0
    %3466 = vmatprep.subr.mxu0 0.0
    %3467 = vmatpush1.msra.mxu0 0.0
    %3468 = vmatprep.subr.mxu0 0.0
    %3469 = vmatpush1.msra.mxu0 0.0
    %3470 = vmatprep.subr.mxu0 0.0
    %3471 = vmatpush1.msra.mxu0 0.0
    %3472 = vmatprep.subr.mxu0 0.0
    %3473 = vmatpush1.msra.mxu0 0.0
    %3474 = vmatprep.subr.mxu0 0.0
    %3475 = vmatpush1.msra.mxu0 0.0
    %3476 = vmatprep.subr.mxu0 0.0
    %3477 = vmatpush1.msra.mxu0 0.0
    %3478 = vmatprep.subr.mxu0 0.0
    %3479 = vmatpush1.msra.mxu0 0.0
    %3480 = vmatprep.subr.mxu0 0.0
    %3481 = vmatpush1.msra.mxu0 0.0
    %3482 = vmatprep.subr.mxu0 0.0
    %3483 = vmatpush1.msra.mxu0 0.0
    %3484 = vmatprep.subr.mxu0 0.0
    %3485 = vmatpush1.msra.mxu0 0.0
    %3486 = vmatprep.subr.mxu0 0.0
    %3487 = vmatpush1.msra.mxu0 0.0
    %3488 = vmatprep.subr.mxu0 0.0
    %3489 = vmatpush1.msra.mxu0 0.0
    %3490 = vmatprep.subr.mxu0 0.0
    %3491 = vmatpush1.msra.mxu0 0.0
    %3492 = vmatprep.subr.mxu0 0.0
    %3493 = vmatpush1.msra.mxu0 0.0
    %3494 = vmatprep.subr.mxu0 0.0
    %3495 = vmatpush1.msra.mxu0 0.0
    %3496 = vmatprep.subr.mxu0 0.0
    %3497 = vmatpush1.msra.mxu0 0.0
    %3498 = vmatprep.subr.mxu0 0.0
    %3499 = vmatpush1.msra.mxu0 0.0
    %3500 = vmatprep.subr.mxu0 0.0
    %3501 = vmatpush1.msra.mxu0 0.0
    %3502 = vmatprep.subr.mxu0 0.0
    %3503 = vmatpush1.msra.mxu0 0.0
    %3504 = vmatprep.subr.mxu0 0.0
    %3505 = vmatpush1.msra.mxu0 0.0
    %3506 = vmatprep.subr.mxu0 0.0
    %3507 = vmatpush1.msra.mxu0 0.0
    %3508 = vmatprep.subr.mxu0 0.0
    %3509 = vmatpush1.msra.mxu0 0.0
    %3510 = vmatprep.subr.mxu0 0.0
    %3511 = vmatpush1.msra.mxu0 0.0
    %3512 = vmatprep.subr.mxu0 0.0
    %3513 = vmatpush1.msra.mxu0 0.0
    %3514 = vmatprep.subr.mxu0 0.0
    %3515 = vmatpush1.msra.mxu0 0.0
    %3516 = vmatprep.subr.mxu0 0.0
    %3517 = vmatpush1.msra.mxu0 0.0
    %3518 = vmatprep.subr.mxu0 0.0
    %3519 = vmatpush1.msra.mxu0 0.0
    %3520 = vmatprep.mubr.f32.mxu0 0.0
    %v3521 = vand.u32 %v3273, 4294901760
    %v3522 = vsub.f32 %v3273, %v3521
    %3523 = vmatmul.mubr.f32.gmra.mrb[0].mxu0 %v3522
    %v3524 = vpop.f32.mrb[0].mxu0
    %v3525 = vadd.f32 %v3443, %v3524
    %v3526 = vpop.f32.mrb[0].mxu0
    %3527 = vmatprep.mubr.f32.mxu0 0.0
    %v3528 = vand.u32 %v3276, 4294901760
    %v3529 = vsub.f32 %v3276, %v3528
    %3530 = vmatmul.mubr.f32.gmra.mrb[0].mxu0 %v3529
    %v3531 = vpop.f32.mrb[0].mxu0
    %v3532 = vadd.f32 %v3449, %v3531
    %v3533 = vpop.f32.mrb[0].mxu0
    %3534 = vdwg.mxu0
    %3535 = vmatprep.subr.mxu0 0.0
    %v3536 = vand.u32 %v3267, 4294901760
    %3537 = vmatpush1.msra.mxu0 %v3536
    %3538 = vmatprep.subr.mxu0 0.0
    %v3539 = vand.u32 %v3269, 4294901760
    %3540 = vmatpush1.msra.mxu0 %v3539
    %3541 = vmatprep.subr.mxu0 0.0
    %3542 = vmatpush1.msra.mxu0 0.0
    %3543 = vmatprep.subr.mxu0 0.0
    %3544 = vmatpush1.msra.mxu0 0.0
    %3545 = vmatprep.subr.mxu0 0.0
    %3546 = vmatpush1.msra.mxu0 0.0
    %3547 = vmatprep.subr.mxu0 0.0
    %3548 = vmatpush1.msra.mxu0 0.0
    %3549 = vmatprep.subr.mxu0 0.0
    %3550 = vmatpush1.msra.mxu0 0.0
    %3551 = vmatprep.subr.mxu0 0.0
    %3552 = vmatpush1.msra.mxu0 0.0
    %3553 = vmatprep.subr.mxu0 0.0
    %3554 = vmatpush1.msra.mxu0 0.0
    %3555 = vmatprep.subr.mxu0 0.0
    %3556 = vmatpush1.msra.mxu0 0.0
    %3557 = vmatprep.subr.mxu0 0.0
    %3558 = vmatpush1.msra.mxu0 0.0
    %3559 = vmatprep.subr.mxu0 0.0
    %3560 = vmatpush1.msra.mxu0 0.0
    %3561 = vmatprep.subr.mxu0 0.0
    %3562 = vmatpush1.msra.mxu0 0.0
    %3563 = vmatprep.subr.mxu0 0.0
    %3564 = vmatpush1.msra.mxu0 0.0
    %3565 = vmatprep.subr.mxu0 0.0
    %3566 = vmatpush1.msra.mxu0 0.0
    %3567 = vmatprep.subr.mxu0 0.0
    %3568 = vmatpush1.msra.mxu0 0.0
    %3569 = vmatprep.subr.mxu0 0.0
    %3570 = vmatpush1.msra.mxu0 0.0
    %3571 = vmatprep.subr.mxu0 0.0
    %3572 = vmatpush1.msra.mxu0 0.0
    %3573 = vmatprep.subr.mxu0 0.0
    %3574 = vmatpush1.msra.mxu0 0.0
    %3575 = vmatprep.subr.mxu0 0.0
    %3576 = vmatpush1.msra.mxu0 0.0
    %3577 = vmatprep.subr.mxu0 0.0
    %3578 = vmatpush1.msra.mxu0 0.0
    %3579 = vmatprep.subr.mxu0 0.0
    %3580 = vmatpush1.msra.mxu0 0.0
    %3581 = vmatprep.subr.mxu0 0.0
    %3582 = vmatpush1.msra.mxu0 0.0
    %3583 = vmatprep.subr.mxu0 0.0
    %3584 = vmatpush1.msra.mxu0 0.0
    %3585 = vmatprep.subr.mxu0 0.0
    %3586 = vmatpush1.msra.mxu0 0.0
    %3587 = vmatprep.subr.mxu0 0.0
    %3588 = vmatpush1.msra.mxu0 0.0
    %3589 = vmatprep.subr.mxu0 0.0
    %3590 = vmatpush1.msra.mxu0 0.0
    %3591 = vmatprep.subr.mxu0 0.0
    %3592 = vmatpush1.msra.mxu0 0.0
    %3593 = vmatprep.subr.mxu0 0.0
    %3594 = vmatpush1.msra.mxu0 0.0
    %3595 = vmatprep.subr.mxu0 0.0
    %3596 = vmatpush1.msra.mxu0 0.0
    %3597 = vmatprep.subr.mxu0 0.0
    %3598 = vmatpush1.msra.mxu0 0.0
    %3599 = vmatprep.subr.mxu0 0.0
    %3600 = vmatpush1.msra.mxu0 0.0
    %3601 = vmatprep.mubr.f32.mxu0 0.0
    %v3602 = vand.u32 %v3273, 4294901760
    %v3603 = vsub.f32 %v3273, %v3602
    %v3604 = vand.u32 %v3603, 4294901760
    %3605 = vmatmul.mubr.f32.gmra.mrb[0].mxu0 %v3604
    %v3606 = vpop.f32.mrb[0].mxu0
    %v3607 = vadd.f32 %v3525, %v3606
    %v3608 = vpop.f32.mrb[0].mxu0
    %3609 = vmatprep.mubr.f32.mxu0 0.0
    %v3610 = vand.u32 %v3276, 4294901760
    %v3611 = vsub.f32 %v3276, %v3610
    %v3612 = vand.u32 %v3611, 4294901760
    %3613 = vmatmul.mubr.f32.gmra.mrb[0].mxu0 %v3612
    %v3614 = vpop.f32.mrb[0].mxu0
    %v3615 = vadd.f32 %v3532, %v3614
    %v3616 = vpop.f32.mrb[0].mxu0
    %3617 = vdwg.mxu0
    %3618 = vmatprep.subr.mxu0 0.0
    %v3619 = vand.u32 %v3267, 4294901760
    %v3620 = vsub.f32 %v3267, %v3619
    %v3621 = vand.u32 %v3620, 4294901760
    %3622 = vmatpush1.msra.mxu0 %v3621
    %3623 = vmatprep.subr.mxu0 0.0
    %v3624 = vand.u32 %v3269, 4294901760
    %v3625 = vsub.f32 %v3269, %v3624
    %v3626 = vand.u32 %v3625, 4294901760
    %3627 = vmatpush1.msra.mxu0 %v3626
    %3628 = vmatprep.subr.mxu0 0.0
    %3629 = vmatpush1.msra.mxu0 0.0
    %3630 = vmatprep.subr.mxu0 0.0
    %3631 = vmatpush1.msra.mxu0 0.0
    %3632 = vmatprep.subr.mxu0 0.0
    %3633 = vmatpush1.msra.mxu0 0.0
    %3634 = vmatprep.subr.mxu0 0.0
    %3635 = vmatpush1.msra.mxu0 0.0
    %3636 = vmatprep.subr.mxu0 0.0
    %3637 = vmatpush1.msra.mxu0 0.0
    %3638 = vmatprep.subr.mxu0 0.0
    %3639 = vmatpush1.msra.mxu0 0.0
    %3640 = vmatprep.subr.mxu0 0.0
    %3641 = vmatpush1.msra.mxu0 0.0
    %3642 = vmatprep.subr.mxu0 0.0
    %3643 = vmatpush1.msra.mxu0 0.0
    %3644 = vmatprep.subr.mxu0 0.0
    %3645 = vmatpush1.msra.mxu0 0.0
    %3646 = vmatprep.subr.mxu0 0.0
    %3647 = vmatpush1.msra.mxu0 0.0
    %3648 = vmatprep.subr.mxu0 0.0
    %3649 = vmatpush1.msra.mxu0 0.0
    %3650 = vmatprep.subr.mxu0 0.0
    %3651 = vmatpush1.msra.mxu0 0.0
    %3652 = vmatprep.subr.mxu0 0.0
    %3653 = vmatpush1.msra.mxu0 0.0
    %3654 = vmatprep.subr.mxu0 0.0
    %3655 = vmatpush1.msra.mxu0 0.0
    %3656 = vmatprep.subr.mxu0 0.0
    %3657 = vmatpush1.msra.mxu0 0.0
    %3658 = vmatprep.subr.mxu0 0.0
    %3659 = vmatpush1.msra.mxu0 0.0
    %3660 = vmatprep.subr.mxu0 0.0
    %3661 = vmatpush1.msra.mxu0 0.0
    %3662 = vmatprep.subr.mxu0 0.0
    %3663 = vmatpush1.msra.mxu0 0.0
    %3664 = vmatprep.subr.mxu0 0.0
    %3665 = vmatpush1.msra.mxu0 0.0
    %3666 = vmatprep.subr.mxu0 0.0
    %3667 = vmatpush1.msra.mxu0 0.0
    %3668 = vmatprep.subr.mxu0 0.0
    %3669 = vmatpush1.msra.mxu0 0.0
    %3670 = vmatprep.subr.mxu0 0.0
    %3671 = vmatpush1.msra.mxu0 0.0
    %3672 = vmatprep.subr.mxu0 0.0
    %3673 = vmatpush1.msra.mxu0 0.0
    %3674 = vmatprep.subr.mxu0 0.0
    %3675 = vmatpush1.msra.mxu0 0.0
    %3676 = vmatprep.subr.mxu0 0.0
    %3677 = vmatpush1.msra.mxu0 0.0
    %3678 = vmatprep.subr.mxu0 0.0
    %3679 = vmatpush1.msra.mxu0 0.0
    %3680 = vmatprep.subr.mxu0 0.0
    %3681 = vmatpush1.msra.mxu0 0.0
    %3682 = vmatprep.subr.mxu0 0.0
    %3683 = vmatpush1.msra.mxu0 0.0
    %3684 = vmatprep.subr.mxu0 0.0
    %3685 = vmatpush1.msra.mxu0 0.0
    %3686 = vmatprep.subr.mxu0 0.0
    %3687 = vmatpush1.msra.mxu0 0.0
    %3688 = vmatprep.mubr.f32.mxu0 0.0
    %v3689 = vand.u32 %v3273, 4294901760
    %3690 = vmatmul.mubr.f32.gmra.mrb[0].mxu0 %v3689
    %v3691 = vpop.f32.mrb[0].mxu0
    %v3692 = vadd.f32 %v3607, %v3691
    %v3693 = vpop.f32.mrb[0].mxu0
    %3694 = vmatprep.mubr.f32.mxu0 0.0
    %v3695 = vand.u32 %v3276, 4294901760
    %3696 = vmatmul.mubr.f32.gmra.mrb[0].mxu0 %v3695
    %v3697 = vpop.f32.mrb[0].mxu0
    %v3698 = vadd.f32 %v3615, %v3697
    %v3699 = vpop.f32.mrb[0].mxu0
    %3700 = vdwg.mxu0
    %3701 = vmatprep.subr.mxu0 0.0
    %v3702 = vand.u32 %v3267, 4294901760
    %3703 = vmatpush1.msra.mxu0 %v3702
    %3704 = vmatprep.subr.mxu0 0.0
    %v3705 = vand.u32 %v3269, 4294901760
    %3706 = vmatpush1.msra.mxu0 %v3705
    %3707 = vmatprep.subr.mxu0 0.0
    %3708 = vmatpush1.msra.mxu0 0.0
    %3709 = vmatprep.subr.mxu0 0.0
    %3710 = vmatpush1.msra.mxu0 0.0
    %3711 = vmatprep.subr.mxu0 0.0
    %3712 = vmatpush1.msra.mxu0 0.0
    %3713 = vmatprep.subr.mxu0 0.0
    %3714 = vmatpush1.msra.mxu0 0.0
    %3715 = vmatprep.subr.mxu0 0.0
    %3716 = vmatpush1.msra.mxu0 0.0
    %3717 = vmatprep.subr.mxu0 0.0
    %3718 = vmatpush1.msra.mxu0 0.0
    %3719 = vmatprep.subr.mxu0 0.0
    %3720 = vmatpush1.msra.mxu0 0.0
    %3721 = vmatprep.subr.mxu0 0.0
    %3722 = vmatpush1.msra.mxu0 0.0
    %3723 = vmatprep.subr.mxu0 0.0
    %3724 = vmatpush1.msra.mxu0 0.0
    %3725 = vmatprep.subr.mxu0 0.0
    %3726 = vmatpush1.msra.mxu0 0.0
    %3727 = vmatprep.subr.mxu0 0.0
    %3728 = vmatpush1.msra.mxu0 0.0
    %3729 = vmatprep.subr.mxu0 0.0
    %3730 = vmatpush1.msra.mxu0 0.0
    %3731 = vmatprep.subr.mxu0 0.0
    %3732 = vmatpush1.msra.mxu0 0.0
    %3733 = vmatprep.subr.mxu0 0.0
    %3734 = vmatpush1.msra.mxu0 0.0
    %3735 = vmatprep.subr.mxu0 0.0
    %3736 = vmatpush1.msra.mxu0 0.0
    %3737 = vmatprep.subr.mxu0 0.0
    %3738 = vmatpush1.msra.mxu0 0.0
    %3739 = vmatprep.subr.mxu0 0.0
    %3740 = vmatpush1.msra.mxu0 0.0
    %3741 = vmatprep.subr.mxu0 0.0
    %3742 = vmatpush1.msra.mxu0 0.0
    %3743 = vmatprep.subr.mxu0 0.0
    %3744 = vmatpush1.msra.mxu0 0.0
    %3745 = vmatprep.subr.mxu0 0.0
    %3746 = vmatpush1.msra.mxu0 0.0
    %3747 = vmatprep.subr.mxu0 0.0
    %3748 = vmatpush1.msra.mxu0 0.0
    %3749 = vmatprep.subr.mxu0 0.0
    %3750 = vmatpush1.msra.mxu0 0.0
    %3751 = vmatprep.subr.mxu0 0.0
    %3752 = vmatpush1.msra.mxu0 0.0
    %3753 = vmatprep.subr.mxu0 0.0
    %3754 = vmatpush1.msra.mxu0 0.0
    %3755 = vmatprep.subr.mxu0 0.0
    %3756 = vmatpush1.msra.mxu0 0.0
    %3757 = vmatprep.subr.mxu0 0.0
    %3758 = vmatpush1.msra.mxu0 0.0
    %3759 = vmatprep.subr.mxu0 0.0
    %3760 = vmatpush1.msra.mxu0 0.0
    %3761 = vmatprep.subr.mxu0 0.0
    %3762 = vmatpush1.msra.mxu0 0.0
    %3763 = vmatprep.subr.mxu0 0.0
    %3764 = vmatpush1.msra.mxu0 0.0
    %3765 = vmatprep.subr.mxu0 0.0
    %3766 = vmatpush1.msra.mxu0 0.0
    %3767 = vmatprep.mubr.f32.mxu0 0.0
    %v3768 = vand.u32 %v3273, 4294901760
    %3769 = vmatmul.mubr.f32.gmra.mrb[0].mxu0 %v3768
    %v3770 = vpop.f32.mrb[0].mxu0
    %v3771 = vadd.f32 %v3692, %v3770
    %v3772 = vpop.f32.mrb[0].mxu0
    %3773 = vmatprep.mubr.f32.mxu0 0.0
    %v3774 = vand.u32 %v3276, 4294901760
    %3775 = vmatmul.mubr.f32.gmra.mrb[0].mxu0 %v3774
    %v3776 = vpop.f32.mrb[0].mxu0
    %v3777 = vadd.f32 %v3698, %v3776
    %v3778 = vpop.f32.mrb[0].mxu0
    %3779 = vdwg.mxu0
    %3780 = vrot.lane.b32.xlu0 %v589, 104
    %v3781 = vpop.permute.xlu0 %3780
    %3782 = vrot.lane.b32.xlu0 %v595, 104
    %v3783 = vpop.permute.xlu0 %3782
    %3784 = vrot.lane.b32.xlu0 %v589, 72
    %v3785 = vpop.permute.xlu0 %3784
    %3786 = vrot.lane.b32.xlu0 %v595, 72
    %v3787 = vpop.permute.xlu0 %3786
    %v3788 = vsel %vm604, %v3781, 0
    %v3790 = vsel %vm604, %v3783, 0
    %v3792 = vsel %vm604, %v3785, 0
    %v3794 = vsel %vm604, %v3787, 0
    %3796 = vmatprep.subr.mxu0 0.0
    %v3797 = vand.u32 %v3792, 4294901760
    %3798 = vmatpush1.xpose.msra.mxu0 %v3797
    %3799 = vmatprep.subr.mxu0 0.0
    %v3800 = vand.u32 %v3794, 4294901760
    %3801 = vmatpush1.xpose.msra.mxu0 %v3800
    %3802 = vmatprep.subr.mxu0 0.0
    %3803 = vmatpush1.xpose.msra.mxu0 0.0
    %3804 = vmatprep.subr.mxu0 0.0
    %3805 = vmatpush1.xpose.msra.mxu0 0.0
    %3806 = vmatprep.subr.mxu0 0.0
    %3807 = vmatpush1.xpose.msra.mxu0 0.0
    %3808 = vmatprep.subr.mxu0 0.0
    %3809 = vmatpush1.xpose.msra.mxu0 0.0
    %3810 = vmatprep.subr.mxu0 0.0
    %3811 = vmatpush1.xpose.msra.mxu0 0.0
    %3812 = vmatprep.subr.mxu0 0.0
    %3813 = vmatpush1.xpose.msra.mxu0 0.0
    %3814 = vmatprep.subr.mxu0 0.0
    %3815 = vmatpush1.xpose.msra.mxu0 0.0
    %3816 = vmatprep.subr.mxu0 0.0
    %3817 = vmatpush1.xpose.msra.mxu0 0.0
    %3818 = vmatprep.subr.mxu0 0.0
    %3819 = vmatpush1.xpose.msra.mxu0 0.0
    %3820 = vmatprep.subr.mxu0 0.0
    %3821 = vmatpush1.xpose.msra.mxu0 0.0
    %3822 = vmatprep.subr.mxu0 0.0
    %3823 = vmatpush1.xpose.msra.mxu0 0.0
    %3824 = vmatprep.subr.mxu0 0.0
    %3825 = vmatpush1.xpose.msra.mxu0 0.0
    %3826 = vmatprep.subr.mxu0 0.0
    %3827 = vmatpush1.xpose.msra.mxu0 0.0
    %3828 = vmatprep.subr.mxu0 0.0
    %3829 = vmatpush1.xpose.msra.mxu0 0.0
    %3830 = vmatprep.subr.mxu0 0.0
    %3831 = vmatpush1.xpose.msra.mxu0 0.0
    %3832 = vmatprep.subr.mxu0 0.0
    %3833 = vmatpush1.xpose.msra.mxu0 0.0
    %3834 = vmatprep.subr.mxu0 0.0
    %3835 = vmatpush1.xpose.msra.mxu0 0.0
    %3836 = vmatprep.subr.mxu0 0.0
    %3837 = vmatpush1.xpose.msra.mxu0 0.0
    %3838 = vmatprep.subr.mxu0 0.0
    %3839 = vmatpush1.xpose.msra.mxu0 0.0
    %3840 = vmatprep.subr.mxu0 0.0
    %3841 = vmatpush1.xpose.msra.mxu0 0.0
    %3842 = vmatprep.subr.mxu0 0.0
    %3843 = vmatpush1.xpose.msra.mxu0 0.0
    %3844 = vmatprep.subr.mxu0 0.0
    %3845 = vmatpush1.xpose.msra.mxu0 0.0
    %3846 = vmatprep.subr.mxu0 0.0
    %3847 = vmatpush1.xpose.msra.mxu0 0.0
    %3848 = vmatprep.subr.mxu0 0.0
    %3849 = vmatpush1.xpose.msra.mxu0 0.0
    %3850 = vmatprep.subr.mxu0 0.0
    %3851 = vmatpush1.xpose.msra.mxu0 0.0
    %3852 = vmatprep.subr.mxu0 0.0
    %3853 = vmatpush1.xpose.msra.mxu0 0.0
    %3854 = vmatprep.subr.mxu0 0.0
    %3855 = vmatpush1.xpose.msra.mxu0 0.0
    %3856 = vmatprep.subr.mxu0 0.0
    %3857 = vmatpush1.xpose.msra.mxu0 0.0
    %3858 = vmatprep.subr.mxu0 0.0
    %3859 = vmatpush1.xpose.msra.mxu0 0.0
    %3860 = vmatprep.subr.mxu0 0.0
    %3861 = vmatpush1.xpose.msra.mxu0 0.0
    %3862 = vmatprep.mubr.f32.mxu0 0.0
    %v3863 = vand.u32 %v3788, 4294901760
    %v3864 = vsub.f32 %v3788, %v3863
    %v3865 = vand.u32 %v3864, 4294901760
    %v3866 = vsub.f32 %v3864, %v3865
    %v3867 = vand.u32 %v3866, 4294901760
    %3868 = vmatmul.mubr.f32.gmra.mrb[0].mxu0 %v3867
    %v3869 = vpop.f32.mrb[0].mxu0
    %v3870 = vadd.f32 0.0, %v3869
    %v3871 = vpop.f32.mrb[0].mxu0
    %3872 = vmatprep.mubr.f32.mxu0 0.0
    %v3873 = vand.u32 %v3790, 4294901760
    %v3874 = vsub.f32 %v3790, %v3873
    %v3875 = vand.u32 %v3874, 4294901760
    %v3876 = vsub.f32 %v3874, %v3875
    %v3877 = vand.u32 %v3876, 4294901760
    %3878 = vmatmul.mubr.f32.gmra.mrb[0].mxu0 %v3877
    %v3879 = vpop.f32.mrb[0].mxu0
    %v3880 = vadd.f32 0.0, %v3879
    %v3881 = vpop.f32.mrb[0].mxu0
    %3882 = vdwg.mxu0
    %3883 = vmatprep.subr.mxu0 0.0
    %v3884 = vand.u32 %v3792, 4294901760
    %v3885 = vsub.f32 %v3792, %v3884
    %v3886 = vand.u32 %v3885, 4294901760
    %v3887 = vsub.f32 %v3885, %v3886
    %v3888 = vand.u32 %v3887, 4294901760
    %3889 = vmatpush1.xpose.msra.mxu0 %v3888
    %3890 = vmatprep.subr.mxu0 0.0
    %v3891 = vand.u32 %v3794, 4294901760
    %v3892 = vsub.f32 %v3794, %v3891
    %v3893 = vand.u32 %v3892, 4294901760
    %v3894 = vsub.f32 %v3892, %v3893
    %v3895 = vand.u32 %v3894, 4294901760
    %3896 = vmatpush1.xpose.msra.mxu0 %v3895
    %3897 = vmatprep.subr.mxu0 0.0
    %3898 = vmatpush1.xpose.msra.mxu0 0.0
    %3899 = vmatprep.subr.mxu0 0.0
    %3900 = vmatpush1.xpose.msra.mxu0 0.0
    %3901 = vmatprep.subr.mxu0 0.0
    %3902 = vmatpush1.xpose.msra.mxu0 0.0
    %3903 = vmatprep.subr.mxu0 0.0
    %3904 = vmatpush1.xpose.msra.mxu0 0.0
    %3905 = vmatprep.subr.mxu0 0.0
    %3906 = vmatpush1.xpose.msra.mxu0 0.0
    %3907 = vmatprep.subr.mxu0 0.0
    %3908 = vmatpush1.xpose.msra.mxu0 0.0
    %3909 = vmatprep.subr.mxu0 0.0
    %3910 = vmatpush1.xpose.msra.mxu0 0.0
    %3911 = vmatprep.subr.mxu0 0.0
    %3912 = vmatpush1.xpose.msra.mxu0 0.0
    %3913 = vmatprep.subr.mxu0 0.0
    %3914 = vmatpush1.xpose.msra.mxu0 0.0
    %3915 = vmatprep.subr.mxu0 0.0
    %3916 = vmatpush1.xpose.msra.mxu0 0.0
    %3917 = vmatprep.subr.mxu0 0.0
    %3918 = vmatpush1.xpose.msra.mxu0 0.0
    %3919 = vmatprep.subr.mxu0 0.0
    %3920 = vmatpush1.xpose.msra.mxu0 0.0
    %3921 = vmatprep.subr.mxu0 0.0
    %3922 = vmatpush1.xpose.msra.mxu0 0.0
    %3923 = vmatprep.subr.mxu0 0.0
    %3924 = vmatpush1.xpose.msra.mxu0 0.0
    %3925 = vmatprep.subr.mxu0 0.0
    %3926 = vmatpush1.xpose.msra.mxu0 0.0
    %3927 = vmatprep.subr.mxu0 0.0
    %3928 = vmatpush1.xpose.msra.mxu0 0.0
    %3929 = vmatprep.subr.mxu0 0.0
    %3930 = vmatpush1.xpose.msra.mxu0 0.0
    %3931 = vmatprep.subr.mxu0 0.0
    %3932 = vmatpush1.xpose.msra.mxu0 0.0
    %3933 = vmatprep.subr.mxu0 0.0
    %3934 = vmatpush1.xpose.msra.mxu0 0.0
    %3935 = vmatprep.subr.mxu0 0.0
    %3936 = vmatpush1.xpose.msra.mxu0 0.0
    %3937 = vmatprep.subr.mxu0 0.0
    %3938 = vmatpush1.xpose.msra.mxu0 0.0
    %3939 = vmatprep.subr.mxu0 0.0
    %3940 = vmatpush1.xpose.msra.mxu0 0.0
    %3941 = vmatprep.subr.mxu0 0.0
    %3942 = vmatpush1.xpose.msra.mxu0 0.0
    %3943 = vmatprep.subr.mxu0 0.0
    %3944 = vmatpush1.xpose.msra.mxu0 0.0
    %3945 = vmatprep.subr.mxu0 0.0
    %3946 = vmatpush1.xpose.msra.mxu0 0.0
    %3947 = vmatprep.subr.mxu0 0.0
    %3948 = vmatpush1.xpose.msra.mxu0 0.0
    %3949 = vmatprep.subr.mxu0 0.0
    %3950 = vmatpush1.xpose.msra.mxu0 0.0
    %3951 = vmatprep.subr.mxu0 0.0
    %3952 = vmatpush1.xpose.msra.mxu0 0.0
    %3953 = vmatprep.subr.mxu0 0.0
    %3954 = vmatpush1.xpose.msra.mxu0 0.0
    %3955 = vmatprep.subr.mxu0 0.0
    %3956 = vmatpush1.xpose.msra.mxu0 0.0
    %3957 = vmatprep.mubr.f32.mxu0 0.0
    %v3958 = vand.u32 %v3788, 4294901760
    %3959 = vmatmul.mubr.f32.gmra.mrb[0].mxu0 %v3958
    %v3960 = vpop.f32.mrb[0].mxu0
    %v3961 = vadd.f32 %v3870, %v3960
    %v3962 = vpop.f32.mrb[0].mxu0
    %3963 = vmatprep.mubr.f32.mxu0 0.0
    %v3964 = vand.u32 %v3790, 4294901760
    %3965 = vmatmul.mubr.f32.gmra.mrb[0].mxu0 %v3964
    %v3966 = vpop.f32.mrb[0].mxu0
    %v3967 = vadd.f32 %v3880, %v3966
    %v3968 = vpop.f32.mrb[0].mxu0
    %3969 = vdwg.mxu0
    %3970 = vmatprep.subr.mxu0 0.0
    %v3971 = vand.u32 %v3792, 4294901760
    %v3972 = vsub.f32 %v3792, %v3971
    %3973 = vmatpush1.xpose.msra.mxu0 %v3972
    %3974 = vmatprep.subr.mxu0 0.0
    %v3975 = vand.u32 %v3794, 4294901760
    %v3976 = vsub.f32 %v3794, %v3975
    %3977 = vmatpush1.xpose.msra.mxu0 %v3976
    %3978 = vmatprep.subr.mxu0 0.0
    %3979 = vmatpush1.xpose.msra.mxu0 0.0
    %3980 = vmatprep.subr.mxu0 0.0
    %3981 = vmatpush1.xpose.msra.mxu0 0.0
    %3982 = vmatprep.subr.mxu0 0.0
    %3983 = vmatpush1.xpose.msra.mxu0 0.0
    %3984 = vmatprep.subr.mxu0 0.0
    %3985 = vmatpush1.xpose.msra.mxu0 0.0
    %3986 = vmatprep.subr.mxu0 0.0
    %3987 = vmatpush1.xpose.msra.mxu0 0.0
    %3988 = vmatprep.subr.mxu0 0.0
    %3989 = vmatpush1.xpose.msra.mxu0 0.0
    %3990 = vmatprep.subr.mxu0 0.0
    %3991 = vmatpush1.xpose.msra.mxu0 0.0
    %3992 = vmatprep.subr.mxu0 0.0
    %3993 = vmatpush1.xpose.msra.mxu0 0.0
    %3994 = vmatprep.subr.mxu0 0.0
    %3995 = vmatpush1.xpose.msra.mxu0 0.0
    %3996 = vmatprep.subr.mxu0 0.0
    %3997 = vmatpush1.xpose.msra.mxu0 0.0
    %3998 = vmatprep.subr.mxu0 0.0
    %3999 = vmatpush1.xpose.msra.mxu0 0.0
    %4000 = vmatprep.subr.mxu0 0.0
    %4001 = vmatpush1.xpose.msra.mxu0 0.0
    %4002 = vmatprep.subr.mxu0 0.0
    %4003 = vmatpush1.xpose.msra.mxu0 0.0
    %4004 = vmatprep.subr.mxu0 0.0
    %4005 = vmatpush1.xpose.msra.mxu0 0.0
    %4006 = vmatprep.subr.mxu0 0.0
    %4007 = vmatpush1.xpose.msra.mxu0 0.0
    %4008 = vmatprep.subr.mxu0 0.0
    %4009 = vmatpush1.xpose.msra.mxu0 0.0
    %4010 = vmatprep.subr.mxu0 0.0
    %4011 = vmatpush1.xpose.msra.mxu0 0.0
    %4012 = vmatprep.subr.mxu0 0.0
    %4013 = vmatpush1.xpose.msra.mxu0 0.0
    %4014 = vmatprep.subr.mxu0 0.0
    %4015 = vmatpush1.xpose.msra.mxu0 0.0
    %4016 = vmatprep.subr.mxu0 0.0
    %4017 = vmatpush1.xpose.msra.mxu0 0.0
    %4018 = vmatprep.subr.mxu0 0.0
    %4019 = vmatpush1.xpose.msra.mxu0 0.0
    %4020 = vmatprep.subr.mxu0 0.0
    %4021 = vmatpush1.xpose.msra.mxu0 0.0
    %4022 = vmatprep.subr.mxu0 0.0
    %4023 = vmatpush1.xpose.msra.mxu0 0.0
    %4024 = vmatprep.subr.mxu0 0.0
    %4025 = vmatpush1.xpose.msra.mxu0 0.0
    %4026 = vmatprep.subr.mxu0 0.0
    %4027 = vmatpush1.xpose.msra.mxu0 0.0
    %4028 = vmatprep.subr.mxu0 0.0
    %4029 = vmatpush1.xpose.msra.mxu0 0.0
    %4030 = vmatprep.subr.mxu0 0.0
    %4031 = vmatpush1.xpose.msra.mxu0 0.0
    %4032 = vmatprep.subr.mxu0 0.0
    %4033 = vmatpush1.xpose.msra.mxu0 0.0
    %4034 = vmatprep.subr.mxu0 0.0
    %4035 = vmatpush1.xpose.msra.mxu0 0.0
    %4036 = vmatprep.subr.mxu0 0.0
    %4037 = vmatpush1.xpose.msra.mxu0 0.0
    %4038 = vmatprep.mubr.f32.mxu0 0.0
    %v4039 = vand.u32 %v3788, 4294901760
    %v4040 = vsub.f32 %v3788, %v4039
    %4041 = vmatmul.mubr.f32.gmra.mrb[0].mxu0 %v4040
    %v4042 = vpop.f32.mrb[0].mxu0
    %v4043 = vadd.f32 %v3961, %v4042
    %v4044 = vpop.f32.mrb[0].mxu0
    %4045 = vmatprep.mubr.f32.mxu0 0.0
    %v4046 = vand.u32 %v3790, 4294901760
    %v4047 = vsub.f32 %v3790, %v4046
    %4048 = vmatmul.mubr.f32.gmra.mrb[0].mxu0 %v4047
    %v4049 = vpop.f32.mrb[0].mxu0
    %v4050 = vadd.f32 %v3967, %v4049
    %v4051 = vpop.f32.mrb[0].mxu0
    %4052 = vdwg.mxu0
    %4053 = vmatprep.subr.mxu0 0.0
    %v4054 = vand.u32 %v3792, 4294901760
    %4055 = vmatpush1.xpose.msra.mxu0 %v4054
    %4056 = vmatprep.subr.mxu0 0.0
    %v4057 = vand.u32 %v3794, 4294901760
    %4058 = vmatpush1.xpose.msra.mxu0 %v4057
    %4059 = vmatprep.subr.mxu0 0.0
    %4060 = vmatpush1.xpose.msra.mxu0 0.0
    %4061 = vmatprep.subr.mxu0 0.0
    %4062 = vmatpush1.xpose.msra.mxu0 0.0
    %4063 = vmatprep.subr.mxu0 0.0
    %4064 = vmatpush1.xpose.msra.mxu0 0.0
    %4065 = vmatprep.subr.mxu0 0.0
    %4066 = vmatpush1.xpose.msra.mxu0 0.0
    %4067 = vmatprep.subr.mxu0 0.0
    %4068 = vmatpush1.xpose.msra.mxu0 0.0
    %4069 = vmatprep.subr.mxu0 0.0
    %4070 = vmatpush1.xpose.msra.mxu0 0.0
    %4071 = vmatprep.subr.mxu0 0.0
    %4072 = vmatpush1.xpose.msra.mxu0 0.0
    %4073 = vmatprep.subr.mxu0 0.0
    %4074 = vmatpush1.xpose.msra.mxu0 0.0
    %4075 = vmatprep.subr.mxu0 0.0
    %4076 = vmatpush1.xpose.msra.mxu0 0.0
    %4077 = vmatprep.subr.mxu0 0.0
    %4078 = vmatpush1.xpose.msra.mxu0 0.0
    %4079 = vmatprep.subr.mxu0 0.0
    %4080 = vmatpush1.xpose.msra.mxu0 0.0
    %4081 = vmatprep.subr.mxu0 0.0
    %4082 = vmatpush1.xpose.msra.mxu0 0.0
    %4083 = vmatprep.subr.mxu0 0.0
    %4084 = vmatpush1.xpose.msra.mxu0 0.0
    %4085 = vmatprep.subr.mxu0 0.0
    %4086 = vmatpush1.xpose.msra.mxu0 0.0
    %4087 = vmatprep.subr.mxu0 0.0
    %4088 = vmatpush1.xpose.msra.mxu0 0.0
    %4089 = vmatprep.subr.mxu0 0.0
    %4090 = vmatpush1.xpose.msra.mxu0 0.0
    %4091 = vmatprep.subr.mxu0 0.0
    %4092 = vmatpush1.xpose.msra.mxu0 0.0
    %4093 = vmatprep.subr.mxu0 0.0
    %4094 = vmatpush1.xpose.msra.mxu0 0.0
    %4095 = vmatprep.subr.mxu0 0.0
    %4096 = vmatpush1.xpose.msra.mxu0 0.0
    %4097 = vmatprep.subr.mxu0 0.0
    %4098 = vmatpush1.xpose.msra.mxu0 0.0
    %4099 = vmatprep.subr.mxu0 0.0
    %4100 = vmatpush1.xpose.msra.mxu0 0.0
    %4101 = vmatprep.subr.mxu0 0.0
    %4102 = vmatpush1.xpose.msra.mxu0 0.0
    %4103 = vmatprep.subr.mxu0 0.0
    %4104 = vmatpush1.xpose.msra.mxu0 0.0
    %4105 = vmatprep.subr.mxu0 0.0
    %4106 = vmatpush1.xpose.msra.mxu0 0.0
    %4107 = vmatprep.subr.mxu0 0.0
    %4108 = vmatpush1.xpose.msra.mxu0 0.0
    %4109 = vmatprep.subr.mxu0 0.0
    %4110 = vmatpush1.xpose.msra.mxu0 0.0
    %4111 = vmatprep.subr.mxu0 0.0
    %4112 = vmatpush1.xpose.msra.mxu0 0.0
    %4113 = vmatprep.subr.mxu0 0.0
    %4114 = vmatpush1.xpose.msra.mxu0 0.0
    %4115 = vmatprep.subr.mxu0 0.0
    %4116 = vmatpush1.xpose.msra.mxu0 0.0
    %4117 = vmatprep.subr.mxu0 0.0
    %4118 = vmatpush1.xpose.msra.mxu0 0.0
    %4119 = vmatprep.mubr.f32.mxu0 0.0
    %v4120 = vand.u32 %v3788, 4294901760
    %v4121 = vsub.f32 %v3788, %v4120
    %v4122 = vand.u32 %v4121, 4294901760
    %4123 = vmatmul.mubr.f32.gmra.mrb[0].mxu0 %v4122
    %v4124 = vpop.f32.mrb[0].mxu0
    %v4125 = vadd.f32 %v4043, %v4124
    %v4126 = vpop.f32.mrb[0].mxu0
    %4127 = vmatprep.mubr.f32.mxu0 0.0
    %v4128 = vand.u32 %v3790, 4294901760
    %v4129 = vsub.f32 %v3790, %v4128
    %v4130 = vand.u32 %v4129, 4294901760
    %4131 = vmatmul.mubr.f32.gmra.mrb[0].mxu0 %v4130
    %v4132 = vpop.f32.mrb[0].mxu0
    %v4133 = vadd.f32 %v4050, %v4132
    %v4134 = vpop.f32.mrb[0].mxu0
    %4135 = vdwg.mxu0
    %4136 = vmatprep.subr.mxu0 0.0
    %v4137 = vand.u32 %v3792, 4294901760
    %v4138 = vsub.f32 %v3792, %v4137
    %v4139 = vand.u32 %v4138, 4294901760
    %4140 = vmatpush1.xpose.msra.mxu0 %v4139
    %4141 = vmatprep.subr.mxu0 0.0
    %v4142 = vand.u32 %v3794, 4294901760
    %v4143 = vsub.f32 %v3794, %v4142
    %v4144 = vand.u32 %v4143, 4294901760
    %4145 = vmatpush1.xpose.msra.mxu0 %v4144
    %4146 = vmatprep.subr.mxu0 0.0
    %4147 = vmatpush1.xpose.msra.mxu0 0.0
    %4148 = vmatprep.subr.mxu0 0.0
    %4149 = vmatpush1.xpose.msra.mxu0 0.0
    %4150 = vmatprep.subr.mxu0 0.0
    %4151 = vmatpush1.xpose.msra.mxu0 0.0
    %4152 = vmatprep.subr.mxu0 0.0
    %4153 = vmatpush1.xpose.msra.mxu0 0.0
    %4154 = vmatprep.subr.mxu0 0.0
    %4155 = vmatpush1.xpose.msra.mxu0 0.0
    %4156 = vmatprep.subr.mxu0 0.0
    %4157 = vmatpush1.xpose.msra.mxu0 0.0
    %4158 = vmatprep.subr.mxu0 0.0
    %4159 = vmatpush1.xpose.msra.mxu0 0.0
    %4160 = vmatprep.subr.mxu0 0.0
    %4161 = vmatpush1.xpose.msra.mxu0 0.0
    %4162 = vmatprep.subr.mxu0 0.0
    %4163 = vmatpush1.xpose.msra.mxu0 0.0
    %4164 = vmatprep.subr.mxu0 0.0
    %4165 = vmatpush1.xpose.msra.mxu0 0.0
    %4166 = vmatprep.subr.mxu0 0.0
    %4167 = vmatpush1.xpose.msra.mxu0 0.0
    %4168 = vmatprep.subr.mxu0 0.0
    %4169 = vmatpush1.xpose.msra.mxu0 0.0
    %4170 = vmatprep.subr.mxu0 0.0
    %4171 = vmatpush1.xpose.msra.mxu0 0.0
    %4172 = vmatprep.subr.mxu0 0.0
    %4173 = vmatpush1.xpose.msra.mxu0 0.0
    %4174 = vmatprep.subr.mxu0 0.0
    %4175 = vmatpush1.xpose.msra.mxu0 0.0
    %4176 = vmatprep.subr.mxu0 0.0
    %4177 = vmatpush1.xpose.msra.mxu0 0.0
    %4178 = vmatprep.subr.mxu0 0.0
    %4179 = vmatpush1.xpose.msra.mxu0 0.0
    %4180 = vmatprep.subr.mxu0 0.0
    %4181 = vmatpush1.xpose.msra.mxu0 0.0
    %4182 = vmatprep.subr.mxu0 0.0
    %4183 = vmatpush1.xpose.msra.mxu0 0.0
    %4184 = vmatprep.subr.mxu0 0.0
    %4185 = vmatpush1.xpose.msra.mxu0 0.0
    %4186 = vmatprep.subr.mxu0 0.0
    %4187 = vmatpush1.xpose.msra.mxu0 0.0
    %4188 = vmatprep.subr.mxu0 0.0
    %4189 = vmatpush1.xpose.msra.mxu0 0.0
    %4190 = vmatprep.subr.mxu0 0.0
    %4191 = vmatpush1.xpose.msra.mxu0 0.0
    %4192 = vmatprep.subr.mxu0 0.0
    %4193 = vmatpush1.xpose.msra.mxu0 0.0
    %4194 = vmatprep.subr.mxu0 0.0
    %4195 = vmatpush1.xpose.msra.mxu0 0.0
    %4196 = vmatprep.subr.mxu0 0.0
    %4197 = vmatpush1.xpose.msra.mxu0 0.0
    %4198 = vmatprep.subr.mxu0 0.0
    %4199 = vmatpush1.xpose.msra.mxu0 0.0
    %4200 = vmatprep.subr.mxu0 0.0
    %4201 = vmatpush1.xpose.msra.mxu0 0.0
    %4202 = vmatprep.subr.mxu0 0.0
    %4203 = vmatpush1.xpose.msra.mxu0 0.0
    %4204 = vmatprep.subr.mxu0 0.0
    %4205 = vmatpush1.xpose.msra.mxu0 0.0
    %4206 = vmatprep.mubr.f32.mxu0 0.0
    %v4207 = vand.u32 %v3788, 4294901760
    %4208 = vmatmul.mubr.f32.gmra.mrb[0].mxu0 %v4207
    %v4209 = vpop.f32.mrb[0].mxu0
    %v4210 = vadd.f32 %v4125, %v4209
    %v4211 = vpop.f32.mrb[0].mxu0
    %4212 = vmatprep.mubr.f32.mxu0 0.0
    %v4213 = vand.u32 %v3790, 4294901760
    %4214 = vmatmul.mubr.f32.gmra.mrb[0].mxu0 %v4213
    %v4215 = vpop.f32.mrb[0].mxu0
    %v4216 = vadd.f32 %v4133, %v4215
    %v4217 = vpop.f32.mrb[0].mxu0
    %4218 = vdwg.mxu0
    %4219 = vmatprep.subr.mxu0 0.0
    %v4220 = vand.u32 %v3792, 4294901760
    %4221 = vmatpush1.xpose.msra.mxu0 %v4220
    %4222 = vmatprep.subr.mxu0 0.0
    %v4223 = vand.u32 %v3794, 4294901760
    %4224 = vmatpush1.xpose.msra.mxu0 %v4223
    %4225 = vmatprep.subr.mxu0 0.0
    %4226 = vmatpush1.xpose.msra.mxu0 0.0
    %4227 = vmatprep.subr.mxu0 0.0
    %4228 = vmatpush1.xpose.msra.mxu0 0.0
    %4229 = vmatprep.subr.mxu0 0.0
    %4230 = vmatpush1.xpose.msra.mxu0 0.0
    %4231 = vmatprep.subr.mxu0 0.0
    %4232 = vmatpush1.xpose.msra.mxu0 0.0
    %4233 = vmatprep.subr.mxu0 0.0
    %4234 = vmatpush1.xpose.msra.mxu0 0.0
    %4235 = vmatprep.subr.mxu0 0.0
    %4236 = vmatpush1.xpose.msra.mxu0 0.0
    %4237 = vmatprep.subr.mxu0 0.0
    %4238 = vmatpush1.xpose.msra.mxu0 0.0
    %4239 = vmatprep.subr.mxu0 0.0
    %4240 = vmatpush1.xpose.msra.mxu0 0.0
    %4241 = vmatprep.subr.mxu0 0.0
    %4242 = vmatpush1.xpose.msra.mxu0 0.0
    %4243 = vmatprep.subr.mxu0 0.0
    %4244 = vmatpush1.xpose.msra.mxu0 0.0
    %4245 = vmatprep.subr.mxu0 0.0
    %4246 = vmatpush1.xpose.msra.mxu0 0.0
    %4247 = vmatprep.subr.mxu0 0.0
    %4248 = vmatpush1.xpose.msra.mxu0 0.0
    %4249 = vmatprep.subr.mxu0 0.0
    %4250 = vmatpush1.xpose.msra.mxu0 0.0
    %4251 = vmatprep.subr.mxu0 0.0
    %4252 = vmatpush1.xpose.msra.mxu0 0.0
    %4253 = vmatprep.subr.mxu0 0.0
    %4254 = vmatpush1.xpose.msra.mxu0 0.0
    %4255 = vmatprep.subr.mxu0 0.0
    %4256 = vmatpush1.xpose.msra.mxu0 0.0
    %4257 = vmatprep.subr.mxu0 0.0
    %4258 = vmatpush1.xpose.msra.mxu0 0.0
    %4259 = vmatprep.subr.mxu0 0.0
    %4260 = vmatpush1.xpose.msra.mxu0 0.0
    %4261 = vmatprep.subr.mxu0 0.0
    %4262 = vmatpush1.xpose.msra.mxu0 0.0
    %4263 = vmatprep.subr.mxu0 0.0
    %4264 = vmatpush1.xpose.msra.mxu0 0.0
    %4265 = vmatprep.subr.mxu0 0.0
    %4266 = vmatpush1.xpose.msra.mxu0 0.0
    %4267 = vmatprep.subr.mxu0 0.0
    %4268 = vmatpush1.xpose.msra.mxu0 0.0
    %4269 = vmatprep.subr.mxu0 0.0
    %4270 = vmatpush1.xpose.msra.mxu0 0.0
    %4271 = vmatprep.subr.mxu0 0.0
    %4272 = vmatpush1.xpose.msra.mxu0 0.0
    %4273 = vmatprep.subr.mxu0 0.0
    %4274 = vmatpush1.xpose.msra.mxu0 0.0
    %4275 = vmatprep.subr.mxu0 0.0
    %4276 = vmatpush1.xpose.msra.mxu0 0.0
    %4277 = vmatprep.subr.mxu0 0.0
    %4278 = vmatpush1.xpose.msra.mxu0 0.0
    %4279 = vmatprep.subr.mxu0 0.0
    %4280 = vmatpush1.xpose.msra.mxu0 0.0
    %4281 = vmatprep.subr.mxu0 0.0
    %4282 = vmatpush1.xpose.msra.mxu0 0.0
    %4283 = vmatprep.subr.mxu0 0.0
    %4284 = vmatpush1.xpose.msra.mxu0 0.0
    %4285 = vmatprep.mubr.f32.mxu0 0.0
    %v4286 = vand.u32 %v3788, 4294901760
    %4287 = vmatmul.mubr.f32.gmra.mrb[0].mxu0 %v4286
    %v4288 = vpop.f32.mrb[0].mxu0
    %v4289 = vadd.f32 %v4210, %v4288
    %v4290 = vpop.f32.mrb[0].mxu0
    %4291 = vmatprep.mubr.f32.mxu0 0.0
    %v4292 = vand.u32 %v3790, 4294901760
    %4293 = vmatmul.mubr.f32.gmra.mrb[0].mxu0 %v4292
    %v4294 = vpop.f32.mrb[0].mxu0
    %v4295 = vadd.f32 %v4216, %v4294
    %v4296 = vpop.f32.mrb[0].mxu0
    %4297 = vdwg.mxu0
    %v4298 = vmul.f32 %v4289, 0.35355338
    %v4299 = vmul.f32 %v4295, 0.35355338
    %v4300 = vadd.f32 %v4298, %v1120
    %v4301 = vadd.f32 %v4299, %v1122
    %v4302 = vsel %vm1127, %v4300, -inf
    %4303 = vmax.xlane.f32.xlu0 %v4302
    %v4304 = vpop.xlane.xlu0 %4303
    %v4305 = vsel %vm1127, %v4301, -inf
    %4306 = vmax.xlane.f32.xlu0 %v4305
    %v4307 = vpop.xlane.xlu0 %4306
    %v4308 = vsub.f32 %v4300, %v4304
    %v4309 = vsub.f32 %v4301, %v4307
    %v4310 = vmul.f32 %v4308, 1.442695
    %v4311 = vpow.pop %v4310
    %v4312 = vmul.f32 %v4309, 1.442695
    %v4313 = vpow.pop %v4312
    %v4314 = vsel %vm1127, %v4311, 0.0
    %4315 = vadd.xlane.f32.xlu0 %v4314
    %v4316 = vpop.xlane.xlu0 %4315
    %v4317 = vsel %vm1127, %v4313, 0.0
    %4318 = vadd.xlane.f32.xlu0 %v4317
    %v4319 = vpop.xlane.xlu0 %4318
    %v4320 = vrcp.pop %v4316
    %v4321 = vmul.f32 %v4311, %v4320
    %v4322 = vrcp.pop %v4319
    %v4323 = vmul.f32 %v4313, %v4322
    %4324 = vrot.lane.b32.xlu0 %v589, 40
    %v4325 = vpop.permute.xlu0 %4324
    %4326 = vrot.lane.b32.xlu0 %v595, 40
    %v4327 = vpop.permute.xlu0 %4326
    %v4331 = vsel %vm1127, %v4321, 0
    %v4334 = vsel %vm1127, %v4323, 0
    %4336 = vmatprep.subr.mxu0 0.0
    %v4337 = vand.u32 %v4325, 4294901760
    %4338 = vmatpush1.msra.mxu0 %v4337
    %4339 = vmatprep.subr.mxu0 0.0
    %v4340 = vand.u32 %v4327, 4294901760
    %4341 = vmatpush1.msra.mxu0 %v4340
    %4342 = vmatprep.subr.mxu0 0.0
    %4343 = vmatpush1.msra.mxu0 0.0
    %4344 = vmatprep.subr.mxu0 0.0
    %4345 = vmatpush1.msra.mxu0 0.0
    %4346 = vmatprep.subr.mxu0 0.0
    %4347 = vmatpush1.msra.mxu0 0.0
    %4348 = vmatprep.subr.mxu0 0.0
    %4349 = vmatpush1.msra.mxu0 0.0
    %4350 = vmatprep.subr.mxu0 0.0
    %4351 = vmatpush1.msra.mxu0 0.0
    %4352 = vmatprep.subr.mxu0 0.0
    %4353 = vmatpush1.msra.mxu0 0.0
    %4354 = vmatprep.subr.mxu0 0.0
    %4355 = vmatpush1.msra.mxu0 0.0
    %4356 = vmatprep.subr.mxu0 0.0
    %4357 = vmatpush1.msra.mxu0 0.0
    %4358 = vmatprep.subr.mxu0 0.0
    %4359 = vmatpush1.msra.mxu0 0.0
    %4360 = vmatprep.subr.mxu0 0.0
    %4361 = vmatpush1.msra.mxu0 0.0
    %4362 = vmatprep.subr.mxu0 0.0
    %4363 = vmatpush1.msra.mxu0 0.0
    %4364 = vmatprep.subr.mxu0 0.0
    %4365 = vmatpush1.msra.mxu0 0.0
    %4366 = vmatprep.subr.mxu0 0.0
    %4367 = vmatpush1.msra.mxu0 0.0
    %4368 = vmatprep.subr.mxu0 0.0
    %4369 = vmatpush1.msra.mxu0 0.0
    %4370 = vmatprep.subr.mxu0 0.0
    %4371 = vmatpush1.msra.mxu0 0.0
    %4372 = vmatprep.subr.mxu0 0.0
    %4373 = vmatpush1.msra.mxu0 0.0
    %4374 = vmatprep.subr.mxu0 0.0
    %4375 = vmatpush1.msra.mxu0 0.0
    %4376 = vmatprep.subr.mxu0 0.0
    %4377 = vmatpush1.msra.mxu0 0.0
    %4378 = vmatprep.subr.mxu0 0.0
    %4379 = vmatpush1.msra.mxu0 0.0
    %4380 = vmatprep.subr.mxu0 0.0
    %4381 = vmatpush1.msra.mxu0 0.0
    %4382 = vmatprep.subr.mxu0 0.0
    %4383 = vmatpush1.msra.mxu0 0.0
    %4384 = vmatprep.subr.mxu0 0.0
    %4385 = vmatpush1.msra.mxu0 0.0
    %4386 = vmatprep.subr.mxu0 0.0
    %4387 = vmatpush1.msra.mxu0 0.0
    %4388 = vmatprep.subr.mxu0 0.0
    %4389 = vmatpush1.msra.mxu0 0.0
    %4390 = vmatprep.subr.mxu0 0.0
    %4391 = vmatpush1.msra.mxu0 0.0
    %4392 = vmatprep.subr.mxu0 0.0
    %4393 = vmatpush1.msra.mxu0 0.0
    %4394 = vmatprep.subr.mxu0 0.0
    %4395 = vmatpush1.msra.mxu0 0.0
    %4396 = vmatprep.subr.mxu0 0.0
    %4397 = vmatpush1.msra.mxu0 0.0
    %4398 = vmatprep.subr.mxu0 0.0
    %4399 = vmatpush1.msra.mxu0 0.0
    %4400 = vmatprep.subr.mxu0 0.0
    %4401 = vmatpush1.msra.mxu0 0.0
    %4402 = vmatprep.mubr.f32.mxu0 0.0
    %v4403 = vand.u32 %v4331, 4294901760
    %v4404 = vsub.f32 %v4331, %v4403
    %v4405 = vand.u32 %v4404, 4294901760
    %v4406 = vsub.f32 %v4404, %v4405
    %v4407 = vand.u32 %v4406, 4294901760
    %4408 = vmatmul.mubr.f32.gmra.mrb[0].mxu0 %v4407
    %v4409 = vpop.f32.mrb[0].mxu0
    %v4410 = vadd.f32 0.0, %v4409
    %v4411 = vpop.f32.mrb[0].mxu0
    %4412 = vmatprep.mubr.f32.mxu0 0.0
    %v4413 = vand.u32 %v4334, 4294901760
    %v4414 = vsub.f32 %v4334, %v4413
    %v4415 = vand.u32 %v4414, 4294901760
    %v4416 = vsub.f32 %v4414, %v4415
    %v4417 = vand.u32 %v4416, 4294901760
    %4418 = vmatmul.mubr.f32.gmra.mrb[0].mxu0 %v4417
    %v4419 = vpop.f32.mrb[0].mxu0
    %v4420 = vadd.f32 0.0, %v4419
    %v4421 = vpop.f32.mrb[0].mxu0
    %4422 = vdwg.mxu0
    %4423 = vmatprep.subr.mxu0 0.0
    %v4424 = vand.u32 %v4325, 4294901760
    %v4425 = vsub.f32 %v4325, %v4424
    %v4426 = vand.u32 %v4425, 4294901760
    %v4427 = vsub.f32 %v4425, %v4426
    %v4428 = vand.u32 %v4427, 4294901760
    %4429 = vmatpush1.msra.mxu0 %v4428
    %4430 = vmatprep.subr.mxu0 0.0
    %v4431 = vand.u32 %v4327, 4294901760
    %v4432 = vsub.f32 %v4327, %v4431
    %v4433 = vand.u32 %v4432, 4294901760
    %v4434 = vsub.f32 %v4432, %v4433
    %v4435 = vand.u32 %v4434, 4294901760
    %4436 = vmatpush1.msra.mxu0 %v4435
    %4437 = vmatprep.subr.mxu0 0.0
    %4438 = vmatpush1.msra.mxu0 0.0
    %4439 = vmatprep.subr.mxu0 0.0
    %4440 = vmatpush1.msra.mxu0 0.0
    %4441 = vmatprep.subr.mxu0 0.0
    %4442 = vmatpush1.msra.mxu0 0.0
    %4443 = vmatprep.subr.mxu0 0.0
    %4444 = vmatpush1.msra.mxu0 0.0
    %4445 = vmatprep.subr.mxu0 0.0
    %4446 = vmatpush1.msra.mxu0 0.0
    %4447 = vmatprep.subr.mxu0 0.0
    %4448 = vmatpush1.msra.mxu0 0.0
    %4449 = vmatprep.subr.mxu0 0.0
    %4450 = vmatpush1.msra.mxu0 0.0
    %4451 = vmatprep.subr.mxu0 0.0
    %4452 = vmatpush1.msra.mxu0 0.0
    %4453 = vmatprep.subr.mxu0 0.0
    %4454 = vmatpush1.msra.mxu0 0.0
    %4455 = vmatprep.subr.mxu0 0.0
    %4456 = vmatpush1.msra.mxu0 0.0
    %4457 = vmatprep.subr.mxu0 0.0
    %4458 = vmatpush1.msra.mxu0 0.0
    %4459 = vmatprep.subr.mxu0 0.0
    %4460 = vmatpush1.msra.mxu0 0.0
    %4461 = vmatprep.subr.mxu0 0.0
    %4462 = vmatpush1.msra.mxu0 0.0
    %4463 = vmatprep.subr.mxu0 0.0
    %4464 = vmatpush1.msra.mxu0 0.0
    %4465 = vmatprep.subr.mxu0 0.0
    %4466 = vmatpush1.msra.mxu0 0.0
    %4467 = vmatprep.subr.mxu0 0.0
    %4468 = vmatpush1.msra.mxu0 0.0
    %4469 = vmatprep.subr.mxu0 0.0
    %4470 = vmatpush1.msra.mxu0 0.0
    %4471 = vmatprep.subr.mxu0 0.0
    %4472 = vmatpush1.msra.mxu0 0.0
    %4473 = vmatprep.subr.mxu0 0.0
    %4474 = vmatpush1.msra.mxu0 0.0
    %4475 = vmatprep.subr.mxu0 0.0
    %4476 = vmatpush1.msra.mxu0 0.0
    %4477 = vmatprep.subr.mxu0 0.0
    %4478 = vmatpush1.msra.mxu0 0.0
    %4479 = vmatprep.subr.mxu0 0.0
    %4480 = vmatpush1.msra.mxu0 0.0
    %4481 = vmatprep.subr.mxu0 0.0
    %4482 = vmatpush1.msra.mxu0 0.0
    %4483 = vmatprep.subr.mxu0 0.0
    %4484 = vmatpush1.msra.mxu0 0.0
    %4485 = vmatprep.subr.mxu0 0.0
    %4486 = vmatpush1.msra.mxu0 0.0
    %4487 = vmatprep.subr.mxu0 0.0
    %4488 = vmatpush1.msra.mxu0 0.0
    %4489 = vmatprep.subr.mxu0 0.0
    %4490 = vmatpush1.msra.mxu0 0.0
    %4491 = vmatprep.subr.mxu0 0.0
    %4492 = vmatpush1.msra.mxu0 0.0
    %4493 = vmatprep.subr.mxu0 0.0
    %4494 = vmatpush1.msra.mxu0 0.0
    %4495 = vmatprep.subr.mxu0 0.0
    %4496 = vmatpush1.msra.mxu0 0.0
    %4497 = vmatprep.mubr.f32.mxu0 0.0
    %v4498 = vand.u32 %v4331, 4294901760
    %4499 = vmatmul.mubr.f32.gmra.mrb[0].mxu0 %v4498
    %v4500 = vpop.f32.mrb[0].mxu0
    %v4501 = vadd.f32 %v4410, %v4500
    %v4502 = vpop.f32.mrb[0].mxu0
    %4503 = vmatprep.mubr.f32.mxu0 0.0
    %v4504 = vand.u32 %v4334, 4294901760
    %4505 = vmatmul.mubr.f32.gmra.mrb[0].mxu0 %v4504
    %v4506 = vpop.f32.mrb[0].mxu0
    %v4507 = vadd.f32 %v4420, %v4506
    %v4508 = vpop.f32.mrb[0].mxu0
    %4509 = vdwg.mxu0
    %4510 = vmatprep.subr.mxu0 0.0
    %v4511 = vand.u32 %v4325, 4294901760
    %v4512 = vsub.f32 %v4325, %v4511
    %4513 = vmatpush1.msra.mxu0 %v4512
    %4514 = vmatprep.subr.mxu0 0.0
    %v4515 = vand.u32 %v4327, 4294901760
    %v4516 = vsub.f32 %v4327, %v4515
    %4517 = vmatpush1.msra.mxu0 %v4516
    %4518 = vmatprep.subr.mxu0 0.0
    %4519 = vmatpush1.msra.mxu0 0.0
    %4520 = vmatprep.subr.mxu0 0.0
    %4521 = vmatpush1.msra.mxu0 0.0
    %4522 = vmatprep.subr.mxu0 0.0
    %4523 = vmatpush1.msra.mxu0 0.0
    %4524 = vmatprep.subr.mxu0 0.0
    %4525 = vmatpush1.msra.mxu0 0.0
    %4526 = vmatprep.subr.mxu0 0.0
    %4527 = vmatpush1.msra.mxu0 0.0
    %4528 = vmatprep.subr.mxu0 0.0
    %4529 = vmatpush1.msra.mxu0 0.0
    %4530 = vmatprep.subr.mxu0 0.0
    %4531 = vmatpush1.msra.mxu0 0.0
    %4532 = vmatprep.subr.mxu0 0.0
    %4533 = vmatpush1.msra.mxu0 0.0
    %4534 = vmatprep.subr.mxu0 0.0
    %4535 = vmatpush1.msra.mxu0 0.0
    %4536 = vmatprep.subr.mxu0 0.0
    %4537 = vmatpush1.msra.mxu0 0.0
    %4538 = vmatprep.subr.mxu0 0.0
    %4539 = vmatpush1.msra.mxu0 0.0
    %4540 = vmatprep.subr.mxu0 0.0
    %4541 = vmatpush1.msra.mxu0 0.0
    %4542 = vmatprep.subr.mxu0 0.0
    %4543 = vmatpush1.msra.mxu0 0.0
    %4544 = vmatprep.subr.mxu0 0.0
    %4545 = vmatpush1.msra.mxu0 0.0
    %4546 = vmatprep.subr.mxu0 0.0
    %4547 = vmatpush1.msra.mxu0 0.0
    %4548 = vmatprep.subr.mxu0 0.0
    %4549 = vmatpush1.msra.mxu0 0.0
    %4550 = vmatprep.subr.mxu0 0.0
    %4551 = vmatpush1.msra.mxu0 0.0
    %4552 = vmatprep.subr.mxu0 0.0
    %4553 = vmatpush1.msra.mxu0 0.0
    %4554 = vmatprep.subr.mxu0 0.0
    %4555 = vmatpush1.msra.mxu0 0.0
    %4556 = vmatprep.subr.mxu0 0.0
    %4557 = vmatpush1.msra.mxu0 0.0
    %4558 = vmatprep.subr.mxu0 0.0
    %4559 = vmatpush1.msra.mxu0 0.0
    %4560 = vmatprep.subr.mxu0 0.0
    %4561 = vmatpush1.msra.mxu0 0.0
    %4562 = vmatprep.subr.mxu0 0.0
    %4563 = vmatpush1.msra.mxu0 0.0
    %4564 = vmatprep.subr.mxu0 0.0
    %4565 = vmatpush1.msra.mxu0 0.0
    %4566 = vmatprep.subr.mxu0 0.0
    %4567 = vmatpush1.msra.mxu0 0.0
    %4568 = vmatprep.subr.mxu0 0.0
    %4569 = vmatpush1.msra.mxu0 0.0
    %4570 = vmatprep.subr.mxu0 0.0
    %4571 = vmatpush1.msra.mxu0 0.0
    %4572 = vmatprep.subr.mxu0 0.0
    %4573 = vmatpush1.msra.mxu0 0.0
    %4574 = vmatprep.subr.mxu0 0.0
    %4575 = vmatpush1.msra.mxu0 0.0
    %4576 = vmatprep.subr.mxu0 0.0
    %4577 = vmatpush1.msra.mxu0 0.0
    %4578 = vmatprep.mubr.f32.mxu0 0.0
    %v4579 = vand.u32 %v4331, 4294901760
    %v4580 = vsub.f32 %v4331, %v4579
    %4581 = vmatmul.mubr.f32.gmra.mrb[0].mxu0 %v4580
    %v4582 = vpop.f32.mrb[0].mxu0
    %v4583 = vadd.f32 %v4501, %v4582
    %v4584 = vpop.f32.mrb[0].mxu0
    %4585 = vmatprep.mubr.f32.mxu0 0.0
    %v4586 = vand.u32 %v4334, 4294901760
    %v4587 = vsub.f32 %v4334, %v4586
    %4588 = vmatmul.mubr.f32.gmra.mrb[0].mxu0 %v4587
    %v4589 = vpop.f32.mrb[0].mxu0
    %v4590 = vadd.f32 %v4507, %v4589
    %v4591 = vpop.f32.mrb[0].mxu0
    %4592 = vdwg.mxu0
    %4593 = vmatprep.subr.mxu0 0.0
    %v4594 = vand.u32 %v4325, 4294901760
    %4595 = vmatpush1.msra.mxu0 %v4594
    %4596 = vmatprep.subr.mxu0 0.0
    %v4597 = vand.u32 %v4327, 4294901760
    %4598 = vmatpush1.msra.mxu0 %v4597
    %4599 = vmatprep.subr.mxu0 0.0
    %4600 = vmatpush1.msra.mxu0 0.0
    %4601 = vmatprep.subr.mxu0 0.0
    %4602 = vmatpush1.msra.mxu0 0.0
    %4603 = vmatprep.subr.mxu0 0.0
    %4604 = vmatpush1.msra.mxu0 0.0
    %4605 = vmatprep.subr.mxu0 0.0
    %4606 = vmatpush1.msra.mxu0 0.0
    %4607 = vmatprep.subr.mxu0 0.0
    %4608 = vmatpush1.msra.mxu0 0.0
    %4609 = vmatprep.subr.mxu0 0.0
    %4610 = vmatpush1.msra.mxu0 0.0
    %4611 = vmatprep.subr.mxu0 0.0
    %4612 = vmatpush1.msra.mxu0 0.0
    %4613 = vmatprep.subr.mxu0 0.0
    %4614 = vmatpush1.msra.mxu0 0.0
    %4615 = vmatprep.subr.mxu0 0.0
    %4616 = vmatpush1.msra.mxu0 0.0
    %4617 = vmatprep.subr.mxu0 0.0
    %4618 = vmatpush1.msra.mxu0 0.0
    %4619 = vmatprep.subr.mxu0 0.0
    %4620 = vmatpush1.msra.mxu0 0.0
    %4621 = vmatprep.subr.mxu0 0.0
    %4622 = vmatpush1.msra.mxu0 0.0
    %4623 = vmatprep.subr.mxu0 0.0
    %4624 = vmatpush1.msra.mxu0 0.0
    %4625 = vmatprep.subr.mxu0 0.0
    %4626 = vmatpush1.msra.mxu0 0.0
    %4627 = vmatprep.subr.mxu0 0.0
    %4628 = vmatpush1.msra.mxu0 0.0
    %4629 = vmatprep.subr.mxu0 0.0
    %4630 = vmatpush1.msra.mxu0 0.0
    %4631 = vmatprep.subr.mxu0 0.0
    %4632 = vmatpush1.msra.mxu0 0.0
    %4633 = vmatprep.subr.mxu0 0.0
    %4634 = vmatpush1.msra.mxu0 0.0
    %4635 = vmatprep.subr.mxu0 0.0
    %4636 = vmatpush1.msra.mxu0 0.0
    %4637 = vmatprep.subr.mxu0 0.0
    %4638 = vmatpush1.msra.mxu0 0.0
    %4639 = vmatprep.subr.mxu0 0.0
    %4640 = vmatpush1.msra.mxu0 0.0
    %4641 = vmatprep.subr.mxu0 0.0
    %4642 = vmatpush1.msra.mxu0 0.0
    %4643 = vmatprep.subr.mxu0 0.0
    %4644 = vmatpush1.msra.mxu0 0.0
    %4645 = vmatprep.subr.mxu0 0.0
    %4646 = vmatpush1.msra.mxu0 0.0
    %4647 = vmatprep.subr.mxu0 0.0
    %4648 = vmatpush1.msra.mxu0 0.0
    %4649 = vmatprep.subr.mxu0 0.0
    %4650 = vmatpush1.msra.mxu0 0.0
    %4651 = vmatprep.subr.mxu0 0.0
    %4652 = vmatpush1.msra.mxu0 0.0
    %4653 = vmatprep.subr.mxu0 0.0
    %4654 = vmatpush1.msra.mxu0 0.0
    %4655 = vmatprep.subr.mxu0 0.0
    %4656 = vmatpush1.msra.mxu0 0.0
    %4657 = vmatprep.subr.mxu0 0.0
    %4658 = vmatpush1.msra.mxu0 0.0
    %4659 = vmatprep.mubr.f32.mxu0 0.0
    %v4660 = vand.u32 %v4331, 4294901760
    %v4661 = vsub.f32 %v4331, %v4660
    %v4662 = vand.u32 %v4661, 4294901760
    %4663 = vmatmul.mubr.f32.gmra.mrb[0].mxu0 %v4662
    %v4664 = vpop.f32.mrb[0].mxu0
    %v4665 = vadd.f32 %v4583, %v4664
    %v4666 = vpop.f32.mrb[0].mxu0
    %4667 = vmatprep.mubr.f32.mxu0 0.0
    %v4668 = vand.u32 %v4334, 4294901760
    %v4669 = vsub.f32 %v4334, %v4668
    %v4670 = vand.u32 %v4669, 4294901760
    %4671 = vmatmul.mubr.f32.gmra.mrb[0].mxu0 %v4670
    %v4672 = vpop.f32.mrb[0].mxu0
    %v4673 = vadd.f32 %v4590, %v4672
    %v4674 = vpop.f32.mrb[0].mxu0
    %4675 = vdwg.mxu0
    %4676 = vmatprep.subr.mxu0 0.0
    %v4677 = vand.u32 %v4325, 4294901760
    %v4678 = vsub.f32 %v4325, %v4677
    %v4679 = vand.u32 %v4678, 4294901760
    %4680 = vmatpush1.msra.mxu0 %v4679
    %4681 = vmatprep.subr.mxu0 0.0
    %v4682 = vand.u32 %v4327, 4294901760
    %v4683 = vsub.f32 %v4327, %v4682
    %v4684 = vand.u32 %v4683, 4294901760
    %4685 = vmatpush1.msra.mxu0 %v4684
    %4686 = vmatprep.subr.mxu0 0.0
    %4687 = vmatpush1.msra.mxu0 0.0
    %4688 = vmatprep.subr.mxu0 0.0
    %4689 = vmatpush1.msra.mxu0 0.0
    %4690 = vmatprep.subr.mxu0 0.0
    %4691 = vmatpush1.msra.mxu0 0.0
    %4692 = vmatprep.subr.mxu0 0.0
    %4693 = vmatpush1.msra.mxu0 0.0
    %4694 = vmatprep.subr.mxu0 0.0
    %4695 = vmatpush1.msra.mxu0 0.0
    %4696 = vmatprep.subr.mxu0 0.0
    %4697 = vmatpush1.msra.mxu0 0.0
    %4698 = vmatprep.subr.mxu0 0.0
    %4699 = vmatpush1.msra.mxu0 0.0
    %4700 = vmatprep.subr.mxu0 0.0
    %4701 = vmatpush1.msra.mxu0 0.0
    %4702 = vmatprep.subr.mxu0 0.0
    %4703 = vmatpush1.msra.mxu0 0.0
    %4704 = vmatprep.subr.mxu0 0.0
    %4705 = vmatpush1.msra.mxu0 0.0
    %4706 = vmatprep.subr.mxu0 0.0
    %4707 = vmatpush1.msra.mxu0 0.0
    %4708 = vmatprep.subr.mxu0 0.0
    %4709 = vmatpush1.msra.mxu0 0.0
    %4710 = vmatprep.subr.mxu0 0.0
    %4711 = vmatpush1.msra.mxu0 0.0
    %4712 = vmatprep.subr.mxu0 0.0
    %4713 = vmatpush1.msra.mxu0 0.0
    %4714 = vmatprep.subr.mxu0 0.0
    %4715 = vmatpush1.msra.mxu0 0.0
    %4716 = vmatprep.subr.mxu0 0.0
    %4717 = vmatpush1.msra.mxu0 0.0
    %4718 = vmatprep.subr.mxu0 0.0
    %4719 = vmatpush1.msra.mxu0 0.0
    %4720 = vmatprep.subr.mxu0 0.0
    %4721 = vmatpush1.msra.mxu0 0.0
    %4722 = vmatprep.subr.mxu0 0.0
    %4723 = vmatpush1.msra.mxu0 0.0
    %4724 = vmatprep.subr.mxu0 0.0
    %4725 = vmatpush1.msra.mxu0 0.0
    %4726 = vmatprep.subr.mxu0 0.0
    %4727 = vmatpush1.msra.mxu0 0.0
    %4728 = vmatprep.subr.mxu0 0.0
    %4729 = vmatpush1.msra.mxu0 0.0
    %4730 = vmatprep.subr.mxu0 0.0
    %4731 = vmatpush1.msra.mxu0 0.0
    %4732 = vmatprep.subr.mxu0 0.0
    %4733 = vmatpush1.msra.mxu0 0.0
    %4734 = vmatprep.subr.mxu0 0.0
    %4735 = vmatpush1.msra.mxu0 0.0
    %4736 = vmatprep.subr.mxu0 0.0
    %4737 = vmatpush1.msra.mxu0 0.0
    %4738 = vmatprep.subr.mxu0 0.0
    %4739 = vmatpush1.msra.mxu0 0.0
    %4740 = vmatprep.subr.mxu0 0.0
    %4741 = vmatpush1.msra.mxu0 0.0
    %4742 = vmatprep.subr.mxu0 0.0
    %4743 = vmatpush1.msra.mxu0 0.0
    %4744 = vmatprep.subr.mxu0 0.0
    %4745 = vmatpush1.msra.mxu0 0.0
    %4746 = vmatprep.mubr.f32.mxu0 0.0
    %v4747 = vand.u32 %v4331, 4294901760
    %4748 = vmatmul.mubr.f32.gmra.mrb[0].mxu0 %v4747
    %v4749 = vpop.f32.mrb[0].mxu0
    %v4750 = vadd.f32 %v4665, %v4749
    %v4751 = vpop.f32.mrb[0].mxu0
    %4752 = vmatprep.mubr.f32.mxu0 0.0
    %v4753 = vand.u32 %v4334, 4294901760
    %4754 = vmatmul.mubr.f32.gmra.mrb[0].mxu0 %v4753
    %v4755 = vpop.f32.mrb[0].mxu0
    %v4756 = vadd.f32 %v4673, %v4755
    %v4757 = vpop.f32.mrb[0].mxu0
    %4758 = vdwg.mxu0
    %4759 = vmatprep.subr.mxu0 0.0
    %v4760 = vand.u32 %v4325, 4294901760
    %4761 = vmatpush1.msra.mxu0 %v4760
    %4762 = vmatprep.subr.mxu0 0.0
    %v4763 = vand.u32 %v4327, 4294901760
    %4764 = vmatpush1.msra.mxu0 %v4763
    %4765 = vmatprep.subr.mxu0 0.0
    %4766 = vmatpush1.msra.mxu0 0.0
    %4767 = vmatprep.subr.mxu0 0.0
    %4768 = vmatpush1.msra.mxu0 0.0
    %4769 = vmatprep.subr.mxu0 0.0
    %4770 = vmatpush1.msra.mxu0 0.0
    %4771 = vmatprep.subr.mxu0 0.0
    %4772 = vmatpush1.msra.mxu0 0.0
    %4773 = vmatprep.subr.mxu0 0.0
    %4774 = vmatpush1.msra.mxu0 0.0
    %4775 = vmatprep.subr.mxu0 0.0
    %4776 = vmatpush1.msra.mxu0 0.0
    %4777 = vmatprep.subr.mxu0 0.0
    %4778 = vmatpush1.msra.mxu0 0.0
    %4779 = vmatprep.subr.mxu0 0.0
    %4780 = vmatpush1.msra.mxu0 0.0
    %4781 = vmatprep.subr.mxu0 0.0
    %4782 = vmatpush1.msra.mxu0 0.0
    %4783 = vmatprep.subr.mxu0 0.0
    %4784 = vmatpush1.msra.mxu0 0.0
    %4785 = vmatprep.subr.mxu0 0.0
    %4786 = vmatpush1.msra.mxu0 0.0
    %4787 = vmatprep.subr.mxu0 0.0
    %4788 = vmatpush1.msra.mxu0 0.0
    %4789 = vmatprep.subr.mxu0 0.0
    %4790 = vmatpush1.msra.mxu0 0.0
    %4791 = vmatprep.subr.mxu0 0.0
    %4792 = vmatpush1.msra.mxu0 0.0
    %4793 = vmatprep.subr.mxu0 0.0
    %4794 = vmatpush1.msra.mxu0 0.0
    %4795 = vmatprep.subr.mxu0 0.0
    %4796 = vmatpush1.msra.mxu0 0.0
    %4797 = vmatprep.subr.mxu0 0.0
    %4798 = vmatpush1.msra.mxu0 0.0
    %4799 = vmatprep.subr.mxu0 0.0
    %4800 = vmatpush1.msra.mxu0 0.0
    %4801 = vmatprep.subr.mxu0 0.0
    %4802 = vmatpush1.msra.mxu0 0.0
    %4803 = vmatprep.subr.mxu0 0.0
    %4804 = vmatpush1.msra.mxu0 0.0
    %4805 = vmatprep.subr.mxu0 0.0
    %4806 = vmatpush1.msra.mxu0 0.0
    %4807 = vmatprep.subr.mxu0 0.0
    %4808 = vmatpush1.msra.mxu0 0.0
    %4809 = vmatprep.subr.mxu0 0.0
    %4810 = vmatpush1.msra.mxu0 0.0
    %4811 = vmatprep.subr.mxu0 0.0
    %4812 = vmatpush1.msra.mxu0 0.0
    %4813 = vmatprep.subr.mxu0 0.0
    %4814 = vmatpush1.msra.mxu0 0.0
    %4815 = vmatprep.subr.mxu0 0.0
    %4816 = vmatpush1.msra.mxu0 0.0
    %4817 = vmatprep.subr.mxu0 0.0
    %4818 = vmatpush1.msra.mxu0 0.0
    %4819 = vmatprep.subr.mxu0 0.0
    %4820 = vmatpush1.msra.mxu0 0.0
    %4821 = vmatprep.subr.mxu0 0.0
    %4822 = vmatpush1.msra.mxu0 0.0
    %4823 = vmatprep.subr.mxu0 0.0
    %4824 = vmatpush1.msra.mxu0 0.0
    %4825 = vmatprep.mubr.f32.mxu0 0.0
    %v4826 = vand.u32 %v4331, 4294901760
    %4827 = vmatmul.mubr.f32.gmra.mrb[0].mxu0 %v4826
    %v4828 = vpop.f32.mrb[0].mxu0
    %v4829 = vadd.f32 %v4750, %v4828
    %v4830 = vpop.f32.mrb[0].mxu0
    %4831 = vmatprep.mubr.f32.mxu0 0.0
    %v4832 = vand.u32 %v4334, 4294901760
    %4833 = vmatmul.mubr.f32.gmra.mrb[0].mxu0 %v4832
    %v4834 = vpop.f32.mrb[0].mxu0
    %v4835 = vadd.f32 %v4756, %v4834
    %v4836 = vpop.f32.mrb[0].mxu0
    %4837 = vdwg.mxu0
    %4840 = vrot.lane.b32.xlu0 %v2713, 8
    %v4841 = vpop.permute.xlu0 %4840
    %4842 = vrot.lane.b32.xlu0 %v2719, 8
    %v4843 = vpop.permute.xlu0 %4842
    %4848 = vrot.lane.b32.xlu0 %v3771, 16
    %v4849 = vpop.permute.xlu0 %4848
    %4850 = vrot.lane.b32.xlu0 %v3777, 16
    %v4851 = vpop.permute.xlu0 %4850
    %4856 = vrot.lane.b32.xlu0 %v4829, 24
    %v4857 = vpop.permute.xlu0 %4856
    %4858 = vrot.lane.b32.xlu0 %v4835, 24
    %v4859 = vpop.permute.xlu0 %4858
    %v4862 = vsel %vm604, %v1655, %v4841
    %v4863 = vsel %vm604, %v1661, %v4843
    %v4864 = vsel %vm1127, %v4862, %v4849
    %v4865 = vsel %vm1127, %v4863, %v4851
    %vm4866 = vcmask 195584
    %v4867 = vsel %vm4866, %v4864, %v4857
    %v4868 = vsel %vm4866, %v4865, %v4859
    %4873 = vrot.lane.b32.xlu0 %v17, 32
    %v4874 = vpop.permute.xlu0 %4873
    %4875 = vrot.lane.b32.xlu0 %v18, 32
    %v4876 = vpop.permute.xlu0 %4875
    %4877 = vrot.lane.b32.xlu0 %v19, 32
    %v4878 = vpop.permute.xlu0 %4877
    %4879 = vrot.lane.b32.xlu0 %v20, 32
    %v4880 = vpop.permute.xlu0 %4879
    %v4886 = vsel %vm38, %v4867, 0
    %v4889 = vsel %vm38, %v4868, 0
    %4891 = vmatprep.subr.mxu0 0.0
    %v4892 = vand.u32 %v4874, 4294901760
    %4893 = vmatpush1.msra.mxu0 %v4892
    %4894 = vmatprep.subr.mxu0 0.0
    %v4895 = vand.u32 %v4876, 4294901760
    %4896 = vmatpush1.msra.mxu0 %v4895
    %4897 = vmatprep.subr.mxu0 0.0
    %v4898 = vand.u32 %v4878, 4294901760
    %4899 = vmatpush1.msra.mxu0 %v4898
    %4900 = vmatprep.subr.mxu0 0.0
    %v4901 = vand.u32 %v4880, 4294901760
    %4902 = vmatpush1.msra.mxu0 %v4901
    %4903 = vmatprep.subr.mxu0 0.0
    %4904 = vmatpush1.msra.mxu0 0.0
    %4905 = vmatprep.subr.mxu0 0.0
    %4906 = vmatpush1.msra.mxu0 0.0
    %4907 = vmatprep.subr.mxu0 0.0
    %4908 = vmatpush1.msra.mxu0 0.0
    %4909 = vmatprep.subr.mxu0 0.0
    %4910 = vmatpush1.msra.mxu0 0.0
    %4911 = vmatprep.subr.mxu0 0.0
    %4912 = vmatpush1.msra.mxu0 0.0
    %4913 = vmatprep.subr.mxu0 0.0
    %4914 = vmatpush1.msra.mxu0 0.0
    %4915 = vmatprep.subr.mxu0 0.0
    %4916 = vmatpush1.msra.mxu0 0.0
    %4917 = vmatprep.subr.mxu0 0.0
    %4918 = vmatpush1.msra.mxu0 0.0
    %4919 = vmatprep.subr.mxu0 0.0
    %4920 = vmatpush1.msra.mxu0 0.0
    %4921 = vmatprep.subr.mxu0 0.0
    %4922 = vmatpush1.msra.mxu0 0.0
    %4923 = vmatprep.subr.mxu0 0.0
    %4924 = vmatpush1.msra.mxu0 0.0
    %4925 = vmatprep.subr.mxu0 0.0
    %4926 = vmatpush1.msra.mxu0 0.0
    %4927 = vmatprep.subr.mxu0 0.0
    %4928 = vmatpush1.msra.mxu0 0.0
    %4929 = vmatprep.subr.mxu0 0.0
    %4930 = vmatpush1.msra.mxu0 0.0
    %4931 = vmatprep.subr.mxu0 0.0
    %4932 = vmatpush1.msra.mxu0 0.0
    %4933 = vmatprep.subr.mxu0 0.0
    %4934 = vmatpush1.msra.mxu0 0.0
    %4935 = vmatprep.subr.mxu0 0.0
    %4936 = vmatpush1.msra.mxu0 0.0
    %4937 = vmatprep.subr.mxu0 0.0
    %4938 = vmatpush1.msra.mxu0 0.0
    %4939 = vmatprep.subr.mxu0 0.0
    %4940 = vmatpush1.msra.mxu0 0.0
    %4941 = vmatprep.subr.mxu0 0.0
    %4942 = vmatpush1.msra.mxu0 0.0
    %4943 = vmatprep.subr.mxu0 0.0
    %4944 = vmatpush1.msra.mxu0 0.0
    %4945 = vmatprep.subr.mxu0 0.0
    %4946 = vmatpush1.msra.mxu0 0.0
    %4947 = vmatprep.subr.mxu0 0.0
    %4948 = vmatpush1.msra.mxu0 0.0
    %4949 = vmatprep.subr.mxu0 0.0
    %4950 = vmatpush1.msra.mxu0 0.0
    %4951 = vmatprep.subr.mxu0 0.0
    %4952 = vmatpush1.msra.mxu0 0.0
    %4953 = vmatprep.subr.mxu0 0.0
    %4954 = vmatpush1.msra.mxu0 0.0
    %4955 = vmatprep.subr.mxu0 0.0
    %4956 = vmatpush1.msra.mxu0 0.0
    %4957 = vmatprep.subr.mxu0 0.0
    %4958 = vmatpush1.msra.mxu0 0.0
    %4959 = vmatprep.mubr.f32.mxu0 0.0
    %v4960 = vand.u32 %v4886, 4294901760
    %v4961 = vsub.f32 %v4886, %v4960
    %v4962 = vand.u32 %v4961, 4294901760
    %v4963 = vsub.f32 %v4961, %v4962
    %v4964 = vand.u32 %v4963, 4294901760
    %4965 = vmatmul.mubr.f32.gmra.mrb[0].mxu0 %v4964
    %v4966 = vpop.f32.mrb[0].mxu0
    %v4967 = vadd.f32 0.0, %v4966
    %v4968 = vpop.f32.mrb[0].mxu0
    %4969 = vmatprep.mubr.f32.mxu0 0.0
    %v4970 = vand.u32 %v4889, 4294901760
    %v4971 = vsub.f32 %v4889, %v4970
    %v4972 = vand.u32 %v4971, 4294901760
    %v4973 = vsub.f32 %v4971, %v4972
    %v4974 = vand.u32 %v4973, 4294901760
    %4975 = vmatmul.mubr.f32.gmra.mrb[0].mxu0 %v4974
    %v4976 = vpop.f32.mrb[0].mxu0
    %v4977 = vadd.f32 0.0, %v4976
    %v4978 = vpop.f32.mrb[0].mxu0
    %4979 = vdwg.mxu0
    %4980 = vmatprep.subr.mxu0 0.0
    %v4981 = vand.u32 %v4874, 4294901760
    %v4982 = vsub.f32 %v4874, %v4981
    %v4983 = vand.u32 %v4982, 4294901760
    %v4984 = vsub.f32 %v4982, %v4983
    %v4985 = vand.u32 %v4984, 4294901760
    %4986 = vmatpush1.msra.mxu0 %v4985
    %4987 = vmatprep.subr.mxu0 0.0
    %v4988 = vand.u32 %v4876, 4294901760
    %v4989 = vsub.f32 %v4876, %v4988
    %v4990 = vand.u32 %v4989, 4294901760
    %v4991 = vsub.f32 %v4989, %v4990
    %v4992 = vand.u32 %v4991, 4294901760
    %4993 = vmatpush1.msra.mxu0 %v4992
    %4994 = vmatprep.subr.mxu0 0.0
    %v4995 = vand.u32 %v4878, 4294901760
    %v4996 = vsub.f32 %v4878, %v4995
    %v4997 = vand.u32 %v4996, 4294901760
    %v4998 = vsub.f32 %v4996, %v4997
    %v4999 = vand.u32 %v4998, 4294901760
    %5000 = vmatpush1.msra.mxu0 %v4999
    %5001 = vmatprep.subr.mxu0 0.0
    %v5002 = vand.u32 %v4880, 4294901760
    %v5003 = vsub.f32 %v4880, %v5002
    %v5004 = vand.u32 %v5003, 4294901760
    %v5005 = vsub.f32 %v5003, %v5004
    %v5006 = vand.u32 %v5005, 4294901760
    %5007 = vmatpush1.msra.mxu0 %v5006
    %5008 = vmatprep.subr.mxu0 0.0
    %5009 = vmatpush1.msra.mxu0 0.0
    %5010 = vmatprep.subr.mxu0 0.0
    %5011 = vmatpush1.msra.mxu0 0.0
    %5012 = vmatprep.subr.mxu0 0.0
    %5013 = vmatpush1.msra.mxu0 0.0
    %5014 = vmatprep.subr.mxu0 0.0
    %5015 = vmatpush1.msra.mxu0 0.0
    %5016 = vmatprep.subr.mxu0 0.0
    %5017 = vmatpush1.msra.mxu0 0.0
    %5018 = vmatprep.subr.mxu0 0.0
    %5019 = vmatpush1.msra.mxu0 0.0
    %5020 = vmatprep.subr.mxu0 0.0
    %5021 = vmatpush1.msra.mxu0 0.0
    %5022 = vmatprep.subr.mxu0 0.0
    %5023 = vmatpush1.msra.mxu0 0.0
    %5024 = vmatprep.subr.mxu0 0.0
    %5025 = vmatpush1.msra.mxu0 0.0
    %5026 = vmatprep.subr.mxu0 0.0
    %5027 = vmatpush1.msra.mxu0 0.0
    %5028 = vmatprep.subr.mxu0 0.0
    %5029 = vmatpush1.msra.mxu0 0.0
    %5030 = vmatprep.subr.mxu0 0.0
    %5031 = vmatpush1.msra.mxu0 0.0
    %5032 = vmatprep.subr.mxu0 0.0
    %5033 = vmatpush1.msra.mxu0 0.0
    %5034 = vmatprep.subr.mxu0 0.0
    %5035 = vmatpush1.msra.mxu0 0.0
    %5036 = vmatprep.subr.mxu0 0.0
    %5037 = vmatpush1.msra.mxu0 0.0
    %5038 = vmatprep.subr.mxu0 0.0
    %5039 = vmatpush1.msra.mxu0 0.0
    %5040 = vmatprep.subr.mxu0 0.0
    %5041 = vmatpush1.msra.mxu0 0.0
    %5042 = vmatprep.subr.mxu0 0.0
    %5043 = vmatpush1.msra.mxu0 0.0
    %5044 = vmatprep.subr.mxu0 0.0
    %5045 = vmatpush1.msra.mxu0 0.0
    %5046 = vmatprep.subr.mxu0 0.0
    %5047 = vmatpush1.msra.mxu0 0.0
    %5048 = vmatprep.subr.mxu0 0.0
    %5049 = vmatpush1.msra.mxu0 0.0
    %5050 = vmatprep.subr.mxu0 0.0
    %5051 = vmatpush1.msra.mxu0 0.0
    %5052 = vmatprep.subr.mxu0 0.0
    %5053 = vmatpush1.msra.mxu0 0.0
    %5054 = vmatprep.subr.mxu0 0.0
    %5055 = vmatpush1.msra.mxu0 0.0
    %5056 = vmatprep.subr.mxu0 0.0
    %5057 = vmatpush1.msra.mxu0 0.0
    %5058 = vmatprep.subr.mxu0 0.0
    %5059 = vmatpush1.msra.mxu0 0.0
    %5060 = vmatprep.subr.mxu0 0.0
    %5061 = vmatpush1.msra.mxu0 0.0
    %5062 = vmatprep.subr.mxu0 0.0
    %5063 = vmatpush1.msra.mxu0 0.0
    %5064 = vmatprep.mubr.f32.mxu0 0.0
    %v5065 = vand.u32 %v4886, 4294901760
    %5066 = vmatmul.mubr.f32.gmra.mrb[0].mxu0 %v5065
    %v5067 = vpop.f32.mrb[0].mxu0
    %v5068 = vadd.f32 %v4967, %v5067
    %v5069 = vpop.f32.mrb[0].mxu0
    %5070 = vmatprep.mubr.f32.mxu0 0.0
    %v5071 = vand.u32 %v4889, 4294901760
    %5072 = vmatmul.mubr.f32.gmra.mrb[0].mxu0 %v5071
    %v5073 = vpop.f32.mrb[0].mxu0
    %v5074 = vadd.f32 %v4977, %v5073
    %v5075 = vpop.f32.mrb[0].mxu0
    %5076 = vdwg.mxu0
    %5077 = vmatprep.subr.mxu0 0.0
    %v5078 = vand.u32 %v4874, 4294901760
    %v5079 = vsub.f32 %v4874, %v5078
    %5080 = vmatpush1.msra.mxu0 %v5079
    %5081 = vmatprep.subr.mxu0 0.0
    %v5082 = vand.u32 %v4876, 4294901760
    %v5083 = vsub.f32 %v4876, %v5082
    %5084 = vmatpush1.msra.mxu0 %v5083
    %5085 = vmatprep.subr.mxu0 0.0
    %v5086 = vand.u32 %v4878, 4294901760
    %v5087 = vsub.f32 %v4878, %v5086
    %5088 = vmatpush1.msra.mxu0 %v5087
    %5089 = vmatprep.subr.mxu0 0.0
    %v5090 = vand.u32 %v4880, 4294901760
    %v5091 = vsub.f32 %v4880, %v5090
    %5092 = vmatpush1.msra.mxu0 %v5091
    %5093 = vmatprep.subr.mxu0 0.0
    %5094 = vmatpush1.msra.mxu0 0.0
    %5095 = vmatprep.subr.mxu0 0.0
    %5096 = vmatpush1.msra.mxu0 0.0
    %5097 = vmatprep.subr.mxu0 0.0
    %5098 = vmatpush1.msra.mxu0 0.0
    %5099 = vmatprep.subr.mxu0 0.0
    %5100 = vmatpush1.msra.mxu0 0.0
    %5101 = vmatprep.subr.mxu0 0.0
    %5102 = vmatpush1.msra.mxu0 0.0
    %5103 = vmatprep.subr.mxu0 0.0
    %5104 = vmatpush1.msra.mxu0 0.0
    %5105 = vmatprep.subr.mxu0 0.0
    %5106 = vmatpush1.msra.mxu0 0.0
    %5107 = vmatprep.subr.mxu0 0.0
    %5108 = vmatpush1.msra.mxu0 0.0
    %5109 = vmatprep.subr.mxu0 0.0
    %5110 = vmatpush1.msra.mxu0 0.0
    %5111 = vmatprep.subr.mxu0 0.0
    %5112 = vmatpush1.msra.mxu0 0.0
    %5113 = vmatprep.subr.mxu0 0.0
    %5114 = vmatpush1.msra.mxu0 0.0
    %5115 = vmatprep.subr.mxu0 0.0
    %5116 = vmatpush1.msra.mxu0 0.0
    %5117 = vmatprep.subr.mxu0 0.0
    %5118 = vmatpush1.msra.mxu0 0.0
    %5119 = vmatprep.subr.mxu0 0.0
    %5120 = vmatpush1.msra.mxu0 0.0
    %5121 = vmatprep.subr.mxu0 0.0
    %5122 = vmatpush1.msra.mxu0 0.0
    %5123 = vmatprep.subr.mxu0 0.0
    %5124 = vmatpush1.msra.mxu0 0.0
    %5125 = vmatprep.subr.mxu0 0.0
    %5126 = vmatpush1.msra.mxu0 0.0
    %5127 = vmatprep.subr.mxu0 0.0
    %5128 = vmatpush1.msra.mxu0 0.0
    %5129 = vmatprep.subr.mxu0 0.0
    %5130 = vmatpush1.msra.mxu0 0.0
    %5131 = vmatprep.subr.mxu0 0.0
    %5132 = vmatpush1.msra.mxu0 0.0
    %5133 = vmatprep.subr.mxu0 0.0
    %5134 = vmatpush1.msra.mxu0 0.0
    %5135 = vmatprep.subr.mxu0 0.0
    %5136 = vmatpush1.msra.mxu0 0.0
    %5137 = vmatprep.subr.mxu0 0.0
    %5138 = vmatpush1.msra.mxu0 0.0
    %5139 = vmatprep.subr.mxu0 0.0
    %5140 = vmatpush1.msra.mxu0 0.0
    %5141 = vmatprep.subr.mxu0 0.0
    %5142 = vmatpush1.msra.mxu0 0.0
    %5143 = vmatprep.subr.mxu0 0.0
    %5144 = vmatpush1.msra.mxu0 0.0
    %5145 = vmatprep.subr.mxu0 0.0
    %5146 = vmatpush1.msra.mxu0 0.0
    %5147 = vmatprep.subr.mxu0 0.0
    %5148 = vmatpush1.msra.mxu0 0.0
    %5149 = vmatprep.mubr.f32.mxu0 0.0
    %v5150 = vand.u32 %v4886, 4294901760
    %v5151 = vsub.f32 %v4886, %v5150
    %5152 = vmatmul.mubr.f32.gmra.mrb[0].mxu0 %v5151
    %v5153 = vpop.f32.mrb[0].mxu0
    %v5154 = vadd.f32 %v5068, %v5153
    %v5155 = vpop.f32.mrb[0].mxu0
    %5156 = vmatprep.mubr.f32.mxu0 0.0
    %v5157 = vand.u32 %v4889, 4294901760
    %v5158 = vsub.f32 %v4889, %v5157
    %5159 = vmatmul.mubr.f32.gmra.mrb[0].mxu0 %v5158
    %v5160 = vpop.f32.mrb[0].mxu0
    %v5161 = vadd.f32 %v5074, %v5160
    %v5162 = vpop.f32.mrb[0].mxu0
    %5163 = vdwg.mxu0
    %5164 = vmatprep.subr.mxu0 0.0
    %v5165 = vand.u32 %v4874, 4294901760
    %5166 = vmatpush1.msra.mxu0 %v5165
    %5167 = vmatprep.subr.mxu0 0.0
    %v5168 = vand.u32 %v4876, 4294901760
    %5169 = vmatpush1.msra.mxu0 %v5168
    %5170 = vmatprep.subr.mxu0 0.0
    %v5171 = vand.u32 %v4878, 4294901760
    %5172 = vmatpush1.msra.mxu0 %v5171
    %5173 = vmatprep.subr.mxu0 0.0
    %v5174 = vand.u32 %v4880, 4294901760
    %5175 = vmatpush1.msra.mxu0 %v5174
    %5176 = vmatprep.subr.mxu0 0.0
    %5177 = vmatpush1.msra.mxu0 0.0
    %5178 = vmatprep.subr.mxu0 0.0
    %5179 = vmatpush1.msra.mxu0 0.0
    %5180 = vmatprep.subr.mxu0 0.0
    %5181 = vmatpush1.msra.mxu0 0.0
    %5182 = vmatprep.subr.mxu0 0.0
    %5183 = vmatpush1.msra.mxu0 0.0
    %5184 = vmatprep.subr.mxu0 0.0
    %5185 = vmatpush1.msra.mxu0 0.0
    %5186 = vmatprep.subr.mxu0 0.0
    %5187 = vmatpush1.msra.mxu0 0.0
    %5188 = vmatprep.subr.mxu0 0.0
    %5189 = vmatpush1.msra.mxu0 0.0
    %5190 = vmatprep.subr.mxu0 0.0
    %5191 = vmatpush1.msra.mxu0 0.0
    %5192 = vmatprep.subr.mxu0 0.0
    %5193 = vmatpush1.msra.mxu0 0.0
    %5194 = vmatprep.subr.mxu0 0.0
    %5195 = vmatpush1.msra.mxu0 0.0
    %5196 = vmatprep.subr.mxu0 0.0
    %5197 = vmatpush1.msra.mxu0 0.0
    %5198 = vmatprep.subr.mxu0 0.0
    %5199 = vmatpush1.msra.mxu0 0.0
    %5200 = vmatprep.subr.mxu0 0.0
    %5201 = vmatpush1.msra.mxu0 0.0
    %5202 = vmatprep.subr.mxu0 0.0
    %5203 = vmatpush1.msra.mxu0 0.0
    %5204 = vmatprep.subr.mxu0 0.0
    %5205 = vmatpush1.msra.mxu0 0.0
    %5206 = vmatprep.subr.mxu0 0.0
    %5207 = vmatpush1.msra.mxu0 0.0
    %5208 = vmatprep.subr.mxu0 0.0
    %5209 = vmatpush1.msra.mxu0 0.0
    %5210 = vmatprep.subr.mxu0 0.0
    %5211 = vmatpush1.msra.mxu0 0.0
    %5212 = vmatprep.subr.mxu0 0.0
    %5213 = vmatpush1.msra.mxu0 0.0
    %5214 = vmatprep.subr.mxu0 0.0
    %5215 = vmatpush1.msra.mxu0 0.0
    %5216 = vmatprep.subr.mxu0 0.0
    %5217 = vmatpush1.msra.mxu0 0.0
    %5218 = vmatprep.subr.mxu0 0.0
    %5219 = vmatpush1.msra.mxu0 0.0
    %5220 = vmatprep.subr.mxu0 0.0
    %5221 = vmatpush1.msra.mxu0 0.0
    %5222 = vmatprep.subr.mxu0 0.0
    %5223 = vmatpush1.msra.mxu0 0.0
    %5224 = vmatprep.subr.mxu0 0.0
    %5225 = vmatpush1.msra.mxu0 0.0
    %5226 = vmatprep.subr.mxu0 0.0
    %5227 = vmatpush1.msra.mxu0 0.0
    %5228 = vmatprep.subr.mxu0 0.0
    %5229 = vmatpush1.msra.mxu0 0.0
    %5230 = vmatprep.subr.mxu0 0.0
    %5231 = vmatpush1.msra.mxu0 0.0
    %5232 = vmatprep.mubr.f32.mxu0 0.0
    %v5233 = vand.u32 %v4886, 4294901760
    %v5234 = vsub.f32 %v4886, %v5233
    %v5235 = vand.u32 %v5234, 4294901760
    %5236 = vmatmul.mubr.f32.gmra.mrb[0].mxu0 %v5235
    %v5237 = vpop.f32.mrb[0].mxu0
    %v5238 = vadd.f32 %v5154, %v5237
    %v5239 = vpop.f32.mrb[0].mxu0
    %5240 = vmatprep.mubr.f32.mxu0 0.0
    %v5241 = vand.u32 %v4889, 4294901760
    %v5242 = vsub.f32 %v4889, %v5241
    %v5243 = vand.u32 %v5242, 4294901760
    %5244 = vmatmul.mubr.f32.gmra.mrb[0].mxu0 %v5243
    %v5245 = vpop.f32.mrb[0].mxu0
    %v5246 = vadd.f32 %v5161, %v5245
    %v5247 = vpop.f32.mrb[0].mxu0
    %5248 = vdwg.mxu0
    %5249 = vmatprep.subr.mxu0 0.0
    %v5250 = vand.u32 %v4874, 4294901760
    %v5251 = vsub.f32 %v4874, %v5250
    %v5252 = vand.u32 %v5251, 4294901760
    %5253 = vmatpush1.msra.mxu0 %v5252
    %5254 = vmatprep.subr.mxu0 0.0
    %v5255 = vand.u32 %v4876, 4294901760
    %v5256 = vsub.f32 %v4876, %v5255
    %v5257 = vand.u32 %v5256, 4294901760
    %5258 = vmatpush1.msra.mxu0 %v5257
    %5259 = vmatprep.subr.mxu0 0.0
    %v5260 = vand.u32 %v4878, 4294901760
    %v5261 = vsub.f32 %v4878, %v5260
    %v5262 = vand.u32 %v5261, 4294901760
    %5263 = vmatpush1.msra.mxu0 %v5262
    %5264 = vmatprep.subr.mxu0 0.0
    %v5265 = vand.u32 %v4880, 4294901760
    %v5266 = vsub.f32 %v4880, %v5265
    %v5267 = vand.u32 %v5266, 4294901760
    %5268 = vmatpush1.msra.mxu0 %v5267
    %5269 = vmatprep.subr.mxu0 0.0
    %5270 = vmatpush1.msra.mxu0 0.0
    %5271 = vmatprep.subr.mxu0 0.0
    %5272 = vmatpush1.msra.mxu0 0.0
    %5273 = vmatprep.subr.mxu0 0.0
    %5274 = vmatpush1.msra.mxu0 0.0
    %5275 = vmatprep.subr.mxu0 0.0
    %5276 = vmatpush1.msra.mxu0 0.0
    %5277 = vmatprep.subr.mxu0 0.0
    %5278 = vmatpush1.msra.mxu0 0.0
    %5279 = vmatprep.subr.mxu0 0.0
    %5280 = vmatpush1.msra.mxu0 0.0
    %5281 = vmatprep.subr.mxu0 0.0
    %5282 = vmatpush1.msra.mxu0 0.0
    %5283 = vmatprep.subr.mxu0 0.0
    %5284 = vmatpush1.msra.mxu0 0.0
    %5285 = vmatprep.subr.mxu0 0.0
    %5286 = vmatpush1.msra.mxu0 0.0
    %5287 = vmatprep.subr.mxu0 0.0
    %5288 = vmatpush1.msra.mxu0 0.0
    %5289 = vmatprep.subr.mxu0 0.0
    %5290 = vmatpush1.msra.mxu0 0.0
    %5291 = vmatprep.subr.mxu0 0.0
    %5292 = vmatpush1.msra.mxu0 0.0
    %5293 = vmatprep.subr.mxu0 0.0
    %5294 = vmatpush1.msra.mxu0 0.0
    %5295 = vmatprep.subr.mxu0 0.0
    %5296 = vmatpush1.msra.mxu0 0.0
    %5297 = vmatprep.subr.mxu0 0.0
    %5298 = vmatpush1.msra.mxu0 0.0
    %5299 = vmatprep.subr.mxu0 0.0
    %5300 = vmatpush1.msra.mxu0 0.0
    %5301 = vmatprep.subr.mxu0 0.0
    %5302 = vmatpush1.msra.mxu0 0.0
    %5303 = vmatprep.subr.mxu0 0.0
    %5304 = vmatpush1.msra.mxu0 0.0
    %5305 = vmatprep.subr.mxu0 0.0
    %5306 = vmatpush1.msra.mxu0 0.0
    %5307 = vmatprep.subr.mxu0 0.0
    %5308 = vmatpush1.msra.mxu0 0.0
    %5309 = vmatprep.subr.mxu0 0.0
    %5310 = vmatpush1.msra.mxu0 0.0
    %5311 = vmatprep.subr.mxu0 0.0
    %5312 = vmatpush1.msra.mxu0 0.0
    %5313 = vmatprep.subr.mxu0 0.0
    %5314 = vmatpush1.msra.mxu0 0.0
    %5315 = vmatprep.subr.mxu0 0.0
    %5316 = vmatpush1.msra.mxu0 0.0
    %5317 = vmatprep.subr.mxu0 0.0
    %5318 = vmatpush1.msra.mxu0 0.0
    %5319 = vmatprep.subr.mxu0 0.0
    %5320 = vmatpush1.msra.mxu0 0.0
    %5321 = vmatprep.subr.mxu0 0.0
    %5322 = vmatpush1.msra.mxu0 0.0
    %5323 = vmatprep.subr.mxu0 0.0
    %5324 = vmatpush1.msra.mxu0 0.0
    %5325 = vmatprep.mubr.f32.mxu0 0.0
    %v5326 = vand.u32 %v4886, 4294901760
    %5327 = vmatmul.mubr.f32.gmra.mrb[0].mxu0 %v5326
    %v5328 = vpop.f32.mrb[0].mxu0
    %v5329 = vadd.f32 %v5238, %v5328
    %v5330 = vpop.f32.mrb[0].mxu0
    %5331 = vmatprep.mubr.f32.mxu0 0.0
    %v5332 = vand.u32 %v4889, 4294901760
    %5333 = vmatmul.mubr.f32.gmra.mrb[0].mxu0 %v5332
    %v5334 = vpop.f32.mrb[0].mxu0
    %v5335 = vadd.f32 %v5246, %v5334
    %v5336 = vpop.f32.mrb[0].mxu0
    %5337 = vdwg.mxu0
    %5338 = vmatprep.subr.mxu0 0.0
    %v5339 = vand.u32 %v4874, 4294901760
    %5340 = vmatpush1.msra.mxu0 %v5339
    %5341 = vmatprep.subr.mxu0 0.0
    %v5342 = vand.u32 %v4876, 4294901760
    %5343 = vmatpush1.msra.mxu0 %v5342
    %5344 = vmatprep.subr.mxu0 0.0
    %v5345 = vand.u32 %v4878, 4294901760
    %5346 = vmatpush1.msra.mxu0 %v5345
    %5347 = vmatprep.subr.mxu0 0.0
    %v5348 = vand.u32 %v4880, 4294901760
    %5349 = vmatpush1.msra.mxu0 %v5348
    %5350 = vmatprep.subr.mxu0 0.0
    %5351 = vmatpush1.msra.mxu0 0.0
    %5352 = vmatprep.subr.mxu0 0.0
    %5353 = vmatpush1.msra.mxu0 0.0
    %5354 = vmatprep.subr.mxu0 0.0
    %5355 = vmatpush1.msra.mxu0 0.0
    %5356 = vmatprep.subr.mxu0 0.0
    %5357 = vmatpush1.msra.mxu0 0.0
    %5358 = vmatprep.subr.mxu0 0.0
    %5359 = vmatpush1.msra.mxu0 0.0
    %5360 = vmatprep.subr.mxu0 0.0
    %5361 = vmatpush1.msra.mxu0 0.0
    %5362 = vmatprep.subr.mxu0 0.0
    %5363 = vmatpush1.msra.mxu0 0.0
    %5364 = vmatprep.subr.mxu0 0.0
    %5365 = vmatpush1.msra.mxu0 0.0
    %5366 = vmatprep.subr.mxu0 0.0
    %5367 = vmatpush1.msra.mxu0 0.0
    %5368 = vmatprep.subr.mxu0 0.0
    %5369 = vmatpush1.msra.mxu0 0.0
    %5370 = vmatprep.subr.mxu0 0.0
    %5371 = vmatpush1.msra.mxu0 0.0
    %5372 = vmatprep.subr.mxu0 0.0
    %5373 = vmatpush1.msra.mxu0 0.0
    %5374 = vmatprep.subr.mxu0 0.0
    %5375 = vmatpush1.msra.mxu0 0.0
    %5376 = vmatprep.subr.mxu0 0.0
    %5377 = vmatpush1.msra.mxu0 0.0
    %5378 = vmatprep.subr.mxu0 0.0
    %5379 = vmatpush1.msra.mxu0 0.0
    %5380 = vmatprep.subr.mxu0 0.0
    %5381 = vmatpush1.msra.mxu0 0.0
    %5382 = vmatprep.subr.mxu0 0.0
    %5383 = vmatpush1.msra.mxu0 0.0
    %5384 = vmatprep.subr.mxu0 0.0
    %5385 = vmatpush1.msra.mxu0 0.0
    %5386 = vmatprep.subr.mxu0 0.0
    %5387 = vmatpush1.msra.mxu0 0.0
    %5388 = vmatprep.subr.mxu0 0.0
    %5389 = vmatpush1.msra.mxu0 0.0
    %5390 = vmatprep.subr.mxu0 0.0
    %5391 = vmatpush1.msra.mxu0 0.0
    %5392 = vmatprep.subr.mxu0 0.0
    %5393 = vmatpush1.msra.mxu0 0.0
    %5394 = vmatprep.subr.mxu0 0.0
    %5395 = vmatpush1.msra.mxu0 0.0
    %5396 = vmatprep.subr.mxu0 0.0
    %5397 = vmatpush1.msra.mxu0 0.0
    %5398 = vmatprep.subr.mxu0 0.0
    %5399 = vmatpush1.msra.mxu0 0.0
    %5400 = vmatprep.subr.mxu0 0.0
    %5401 = vmatpush1.msra.mxu0 0.0
    %5402 = vmatprep.subr.mxu0 0.0
    %5403 = vmatpush1.msra.mxu0 0.0
    %5404 = vmatprep.subr.mxu0 0.0
    %5405 = vmatpush1.msra.mxu0 0.0
    %5406 = vmatprep.mubr.f32.mxu0 0.0
    %v5407 = vand.u32 %v4886, 4294901760
    %5408 = vmatmul.mubr.f32.gmra.mrb[0].mxu0 %v5407
    %v5409 = vpop.f32.mrb[0].mxu0
    %v5410 = vadd.f32 %v5329, %v5409
    %v5411 = vpop.f32.mrb[0].mxu0
    %5412 = vmatprep.mubr.f32.mxu0 0.0
    %v5413 = vand.u32 %v4889, 4294901760
    %5414 = vmatmul.mubr.f32.gmra.mrb[0].mxu0 %v5413
    %v5415 = vpop.f32.mrb[0].mxu0
    %v5416 = vadd.f32 %v5335, %v5415
    %v5417 = vpop.f32.mrb[0].mxu0
    %5418 = vdwg.mxu0
    %v5419 = vadd.f32 %v15, %v5410
    %v5420 = vadd.f32 %v16, %v5416
    %5422 = vrot.lane.b32.xlu0 %v57, 64
    %v5423 = vpop.permute.xlu0 %5422
    %v5425 = vadd.f32 %v5419, %v5423
    %v5426 = vadd.f32 %v5420, %v5423
    %v5427 = vmul.f32 %v5425, %v5425
    %v5428 = vmul.f32 %v5426, %v5426
    %v5429 = vsel %vm38, %v5427, 0.0
    %5430 = vadd.xlane.f32.xlu0 %v5429
    %v5431 = vpop.xlane.xlu0 %5430
    %v5432 = vsel %vm38, %v5428, 0.0
    %5433 = vadd.xlane.f32.xlu0 %v5432
    %v5434 = vpop.xlane.xlu0 %5433
    %v5435 = vmul.f32 %v5431, %v45
    %v5436 = vmul.f32 %v5434, %v45
    %v5437 = vadd.f32 %v5435, 1e-06
    %v5438 = vadd.f32 %v5436, 1e-06
    %v5439 = vrsqrt.pop %v5437
    %v5440 = vrsqrt.pop %v5438
    %v5441 = vmul.f32 %v5425, %v5439
    %v5442 = vmul.f32 %v5426, %v5440
    %5443 = vrot.lane.b32.xlu0 %v57, 96
    %v5444 = vpop.permute.xlu0 %5443
    %v5446 = vmul.f32 %v5441, %v5444
    %v5447 = vmul.f32 %v5442, %v5444
    %v5448 = vlaneseq
    %v5449 = vshrl.u32 %v5448, 7
    %v5450 = vsub.s32 0, %v5449
    %v5451 = vrot.slane %v35, %v5450
    %v5453 = vsel %vm38, %v5446, 0
    %v5456 = vsel %vm38, %v5447, 0
    %5458 = vmatprep.subr.mxu0 0.0
    %v5459 = vand.u32 %v21, 4294901760
    %5460 = vmatpush1.msra.mxu0 %v5459
    %5461 = vmatprep.subr.mxu0 0.0
    %v5462 = vand.u32 %v22, 4294901760
    %5463 = vmatpush1.msra.mxu0 %v5462
    %5464 = vmatprep.subr.mxu0 0.0
    %v5465 = vand.u32 %v23, 4294901760
    %5466 = vmatpush1.msra.mxu0 %v5465
    %5467 = vmatprep.subr.mxu0 0.0
    %v5468 = vand.u32 %v24, 4294901760
    %5469 = vmatpush1.msra.mxu0 %v5468
    %5470 = vmatprep.subr.mxu0 0.0
    %5471 = vmatpush1.msra.mxu0 0.0
    %5472 = vmatprep.subr.mxu0 0.0
    %5473 = vmatpush1.msra.mxu0 0.0
    %5474 = vmatprep.subr.mxu0 0.0
    %5475 = vmatpush1.msra.mxu0 0.0
    %5476 = vmatprep.subr.mxu0 0.0
    %5477 = vmatpush1.msra.mxu0 0.0
    %5478 = vmatprep.subr.mxu0 0.0
    %5479 = vmatpush1.msra.mxu0 0.0
    %5480 = vmatprep.subr.mxu0 0.0
    %5481 = vmatpush1.msra.mxu0 0.0
    %5482 = vmatprep.subr.mxu0 0.0
    %5483 = vmatpush1.msra.mxu0 0.0
    %5484 = vmatprep.subr.mxu0 0.0
    %5485 = vmatpush1.msra.mxu0 0.0
    %5486 = vmatprep.subr.mxu0 0.0
    %5487 = vmatpush1.msra.mxu0 0.0
    %5488 = vmatprep.subr.mxu0 0.0
    %5489 = vmatpush1.msra.mxu0 0.0
    %5490 = vmatprep.subr.mxu0 0.0
    %5491 = vmatpush1.msra.mxu0 0.0
    %5492 = vmatprep.subr.mxu0 0.0
    %5493 = vmatpush1.msra.mxu0 0.0
    %5494 = vmatprep.subr.mxu0 0.0
    %5495 = vmatpush1.msra.mxu0 0.0
    %5496 = vmatprep.subr.mxu0 0.0
    %5497 = vmatpush1.msra.mxu0 0.0
    %5498 = vmatprep.subr.mxu0 0.0
    %5499 = vmatpush1.msra.mxu0 0.0
    %5500 = vmatprep.subr.mxu0 0.0
    %5501 = vmatpush1.msra.mxu0 0.0
    %5502 = vmatprep.subr.mxu0 0.0
    %5503 = vmatpush1.msra.mxu0 0.0
    %5504 = vmatprep.subr.mxu0 0.0
    %5505 = vmatpush1.msra.mxu0 0.0
    %5506 = vmatprep.subr.mxu0 0.0
    %5507 = vmatpush1.msra.mxu0 0.0
    %5508 = vmatprep.subr.mxu0 0.0
    %5509 = vmatpush1.msra.mxu0 0.0
    %5510 = vmatprep.subr.mxu0 0.0
    %5511 = vmatpush1.msra.mxu0 0.0
    %5512 = vmatprep.subr.mxu0 0.0
    %5513 = vmatpush1.msra.mxu0 0.0
    %5514 = vmatprep.subr.mxu0 0.0
    %5515 = vmatpush1.msra.mxu0 0.0
    %5516 = vmatprep.subr.mxu0 0.0
    %5517 = vmatpush1.msra.mxu0 0.0
    %5518 = vmatprep.subr.mxu0 0.0
    %5519 = vmatpush1.msra.mxu0 0.0
    %5520 = vmatprep.subr.mxu0 0.0
    %5521 = vmatpush1.msra.mxu0 0.0
    %5522 = vmatprep.subr.mxu0 0.0
    %5523 = vmatpush1.msra.mxu0 0.0
    %5524 = vmatprep.subr.mxu0 0.0
    %5525 = vmatpush1.msra.mxu0 0.0
    %5526 = vmatprep.mubr.f32.mxu0 0.0
    %v5527 = vand.u32 %v5453, 4294901760
    %v5528 = vsub.f32 %v5453, %v5527
    %v5529 = vand.u32 %v5528, 4294901760
    %v5530 = vsub.f32 %v5528, %v5529
    %v5531 = vand.u32 %v5530, 4294901760
    %5532 = vmatmul.mubr.f32.gmra.mrb[0].mxu0 %v5531
    %v5533 = vpop.f32.mrb[0].mxu0
    %v5534 = vadd.f32 %v5451, %v5533
    %v5535 = vpop.f32.mrb[0].mxu0
    %5536 = vmatprep.mubr.f32.mxu0 0.0
    %v5537 = vand.u32 %v5456, 4294901760
    %v5538 = vsub.f32 %v5456, %v5537
    %v5539 = vand.u32 %v5538, 4294901760
    %v5540 = vsub.f32 %v5538, %v5539
    %v5541 = vand.u32 %v5540, 4294901760
    %5542 = vmatmul.mubr.f32.gmra.mrb[0].mxu0 %v5541
    %v5543 = vpop.f32.mrb[0].mxu0
    %v5544 = vadd.f32 %v5451, %v5543
    %v5545 = vpop.f32.mrb[0].mxu0
    %5546 = vdwg.mxu0
    %5547 = vmatprep.subr.mxu0 0.0
    %v5548 = vand.u32 %v21, 4294901760
    %v5549 = vsub.f32 %v21, %v5548
    %v5550 = vand.u32 %v5549, 4294901760
    %v5551 = vsub.f32 %v5549, %v5550
    %v5552 = vand.u32 %v5551, 4294901760
    %5553 = vmatpush1.msra.mxu0 %v5552
    %5554 = vmatprep.subr.mxu0 0.0
    %v5555 = vand.u32 %v22, 4294901760
    %v5556 = vsub.f32 %v22, %v5555
    %v5557 = vand.u32 %v5556, 4294901760
    %v5558 = vsub.f32 %v5556, %v5557
    %v5559 = vand.u32 %v5558, 4294901760
    %5560 = vmatpush1.msra.mxu0 %v5559
    %5561 = vmatprep.subr.mxu0 0.0
    %v5562 = vand.u32 %v23, 4294901760
    %v5563 = vsub.f32 %v23, %v5562
    %v5564 = vand.u32 %v5563, 4294901760
    %v5565 = vsub.f32 %v5563, %v5564
    %v5566 = vand.u32 %v5565, 4294901760
    %5567 = vmatpush1.msra.mxu0 %v5566
    %5568 = vmatprep.subr.mxu0 0.0
    %v5569 = vand.u32 %v24, 4294901760
    %v5570 = vsub.f32 %v24, %v5569
    %v5571 = vand.u32 %v5570, 4294901760
    %v5572 = vsub.f32 %v5570, %v5571
    %v5573 = vand.u32 %v5572, 4294901760
    %5574 = vmatpush1.msra.mxu0 %v5573
    %5575 = vmatprep.subr.mxu0 0.0
    %5576 = vmatpush1.msra.mxu0 0.0
    %5577 = vmatprep.subr.mxu0 0.0
    %5578 = vmatpush1.msra.mxu0 0.0
    %5579 = vmatprep.subr.mxu0 0.0
    %5580 = vmatpush1.msra.mxu0 0.0
    %5581 = vmatprep.subr.mxu0 0.0
    %5582 = vmatpush1.msra.mxu0 0.0
    %5583 = vmatprep.subr.mxu0 0.0
    %5584 = vmatpush1.msra.mxu0 0.0
    %5585 = vmatprep.subr.mxu0 0.0
    %5586 = vmatpush1.msra.mxu0 0.0
    %5587 = vmatprep.subr.mxu0 0.0
    %5588 = vmatpush1.msra.mxu0 0.0
    %5589 = vmatprep.subr.mxu0 0.0
    %5590 = vmatpush1.msra.mxu0 0.0
    %5591 = vmatprep.subr.mxu0 0.0
    %5592 = vmatpush1.msra.mxu0 0.0
    %5593 = vmatprep.subr.mxu0 0.0
    %5594 = vmatpush1.msra.mxu0 0.0
    %5595 = vmatprep.subr.mxu0 0.0
    %5596 = vmatpush1.msra.mxu0 0.0
    %5597 = vmatprep.subr.mxu0 0.0
    %5598 = vmatpush1.msra.mxu0 0.0
    %5599 = vmatprep.subr.mxu0 0.0
    %5600 = vmatpush1.msra.mxu0 0.0
    %5601 = vmatprep.subr.mxu0 0.0
    %5602 = vmatpush1.msra.mxu0 0.0
    %5603 = vmatprep.subr.mxu0 0.0
    %5604 = vmatpush1.msra.mxu0 0.0
    %5605 = vmatprep.subr.mxu0 0.0
    %5606 = vmatpush1.msra.mxu0 0.0
    %5607 = vmatprep.subr.mxu0 0.0
    %5608 = vmatpush1.msra.mxu0 0.0
    %5609 = vmatprep.subr.mxu0 0.0
    %5610 = vmatpush1.msra.mxu0 0.0
    %5611 = vmatprep.subr.mxu0 0.0
    %5612 = vmatpush1.msra.mxu0 0.0
    %5613 = vmatprep.subr.mxu0 0.0
    %5614 = vmatpush1.msra.mxu0 0.0
    %5615 = vmatprep.subr.mxu0 0.0
    %5616 = vmatpush1.msra.mxu0 0.0
    %5617 = vmatprep.subr.mxu0 0.0
    %5618 = vmatpush1.msra.mxu0 0.0
    %5619 = vmatprep.subr.mxu0 0.0
    %5620 = vmatpush1.msra.mxu0 0.0
    %5621 = vmatprep.subr.mxu0 0.0
    %5622 = vmatpush1.msra.mxu0 0.0
    %5623 = vmatprep.subr.mxu0 0.0
    %5624 = vmatpush1.msra.mxu0 0.0
    %5625 = vmatprep.subr.mxu0 0.0
    %5626 = vmatpush1.msra.mxu0 0.0
    %5627 = vmatprep.subr.mxu0 0.0
    %5628 = vmatpush1.msra.mxu0 0.0
    %5629 = vmatprep.subr.mxu0 0.0
    %5630 = vmatpush1.msra.mxu0 0.0
    %5631 = vmatprep.mubr.f32.mxu0 0.0
    %v5632 = vand.u32 %v5453, 4294901760
    %5633 = vmatmul.mubr.f32.gmra.mrb[0].mxu0 %v5632
    %v5634 = vpop.f32.mrb[0].mxu0
    %v5635 = vadd.f32 %v5534, %v5634
    %v5636 = vpop.f32.mrb[0].mxu0
    %5637 = vmatprep.mubr.f32.mxu0 0.0
    %v5638 = vand.u32 %v5456, 4294901760
    %5639 = vmatmul.mubr.f32.gmra.mrb[0].mxu0 %v5638
    %v5640 = vpop.f32.mrb[0].mxu0
    %v5641 = vadd.f32 %v5544, %v5640
    %v5642 = vpop.f32.mrb[0].mxu0
    %5643 = vdwg.mxu0
    %5644 = vmatprep.subr.mxu0 0.0
    %v5645 = vand.u32 %v21, 4294901760
    %v5646 = vsub.f32 %v21, %v5645
    %5647 = vmatpush1.msra.mxu0 %v5646
    %5648 = vmatprep.subr.mxu0 0.0
    %v5649 = vand.u32 %v22, 4294901760
    %v5650 = vsub.f32 %v22, %v5649
    %5651 = vmatpush1.msra.mxu0 %v5650
    %5652 = vmatprep.subr.mxu0 0.0
    %v5653 = vand.u32 %v23, 4294901760
    %v5654 = vsub.f32 %v23, %v5653
    %5655 = vmatpush1.msra.mxu0 %v5654
    %5656 = vmatprep.subr.mxu0 0.0
    %v5657 = vand.u32 %v24, 4294901760
    %v5658 = vsub.f32 %v24, %v5657
    %5659 = vmatpush1.msra.mxu0 %v5658
    %5660 = vmatprep.subr.mxu0 0.0
    %5661 = vmatpush1.msra.mxu0 0.0
    %5662 = vmatprep.subr.mxu0 0.0
    %5663 = vmatpush1.msra.mxu0 0.0
    %5664 = vmatprep.subr.mxu0 0.0
    %5665 = vmatpush1.msra.mxu0 0.0
    %5666 = vmatprep.subr.mxu0 0.0
    %5667 = vmatpush1.msra.mxu0 0.0
    %5668 = vmatprep.subr.mxu0 0.0
    %5669 = vmatpush1.msra.mxu0 0.0
    %5670 = vmatprep.subr.mxu0 0.0
    %5671 = vmatpush1.msra.mxu0 0.0
    %5672 = vmatprep.subr.mxu0 0.0
    %5673 = vmatpush1.msra.mxu0 0.0
    %5674 = vmatprep.subr.mxu0 0.0
    %5675 = vmatpush1.msra.mxu0 0.0
    %5676 = vmatprep.subr.mxu0 0.0
    %5677 = vmatpush1.msra.mxu0 0.0
    %5678 = vmatprep.subr.mxu0 0.0
    %5679 = vmatpush1.msra.mxu0 0.0
    %5680 = vmatprep.subr.mxu0 0.0
    %5681 = vmatpush1.msra.mxu0 0.0
    %5682 = vmatprep.subr.mxu0 0.0
    %5683 = vmatpush1.msra.mxu0 0.0
    %5684 = vmatprep.subr.mxu0 0.0
    %5685 = vmatpush1.msra.mxu0 0.0
    %5686 = vmatprep.subr.mxu0 0.0
    %5687 = vmatpush1.msra.mxu0 0.0
    %5688 = vmatprep.subr.mxu0 0.0
    %5689 = vmatpush1.msra.mxu0 0.0
    %5690 = vmatprep.subr.mxu0 0.0
    %5691 = vmatpush1.msra.mxu0 0.0
    %5692 = vmatprep.subr.mxu0 0.0
    %5693 = vmatpush1.msra.mxu0 0.0
    %5694 = vmatprep.subr.mxu0 0.0
    %5695 = vmatpush1.msra.mxu0 0.0
    %5696 = vmatprep.subr.mxu0 0.0
    %5697 = vmatpush1.msra.mxu0 0.0
    %5698 = vmatprep.subr.mxu0 0.0
    %5699 = vmatpush1.msra.mxu0 0.0
    %5700 = vmatprep.subr.mxu0 0.0
    %5701 = vmatpush1.msra.mxu0 0.0
    %5702 = vmatprep.subr.mxu0 0.0
    %5703 = vmatpush1.msra.mxu0 0.0
    %5704 = vmatprep.subr.mxu0 0.0
    %5705 = vmatpush1.msra.mxu0 0.0
    %5706 = vmatprep.subr.mxu0 0.0
    %5707 = vmatpush1.msra.mxu0 0.0
    %5708 = vmatprep.subr.mxu0 0.0
    %5709 = vmatpush1.msra.mxu0 0.0
    %5710 = vmatprep.subr.mxu0 0.0
    %5711 = vmatpush1.msra.mxu0 0.0
    %5712 = vmatprep.subr.mxu0 0.0
    %5713 = vmatpush1.msra.mxu0 0.0
    %5714 = vmatprep.subr.mxu0 0.0
    %5715 = vmatpush1.msra.mxu0 0.0
    %5716 = vmatprep.mubr.f32.mxu0 0.0
    %v5717 = vand.u32 %v5453, 4294901760
    %v5718 = vsub.f32 %v5453, %v5717
    %5719 = vmatmul.mubr.f32.gmra.mrb[0].mxu0 %v5718
    %v5720 = vpop.f32.mrb[0].mxu0
    %v5721 = vadd.f32 %v5635, %v5720
    %v5722 = vpop.f32.mrb[0].mxu0
    %5723 = vmatprep.mubr.f32.mxu0 0.0
    %v5724 = vand.u32 %v5456, 4294901760
    %v5725 = vsub.f32 %v5456, %v5724
    %5726 = vmatmul.mubr.f32.gmra.mrb[0].mxu0 %v5725
    %v5727 = vpop.f32.mrb[0].mxu0
    %v5728 = vadd.f32 %v5641, %v5727
    %v5729 = vpop.f32.mrb[0].mxu0
    %5730 = vdwg.mxu0
    %5731 = vmatprep.subr.mxu0 0.0
    %v5732 = vand.u32 %v21, 4294901760
    %5733 = vmatpush1.msra.mxu0 %v5732
    %5734 = vmatprep.subr.mxu0 0.0
    %v5735 = vand.u32 %v22, 4294901760
    %5736 = vmatpush1.msra.mxu0 %v5735
    %5737 = vmatprep.subr.mxu0 0.0
    %v5738 = vand.u32 %v23, 4294901760
    %5739 = vmatpush1.msra.mxu0 %v5738
    %5740 = vmatprep.subr.mxu0 0.0
    %v5741 = vand.u32 %v24, 4294901760
    %5742 = vmatpush1.msra.mxu0 %v5741
    %5743 = vmatprep.subr.mxu0 0.0
    %5744 = vmatpush1.msra.mxu0 0.0
    %5745 = vmatprep.subr.mxu0 0.0
    %5746 = vmatpush1.msra.mxu0 0.0
    %5747 = vmatprep.subr.mxu0 0.0
    %5748 = vmatpush1.msra.mxu0 0.0
    %5749 = vmatprep.subr.mxu0 0.0
    %5750 = vmatpush1.msra.mxu0 0.0
    %5751 = vmatprep.subr.mxu0 0.0
    %5752 = vmatpush1.msra.mxu0 0.0
    %5753 = vmatprep.subr.mxu0 0.0
    %5754 = vmatpush1.msra.mxu0 0.0
    %5755 = vmatprep.subr.mxu0 0.0
    %5756 = vmatpush1.msra.mxu0 0.0
    %5757 = vmatprep.subr.mxu0 0.0
    %5758 = vmatpush1.msra.mxu0 0.0
    %5759 = vmatprep.subr.mxu0 0.0
    %5760 = vmatpush1.msra.mxu0 0.0
    %5761 = vmatprep.subr.mxu0 0.0
    %5762 = vmatpush1.msra.mxu0 0.0
    %5763 = vmatprep.subr.mxu0 0.0
    %5764 = vmatpush1.msra.mxu0 0.0
    %5765 = vmatprep.subr.mxu0 0.0
    %5766 = vmatpush1.msra.mxu0 0.0
    %5767 = vmatprep.subr.mxu0 0.0
    %5768 = vmatpush1.msra.mxu0 0.0
    %5769 = vmatprep.subr.mxu0 0.0
    %5770 = vmatpush1.msra.mxu0 0.0
    %5771 = vmatprep.subr.mxu0 0.0
    %5772 = vmatpush1.msra.mxu0 0.0
    %5773 = vmatprep.subr.mxu0 0.0
    %5774 = vmatpush1.msra.mxu0 0.0
    %5775 = vmatprep.subr.mxu0 0.0
    %5776 = vmatpush1.msra.mxu0 0.0
    %5777 = vmatprep.subr.mxu0 0.0
    %5778 = vmatpush1.msra.mxu0 0.0
    %5779 = vmatprep.subr.mxu0 0.0
    %5780 = vmatpush1.msra.mxu0 0.0
    %5781 = vmatprep.subr.mxu0 0.0
    %5782 = vmatpush1.msra.mxu0 0.0
    %5783 = vmatprep.subr.mxu0 0.0
    %5784 = vmatpush1.msra.mxu0 0.0
    %5785 = vmatprep.subr.mxu0 0.0
    %5786 = vmatpush1.msra.mxu0 0.0
    %5787 = vmatprep.subr.mxu0 0.0
    %5788 = vmatpush1.msra.mxu0 0.0
    %5789 = vmatprep.subr.mxu0 0.0
    %5790 = vmatpush1.msra.mxu0 0.0
    %5791 = vmatprep.subr.mxu0 0.0
    %5792 = vmatpush1.msra.mxu0 0.0
    %5793 = vmatprep.subr.mxu0 0.0
    %5794 = vmatpush1.msra.mxu0 0.0
    %5795 = vmatprep.subr.mxu0 0.0
    %5796 = vmatpush1.msra.mxu0 0.0
    %5797 = vmatprep.subr.mxu0 0.0
    %5798 = vmatpush1.msra.mxu0 0.0
    %5799 = vmatprep.mubr.f32.mxu0 0.0
    %v5800 = vand.u32 %v5453, 4294901760
    %v5801 = vsub.f32 %v5453, %v5800
    %v5802 = vand.u32 %v5801, 4294901760
    %5803 = vmatmul.mubr.f32.gmra.mrb[0].mxu0 %v5802
    %v5804 = vpop.f32.mrb[0].mxu0
    %v5805 = vadd.f32 %v5721, %v5804
    %v5806 = vpop.f32.mrb[0].mxu0
    %5807 = vmatprep.mubr.f32.mxu0 0.0
    %v5808 = vand.u32 %v5456, 4294901760
    %v5809 = vsub.f32 %v5456, %v5808
    %v5810 = vand.u32 %v5809, 4294901760
    %5811 = vmatmul.mubr.f32.gmra.mrb[0].mxu0 %v5810
    %v5812 = vpop.f32.mrb[0].mxu0
    %v5813 = vadd.f32 %v5728, %v5812
    %v5814 = vpop.f32.mrb[0].mxu0
    %5815 = vdwg.mxu0
    %5816 = vmatprep.subr.mxu0 0.0
    %v5817 = vand.u32 %v21, 4294901760
    %v5818 = vsub.f32 %v21, %v5817
    %v5819 = vand.u32 %v5818, 4294901760
    %5820 = vmatpush1.msra.mxu0 %v5819
    %5821 = vmatprep.subr.mxu0 0.0
    %v5822 = vand.u32 %v22, 4294901760
    %v5823 = vsub.f32 %v22, %v5822
    %v5824 = vand.u32 %v5823, 4294901760
    %5825 = vmatpush1.msra.mxu0 %v5824
    %5826 = vmatprep.subr.mxu0 0.0
    %v5827 = vand.u32 %v23, 4294901760
    %v5828 = vsub.f32 %v23, %v5827
    %v5829 = vand.u32 %v5828, 4294901760
    %5830 = vmatpush1.msra.mxu0 %v5829
    %5831 = vmatprep.subr.mxu0 0.0
    %v5832 = vand.u32 %v24, 4294901760
    %v5833 = vsub.f32 %v24, %v5832
    %v5834 = vand.u32 %v5833, 4294901760
    %5835 = vmatpush1.msra.mxu0 %v5834
    %5836 = vmatprep.subr.mxu0 0.0
    %5837 = vmatpush1.msra.mxu0 0.0
    %5838 = vmatprep.subr.mxu0 0.0
    %5839 = vmatpush1.msra.mxu0 0.0
    %5840 = vmatprep.subr.mxu0 0.0
    %5841 = vmatpush1.msra.mxu0 0.0
    %5842 = vmatprep.subr.mxu0 0.0
    %5843 = vmatpush1.msra.mxu0 0.0
    %5844 = vmatprep.subr.mxu0 0.0
    %5845 = vmatpush1.msra.mxu0 0.0
    %5846 = vmatprep.subr.mxu0 0.0
    %5847 = vmatpush1.msra.mxu0 0.0
    %5848 = vmatprep.subr.mxu0 0.0
    %5849 = vmatpush1.msra.mxu0 0.0
    %5850 = vmatprep.subr.mxu0 0.0
    %5851 = vmatpush1.msra.mxu0 0.0
    %5852 = vmatprep.subr.mxu0 0.0
    %5853 = vmatpush1.msra.mxu0 0.0
    %5854 = vmatprep.subr.mxu0 0.0
    %5855 = vmatpush1.msra.mxu0 0.0
    %5856 = vmatprep.subr.mxu0 0.0
    %5857 = vmatpush1.msra.mxu0 0.0
    %5858 = vmatprep.subr.mxu0 0.0
    %5859 = vmatpush1.msra.mxu0 0.0
    %5860 = vmatprep.subr.mxu0 0.0
    %5861 = vmatpush1.msra.mxu0 0.0
    %5862 = vmatprep.subr.mxu0 0.0
    %5863 = vmatpush1.msra.mxu0 0.0
    %5864 = vmatprep.subr.mxu0 0.0
    %5865 = vmatpush1.msra.mxu0 0.0
    %5866 = vmatprep.subr.mxu0 0.0
    %5867 = vmatpush1.msra.mxu0 0.0
    %5868 = vmatprep.subr.mxu0 0.0
    %5869 = vmatpush1.msra.mxu0 0.0
    %5870 = vmatprep.subr.mxu0 0.0
    %5871 = vmatpush1.msra.mxu0 0.0
    %5872 = vmatprep.subr.mxu0 0.0
    %5873 = vmatpush1.msra.mxu0 0.0
    %5874 = vmatprep.subr.mxu0 0.0
    %5875 = vmatpush1.msra.mxu0 0.0
    %5876 = vmatprep.subr.mxu0 0.0
    %5877 = vmatpush1.msra.mxu0 0.0
    %5878 = vmatprep.subr.mxu0 0.0
    %5879 = vmatpush1.msra.mxu0 0.0
    %5880 = vmatprep.subr.mxu0 0.0
    %5881 = vmatpush1.msra.mxu0 0.0
    %5882 = vmatprep.subr.mxu0 0.0
    %5883 = vmatpush1.msra.mxu0 0.0
    %5884 = vmatprep.subr.mxu0 0.0
    %5885 = vmatpush1.msra.mxu0 0.0
    %5886 = vmatprep.subr.mxu0 0.0
    %5887 = vmatpush1.msra.mxu0 0.0
    %5888 = vmatprep.subr.mxu0 0.0
    %5889 = vmatpush1.msra.mxu0 0.0
    %5890 = vmatprep.subr.mxu0 0.0
    %5891 = vmatpush1.msra.mxu0 0.0
    %5892 = vmatprep.mubr.f32.mxu0 0.0
    %v5893 = vand.u32 %v5453, 4294901760
    %5894 = vmatmul.mubr.f32.gmra.mrb[0].mxu0 %v5893
    %v5895 = vpop.f32.mrb[0].mxu0
    %v5896 = vadd.f32 %v5805, %v5895
    %v5897 = vpop.f32.mrb[0].mxu0
    %5898 = vmatprep.mubr.f32.mxu0 0.0
    %v5899 = vand.u32 %v5456, 4294901760
    %5900 = vmatmul.mubr.f32.gmra.mrb[0].mxu0 %v5899
    %v5901 = vpop.f32.mrb[0].mxu0
    %v5902 = vadd.f32 %v5813, %v5901
    %v5903 = vpop.f32.mrb[0].mxu0
    %5904 = vdwg.mxu0
    %5905 = vmatprep.subr.mxu0 0.0
    %v5906 = vand.u32 %v21, 4294901760
    %5907 = vmatpush1.msra.mxu0 %v5906
    %5908 = vmatprep.subr.mxu0 0.0
    %v5909 = vand.u32 %v22, 4294901760
    %5910 = vmatpush1.msra.mxu0 %v5909
    %5911 = vmatprep.subr.mxu0 0.0
    %v5912 = vand.u32 %v23, 4294901760
    %5913 = vmatpush1.msra.mxu0 %v5912
    %5914 = vmatprep.subr.mxu0 0.0
    %v5915 = vand.u32 %v24, 4294901760
    %5916 = vmatpush1.msra.mxu0 %v5915
    %5917 = vmatprep.subr.mxu0 0.0
    %5918 = vmatpush1.msra.mxu0 0.0
    %5919 = vmatprep.subr.mxu0 0.0
    %5920 = vmatpush1.msra.mxu0 0.0
    %5921 = vmatprep.subr.mxu0 0.0
    %5922 = vmatpush1.msra.mxu0 0.0
    %5923 = vmatprep.subr.mxu0 0.0
    %5924 = vmatpush1.msra.mxu0 0.0
    %5925 = vmatprep.subr.mxu0 0.0
    %5926 = vmatpush1.msra.mxu0 0.0
    %5927 = vmatprep.subr.mxu0 0.0
    %5928 = vmatpush1.msra.mxu0 0.0
    %5929 = vmatprep.subr.mxu0 0.0
    %5930 = vmatpush1.msra.mxu0 0.0
    %5931 = vmatprep.subr.mxu0 0.0
    %5932 = vmatpush1.msra.mxu0 0.0
    %5933 = vmatprep.subr.mxu0 0.0
    %5934 = vmatpush1.msra.mxu0 0.0
    %5935 = vmatprep.subr.mxu0 0.0
    %5936 = vmatpush1.msra.mxu0 0.0
    %5937 = vmatprep.subr.mxu0 0.0
    %5938 = vmatpush1.msra.mxu0 0.0
    %5939 = vmatprep.subr.mxu0 0.0
    %5940 = vmatpush1.msra.mxu0 0.0
    %5941 = vmatprep.subr.mxu0 0.0
    %5942 = vmatpush1.msra.mxu0 0.0
    %5943 = vmatprep.subr.mxu0 0.0
    %5944 = vmatpush1.msra.mxu0 0.0
    %5945 = vmatprep.subr.mxu0 0.0
    %5946 = vmatpush1.msra.mxu0 0.0
    %5947 = vmatprep.subr.mxu0 0.0
    %5948 = vmatpush1.msra.mxu0 0.0
    %5949 = vmatprep.subr.mxu0 0.0
    %5950 = vmatpush1.msra.mxu0 0.0
    %5951 = vmatprep.subr.mxu0 0.0
    %5952 = vmatpush1.msra.mxu0 0.0
    %5953 = vmatprep.subr.mxu0 0.0
    %5954 = vmatpush1.msra.mxu0 0.0
    %5955 = vmatprep.subr.mxu0 0.0
    %5956 = vmatpush1.msra.mxu0 0.0
    %5957 = vmatprep.subr.mxu0 0.0
    %5958 = vmatpush1.msra.mxu0 0.0
    %5959 = vmatprep.subr.mxu0 0.0
    %5960 = vmatpush1.msra.mxu0 0.0
    %5961 = vmatprep.subr.mxu0 0.0
    %5962 = vmatpush1.msra.mxu0 0.0
    %5963 = vmatprep.subr.mxu0 0.0
    %5964 = vmatpush1.msra.mxu0 0.0
    %5965 = vmatprep.subr.mxu0 0.0
    %5966 = vmatpush1.msra.mxu0 0.0
    %5967 = vmatprep.subr.mxu0 0.0
    %5968 = vmatpush1.msra.mxu0 0.0
    %5969 = vmatprep.subr.mxu0 0.0
    %5970 = vmatpush1.msra.mxu0 0.0
    %5971 = vmatprep.subr.mxu0 0.0
    %5972 = vmatpush1.msra.mxu0 0.0
    %5973 = vmatprep.mubr.f32.mxu0 0.0
    %v5974 = vand.u32 %v5453, 4294901760
    %5975 = vmatmul.mubr.f32.gmra.mrb[0].mxu0 %v5974
    %v5976 = vpop.f32.mrb[0].mxu0
    %v5977 = vadd.f32 %v5896, %v5976
    %v5978 = vpop.f32.mrb[0].mxu0
    %5979 = vmatprep.mubr.f32.mxu0 0.0
    %v5980 = vand.u32 %v5456, 4294901760
    %5981 = vmatmul.mubr.f32.gmra.mrb[0].mxu0 %v5980
    %v5982 = vpop.f32.mrb[0].mxu0
    %v5983 = vadd.f32 %v5902, %v5982
    %v5984 = vpop.f32.mrb[0].mxu0
    %5985 = vdwg.mxu0
    %v5986 = vmax.f32 %v5977, 0.0
    %v5987 = vmax.f32 %v5983, 0.0
    %5988 = vrot.lane.b32.xlu0 %v57, 32
    %v5989 = vpop.permute.xlu0 %5988
    %vm5991 = vcmask 523264
    %v5993 = vsel %vm5991, %v5986, 0
    %v5996 = vsel %vm5991, %v5987, 0
    %5998 = vmatprep.subr.mxu0 0.0
    %v5999 = vand.u32 %v25, 4294901760
    %6000 = vmatpush1.msra.mxu0 %v5999
    %6001 = vmatprep.subr.mxu0 0.0
    %v6002 = vand.u32 %v26, 4294901760
    %6003 = vmatpush1.msra.mxu0 %v6002
    %6004 = vmatprep.subr.mxu0 0.0
    %v6005 = vand.u32 %v27, 4294901760
    %6006 = vmatpush1.msra.mxu0 %v6005
    %6007 = vmatprep.subr.mxu0 0.0
    %v6008 = vand.u32 %v28, 4294901760
    %6009 = vmatpush1.msra.mxu0 %v6008
    %6010 = vmatprep.subr.mxu0 0.0
    %v6011 = vand.u32 %v29, 4294901760
    %6012 = vmatpush1.msra.mxu0 %v6011
    %6013 = vmatprep.subr.mxu0 0.0
    %v6014 = vand.u32 %v30, 4294901760
    %6015 = vmatpush1.msra.mxu0 %v6014
    %6016 = vmatprep.subr.mxu0 0.0
    %v6017 = vand.u32 %v31, 4294901760
    %6018 = vmatpush1.msra.mxu0 %v6017
    %6019 = vmatprep.subr.mxu0 0.0
    %v6020 = vand.u32 %v32, 4294901760
    %6021 = vmatpush1.msra.mxu0 %v6020
    %6022 = vmatprep.subr.mxu0 0.0
    %6023 = vmatpush1.msra.mxu0 0.0
    %6024 = vmatprep.subr.mxu0 0.0
    %6025 = vmatpush1.msra.mxu0 0.0
    %6026 = vmatprep.subr.mxu0 0.0
    %6027 = vmatpush1.msra.mxu0 0.0
    %6028 = vmatprep.subr.mxu0 0.0
    %6029 = vmatpush1.msra.mxu0 0.0
    %6030 = vmatprep.subr.mxu0 0.0
    %6031 = vmatpush1.msra.mxu0 0.0
    %6032 = vmatprep.subr.mxu0 0.0
    %6033 = vmatpush1.msra.mxu0 0.0
    %6034 = vmatprep.subr.mxu0 0.0
    %6035 = vmatpush1.msra.mxu0 0.0
    %6036 = vmatprep.subr.mxu0 0.0
    %6037 = vmatpush1.msra.mxu0 0.0
    %6038 = vmatprep.subr.mxu0 0.0
    %6039 = vmatpush1.msra.mxu0 0.0
    %6040 = vmatprep.subr.mxu0 0.0
    %6041 = vmatpush1.msra.mxu0 0.0
    %6042 = vmatprep.subr.mxu0 0.0
    %6043 = vmatpush1.msra.mxu0 0.0
    %6044 = vmatprep.subr.mxu0 0.0
    %6045 = vmatpush1.msra.mxu0 0.0
    %6046 = vmatprep.subr.mxu0 0.0
    %6047 = vmatpush1.msra.mxu0 0.0
    %6048 = vmatprep.subr.mxu0 0.0
    %6049 = vmatpush1.msra.mxu0 0.0
    %6050 = vmatprep.subr.mxu0 0.0
    %6051 = vmatpush1.msra.mxu0 0.0
    %6052 = vmatprep.subr.mxu0 0.0
    %6053 = vmatpush1.msra.mxu0 0.0
    %6054 = vmatprep.subr.mxu0 0.0
    %6055 = vmatpush1.msra.mxu0 0.0
    %6056 = vmatprep.subr.mxu0 0.0
    %6057 = vmatpush1.msra.mxu0 0.0
    %6058 = vmatprep.subr.mxu0 0.0
    %6059 = vmatpush1.msra.mxu0 0.0
    %6060 = vmatprep.subr.mxu0 0.0
    %6061 = vmatpush1.msra.mxu0 0.0
    %6062 = vmatprep.subr.mxu0 0.0
    %6063 = vmatpush1.msra.mxu0 0.0
    %6064 = vmatprep.subr.mxu0 0.0
    %6065 = vmatpush1.msra.mxu0 0.0
    %6066 = vmatprep.subr.mxu0 0.0
    %6067 = vmatpush1.msra.mxu0 0.0
    %6068 = vmatprep.subr.mxu0 0.0
    %6069 = vmatpush1.msra.mxu0 0.0
    %6070 = vmatprep.mubr.f32.mxu0 0.0
    %v6071 = vand.u32 %v5993, 4294901760
    %v6072 = vsub.f32 %v5993, %v6071
    %v6073 = vand.u32 %v6072, 4294901760
    %v6074 = vsub.f32 %v6072, %v6073
    %v6075 = vand.u32 %v6074, 4294901760
    %6076 = vmatmul.mubr.f32.gmra.mrb[0].mxu0 %v6075
    %v6077 = vpop.f32.mrb[0].mxu0
    %v6078 = vadd.f32 %v5989, %v6077
    %v6079 = vpop.f32.mrb[0].mxu0
    %6080 = vmatprep.mubr.f32.mxu0 0.0
    %v6081 = vand.u32 %v5996, 4294901760
    %v6082 = vsub.f32 %v5996, %v6081
    %v6083 = vand.u32 %v6082, 4294901760
    %v6084 = vsub.f32 %v6082, %v6083
    %v6085 = vand.u32 %v6084, 4294901760
    %6086 = vmatmul.mubr.f32.gmra.mrb[0].mxu0 %v6085
    %v6087 = vpop.f32.mrb[0].mxu0
    %v6088 = vadd.f32 %v5989, %v6087
    %v6089 = vpop.f32.mrb[0].mxu0
    %6090 = vdwg.mxu0
    %6091 = vmatprep.subr.mxu0 0.0
    %v6092 = vand.u32 %v25, 4294901760
    %v6093 = vsub.f32 %v25, %v6092
    %v6094 = vand.u32 %v6093, 4294901760
    %v6095 = vsub.f32 %v6093, %v6094
    %v6096 = vand.u32 %v6095, 4294901760
    %6097 = vmatpush1.msra.mxu0 %v6096
    %6098 = vmatprep.subr.mxu0 0.0
    %v6099 = vand.u32 %v26, 4294901760
    %v6100 = vsub.f32 %v26, %v6099
    %v6101 = vand.u32 %v6100, 4294901760
    %v6102 = vsub.f32 %v6100, %v6101
    %v6103 = vand.u32 %v6102, 4294901760
    %6104 = vmatpush1.msra.mxu0 %v6103
    %6105 = vmatprep.subr.mxu0 0.0
    %v6106 = vand.u32 %v27, 4294901760
    %v6107 = vsub.f32 %v27, %v6106
    %v6108 = vand.u32 %v6107, 4294901760
    %v6109 = vsub.f32 %v6107, %v6108
    %v6110 = vand.u32 %v6109, 4294901760
    %6111 = vmatpush1.msra.mxu0 %v6110
    %6112 = vmatprep.subr.mxu0 0.0
    %v6113 = vand.u32 %v28, 4294901760
    %v6114 = vsub.f32 %v28, %v6113
    %v6115 = vand.u32 %v6114, 4294901760
    %v6116 = vsub.f32 %v6114, %v6115
    %v6117 = vand.u32 %v6116, 4294901760
    %6118 = vmatpush1.msra.mxu0 %v6117
    %6119 = vmatprep.subr.mxu0 0.0
    %v6120 = vand.u32 %v29, 4294901760
    %v6121 = vsub.f32 %v29, %v6120
    %v6122 = vand.u32 %v6121, 4294901760
    %v6123 = vsub.f32 %v6121, %v6122
    %v6124 = vand.u32 %v6123, 4294901760
    %6125 = vmatpush1.msra.mxu0 %v6124
    %6126 = vmatprep.subr.mxu0 0.0
    %v6127 = vand.u32 %v30, 4294901760
    %v6128 = vsub.f32 %v30, %v6127
    %v6129 = vand.u32 %v6128, 4294901760
    %v6130 = vsub.f32 %v6128, %v6129
    %v6131 = vand.u32 %v6130, 4294901760
    %6132 = vmatpush1.msra.mxu0 %v6131
    %6133 = vmatprep.subr.mxu0 0.0
    %v6134 = vand.u32 %v31, 4294901760
    %v6135 = vsub.f32 %v31, %v6134
    %v6136 = vand.u32 %v6135, 4294901760
    %v6137 = vsub.f32 %v6135, %v6136
    %v6138 = vand.u32 %v6137, 4294901760
    %6139 = vmatpush1.msra.mxu0 %v6138
    %6140 = vmatprep.subr.mxu0 0.0
    %v6141 = vand.u32 %v32, 4294901760
    %v6142 = vsub.f32 %v32, %v6141
    %v6143 = vand.u32 %v6142, 4294901760
    %v6144 = vsub.f32 %v6142, %v6143
    %v6145 = vand.u32 %v6144, 4294901760
    %6146 = vmatpush1.msra.mxu0 %v6145
    %6147 = vmatprep.subr.mxu0 0.0
    %6148 = vmatpush1.msra.mxu0 0.0
    %6149 = vmatprep.subr.mxu0 0.0
    %6150 = vmatpush1.msra.mxu0 0.0
    %6151 = vmatprep.subr.mxu0 0.0
    %6152 = vmatpush1.msra.mxu0 0.0
    %6153 = vmatprep.subr.mxu0 0.0
    %6154 = vmatpush1.msra.mxu0 0.0
    %6155 = vmatprep.subr.mxu0 0.0
    %6156 = vmatpush1.msra.mxu0 0.0
    %6157 = vmatprep.subr.mxu0 0.0
    %6158 = vmatpush1.msra.mxu0 0.0
    %6159 = vmatprep.subr.mxu0 0.0
    %6160 = vmatpush1.msra.mxu0 0.0
    %6161 = vmatprep.subr.mxu0 0.0
    %6162 = vmatpush1.msra.mxu0 0.0
    %6163 = vmatprep.subr.mxu0 0.0
    %6164 = vmatpush1.msra.mxu0 0.0
    %6165 = vmatprep.subr.mxu0 0.0
    %6166 = vmatpush1.msra.mxu0 0.0
    %6167 = vmatprep.subr.mxu0 0.0
    %6168 = vmatpush1.msra.mxu0 0.0
    %6169 = vmatprep.subr.mxu0 0.0
    %6170 = vmatpush1.msra.mxu0 0.0
    %6171 = vmatprep.subr.mxu0 0.0
    %6172 = vmatpush1.msra.mxu0 0.0
    %6173 = vmatprep.subr.mxu0 0.0
    %6174 = vmatpush1.msra.mxu0 0.0
    %6175 = vmatprep.subr.mxu0 0.0
    %6176 = vmatpush1.msra.mxu0 0.0
    %6177 = vmatprep.subr.mxu0 0.0
    %6178 = vmatpush1.msra.mxu0 0.0
    %6179 = vmatprep.subr.mxu0 0.0
    %6180 = vmatpush1.msra.mxu0 0.0
    %6181 = vmatprep.subr.mxu0 0.0
    %6182 = vmatpush1.msra.mxu0 0.0
    %6183 = vmatprep.subr.mxu0 0.0
    %6184 = vmatpush1.msra.mxu0 0.0
    %6185 = vmatprep.subr.mxu0 0.0
    %6186 = vmatpush1.msra.mxu0 0.0
    %6187 = vmatprep.subr.mxu0 0.0
    %6188 = vmatpush1.msra.mxu0 0.0
    %6189 = vmatprep.subr.mxu0 0.0
    %6190 = vmatpush1.msra.mxu0 0.0
    %6191 = vmatprep.subr.mxu0 0.0
    %6192 = vmatpush1.msra.mxu0 0.0
    %6193 = vmatprep.subr.mxu0 0.0
    %6194 = vmatpush1.msra.mxu0 0.0
    %6195 = vmatprep.mubr.f32.mxu0 0.0
    %v6196 = vand.u32 %v5993, 4294901760
    %6197 = vmatmul.mubr.f32.gmra.mrb[0].mxu0 %v6196
    %v6198 = vpop.f32.mrb[0].mxu0
    %v6199 = vadd.f32 %v6078, %v6198
    %v6200 = vpop.f32.mrb[0].mxu0
    %6201 = vmatprep.mubr.f32.mxu0 0.0
    %v6202 = vand.u32 %v5996, 4294901760
    %6203 = vmatmul.mubr.f32.gmra.mrb[0].mxu0 %v6202
    %v6204 = vpop.f32.mrb[0].mxu0
    %v6205 = vadd.f32 %v6088, %v6204
    %v6206 = vpop.f32.mrb[0].mxu0
    %6207 = vdwg.mxu0
    %6208 = vmatprep.subr.mxu0 0.0
    %v6209 = vand.u32 %v25, 4294901760
    %v6210 = vsub.f32 %v25, %v6209
    %6211 = vmatpush1.msra.mxu0 %v6210
    %6212 = vmatprep.subr.mxu0 0.0
    %v6213 = vand.u32 %v26, 4294901760
    %v6214 = vsub.f32 %v26, %v6213
    %6215 = vmatpush1.msra.mxu0 %v6214
    %6216 = vmatprep.subr.mxu0 0.0
    %v6217 = vand.u32 %v27, 4294901760
    %v6218 = vsub.f32 %v27, %v6217
    %6219 = vmatpush1.msra.mxu0 %v6218
    %6220 = vmatprep.subr.mxu0 0.0
    %v6221 = vand.u32 %v28, 4294901760
    %v6222 = vsub.f32 %v28, %v6221
    %6223 = vmatpush1.msra.mxu0 %v6222
    %6224 = vmatprep.subr.mxu0 0.0
    %v6225 = vand.u32 %v29, 4294901760
    %v6226 = vsub.f32 %v29, %v6225
    %6227 = vmatpush1.msra.mxu0 %v6226
    %6228 = vmatprep.subr.mxu0 0.0
    %v6229 = vand.u32 %v30, 4294901760
    %v6230 = vsub.f32 %v30, %v6229
    %6231 = vmatpush1.msra.mxu0 %v6230
    %6232 = vmatprep.subr.mxu0 0.0
    %v6233 = vand.u32 %v31, 4294901760
    %v6234 = vsub.f32 %v31, %v6233
    %6235 = vmatpush1.msra.mxu0 %v6234
    %6236 = vmatprep.subr.mxu0 0.0
    %v6237 = vand.u32 %v32, 4294901760
    %v6238 = vsub.f32 %v32, %v6237
    %6239 = vmatpush1.msra.mxu0 %v6238
    %6240 = vmatprep.subr.mxu0 0.0
    %6241 = vmatpush1.msra.mxu0 0.0
    %6242 = vmatprep.subr.mxu0 0.0
    %6243 = vmatpush1.msra.mxu0 0.0
    %6244 = vmatprep.subr.mxu0 0.0
    %6245 = vmatpush1.msra.mxu0 0.0
    %6246 = vmatprep.subr.mxu0 0.0
    %6247 = vmatpush1.msra.mxu0 0.0
    %6248 = vmatprep.subr.mxu0 0.0
    %6249 = vmatpush1.msra.mxu0 0.0
    %6250 = vmatprep.subr.mxu0 0.0
    %6251 = vmatpush1.msra.mxu0 0.0
    %6252 = vmatprep.subr.mxu0 0.0
    %6253 = vmatpush1.msra.mxu0 0.0
    %6254 = vmatprep.subr.mxu0 0.0
    %6255 = vmatpush1.msra.mxu0 0.0
    %6256 = vmatprep.subr.mxu0 0.0
    %6257 = vmatpush1.msra.mxu0 0.0
    %6258 = vmatprep.subr.mxu0 0.0
    %6259 = vmatpush1.msra.mxu0 0.0
    %6260 = vmatprep.subr.mxu0 0.0
    %6261 = vmatpush1.msra.mxu0 0.0
    %6262 = vmatprep.subr.mxu0 0.0
    %6263 = vmatpush1.msra.mxu0 0.0
    %6264 = vmatprep.subr.mxu0 0.0
    %6265 = vmatpush1.msra.mxu0 0.0
    %6266 = vmatprep.subr.mxu0 0.0
    %6267 = vmatpush1.msra.mxu0 0.0
    %6268 = vmatprep.subr.mxu0 0.0
    %6269 = vmatpush1.msra.mxu0 0.0
    %6270 = vmatprep.subr.mxu0 0.0
    %6271 = vmatpush1.msra.mxu0 0.0
    %6272 = vmatprep.subr.mxu0 0.0
    %6273 = vmatpush1.msra.mxu0 0.0
    %6274 = vmatprep.subr.mxu0 0.0
    %6275 = vmatpush1.msra.mxu0 0.0
    %6276 = vmatprep.subr.mxu0 0.0
    %6277 = vmatpush1.msra.mxu0 0.0
    %6278 = vmatprep.subr.mxu0 0.0
    %6279 = vmatpush1.msra.mxu0 0.0
    %6280 = vmatprep.subr.mxu0 0.0
    %6281 = vmatpush1.msra.mxu0 0.0
    %6282 = vmatprep.subr.mxu0 0.0
    %6283 = vmatpush1.msra.mxu0 0.0
    %6284 = vmatprep.subr.mxu0 0.0
    %6285 = vmatpush1.msra.mxu0 0.0
    %6286 = vmatprep.subr.mxu0 0.0
    %6287 = vmatpush1.msra.mxu0 0.0
    %6288 = vmatprep.mubr.f32.mxu0 0.0
    %v6289 = vand.u32 %v5993, 4294901760
    %v6290 = vsub.f32 %v5993, %v6289
    %6291 = vmatmul.mubr.f32.gmra.mrb[0].mxu0 %v6290
    %v6292 = vpop.f32.mrb[0].mxu0
    %v6293 = vadd.f32 %v6199, %v6292
    %v6294 = vpop.f32.mrb[0].mxu0
    %6295 = vmatprep.mubr.f32.mxu0 0.0
    %v6296 = vand.u32 %v5996, 4294901760
    %v6297 = vsub.f32 %v5996, %v6296
    %6298 = vmatmul.mubr.f32.gmra.mrb[0].mxu0 %v6297
    %v6299 = vpop.f32.mrb[0].mxu0
    %v6300 = vadd.f32 %v6205, %v6299
    %v6301 = vpop.f32.mrb[0].mxu0
    %6302 = vdwg.mxu0
    %6303 = vmatprep.subr.mxu0 0.0
    %v6304 = vand.u32 %v25, 4294901760
    %6305 = vmatpush1.msra.mxu0 %v6304
    %6306 = vmatprep.subr.mxu0 0.0
    %v6307 = vand.u32 %v26, 4294901760
    %6308 = vmatpush1.msra.mxu0 %v6307
    %6309 = vmatprep.subr.mxu0 0.0
    %v6310 = vand.u32 %v27, 4294901760
    %6311 = vmatpush1.msra.mxu0 %v6310
    %6312 = vmatprep.subr.mxu0 0.0
    %v6313 = vand.u32 %v28, 4294901760
    %6314 = vmatpush1.msra.mxu0 %v6313
    %6315 = vmatprep.subr.mxu0 0.0
    %v6316 = vand.u32 %v29, 4294901760
    %6317 = vmatpush1.msra.mxu0 %v6316
    %6318 = vmatprep.subr.mxu0 0.0
    %v6319 = vand.u32 %v30, 4294901760
    %6320 = vmatpush1.msra.mxu0 %v6319
    %6321 = vmatprep.subr.mxu0 0.0
    %v6322 = vand.u32 %v31, 4294901760
    %6323 = vmatpush1.msra.mxu0 %v6322
    %6324 = vmatprep.subr.mxu0 0.0
    %v6325 = vand.u32 %v32, 4294901760
    %6326 = vmatpush1.msra.mxu0 %v6325
    %6327 = vmatprep.subr.mxu0 0.0
    %6328 = vmatpush1.msra.mxu0 0.0
    %6329 = vmatprep.subr.mxu0 0.0
    %6330 = vmatpush1.msra.mxu0 0.0
    %6331 = vmatprep.subr.mxu0 0.0
    %6332 = vmatpush1.msra.mxu0 0.0
    %6333 = vmatprep.subr.mxu0 0.0
    %6334 = vmatpush1.msra.mxu0 0.0
    %6335 = vmatprep.subr.mxu0 0.0
    %6336 = vmatpush1.msra.mxu0 0.0
    %6337 = vmatprep.subr.mxu0 0.0
    %6338 = vmatpush1.msra.mxu0 0.0
    %6339 = vmatprep.subr.mxu0 0.0
    %6340 = vmatpush1.msra.mxu0 0.0
    %6341 = vmatprep.subr.mxu0 0.0
    %6342 = vmatpush1.msra.mxu0 0.0
    %6343 = vmatprep.subr.mxu0 0.0
    %6344 = vmatpush1.msra.mxu0 0.0
    %6345 = vmatprep.subr.mxu0 0.0
    %6346 = vmatpush1.msra.mxu0 0.0
    %6347 = vmatprep.subr.mxu0 0.0
    %6348 = vmatpush1.msra.mxu0 0.0
    %6349 = vmatprep.subr.mxu0 0.0
    %6350 = vmatpush1.msra.mxu0 0.0
    %6351 = vmatprep.subr.mxu0 0.0
    %6352 = vmatpush1.msra.mxu0 0.0
    %6353 = vmatprep.subr.mxu0 0.0
    %6354 = vmatpush1.msra.mxu0 0.0
    %6355 = vmatprep.subr.mxu0 0.0
    %6356 = vmatpush1.msra.mxu0 0.0
    %6357 = vmatprep.subr.mxu0 0.0
    %6358 = vmatpush1.msra.mxu0 0.0
    %6359 = vmatprep.subr.mxu0 0.0
    %6360 = vmatpush1.msra.mxu0 0.0
    %6361 = vmatprep.subr.mxu0 0.0
    %6362 = vmatpush1.msra.mxu0 0.0
    %6363 = vmatprep.subr.mxu0 0.0
    %6364 = vmatpush1.msra.mxu0 0.0
    %6365 = vmatprep.subr.mxu0 0.0
    %6366 = vmatpush1.msra.mxu0 0.0
    %6367 = vmatprep.subr.mxu0 0.0
    %6368 = vmatpush1.msra.mxu0 0.0
    %6369 = vmatprep.subr.mxu0 0.0
    %6370 = vmatpush1.msra.mxu0 0.0
    %6371 = vmatprep.subr.mxu0 0.0
    %6372 = vmatpush1.msra.mxu0 0.0
    %6373 = vmatprep.subr.mxu0 0.0
    %6374 = vmatpush1.msra.mxu0 0.0
    %6375 = vmatprep.mubr.f32.mxu0 0.0
    %v6376 = vand.u32 %v5993, 4294901760
    %v6377 = vsub.f32 %v5993, %v6376
    %v6378 = vand.u32 %v6377, 4294901760
    %6379 = vmatmul.mubr.f32.gmra.mrb[0].mxu0 %v6378
    %v6380 = vpop.f32.mrb[0].mxu0
    %v6381 = vadd.f32 %v6293, %v6380
    %v6382 = vpop.f32.mrb[0].mxu0
    %6383 = vmatprep.mubr.f32.mxu0 0.0
    %v6384 = vand.u32 %v5996, 4294901760
    %v6385 = vsub.f32 %v5996, %v6384
    %v6386 = vand.u32 %v6385, 4294901760
    %6387 = vmatmul.mubr.f32.gmra.mrb[0].mxu0 %v6386
    %v6388 = vpop.f32.mrb[0].mxu0
    %v6389 = vadd.f32 %v6300, %v6388
    %v6390 = vpop.f32.mrb[0].mxu0
    %6391 = vdwg.mxu0
    %6392 = vmatprep.subr.mxu0 0.0
    %v6393 = vand.u32 %v25, 4294901760
    %v6394 = vsub.f32 %v25, %v6393
    %v6395 = vand.u32 %v6394, 4294901760
    %6396 = vmatpush1.msra.mxu0 %v6395
    %6397 = vmatprep.subr.mxu0 0.0
    %v6398 = vand.u32 %v26, 4294901760
    %v6399 = vsub.f32 %v26, %v6398
    %v6400 = vand.u32 %v6399, 4294901760
    %6401 = vmatpush1.msra.mxu0 %v6400
    %6402 = vmatprep.subr.mxu0 0.0
    %v6403 = vand.u32 %v27, 4294901760
    %v6404 = vsub.f32 %v27, %v6403
    %v6405 = vand.u32 %v6404, 4294901760
    %6406 = vmatpush1.msra.mxu0 %v6405
    %6407 = vmatprep.subr.mxu0 0.0
    %v6408 = vand.u32 %v28, 4294901760
    %v6409 = vsub.f32 %v28, %v6408
    %v6410 = vand.u32 %v6409, 4294901760
    %6411 = vmatpush1.msra.mxu0 %v6410
    %6412 = vmatprep.subr.mxu0 0.0
    %v6413 = vand.u32 %v29, 4294901760
    %v6414 = vsub.f32 %v29, %v6413
    %v6415 = vand.u32 %v6414, 4294901760
    %6416 = vmatpush1.msra.mxu0 %v6415
    %6417 = vmatprep.subr.mxu0 0.0
    %v6418 = vand.u32 %v30, 4294901760
    %v6419 = vsub.f32 %v30, %v6418
    %v6420 = vand.u32 %v6419, 4294901760
    %6421 = vmatpush1.msra.mxu0 %v6420
    %6422 = vmatprep.subr.mxu0 0.0
    %v6423 = vand.u32 %v31, 4294901760
    %v6424 = vsub.f32 %v31, %v6423
    %v6425 = vand.u32 %v6424, 4294901760
    %6426 = vmatpush1.msra.mxu0 %v6425
    %6427 = vmatprep.subr.mxu0 0.0
    %v6428 = vand.u32 %v32, 4294901760
    %v6429 = vsub.f32 %v32, %v6428
    %v6430 = vand.u32 %v6429, 4294901760
    %6431 = vmatpush1.msra.mxu0 %v6430
    %6432 = vmatprep.subr.mxu0 0.0
    %6433 = vmatpush1.msra.mxu0 0.0
    %6434 = vmatprep.subr.mxu0 0.0
    %6435 = vmatpush1.msra.mxu0 0.0
    %6436 = vmatprep.subr.mxu0 0.0
    %6437 = vmatpush1.msra.mxu0 0.0
    %6438 = vmatprep.subr.mxu0 0.0
    %6439 = vmatpush1.msra.mxu0 0.0
    %6440 = vmatprep.subr.mxu0 0.0
    %6441 = vmatpush1.msra.mxu0 0.0
    %6442 = vmatprep.subr.mxu0 0.0
    %6443 = vmatpush1.msra.mxu0 0.0
    %6444 = vmatprep.subr.mxu0 0.0
    %6445 = vmatpush1.msra.mxu0 0.0
    %6446 = vmatprep.subr.mxu0 0.0
    %6447 = vmatpush1.msra.mxu0 0.0
    %6448 = vmatprep.subr.mxu0 0.0
    %6449 = vmatpush1.msra.mxu0 0.0
    %6450 = vmatprep.subr.mxu0 0.0
    %6451 = vmatpush1.msra.mxu0 0.0
    %6452 = vmatprep.subr.mxu0 0.0
    %6453 = vmatpush1.msra.mxu0 0.0
    %6454 = vmatprep.subr.mxu0 0.0
    %6455 = vmatpush1.msra.mxu0 0.0
    %6456 = vmatprep.subr.mxu0 0.0
    %6457 = vmatpush1.msra.mxu0 0.0
    %6458 = vmatprep.subr.mxu0 0.0
    %6459 = vmatpush1.msra.mxu0 0.0
    %6460 = vmatprep.subr.mxu0 0.0
    %6461 = vmatpush1.msra.mxu0 0.0
    %6462 = vmatprep.subr.mxu0 0.0
    %6463 = vmatpush1.msra.mxu0 0.0
    %6464 = vmatprep.subr.mxu0 0.0
    %6465 = vmatpush1.msra.mxu0 0.0
    %6466 = vmatprep.subr.mxu0 0.0
    %6467 = vmatpush1.msra.mxu0 0.0
    %6468 = vmatprep.subr.mxu0 0.0
    %6469 = vmatpush1.msra.mxu0 0.0
    %6470 = vmatprep.subr.mxu0 0.0
    %6471 = vmatpush1.msra.mxu0 0.0
    %6472 = vmatprep.subr.mxu0 0.0
    %6473 = vmatpush1.msra.mxu0 0.0
    %6474 = vmatprep.subr.mxu0 0.0
    %6475 = vmatpush1.msra.mxu0 0.0
    %6476 = vmatprep.subr.mxu0 0.0
    %6477 = vmatpush1.msra.mxu0 0.0
    %6478 = vmatprep.subr.mxu0 0.0
    %6479 = vmatpush1.msra.mxu0 0.0
    %6480 = vmatprep.mubr.f32.mxu0 0.0
    %v6481 = vand.u32 %v5993, 4294901760
    %6482 = vmatmul.mubr.f32.gmra.mrb[0].mxu0 %v6481
    %v6483 = vpop.f32.mrb[0].mxu0
    %v6484 = vadd.f32 %v6381, %v6483
    %v6485 = vpop.f32.mrb[0].mxu0
    %6486 = vmatprep.mubr.f32.mxu0 0.0
    %v6487 = vand.u32 %v5996, 4294901760
    %6488 = vmatmul.mubr.f32.gmra.mrb[0].mxu0 %v6487
    %v6489 = vpop.f32.mrb[0].mxu0
    %v6490 = vadd.f32 %v6389, %v6489
    %v6491 = vpop.f32.mrb[0].mxu0
    %6492 = vdwg.mxu0
    %6493 = vmatprep.subr.mxu0 0.0
    %v6494 = vand.u32 %v25, 4294901760
    %6495 = vmatpush1.msra.mxu0 %v6494
    %6496 = vmatprep.subr.mxu0 0.0
    %v6497 = vand.u32 %v26, 4294901760
    %6498 = vmatpush1.msra.mxu0 %v6497
    %6499 = vmatprep.subr.mxu0 0.0
    %v6500 = vand.u32 %v27, 4294901760
    %6501 = vmatpush1.msra.mxu0 %v6500
    %6502 = vmatprep.subr.mxu0 0.0
    %v6503 = vand.u32 %v28, 4294901760
    %6504 = vmatpush1.msra.mxu0 %v6503
    %6505 = vmatprep.subr.mxu0 0.0
    %v6506 = vand.u32 %v29, 4294901760
    %6507 = vmatpush1.msra.mxu0 %v6506
    %6508 = vmatprep.subr.mxu0 0.0
    %v6509 = vand.u32 %v30, 4294901760
    %6510 = vmatpush1.msra.mxu0 %v6509
    %6511 = vmatprep.subr.mxu0 0.0
    %v6512 = vand.u32 %v31, 4294901760
    %6513 = vmatpush1.msra.mxu0 %v6512
    %6514 = vmatprep.subr.mxu0 0.0
    %v6515 = vand.u32 %v32, 4294901760
    %6516 = vmatpush1.msra.mxu0 %v6515
    %6517 = vmatprep.subr.mxu0 0.0
    %6518 = vmatpush1.msra.mxu0 0.0
    %6519 = vmatprep.subr.mxu0 0.0
    %6520 = vmatpush1.msra.mxu0 0.0
    %6521 = vmatprep.subr.mxu0 0.0
    %6522 = vmatpush1.msra.mxu0 0.0
    %6523 = vmatprep.subr.mxu0 0.0
    %6524 = vmatpush1.msra.mxu0 0.0
    %6525 = vmatprep.subr.mxu0 0.0
    %6526 = vmatpush1.msra.mxu0 0.0
    %6527 = vmatprep.subr.mxu0 0.0
    %6528 = vmatpush1.msra.mxu0 0.0
    %6529 = vmatprep.subr.mxu0 0.0
    %6530 = vmatpush1.msra.mxu0 0.0
    %6531 = vmatprep.subr.mxu0 0.0
    %6532 = vmatpush1.msra.mxu0 0.0
    %6533 = vmatprep.subr.mxu0 0.0
    %6534 = vmatpush1.msra.mxu0 0.0
    %6535 = vmatprep.subr.mxu0 0.0
    %6536 = vmatpush1.msra.mxu0 0.0
    %6537 = vmatprep.subr.mxu0 0.0
    %6538 = vmatpush1.msra.mxu0 0.0
    %6539 = vmatprep.subr.mxu0 0.0
    %6540 = vmatpush1.msra.mxu0 0.0
    %6541 = vmatprep.subr.mxu0 0.0
    %6542 = vmatpush1.msra.mxu0 0.0
    %6543 = vmatprep.subr.mxu0 0.0
    %6544 = vmatpush1.msra.mxu0 0.0
    %6545 = vmatprep.subr.mxu0 0.0
    %6546 = vmatpush1.msra.mxu0 0.0
    %6547 = vmatprep.subr.mxu0 0.0
    %6548 = vmatpush1.msra.mxu0 0.0
    %6549 = vmatprep.subr.mxu0 0.0
    %6550 = vmatpush1.msra.mxu0 0.0
    %6551 = vmatprep.subr.mxu0 0.0
    %6552 = vmatpush1.msra.mxu0 0.0
    %6553 = vmatprep.subr.mxu0 0.0
    %6554 = vmatpush1.msra.mxu0 0.0
    %6555 = vmatprep.subr.mxu0 0.0
    %6556 = vmatpush1.msra.mxu0 0.0
    %6557 = vmatprep.subr.mxu0 0.0
    %6558 = vmatpush1.msra.mxu0 0.0
    %6559 = vmatprep.subr.mxu0 0.0
    %6560 = vmatpush1.msra.mxu0 0.0
    %6561 = vmatprep.subr.mxu0 0.0
    %6562 = vmatpush1.msra.mxu0 0.0
    %6563 = vmatprep.subr.mxu0 0.0
    %6564 = vmatpush1.msra.mxu0 0.0
    %6565 = vmatprep.mubr.f32.mxu0 0.0
    %v6566 = vand.u32 %v5993, 4294901760
    %6567 = vmatmul.mubr.f32.gmra.mrb[0].mxu0 %v6566
    %v6568 = vpop.f32.mrb[0].mxu0
    %v6569 = vadd.f32 %v6484, %v6568
    %v6570 = vpop.f32.mrb[0].mxu0
    %6571 = vmatprep.mubr.f32.mxu0 0.0
    %v6572 = vand.u32 %v5996, 4294901760
    %6573 = vmatmul.mubr.f32.gmra.mrb[0].mxu0 %v6572
    %v6574 = vpop.f32.mrb[0].mxu0
    %v6575 = vadd.f32 %v6490, %v6574
    %v6576 = vpop.f32.mrb[0].mxu0
    %6577 = vdwg.mxu0
    %v6578 = vadd.f32 %v5425, %v6569
    %v6579 = vadd.f32 %v5426, %v6575
    %6580 = vst.msk [vmem:[#allocation2] sm:$0xff] %vm38, %v6578
    %6581 = vst.msk [vmem:[#allocation2 + $0x8] sm:$0xff] %vm38, %v6579
    // Predicated region
    $region14: #{encoder_block.1} parent=1 // pred_check
      _
    $region15: #{encoder_block.1} parent=1 // pred_check_branch
      %6583 = sbr.rel (0) target = $region17
    $region16: #{encoder_block.1} parent=1 // pred_region
      %s6585 = ssub.s32 256, 256
      %6586 = vsyncadd [#allocation3], %s6585
      %s6587 = sshll.u32 [#allocation2], 4
      %s6588 = int_to_ptr.vmem [resolvable:$true] %s6587
      %6593 = dma.vmem_to_hbm [thread:$0]  %s6588, 256, %s3, [#allocation3], 128, 128, 8
    $region17: #{encoder_block.1} parent=1 // pred_fallthru
      _
    // Predicated region
    $region18: #{encoder_block.1} parent=1 // pred_check
      _
    $region19: #{encoder_block.1} parent=1 // pred_check_branch
      %6595 = sbr.rel (0) target = $region21
    $region20: #{encoder_block.1} parent=1 // pred_region
      %6596 = dma.done [#allocation3], 256
    $region21: #{encoder_block.1} parent=1 // pred_fallthru
      _
    %6597 = vsyncpa [#allocation3], 1

</llo_original>
